<compile_context>
chip_gen: v7x
topology: tpu7x:2x2x1
jax: 0.10.0
libtpu: 0.0.40
codegen_flags: <defaults>
</compile_context>

<pallas_src>
import jax
import jax.numpy as jnp
from jax.experimental import pallas as pl
from jax.experimental.pallas import tpu as pltpu

NEG_SLOPE = 0.01   # nn.LeakyReLU default
BN_EPS = 1e-5      # nn.BatchNorm2d default
LANE = 128

_VMEM = pl.BlockSpec(memory_space=pltpu.MemorySpace.VMEM)


def _round_up(c, m=LANE):
    return ((c + m - 1) // m) * m


def _leaky(x):
    # LeakyReLU in the value's native dtype (bf16 activations, f32 accumulators).
    return jnp.where(x > 0, x, x * jnp.asarray(NEG_SLOPE, dtype=x.dtype))


# ------------------------------ Pallas kernels ------------------------------

def _spatial_block_kernel(taps_ref, xc_ref, w3_ref, b3_ref, w1_ref, wt_ref,
                          b1t_ref, o_ref):
    """One stride-2 residual block; batch+spatial flattened into matmul M.

    taps_ref: (M, 9*Cact) bf16  stride-2 im2col of the zero-padded input.
    xc_ref:   (M, Cact)   bf16  raw stride-2 samples (transform conv input).
    w3_ref:   (9*Cact, Cmid_p) bf16  3x3 conv weights, BN1 scale folded in.
    b3_ref:   (1, Cmid_p) f32
    w1_ref:   (Cmid_p, Cout_p) bf16  residual 1x1 conv, BN2 scale folded in.
    wt_ref:   (Cact, Cout_p)   bf16  transform 1x1 / stride-2 conv.
    b1t_ref:  (1, Cout_p) f32        fused b1 + bt.
    o_ref:    (M, Cout_p) bf16
    """
    h1 = _leaky(taps_ref[...])                       # one-shot activation
    z = jnp.dot(h1, w3_ref[...], preferred_element_type=jnp.float32) + b3_ref[...]
    h2 = _leaky(z).astype(jnp.bfloat16)
    out = (jnp.dot(h2, w1_ref[...], preferred_element_type=jnp.float32)
           + jnp.dot(xc_ref[...], wt_ref[...], preferred_element_type=jnp.float32)
           + b1t_ref[...])
    o_ref[...] = out.astype(o_ref.dtype)


def _make_tail_kernel(n_blocks):
    """Fused 1x1-spatial tail: n_blocks residual blocks + head conv + logit sum.

    With padding=1 on a 1x1 input only the center tap of the 3x3 conv is live.
    refs layout: x, (w3c, b3, w1, wt, b1t) * n_blocks, wh, bh, out.
    Output: (8, 128) f32 slab broadcast-filled with sum_n(logits) (lane-dense).
    """
    def kernel(*refs):
        x_ref, o_ref = refs[0], refs[-1]
        x = x_ref[...]                               # (N, Cin_p) bf16
        idx = 1
        for _ in range(n_blocks):
            w3c, b3, w1, wt, b1t = refs[idx:idx + 5]
            idx += 5
            h1 = _leaky(x)
            z = jnp.dot(h1, w3c[...], preferred_element_type=jnp.float32) + b3[...]
            h2 = _leaky(z).astype(jnp.bfloat16)
            x = (jnp.dot(h2, w1[...], preferred_element_type=jnp.float32)
                 + jnp.dot(x, wt[...], preferred_element_type=jnp.float32)
                 + b1t[...]).astype(jnp.bfloat16)
        wh, bh = refs[idx], refs[idx + 1]
        logits = (jnp.sum(x.astype(jnp.float32) * wh[...], axis=-1, keepdims=True)
                  + bh[...])                         # (N, 1)
        o_ref[...] = jnp.zeros((8, LANE), jnp.float32) + jnp.sum(logits)
    return kernel


# ------------------------------ call wrappers -------------------------------

def _im2col_s2(x):
    """Stride-2 im2col of the zero-padded NHWC activation + raw stride-2 samples."""
    n, h, w, c = x.shape
    ho, wo = h // 2, w // 2
    xp = jnp.pad(x, ((0, 0), (1, 1), (1, 1), (0, 0)))
    taps = []
    for di in range(3):
        for dj in range(3):
            taps.append(jax.lax.slice(
                xp, (0, di, dj, 0),
                (n, di + 2 * ho - 1, dj + 2 * wo - 1, c),
                (1, 2, 2, 1)))
    taps = jnp.concatenate(taps, axis=-1).reshape(n * ho * wo, 9 * c)
    xc = x[:, ::2, ::2, :].reshape(n * ho * wo, c)
    return taps, xc


def spatial_block_forward(bp, x):
    n, h, w, _ = x.shape
    assert h % 2 == 0 and w % 2 == 0, "spatial block expects even H, W"
    ho, wo = h // 2, w // 2
    m = n * ho * wo
    cout_p = bp['b1t'].shape[1]
    # TODO(synk): for large H/W, extract the taps inside the kernel (strided
    # VMEM slices / phase-layout outputs) instead of a JAX-side im2col slab.
    taps, xc = _im2col_s2(x)
    out = pl.pallas_call(
        _spatial_block_kernel,
        out_shape=jax.ShapeDtypeStruct((m, cout_p), jnp.bfloat16),
        in_specs=[_VMEM] * 7,
        out_specs=_VMEM,
    )(taps, xc, bp['w3'], bp['b3'], bp['w1'], bp['wt'], bp['b1t'])
    return out.reshape(n, ho, wo, cout_p)


def tail_forward(tail_blocks, head, x):
    """x: (N, Cin_p) bf16 -> f32 scalar: sum over batch of this head's logits."""
    args = [x]
    for bp in tail_blocks:
        args += [bp['w3c'], bp['b3'], bp['w1'], bp['wt'], bp['b1t']]
    args += [head['wh'], head['bh']]
    out = pl.pallas_call(
        _make_tail_kernel(len(tail_blocks)),
        out_shape=jax.ShapeDtypeStruct((8, LANE), jnp.float32),
        in_specs=[_VMEM] * len(args),
        out_specs=_VMEM,
    )(*args)
    return out[0, 0]


def discriminator_forward(p, x):
    """x: (N, H, W, C) bf16 NHWC. Returns sum over batch of the head logits."""
    blocks = p['blocks']
    i = 0
    while i < len(blocks) and (x.shape[1] > 1 or x.shape[2] > 1):
        x = spatial_block_forward(blocks[i], x)
        i += 1
    assert x.shape[1] == 1 and x.shape[2] == 1, (
        "TODO(synk): inputs that do not collapse to 1x1 spatial before the "
        "blocks run out need a spatial head reduction")
    x = x.reshape(x.shape[0], x.shape[3])
    return tail_forward(blocks[i:], p['head'], x)


def msdiscriminator_forward(params, inputs_nchw):
    x = jnp.transpose(inputs_nchw, (0, 2, 3, 1)).astype(jnp.bfloat16)   # NHWC
    n = x.shape[0]
    s1 = discriminator_forward(params['d1'], x)
    s2 = discriminator_forward(params['d2'], x[:, ::2, ::2, :])   # interp 0.5
    s3 = discriminator_forward(params['d3'], x[:, ::4, ::4, :])   # interp 0.25
    # torch.mean(torch.stack((l1, l2, l3))) with each l_i of length N.
    return (s1 + s2 + s3) / jnp.float32(3 * n)


# -------------------------- parameter construction --------------------------

def _spectral_norm(w, key, n_iter=1, eps=1e-12):
    # TODO(synk): PyTorch's spectral_norm updates u every forward; this is one
    # deterministic power iteration applied once at init.
    w_mat = w.reshape(w.shape[0], -1)
    u = jax.random.normal(key, (w.shape[0],), jnp.float32)
    u = u / (jnp.linalg.norm(u) + eps)
    v = None
    for _ in range(n_iter):
        v = w_mat.T @ u
        v = v / (jnp.linalg.norm(v) + eps)
        u = w_mat @ v
        u = u / (jnp.linalg.norm(u) + eps)
    sigma = u @ (w_mat @ v)
    return w / sigma


def _conv_init(key, cout, cin, kh, kw, spectral=True):
    # Mimics nn.Conv2d default init bounds (1/sqrt(fan_in)).
    k_w, k_b, k_s = jax.random.split(key, 3)
    fan_in = cin * kh * kw
    bound = float(fan_in) ** -0.5
    w = jax.random.uniform(k_w, (cout, cin, kh, kw), jnp.float32, -bound, bound)
    b = jax.random.uniform(k_b, (cout,), jnp.float32, -bound, bound)
    if spectral:
        w = _spectral_norm(w, k_s)
    return w, b


def _pad_axis(a, size, axis):
    if a.shape[axis] == size:
        return a
    widths = [(0, 0)] * a.ndim
    widths[axis] = (0, size - a.shape[axis])
    return jnp.pad(a, widths)


def init_residual_block(key, cin, cout, cin_act):
    """cin_act = actual (possibly lane-padded) channel width of the incoming activation."""
    k3, k1, kt = jax.random.split(key, 3)
    w3, b3 = _conv_init(k3, cin, cin, 3, 3)      # Conv3X3NoPadding(stride=2, pad=1)
    w1, b1 = _conv_init(k1, cout, cin, 1, 1)     # residual 1x1 conv
    wt, bt = _conv_init(kt, cout, cin, 1, 1)     # transform 1x1 conv, stride 2
    cmid_p = _round_up(cin)
    cout_p = _round_up(cout)
    # Inference BatchNorm with default stats: y = x / sqrt(1 + eps); shift == 0
    # and scale > 0, so LeakyReLU(BN(x)) = scale * LeakyReLU(x) and the scale
    # folds into the next conv.  BN1 -> w3 input rows, BN2 -> w1 input rows.
    # TODO(synk): re-derive this folding if real (nonzero-mean/shift) BN stats
    # are ever loaded.
    s = (1.0 + BN_EPS) ** -0.5
    # torch (Cout, Cin, kh, kw) -> im2col matmul layout (tap, Cin, Cout).
    w3_m = jnp.transpose(w3, (2, 3, 1, 0)).reshape(9, cin, cin) * s
    w3_m = _pad_axis(_pad_axis(w3_m, cin_act, 1), cmid_p, 2)      # (9, Cact, Cmid_p)
    w1_m = w1[:, :, 0, 0].T * s
    w1_m = _pad_axis(_pad_axis(w1_m, cmid_p, 0), cout_p, 1)       # (Cmid_p, Cout_p)
    wt_m = wt[:, :, 0, 0].T
    wt_m = _pad_axis(_pad_axis(wt_m, cin_act, 0), cout_p, 1)      # (Cact, Cout_p)
    return {
        'w3': w3_m.reshape(9 * cin_act, cmid_p).astype(jnp.bfloat16),
        'w3c': w3_m[4].astype(jnp.bfloat16),                       # center tap
        'w1': w1_m.astype(jnp.bfloat16),
        'wt': wt_m.astype(jnp.bfloat16),
        'b3': _pad_axis(b3.reshape(1, cin), cmid_p, 1).astype(jnp.float32),
        'b1t': _pad_axis((b1 + bt).reshape(1, cout), cout_p, 1).astype(jnp.float32),
    }


def init_discriminator(key, channels):
    n = len(channels)
    keys = jax.random.split(key, n)
    blocks = []
    cin_act = channels[0]            # raw network input is NOT channel-padded
    for i in range(1, n):
        blocks.append(
            init_residual_block(keys[i - 1], channels[i - 1], channels[i], cin_act))
        cin_act = _round_up(channels[i])
    wf, bf = _conv_init(keys[-1], 1, channels[-1], 1, 1)   # final 1x1 conv -> 1 ch
    head = {
        'wh': _pad_axis(wf[:, :, 0, 0], cin_act, 1).astype(jnp.float32),  # (1, Cp)
        'bh': bf.reshape(1, 1).astype(jnp.float32),
    }
    return {'blocks': blocks, 'head': head}


def init_msdiscriminator(key, num_bands):
    k1, k2, k3 = jax.random.split(key, 3)
    c0 = num_bands * 2
    return {
        'd1': init_discriminator(k1, (c0, 32, 32, 64, 64, 128, 128, 256, 256)),
        'd2': init_discriminator(k2, (c0, 32, 64, 64, 128, 128, 256, 256)),
        'd3': init_discriminator(k3, (c0, 32, 64, 128, 128, 256, 256)),
    }


# ----------------------------------- main ------------------------------------

if __name__ == "__main__":
    num_bands = 2
    key = jax.random.PRNGKey(0)
    kp, kx = jax.random.split(key)
    params = init_msdiscriminator(kp, num_bands)
    # Input matches the PyTorch module's NCHW convention: (B, num_bands*2, H, W)
    x = jax.random.normal(kx, (2, num_bands * 2, 16, 16), jnp.float32)
    fwd = jax.jit(msdiscriminator_forward)
    out = fwd(params, x)
    jax.block_until_ready(out)
    assert out.shape == () and bool(jnp.isfinite(out))
    print("KERNEL_OK")
</pallas_src>

<mosaic_0001>
module attributes {stable_mosaic.version = 11 : i64} {
  func.func @_spatial_block_kernel(%arg0: memref<8x36xbf16, #tpu.memory_space<vmem>>, %arg1: memref<8x4xbf16, #tpu.memory_space<vmem>>, %arg2: memref<36x128xbf16, #tpu.memory_space<vmem>>, %arg3: memref<1x128xf32, #tpu.memory_space<vmem>>, %arg4: memref<128x128xbf16, #tpu.memory_space<vmem>>, %arg5: memref<4x128xbf16, #tpu.memory_space<vmem>>, %arg6: memref<1x128xf32, #tpu.memory_space<vmem>>, %arg7: memref<8x128xbf16, #tpu.memory_space<vmem>>) attributes {dimension_semantics = [], scalar_prefetch = 0 : i64, scratch_operands = 0 : i64, tpu.core_type = #tpu.core_type<tc>} {
    %c0 = arith.constant 0 : index
    %c0_0 = arith.constant 0 : index
    %0 = vector.load %arg0[%c0, %c0_0] : memref<8x36xbf16, #tpu.memory_space<vmem>>, vector<8x36xbf16>
    %cst = arith.constant 0.000000e+00 : bf16
    %1 = vector.broadcast %cst : bf16 to vector<8x36xbf16>
    %2 = arith.cmpf ogt, %0, %1 : vector<8x36xbf16>
    %cst_1 = arith.constant 1.000980e-02 : bf16
    %3 = vector.broadcast %cst_1 : bf16 to vector<8x36xbf16>
    %4 = arith.mulf %0, %3 : vector<8x36xbf16>
    %5 = arith.select %2, %0, %4 : vector<8x36xi1>, vector<8x36xbf16>
    %c0_2 = arith.constant 0 : index
    %c0_3 = arith.constant 0 : index
    %6 = vector.load %arg2[%c0_2, %c0_3] : memref<36x128xbf16, #tpu.memory_space<vmem>>, vector<36x128xbf16>
    %cst_4 = arith.constant dense<0.000000e+00> : vector<8x128xf32>
    %7 = tpu.matmul %5, %6, %cst_4 {dimension_numbers = #tpu.dot_dimension_numbers<[1], [0], [0], [1], [0, 0, 1, 1], [], []>} : vector<8x36xbf16>, vector<36x128xbf16>, vector<8x128xf32> -> vector<8x128xf32>
    %c0_5 = arith.constant 0 : index
    %c0_6 = arith.constant 0 : index
    %8 = vector.load %arg3[%c0_5, %c0_6] : memref<1x128xf32, #tpu.memory_space<vmem>>, vector<1x128xf32>
    %9 = vector.broadcast %8 : vector<1x128xf32> to vector<8x128xf32>
    %10 = arith.addf %7, %9 : vector<8x128xf32>
    %cst_7 = arith.constant 0.000000e+00 : f32
    %11 = vector.broadcast %cst_7 : f32 to vector<8x128xf32>
    %12 = arith.cmpf ogt, %10, %11 : vector<8x128xf32>
    %cst_8 = arith.constant 0.00999999977 : f32
    %13 = vector.broadcast %cst_8 : f32 to vector<8x128xf32>
    %14 = arith.mulf %10, %13 : vector<8x128xf32>
    %15 = arith.select %12, %10, %14 : vector<8x128xi1>, vector<8x128xf32>
    %16 = arith.truncf %15 : vector<8x128xf32> to vector<8x128xbf16>
    %c0_9 = arith.constant 0 : index
    %c0_10 = arith.constant 0 : index
    %17 = vector.load %arg4[%c0_9, %c0_10] : memref<128x128xbf16, #tpu.memory_space<vmem>>, vector<128x128xbf16>
    %cst_11 = arith.constant dense<0.000000e+00> : vector<8x128xf32>
    %18 = tpu.matmul %16, %17, %cst_11 {dimension_numbers = #tpu.dot_dimension_numbers<[1], [0], [0], [1], [0, 0, 1, 1], [], []>} : vector<8x128xbf16>, vector<128x128xbf16>, vector<8x128xf32> -> vector<8x128xf32>
    %c0_12 = arith.constant 0 : index
    %c0_13 = arith.constant 0 : index
    %19 = vector.load %arg1[%c0_12, %c0_13] : memref<8x4xbf16, #tpu.memory_space<vmem>>, vector<8x4xbf16>
    %c0_14 = arith.constant 0 : index
    %c0_15 = arith.constant 0 : index
    %20 = vector.load %arg5[%c0_14, %c0_15] : memref<4x128xbf16, #tpu.memory_space<vmem>>, vector<4x128xbf16>
    %cst_16 = arith.constant dense<0.000000e+00> : vector<8x128xf32>
    %21 = tpu.matmul %19, %20, %cst_16 {dimension_numbers = #tpu.dot_dimension_numbers<[1], [0], [0], [1], [0, 0, 1, 1], [], []>} : vector<8x4xbf16>, vector<4x128xbf16>, vector<8x128xf32> -> vector<8x128xf32>
    %22 = arith.addf %18, %21 : vector<8x128xf32>
    %c0_17 = arith.constant 0 : index
    %c0_18 = arith.constant 0 : index
    %23 = vector.load %arg6[%c0_17, %c0_18] : memref<1x128xf32, #tpu.memory_space<vmem>>, vector<1x128xf32>
    %24 = vector.broadcast %23 : vector<1x128xf32> to vector<8x128xf32>
    %25 = arith.addf %22, %24 : vector<8x128xf32>
    %26 = arith.truncf %25 : vector<8x128xf32> to vector<8x128xbf16>
    %c0_19 = arith.constant 0 : index
    %c0_20 = arith.constant 0 : index
    %27 = vector.load %arg7[%c0_19, %c0_20] : memref<8x128xbf16, #tpu.memory_space<vmem>>, vector<8x128xbf16>
    tpu.vector_store %arg7[%c0_19, %c0_20], %26 {strides = array<i32>} : memref<8x128xbf16, #tpu.memory_space<vmem>>, vector<8x128xbf16>,
    return
  }
}

module attributes {stable_mosaic.version = 11 : i64} {
  func.func @_spatial_block_kernel(%arg0: memref<2x1152xbf16, #tpu.memory_space<vmem>>, %arg1: memref<2x128xbf16, #tpu.memory_space<vmem>>, %arg2: memref<1152x128xbf16, #tpu.memory_space<vmem>>, %arg3: memref<1x128xf32, #tpu.memory_space<vmem>>, %arg4: memref<128x128xbf16, #tpu.memory_space<vmem>>, %arg5: memref<128x128xbf16, #tpu.memory_space<vmem>>, %arg6: memref<1x128xf32, #tpu.memory_space<vmem>>, %arg7: memref<2x128xbf16, #tpu.memory_space<vmem>>) attributes {dimension_semantics = [], scalar_prefetch = 0 : i64, scratch_operands = 0 : i64, tpu.core_type = #tpu.core_type<tc>} {
    %c0 = arith.constant 0 : index
    %c0_0 = arith.constant 0 : index
    %0 = vector.load %arg0[%c0, %c0_0] : memref<2x1152xbf16, #tpu.memory_space<vmem>>, vector<2x1152xbf16>
    %cst = arith.constant 0.000000e+00 : bf16
    %1 = vector.broadcast %cst : bf16 to vector<2x1152xbf16>
    %2 = arith.cmpf ogt, %0, %1 : vector<2x1152xbf16>
    %cst_1 = arith.constant 1.000980e-02 : bf16
    %3 = vector.broadcast %cst_1 : bf16 to vector<2x1152xbf16>
    %4 = arith.mulf %0, %3 : vector<2x1152xbf16>
    %5 = arith.select %2, %0, %4 : vector<2x1152xi1>, vector<2x1152xbf16>
    %c0_2 = arith.constant 0 : index
    %c0_3 = arith.constant 0 : index
    %6 = vector.load %arg2[%c0_2, %c0_3] : memref<1152x128xbf16, #tpu.memory_space<vmem>>, vector<1152x128xbf16>
    %cst_4 = arith.constant dense<0.000000e+00> : vector<2x128xf32>
    %7 = tpu.matmul %5, %6, %cst_4 {dimension_numbers = #tpu.dot_dimension_numbers<[1], [0], [0], [1], [0, 0, 1, 1], [], []>} : vector<2x1152xbf16>, vector<1152x128xbf16>, vector<2x128xf32> -> vector<2x128xf32>
    %c0_5 = arith.constant 0 : index
    %c0_6 = arith.constant 0 : index
    %8 = vector.load %arg3[%c0_5, %c0_6] : memref<1x128xf32, #tpu.memory_space<vmem>>, vector<1x128xf32>
    %9 = vector.broadcast %8 : vector<1x128xf32> to vector<2x128xf32>
    %10 = arith.addf %7, %9 : vector<2x128xf32>
    %cst_7 = arith.constant 0.000000e+00 : f32
    %11 = vector.broadcast %cst_7 : f32 to vector<2x128xf32>
    %12 = arith.cmpf ogt, %10, %11 : vector<2x128xf32>
    %cst_8 = arith.constant 0.00999999977 : f32
    %13 = vector.broadcast %cst_8 : f32 to vector<2x128xf32>
    %14 = arith.mulf %10, %13 : vector<2x128xf32>
    %15 = arith.select %12, %10, %14 : vector<2x128xi1>, vector<2x128xf32>
    %16 = arith.truncf %15 : vector<2x128xf32> to vector<2x128xbf16>
    %c0_9 = arith.constant 0 : index
    %c0_10 = arith.constant 0 : index
    %17 = vector.load %arg4[%c0_9, %c0_10] : memref<128x128xbf16, #tpu.memory_space<vmem>>, vector<128x128xbf16>
    %cst_11 = arith.constant dense<0.000000e+00> : vector<2x128xf32>
    %18 = tpu.matmul %16, %17, %cst_11 {dimension_numbers = #tpu.dot_dimension_numbers<[1], [0], [0], [1], [0, 0, 1, 1], [], []>} : vector<2x128xbf16>, vector<128x128xbf16>, vector<2x128xf32> -> vector<2x128xf32>
    %c0_12 = arith.constant 0 : index
    %c0_13 = arith.constant 0 : index
    %19 = vector.load %arg1[%c0_12, %c0_13] : memref<2x128xbf16, #tpu.memory_space<vmem>>, vector<2x128xbf16>
    %c0_14 = arith.constant 0 : index
    %c0_15 = arith.constant 0 : index
    %20 = vector.load %arg5[%c0_14, %c0_15] : memref<128x128xbf16, #tpu.memory_space<vmem>>, vector<128x128xbf16>
    %cst_16 = arith.constant dense<0.000000e+00> : vector<2x128xf32>
    %21 = tpu.matmul %19, %20, %cst_16 {dimension_numbers = #tpu.dot_dimension_numbers<[1], [0], [0], [1], [0, 0, 1, 1], [], []>} : vector<2x128xbf16>, vector<128x128xbf16>, vector<2x128xf32> -> vector<2x128xf32>
    %22 = arith.addf %18, %21 : vector<2x128xf32>
    %c0_17 = arith.constant 0 : index
    %c0_18 = arith.constant 0 : index
    %23 = vector.load %arg6[%c0_17, %c0_18] : memref<1x128xf32, #tpu.memory_space<vmem>>, vector<1x128xf32>
    %24 = vector.broadcast %23 : vector<1x128xf32> to vector<2x128xf32>
    %25 = arith.addf %22, %24 : vector<2x128xf32>
    %26 = arith.truncf %25 : vector<2x128xf32> to vector<2x128xbf16>
    %c0_19 = arith.constant 0 : index
    %c0_20 = arith.constant 0 : index
    %27 = vector.load %arg7[%c0_19, %c0_20] : memref<2x128xbf16, #tpu.memory_space<vmem>>, vector<2x128xbf16>
    tpu.vector_store %arg7[%c0_19, %c0_20], %26 {strides = array<i32>} : memref<2x128xbf16, #tpu.memory_space<vmem>>, vector<2x128xbf16>,
    return
  }
}

module attributes {stable_mosaic.version = 11 : i64} {
  func.func @kernel(%arg0: memref<2x128xbf16, #tpu.memory_space<vmem>>, %arg1: memref<128x128xbf16, #tpu.memory_space<vmem>>, %arg2: memref<1x128xf32, #tpu.memory_space<vmem>>, %arg3: memref<128x128xbf16, #tpu.memory_space<vmem>>, %arg4: memref<128x128xbf16, #tpu.memory_space<vmem>>, %arg5: memref<1x128xf32, #tpu.memory_space<vmem>>, %arg6: memref<128x128xbf16, #tpu.memory_space<vmem>>, %arg7: memref<1x128xf32, #tpu.memory_space<vmem>>, %arg8: memref<128x128xbf16, #tpu.memory_space<vmem>>, %arg9: memref<128x128xbf16, #tpu.memory_space<vmem>>, %arg10: memref<1x128xf32, #tpu.memory_space<vmem>>, %arg11: memref<128x128xbf16, #tpu.memory_space<vmem>>, %arg12: memref<1x128xf32, #tpu.memory_space<vmem>>, %arg13: memref<128x256xbf16, #tpu.memory_space<vmem>>, %arg14: memref<128x256xbf16, #tpu.memory_space<vmem>>, %arg15: memref<1x256xf32, #tpu.memory_space<vmem>>, %arg16: memref<256x256xbf16, #tpu.memory_space<vmem>>, %arg17: memref<1x256xf32, #tpu.memory_space<vmem>>, %arg18: memref<256x256xbf16, #tpu.memory_space<vmem>>, %arg19: memref<256x256xbf16, #tpu.memory_space<vmem>>, %arg20: memref<1x256xf32, #tpu.memory_space<vmem>>, %arg21: memref<1x256xf32, #tpu.memory_space<vmem>>, %arg22: memref<1x1xf32, #tpu.memory_space<vmem>>, %arg23: memref<8x128xf32, #tpu.memory_space<vmem>>) attributes {dimension_semantics = [], scalar_prefetch = 0 : i64, scratch_operands = 0 : i64, tpu.core_type = #tpu.core_type<tc>} {
    %c0 = arith.constant 0 : index
    %c0_0 = arith.constant 0 : index
    %0 = vector.load %arg0[%c0, %c0_0] : memref<2x128xbf16, #tpu.memory_space<vmem>>, vector<2x128xbf16>
    %cst = arith.constant 0.000000e+00 : bf16
    %1 = vector.broadcast %cst : bf16 to vector<2x128xbf16>
    %2 = arith.cmpf ogt, %0, %1 : vector<2x128xbf16>
    %cst_1 = arith.constant 1.000980e-02 : bf16
    %3 = vector.broadcast %cst_1 : bf16 to vector<2x128xbf16>
    %4 = arith.mulf %0, %3 : vector<2x128xbf16>
    %5 = arith.select %2, %0, %4 : vector<2x128xi1>, vector<2x128xbf16>
    %c0_2 = arith.constant 0 : index
    %c0_3 = arith.constant 0 : index
    %6 = vector.load %arg1[%c0_2, %c0_3] : memref<128x128xbf16, #tpu.memory_space<vmem>>, vector<128x128xbf16>
    %cst_4 = arith.constant dense<0.000000e+00> : vector<2x128xf32>
    %7 = tpu.matmul %5, %6, %cst_4 {dimension_numbers = #tpu.dot_dimension_numbers<[1], [0], [0], [1], [0, 0, 1, 1], [], []>} : vector<2x128xbf16>, vector<128x128xbf16>, vector<2x128xf32> -> vector<2x128xf32>
    %c0_5 = arith.constant 0 : index
    %c0_6 = arith.constant 0 : index
    %8 = vector.load %arg2[%c0_5, %c0_6] : memref<1x128xf32, #tpu.memory_space<vmem>>, vector<1x128xf32>
    %9 = vector.broadcast %8 : vector<1x128xf32> to vector<2x128xf32>
    %10 = arith.addf %7, %9 : vector<2x128xf32>
    %cst_7 = arith.constant 0.000000e+00 : f32
    %11 = vector.broadcast %cst_7 : f32 to vector<2x128xf32>
    %12 = arith.cmpf ogt, %10, %11 : vector<2x128xf32>
    %cst_8 = arith.constant 0.00999999977 : f32
    %13 = vector.broadcast %cst_8 : f32 to vector<2x128xf32>
    %14 = arith.mulf %10, %13 : vector<2x128xf32>
    %15 = arith.select %12, %10, %14 : vector<2x128xi1>, vector<2x128xf32>
    %16 = arith.truncf %15 : vector<2x128xf32> to vector<2x128xbf16>
    %c0_9 = arith.constant 0 : index
    %c0_10 = arith.constant 0 : index
    %17 = vector.load %arg3[%c0_9, %c0_10] : memref<128x128xbf16, #tpu.memory_space<vmem>>, vector<128x128xbf16>
    %cst_11 = arith.constant dense<0.000000e+00> : vector<2x128xf32>
    %18 = tpu.matmul %16, %17, %cst_11 {dimension_numbers = #tpu.dot_dimension_numbers<[1], [0], [0], [1], [0, 0, 1, 1], [], []>} : vector<2x128xbf16>, vector<128x128xbf16>, vector<2x128xf32> -> vector<2x128xf32>
    %c0_12 = arith.constant 0 : index
    %c0_13 = arith.constant 0 : index
    %19 = vector.load %arg4[%c0_12, %c0_13] : memref<128x128xbf16, #tpu.memory_space<vmem>>, vector<128x128xbf16>
    %cst_14 = arith.constant dense<0.000000e+00> : vector<2x128xf32>
    %20 = tpu.matmul %0, %19, %cst_14 {dimension_numbers = #tpu.dot_dimension_numbers<[1], [0], [0], [1], [0, 0, 1, 1], [], []>} : vector<2x128xbf16>, vector<128x128xbf16>, vector<2x128xf32> -> vector<2x128xf32>
    %21 = arith.addf %18, %20 : vector<2x128xf32>
    %c0_15 = arith.constant 0 : index
    %c0_16 = arith.constant 0 : index
    %22 = vector.load %arg5[%c0_15, %c0_16] : memref<1x128xf32, #tpu.memory_space<vmem>>, vector<1x128xf32>
    %23 = vector.broadcast %22 : vector<1x128xf32> to vector<2x128xf32>
    %24 = arith.addf %21, %23 : vector<2x128xf32>
    %25 = arith.truncf %24 : vector<2x128xf32> to vector<2x128xbf16>
    %cst_17 = arith.constant 0.000000e+00 : bf16
    %26 = vector.broadcast %cst_17 : bf16 to vector<2x128xbf16>
    %27 = arith.cmpf ogt, %25, %26 : vector<2x128xbf16>
    %cst_18 = arith.constant 1.000980e-02 : bf16
    %28 = vector.broadcast %cst_18 : bf16 to vector<2x128xbf16>
    %29 = arith.mulf %25, %28 : vector<2x128xbf16>
    %30 = arith.select %27, %25, %29 : vector<2x128xi1>, vector<2x128xbf16>
    %c0_19 = arith.constant 0 : index
    %c0_20 = arith.constant 0 : index
    %31 = vector.load %arg6[%c0_19, %c0_20] : memref<128x128xbf16, #tpu.memory_space<vmem>>, vector<128x128xbf16>
    %cst_21 = arith.constant dense<0.000000e+00> : vector<2x128xf32>
    %32 = tpu.matmul %30, %31, %cst_21 {dimension_numbers = #tpu.dot_dimension_numbers<[1], [0], [0], [1], [0, 0, 1, 1], [], []>} : vector<2x128xbf16>, vector<128x128xbf16>, vector<2x128xf32> -> vector<2x128xf32>
    %c0_22 = arith.constant 0 : index
    %c0_23 = arith.constant 0 : index
    %33 = vector.load %arg7[%c0_22, %c0_23] : memref<1x128xf32, #tpu.memory_space<vmem>>, vector<1x128xf32>
    %34 = vector.broadcast %33 : vector<1x128xf32> to vector<2x128xf32>
    %35 = arith.addf %32, %34 : vector<2x128xf32>
    %cst_24 = arith.constant 0.000000e+00 : f32
    %36 = vector.broadcast %cst_24 : f32 to vector<2x128xf32>
    %37 = arith.cmpf ogt, %35, %36 : vector<2x128xf32>
    %cst_25 = arith.constant 0.00999999977 : f32
    %38 = vector.broadcast %cst_25 : f32 to vector<2x128xf32>
    %39 = arith.mulf %35, %38 : vector<2x128xf32>
    %40 = arith.select %37, %35, %39 : vector<2x128xi1>, vector<2x128xf32>
    %41 = arith.truncf %40 : vector<2x128xf32> to vector<2x128xbf16>
    %c0_26 = arith.constant 0 : index
    %c0_27 = arith.constant 0 : index
    %42 = vector.load %arg8[%c0_26, %c0_27] : memref<128x128xbf16, #tpu.memory_space<vmem>>, vector<128x128xbf16>
    %cst_28 = arith.constant dense<0.000000e+00> : vector<2x128xf32>
    %43 = tpu.matmul %41, %42, %cst_28 {dimension_numbers = #tpu.dot_dimension_numbers<[1], [0], [0], [1], [0, 0, 1, 1], [], []>} : vector<2x128xbf16>, vector<128x128xbf16>, vector<2x128xf32> -> vector<2x128xf32>
    %c0_29 = arith.constant 0 : index
    %c0_30 = arith.constant 0 : index
    %44 = vector.load %arg9[%c0_29, %c0_30] : memref<128x128xbf16, #tpu.memory_space<vmem>>, vector<128x128xbf16>
    %cst_31 = arith.constant dense<0.000000e+00> : vector<2x128xf32>
    %45 = tpu.matmul %25, %44, %cst_31 {dimension_numbers = #tpu.dot_dimension_numbers<[1], [0], [0], [1], [0, 0, 1, 1], [], []>} : vector<2x128xbf16>, vector<128x128xbf16>, vector<2x128xf32> -> vector<2x128xf32>
    %46 = arith.addf %43, %45 : vector<2x128xf32>
    %c0_32 = arith.constant 0 : index
    %c0_33 = arith.constant 0 : index
    %47 = vector.load %arg10[%c0_32, %c0_33] : memref<1x128xf32, #tpu.memory_space<vmem>>, vector<1x128xf32>
    %48 = vector.broadcast %47 : vector<1x128xf32> to vector<2x128xf32>
    %49 = arith.addf %46, %48 : vector<2x128xf32>
    %50 = arith.truncf %49 : vector<2x128xf32> to vector<2x128xbf16>
    %cst_34 = arith.constant 0.000000e+00 : bf16
    %51 = vector.broadcast %cst_34 : bf16 to vector<2x128xbf16>
    %52 = arith.cmpf ogt, %50, %51 : vector<2x128xbf16>
    %cst_35 = arith.constant 1.000980e-02 : bf16
    %53 = vector.broadcast %cst_35 : bf16 to vector<2x128xbf16>
    %54 = arith.mulf %50, %53 : vector<2x128xbf16>
    %55 = arith.select %52, %50, %54 : vector<2x128xi1>, vector<2x128xbf16>
    %c0_36 = arith.constant 0 : index
    %c0_37 = arith.constant 0 : index
    %56 = vector.load %arg11[%c0_36, %c0_37] : memref<128x128xbf16, #tpu.memory_space<vmem>>, vector<128x128xbf16>
    %cst_38 = arith.constant dense<0.000000e+00> : vector<2x128xf32>
    %57 = tpu.matmul %55, %56, %cst_38 {dimension_numbers = #tpu.dot_dimension_numbers<[1], [0], [0], [1], [0, 0, 1, 1], [], []>} : vector<2x128xbf16>, vector<128x128xbf16>, vector<2x128xf32> -> vector<2x128xf32>
    %c0_39 = arith.constant 0 : index
    %c0_40 = arith.constant 0 : index
    %58 = vector.load %arg12[%c0_39, %c0_40] : memref<1x128xf32, #tpu.memory_space<vmem>>, vector<1x128xf32>
    %59 = vector.broadcast %58 : vector<1x128xf32> to vector<2x128xf32>
    %60 = arith.addf %57, %59 : vector<2x128xf32>
    %cst_41 = arith.constant 0.000000e+00 : f32
    %61 = vector.broadcast %cst_41 : f32 to vector<2x128xf32>
    %62 = arith.cmpf ogt, %60, %61 : vector<2x128xf32>
    %cst_42 = arith.constant 0.00999999977 : f32
    %63 = vector.broadcast %cst_42 : f32 to vector<2x128xf32>
    %64 = arith.mulf %60, %63 : vector<2x128xf32>
    %65 = arith.select %62, %60, %64 : vector<2x128xi1>, vector<2x128xf32>
    %66 = arith.truncf %65 : vector<2x128xf32> to vector<2x128xbf16>
    %c0_43 = arith.constant 0 : index
    %c0_44 = arith.constant 0 : index
    %67 = vector.load %arg13[%c0_43, %c0_44] : memref<128x256xbf16, #tpu.memory_space<vmem>>, vector<128x256xbf16>
    %cst_45 = arith.constant dense<0.000000e+00> : vector<2x256xf32>
    %68 = tpu.matmul %66, %67, %cst_45 {dimension_numbers = #tpu.dot_dimension_numbers<[1], [0], [0], [1], [0, 0, 1, 1], [], []>} : vector<2x128xbf16>, vector<128x256xbf16>, vector<2x256xf32> -> vector<2x256xf32>
    %c0_46 = arith.constant 0 : index
    %c0_47 = arith.constant 0 : index
    %69 = vector.load %arg14[%c0_46, %c0_47] : memref<128x256xbf16, #tpu.memory_space<vmem>>, vector<128x256xbf16>
    %cst_48 = arith.constant dense<0.000000e+00> : vector<2x256xf32>
    %70 = tpu.matmul %50, %69, %cst_48 {dimension_numbers = #tpu.dot_dimension_numbers<[1], [0], [0], [1], [0, 0, 1, 1], [], []>} : vector<2x128xbf16>, vector<128x256xbf16>, vector<2x256xf32> -> vector<2x256xf32>
    %71 = arith.addf %68, %70 : vector<2x256xf32>
    %c0_49 = arith.constant 0 : index
    %c0_50 = arith.constant 0 : index
    %72 = vector.load %arg15[%c0_49, %c0_50] : memref<1x256xf32, #tpu.memory_space<vmem>>, vector<1x256xf32>
    %73 = vector.broadcast %72 : vector<1x256xf32> to vector<2x256xf32>
    %74 = arith.addf %71, %73 : vector<2x256xf32>
    %75 = arith.truncf %74 : vector<2x256xf32> to vector<2x256xbf16>
    %cst_51 = arith.constant 0.000000e+00 : bf16
    %76 = vector.broadcast %cst_51 : bf16 to vector<2x256xbf16>
    %77 = arith.cmpf ogt, %75, %76 : vector<2x256xbf16>
    %cst_52 = arith.constant 1.000980e-02 : bf16
    %78 = vector.broadcast %cst_52 : bf16 to vector<2x256xbf16>
    %79 = arith.mulf %75, %78 : vector<2x256xbf16>
    %80 = arith.select %77, %75, %79 : vector<2x256xi1>, vector<2x256xbf16>
    %c0_53 = arith.constant 0 : index
    %c0_54 = arith.constant 0 : index
    %81 = vector.load %arg16[%c0_53, %c0_54] : memref<256x256xbf16, #tpu.memory_space<vmem>>, vector<256x256xbf16>
    %cst_55 = arith.constant dense<0.000000e+00> : vector<2x256xf32>
    %82 = tpu.matmul %80, %81, %cst_55 {dimension_numbers = #tpu.dot_dimension_numbers<[1], [0], [0], [1], [0, 0, 1, 1], [], []>} : vector<2x256xbf16>, vector<256x256xbf16>, vector<2x256xf32> -> vector<2x256xf32>
    %c0_56 = arith.constant 0 : index
    %c0_57 = arith.constant 0 : index
    %83 = vector.load %arg17[%c0_56, %c0_57] : memref<1x256xf32, #tpu.memory_space<vmem>>, vector<1x256xf32>
    %84 = vector.broadcast %83 : vector<1x256xf32> to vector<2x256xf32>
    %85 = arith.addf %82, %84 : vector<2x256xf32>
    %cst_58 = arith.constant 0.000000e+00 : f32
    %86 = vector.broadcast %cst_58 : f32 to vector<2x256xf32>
    %87 = arith.cmpf ogt, %85, %86 : vector<2x256xf32>
    %cst_59 = arith.constant 0.00999999977 : f32
    %88 = vector.broadcast %cst_59 : f32 to vector<2x256xf32>
    %89 = arith.mulf %85, %88 : vector<2x256xf32>
    %90 = arith.select %87, %85, %89 : vector<2x256xi1>, vector<2x256xf32>
    %91 = arith.truncf %90 : vector<2x256xf32> to vector<2x256xbf16>
    %c0_60 = arith.constant 0 : index
    %c0_61 = arith.constant 0 : index
    %92 = vector.load %arg18[%c0_60, %c0_61] : memref<256x256xbf16, #tpu.memory_space<vmem>>, vector<256x256xbf16>
    %cst_62 = arith.constant dense<0.000000e+00> : vector<2x256xf32>
    %93 = tpu.matmul %91, %92, %cst_62 {dimension_numbers = #tpu.dot_dimension_numbers<[1], [0], [0], [1], [0, 0, 1, 1], [], []>} : vector<2x256xbf16>, vector<256x256xbf16>, vector<2x256xf32> -> vector<2x256xf32>
    %c0_63 = arith.constant 0 : index
    %c0_64 = arith.constant 0 : index
    %94 = vector.load %arg19[%c0_63, %c0_64] : memref<256x256xbf16, #tpu.memory_space<vmem>>, vector<256x256xbf16>
    %cst_65 = arith.constant dense<0.000000e+00> : vector<2x256xf32>
    %95 = tpu.matmul %75, %94, %cst_65 {dimension_numbers = #tpu.dot_dimension_numbers<[1], [0], [0], [1], [0, 0, 1, 1], [], []>} : vector<2x256xbf16>, vector<256x256xbf16>, vector<2x256xf32> -> vector<2x256xf32>
    %96 = arith.addf %93, %95 : vector<2x256xf32>
    %c0_66 = arith.constant 0 : index
    %c0_67 = arith.constant 0 : index
    %97 = vector.load %arg20[%c0_66, %c0_67] : memref<1x256xf32, #tpu.memory_space<vmem>>, vector<1x256xf32>
    %98 = vector.broadcast %97 : vector<1x256xf32> to vector<2x256xf32>
    %99 = arith.addf %96, %98 : vector<2x256xf32>
    %100 = arith.truncf %99 : vector<2x256xf32> to vector<2x256xbf16>
    %101 = arith.extf %100 : vector<2x256xbf16> to vector<2x256xf32>
    %c0_68 = arith.constant 0 : index
    %c0_69 = arith.constant 0 : index
    %102 = vector.load %arg21[%c0_68, %c0_69] : memref<1x256xf32, #tpu.memory_space<vmem>>, vector<1x256xf32>
    %103 = vector.broadcast %102 : vector<1x256xf32> to vector<2x256xf32>
    %104 = arith.mulf %101, %103 : vector<2x256xf32>
    %cst_70 = arith.constant dense<0.000000e+00> : vector<2xf32>
    %105 = vector.multi_reduction <add>, %104, %cst_70 [1] : vector<2x256xf32> to vector<2xf32>
    %106 = vector.shape_cast %105 : vector<2xf32> to vector<2x1xf32>
    %c0_71 = arith.constant 0 : index
    %c0_72 = arith.constant 0 : index
    %107 = vector.load %arg22[%c0_71, %c0_72] : memref<1x1xf32, #tpu.memory_space<vmem>>, vector<1x1xf32>
    %108 = vector.broadcast %107 : vector<1x1xf32> to vector<2x1xf32>
    %109 = arith.addf %106, %108 : vector<2x1xf32>
    %cst_73 = arith.constant 0.000000e+00 : f32
    %110 = vector.broadcast %cst_73 : f32 to vector<8x128xf32>
    %111 = vector.shape_cast %109 : vector<2x1xf32> to vector<1x2x1xf32>
    %cst_74 = arith.constant dense<0.000000e+00> : vector<1xf32>
    %112 = vector.multi_reduction <add>, %111, %cst_74 [1, 2] : vector<1x2x1xf32> to vector<1xf32>
    %113 = vector.shape_cast %112 : vector<1xf32> to vector<1x1x1xf32>
    %114 = vector.extract %113[0, 0, 0] : f32 from vector<1x1x1xf32>
    %115 = vector.broadcast %114 : f32 to vector<8x128xf32>
    %116 = arith.addf %110, %115 : vector<8x128xf32>
    %c0_75 = arith.constant 0 : index
    %c0_76 = arith.constant 0 : index
    %117 = vector.load %arg23[%c0_75, %c0_76] : memref<8x128xf32, #tpu.memory_space<vmem>>, vector<8x128xf32>
    tpu.vector_store %arg23[%c0_75, %c0_76], %116 {strides = array<i32>} : memref<8x128xf32, #tpu.memory_space<vmem>>, vector<8x128xf32>,
    return
  }
}

module attributes {stable_mosaic.version = 11 : i64} {
  func.func @_spatial_block_kernel(%arg0: memref<32x36xbf16, #tpu.memory_space<vmem>>, %arg1: memref<32x4xbf16, #tpu.memory_space<vmem>>, %arg2: memref<36x128xbf16, #tpu.memory_space<vmem>>, %arg3: memref<1x128xf32, #tpu.memory_space<vmem>>, %arg4: memref<128x128xbf16, #tpu.memory_space<vmem>>, %arg5: memref<4x128xbf16, #tpu.memory_space<vmem>>, %arg6: memref<1x128xf32, #tpu.memory_space<vmem>>, %arg7: memref<32x128xbf16, #tpu.memory_space<vmem>>) attributes {dimension_semantics = [], scalar_prefetch = 0 : i64, scratch_operands = 0 : i64, tpu.core_type = #tpu.core_type<tc>} {
    %c0 = arith.constant 0 : index
    %c0_0 = arith.constant 0 : index
    %0 = vector.load %arg0[%c0, %c0_0] : memref<32x36xbf16, #tpu.memory_space<vmem>>, vector<32x36xbf16>
    %cst = arith.constant 0.000000e+00 : bf16
    %1 = vector.broadcast %cst : bf16 to vector<32x36xbf16>
    %2 = arith.cmpf ogt, %0, %1 : vector<32x36xbf16>
    %cst_1 = arith.constant 1.000980e-02 : bf16
    %3 = vector.broadcast %cst_1 : bf16 to vector<32x36xbf16>
    %4 = arith.mulf %0, %3 : vector<32x36xbf16>
    %5 = arith.select %2, %0, %4 : vector<32x36xi1>, vector<32x36xbf16>
    %c0_2 = arith.constant 0 : index
    %c0_3 = arith.constant 0 : index
    %6 = vector.load %arg2[%c0_2, %c0_3] : memref<36x128xbf16, #tpu.memory_space<vmem>>, vector<36x128xbf16>
    %cst_4 = arith.constant dense<0.000000e+00> : vector<32x128xf32>
    %7 = tpu.matmul %5, %6, %cst_4 {dimension_numbers = #tpu.dot_dimension_numbers<[1], [0], [0], [1], [0, 0, 1, 1], [], []>} : vector<32x36xbf16>, vector<36x128xbf16>, vector<32x128xf32> -> vector<32x128xf32>
    %c0_5 = arith.constant 0 : index
    %c0_6 = arith.constant 0 : index
    %8 = vector.load %arg3[%c0_5, %c0_6] : memref<1x128xf32, #tpu.memory_space<vmem>>, vector<1x128xf32>
    %9 = vector.broadcast %8 : vector<1x128xf32> to vector<32x128xf32>
    %10 = arith.addf %7, %9 : vector<32x128xf32>
    %cst_7 = arith.constant 0.000000e+00 : f32
    %11 = vector.broadcast %cst_7 : f32 to vector<32x128xf32>
    %12 = arith.cmpf ogt, %10, %11 : vector<32x128xf32>
    %cst_8 = arith.constant 0.00999999977 : f32
    %13 = vector.broadcast %cst_8 : f32 to vector<32x128xf32>
    %14 = arith.mulf %10, %13 : vector<32x128xf32>
    %15 = arith.select %12, %10, %14 : vector<32x128xi1>, vector<32x128xf32>
    %16 = arith.truncf %15 : vector<32x128xf32> to vector<32x128xbf16>
    %c0_9 = arith.constant 0 : index
    %c0_10 = arith.constant 0 : index
    %17 = vector.load %arg4[%c0_9, %c0_10] : memref<128x128xbf16, #tpu.memory_space<vmem>>, vector<128x128xbf16>
    %cst_11 = arith.constant dense<0.000000e+00> : vector<32x128xf32>
    %18 = tpu.matmul %16, %17, %cst_11 {dimension_numbers = #tpu.dot_dimension_numbers<[1], [0], [0], [1], [0, 0, 1, 1], [], []>} : vector<32x128xbf16>, vector<128x128xbf16>, vector<32x128xf32> -> vector<32x128xf32>
    %c0_12 = arith.constant 0 : index
    %c0_13 = arith.constant 0 : index
    %19 = vector.load %arg1[%c0_12, %c0_13] : memref<32x4xbf16, #tpu.memory_space<vmem>>, vector<32x4xbf16>
    %c0_14 = arith.constant 0 : index
    %c0_15 = arith.constant 0 : index
    %20 = vector.load %arg5[%c0_14, %c0_15] : memref<4x128xbf16, #tpu.memory_space<vmem>>, vector<4x128xbf16>
    %cst_16 = arith.constant dense<0.000000e+00> : vector<32x128xf32>
    %21 = tpu.matmul %19, %20, %cst_16 {dimension_numbers = #tpu.dot_dimension_numbers<[1], [0], [0], [1], [0, 0, 1, 1], [], []>} : vector<32x4xbf16>, vector<4x128xbf16>, vector<32x128xf32> -> vector<32x128xf32>
    %22 = arith.addf %18, %21 : vector<32x128xf32>
    %c0_17 = arith.constant 0 : index
    %c0_18 = arith.constant 0 : index
    %23 = vector.load %arg6[%c0_17, %c0_18] : memref<1x128xf32, #tpu.memory_space<vmem>>, vector<1x128xf32>
    %24 = vector.broadcast %23 : vector<1x128xf32> to vector<32x128xf32>
    %25 = arith.addf %22, %24 : vector<32x128xf32>
    %26 = arith.truncf %25 : vector<32x128xf32> to vector<32x128xbf16>
    %c0_19 = arith.constant 0 : index
    %c0_20 = arith.constant 0 : index
    %27 = vector.load %arg7[%c0_19, %c0_20] : memref<32x128xbf16, #tpu.memory_space<vmem>>, vector<32x128xbf16>
    tpu.vector_store %arg7[%c0_19, %c0_20], %26 {strides = array<i32>} : memref<32x128xbf16, #tpu.memory_space<vmem>>, vector<32x128xbf16>,
    return
  }
}

module attributes {stable_mosaic.version = 11 : i64} {
  func.func @_spatial_block_kernel(%arg0: memref<8x1152xbf16, #tpu.memory_space<vmem>>, %arg1: memref<8x128xbf16, #tpu.memory_space<vmem>>, %arg2: memref<1152x128xbf16, #tpu.memory_space<vmem>>, %arg3: memref<1x128xf32, #tpu.memory_space<vmem>>, %arg4: memref<128x128xbf16, #tpu.memory_space<vmem>>, %arg5: memref<128x128xbf16, #tpu.memory_space<vmem>>, %arg6: memref<1x128xf32, #tpu.memory_space<vmem>>, %arg7: memref<8x128xbf16, #tpu.memory_space<vmem>>) attributes {dimension_semantics = [], scalar_prefetch = 0 : i64, scratch_operands = 0 : i64, tpu.core_type = #tpu.core_type<tc>} {
    %c0 = arith.constant 0 : index
    %c0_0 = arith.constant 0 : index
    %0 = vector.load %arg0[%c0, %c0_0] : memref<8x1152xbf16, #tpu.memory_space<vmem>>, vector<8x1152xbf16>
    %cst = arith.constant 0.000000e+00 : bf16
    %1 = vector.broadcast %cst : bf16 to vector<8x1152xbf16>
    %2 = arith.cmpf ogt, %0, %1 : vector<8x1152xbf16>
    %cst_1 = arith.constant 1.000980e-02 : bf16
    %3 = vector.broadcast %cst_1 : bf16 to vector<8x1152xbf16>
    %4 = arith.mulf %0, %3 : vector<8x1152xbf16>
    %5 = arith.select %2, %0, %4 : vector<8x1152xi1>, vector<8x1152xbf16>
    %c0_2 = arith.constant 0 : index
    %c0_3 = arith.constant 0 : index
    %6 = vector.load %arg2[%c0_2, %c0_3] : memref<1152x128xbf16, #tpu.memory_space<vmem>>, vector<1152x128xbf16>
    %cst_4 = arith.constant dense<0.000000e+00> : vector<8x128xf32>
    %7 = tpu.matmul %5, %6, %cst_4 {dimension_numbers = #tpu.dot_dimension_numbers<[1], [0], [0], [1], [0, 0, 1, 1], [], []>} : vector<8x1152xbf16>, vector<1152x128xbf16>, vector<8x128xf32> -> vector<8x128xf32>
    %c0_5 = arith.constant 0 : index
    %c0_6 = arith.constant 0 : index
    %8 = vector.load %arg3[%c0_5, %c0_6] : memref<1x128xf32, #tpu.memory_space<vmem>>, vector<1x128xf32>
    %9 = vector.broadcast %8 : vector<1x128xf32> to vector<8x128xf32>
    %10 = arith.addf %7, %9 : vector<8x128xf32>
    %cst_7 = arith.constant 0.000000e+00 : f32
    %11 = vector.broadcast %cst_7 : f32 to vector<8x128xf32>
    %12 = arith.cmpf ogt, %10, %11 : vector<8x128xf32>
    %cst_8 = arith.constant 0.00999999977 : f32
    %13 = vector.broadcast %cst_8 : f32 to vector<8x128xf32>
    %14 = arith.mulf %10, %13 : vector<8x128xf32>
    %15 = arith.select %12, %10, %14 : vector<8x128xi1>, vector<8x128xf32>
    %16 = arith.truncf %15 : vector<8x128xf32> to vector<8x128xbf16>
    %c0_9 = arith.constant 0 : index
    %c0_10 = arith.constant 0 : index
    %17 = vector.load %arg4[%c0_9, %c0_10] : memref<128x128xbf16, #tpu.memory_space<vmem>>, vector<128x128xbf16>
    %cst_11 = arith.constant dense<0.000000e+00> : vector<8x128xf32>
    %18 = tpu.matmul %16, %17, %cst_11 {dimension_numbers = #tpu.dot_dimension_numbers<[1], [0], [0], [1], [0, 0, 1, 1], [], []>} : vector<8x128xbf16>, vector<128x128xbf16>, vector<8x128xf32> -> vector<8x128xf32>
    %c0_12 = arith.constant 0 : index
    %c0_13 = arith.constant 0 : index
    %19 = vector.load %arg1[%c0_12, %c0_13] : memref<8x128xbf16, #tpu.memory_space<vmem>>, vector<8x128xbf16>
    %c0_14 = arith.constant 0 : index
    %c0_15 = arith.constant 0 : index
    %20 = vector.load %arg5[%c0_14, %c0_15] : memref<128x128xbf16, #tpu.memory_space<vmem>>, vector<128x128xbf16>
    %cst_16 = arith.constant dense<0.000000e+00> : vector<8x128xf32>
    %21 = tpu.matmul %19, %20, %cst_16 {dimension_numbers = #tpu.dot_dimension_numbers<[1], [0], [0], [1], [0, 0, 1, 1], [], []>} : vector<8x128xbf16>, vector<128x128xbf16>, vector<8x128xf32> -> vector<8x128xf32>
    %22 = arith.addf %18, %21 : vector<8x128xf32>
    %c0_17 = arith.constant 0 : index
    %c0_18 = arith.constant 0 : index
    %23 = vector.load %arg6[%c0_17, %c0_18] : memref<1x128xf32, #tpu.memory_space<vmem>>, vector<1x128xf32>
    %24 = vector.broadcast %23 : vector<1x128xf32> to vector<8x128xf32>
    %25 = arith.addf %22, %24 : vector<8x128xf32>
    %26 = arith.truncf %25 : vector<8x128xf32> to vector<8x128xbf16>
    %c0_19 = arith.constant 0 : index
    %c0_20 = arith.constant 0 : index
    %27 = vector.load %arg7[%c0_19, %c0_20] : memref<8x128xbf16, #tpu.memory_space<vmem>>, vector<8x128xbf16>
    tpu.vector_store %arg7[%c0_19, %c0_20], %26 {strides = array<i32>} : memref<8x128xbf16, #tpu.memory_space<vmem>>, vector<8x128xbf16>,
    return
  }
}

module attributes {stable_mosaic.version = 11 : i64} {
  func.func @kernel(%arg0: memref<2x128xbf16, #tpu.memory_space<vmem>>, %arg1: memref<128x128xbf16, #tpu.memory_space<vmem>>, %arg2: memref<1x128xf32, #tpu.memory_space<vmem>>, %arg3: memref<128x128xbf16, #tpu.memory_space<vmem>>, %arg4: memref<128x128xbf16, #tpu.memory_space<vmem>>, %arg5: memref<1x128xf32, #tpu.memory_space<vmem>>, %arg6: memref<128x128xbf16, #tpu.memory_space<vmem>>, %arg7: memref<1x128xf32, #tpu.memory_space<vmem>>, %arg8: memref<128x128xbf16, #tpu.memory_space<vmem>>, %arg9: memref<128x128xbf16, #tpu.memory_space<vmem>>, %arg10: memref<1x128xf32, #tpu.memory_space<vmem>>, %arg11: memref<128x128xbf16, #tpu.memory_space<vmem>>, %arg12: memref<1x128xf32, #tpu.memory_space<vmem>>, %arg13: memref<128x256xbf16, #tpu.memory_space<vmem>>, %arg14: memref<128x256xbf16, #tpu.memory_space<vmem>>, %arg15: memref<1x256xf32, #tpu.memory_space<vmem>>, %arg16: memref<256x256xbf16, #tpu.memory_space<vmem>>, %arg17: memref<1x256xf32, #tpu.memory_space<vmem>>, %arg18: memref<256x256xbf16, #tpu.memory_space<vmem>>, %arg19: memref<256x256xbf16, #tpu.memory_space<vmem>>, %arg20: memref<1x256xf32, #tpu.memory_space<vmem>>, %arg21: memref<1x256xf32, #tpu.memory_space<vmem>>, %arg22: memref<1x1xf32, #tpu.memory_space<vmem>>, %arg23: memref<8x128xf32, #tpu.memory_space<vmem>>) attributes {dimension_semantics = [], scalar_prefetch = 0 : i64, scratch_operands = 0 : i64, tpu.core_type = #tpu.core_type<tc>} {
    %c0 = arith.constant 0 : index
    %c0_0 = arith.constant 0 : index
    %0 = vector.load %arg0[%c0, %c0_0] : memref<2x128xbf16, #tpu.memory_space<vmem>>, vector<2x128xbf16>
    %cst = arith.constant 0.000000e+00 : bf16
    %1 = vector.broadcast %cst : bf16 to vector<2x128xbf16>
    %2 = arith.cmpf ogt, %0, %1 : vector<2x128xbf16>
    %cst_1 = arith.constant 1.000980e-02 : bf16
    %3 = vector.broadcast %cst_1 : bf16 to vector<2x128xbf16>
    %4 = arith.mulf %0, %3 : vector<2x128xbf16>
    %5 = arith.select %2, %0, %4 : vector<2x128xi1>, vector<2x128xbf16>
    %c0_2 = arith.constant 0 : index
    %c0_3 = arith.constant 0 : index
    %6 = vector.load %arg1[%c0_2, %c0_3] : memref<128x128xbf16, #tpu.memory_space<vmem>>, vector<128x128xbf16>
    %cst_4 = arith.constant dense<0.000000e+00> : vector<2x128xf32>
    %7 = tpu.matmul %5, %6, %cst_4 {dimension_numbers = #tpu.dot_dimension_numbers<[1], [0], [0], [1], [0, 0, 1, 1], [], []>} : vector<2x128xbf16>, vector<128x128xbf16>, vector<2x128xf32> -> vector<2x128xf32>
    %c0_5 = arith.constant 0 : index
    %c0_6 = arith.constant 0 : index
    %8 = vector.load %arg2[%c0_5, %c0_6] : memref<1x128xf32, #tpu.memory_space<vmem>>, vector<1x128xf32>
    %9 = vector.broadcast %8 : vector<1x128xf32> to vector<2x128xf32>
    %10 = arith.addf %7, %9 : vector<2x128xf32>
    %cst_7 = arith.constant 0.000000e+00 : f32
    %11 = vector.broadcast %cst_7 : f32 to vector<2x128xf32>
    %12 = arith.cmpf ogt, %10, %11 : vector<2x128xf32>
    %cst_8 = arith.constant 0.00999999977 : f32
    %13 = vector.broadcast %cst_8 : f32 to vector<2x128xf32>
    %14 = arith.mulf %10, %13 : vector<2x128xf32>
    %15 = arith.select %12, %10, %14 : vector<2x128xi1>, vector<2x128xf32>
    %16 = arith.truncf %15 : vector<2x128xf32> to vector<2x128xbf16>
    %c0_9 = arith.constant 0 : index
    %c0_10 = arith.constant 0 : index
    %17 = vector.load %arg3[%c0_9, %c0_10] : memref<128x128xbf16, #tpu.memory_space<vmem>>, vector<128x128xbf16>
    %cst_11 = arith.constant dense<0.000000e+00> : vector<2x128xf32>
    %18 = tpu.matmul %16, %17, %cst_11 {dimension_numbers = #tpu.dot_dimension_numbers<[1], [0], [0], [1], [0, 0, 1, 1], [], []>} : vector<2x128xbf16>, vector<128x128xbf16>, vector<2x128xf32> -> vector<2x128xf32>
    %c0_12 = arith.constant 0 : index
    %c0_13 = arith.constant 0 : index
    %19 = vector.load %arg4[%c0_12, %c0_13] : memref<128x128xbf16, #tpu.memory_space<vmem>>, vector<128x128xbf16>
    %cst_14 = arith.constant dense<0.000000e+00> : vector<2x128xf32>
    %20 = tpu.matmul %0, %19, %cst_14 {dimension_numbers = #tpu.dot_dimension_numbers<[1], [0], [0], [1], [0, 0, 1, 1], [], []>} : vector<2x128xbf16>, vector<128x128xbf16>, vector<2x128xf32> -> vector<2x128xf32>
    %21 = arith.addf %18, %20 : vector<2x128xf32>
    %c0_15 = arith.constant 0 : index
    %c0_16 = arith.constant 0 : index
    %22 = vector.load %arg5[%c0_15, %c0_16] : memref<1x128xf32, #tpu.memory_space<vmem>>, vector<1x128xf32>
    %23 = vector.broadcast %22 : vector<1x128xf32> to vector<2x128xf32>
    %24 = arith.addf %21, %23 : vector<2x128xf32>
    %25 = arith.truncf %24 : vector<2x128xf32> to vector<2x128xbf16>
    %cst_17 = arith.constant 0.000000e+00 : bf16
    %26 = vector.broadcast %cst_17 : bf16 to vector<2x128xbf16>
    %27 = arith.cmpf ogt, %25, %26 : vector<2x128xbf16>
    %cst_18 = arith.constant 1.000980e-02 : bf16
    %28 = vector.broadcast %cst_18 : bf16 to vector<2x128xbf16>
    %29 = arith.mulf %25, %28 : vector<2x128xbf16>
    %30 = arith.select %27, %25, %29 : vector<2x128xi1>, vector<2x128xbf16>
    %c0_19 = arith.constant 0 : index
    %c0_20 = arith.constant 0 : index
    %31 = vector.load %arg6[%c0_19, %c0_20] : memref<128x128xbf16, #tpu.memory_space<vmem>>, vector<128x128xbf16>
    %cst_21 = arith.constant dense<0.000000e+00> : vector<2x128xf32>
    %32 = tpu.matmul %30, %31, %cst_21 {dimension_numbers = #tpu.dot_dimension_numbers<[1], [0], [0], [1], [0, 0, 1, 1], [], []>} : vector<2x128xbf16>, vector<128x128xbf16>, vector<2x128xf32> -> vector<2x128xf32>
    %c0_22 = arith.constant 0 : index
    %c0_23 = arith.constant 0 : index
    %33 = vector.load %arg7[%c0_22, %c0_23] : memref<1x128xf32, #tpu.memory_space<vmem>>, vector<1x128xf32>
    %34 = vector.broadcast %33 : vector<1x128xf32> to vector<2x128xf32>
    %35 = arith.addf %32, %34 : vector<2x128xf32>
    %cst_24 = arith.constant 0.000000e+00 : f32
    %36 = vector.broadcast %cst_24 : f32 to vector<2x128xf32>
    %37 = arith.cmpf ogt, %35, %36 : vector<2x128xf32>
    %cst_25 = arith.constant 0.00999999977 : f32
    %38 = vector.broadcast %cst_25 : f32 to vector<2x128xf32>
    %39 = arith.mulf %35, %38 : vector<2x128xf32>
    %40 = arith.select %37, %35, %39 : vector<2x128xi1>, vector<2x128xf32>
    %41 = arith.truncf %40 : vector<2x128xf32> to vector<2x128xbf16>
    %c0_26 = arith.constant 0 : index
    %c0_27 = arith.constant 0 : index
    %42 = vector.load %arg8[%c0_26, %c0_27] : memref<128x128xbf16, #tpu.memory_space<vmem>>, vector<128x128xbf16>
    %cst_28 = arith.constant dense<0.000000e+00> : vector<2x128xf32>
    %43 = tpu.matmul %41, %42, %cst_28 {dimension_numbers = #tpu.dot_dimension_numbers<[1], [0], [0], [1], [0, 0, 1, 1], [], []>} : vector<2x128xbf16>, vector<128x128xbf16>, vector<2x128xf32> -> vector<2x128xf32>
    %c0_29 = arith.constant 0 : index
    %c0_30 = arith.constant 0 : index
    %44 = vector.load %arg9[%c0_29, %c0_30] : memref<128x128xbf16, #tpu.memory_space<vmem>>, vector<128x128xbf16>
    %cst_31 = arith.constant dense<0.000000e+00> : vector<2x128xf32>
    %45 = tpu.matmul %25, %44, %cst_31 {dimension_numbers = #tpu.dot_dimension_numbers<[1], [0], [0], [1], [0, 0, 1, 1], [], []>} : vector<2x128xbf16>, vector<128x128xbf16>, vector<2x128xf32> -> vector<2x128xf32>
    %46 = arith.addf %43, %45 : vector<2x128xf32>
    %c0_32 = arith.constant 0 : index
    %c0_33 = arith.constant 0 : index
    %47 = vector.load %arg10[%c0_32, %c0_33] : memref<1x128xf32, #tpu.memory_space<vmem>>, vector<1x128xf32>
    %48 = vector.broadcast %47 : vector<1x128xf32> to vector<2x128xf32>
    %49 = arith.addf %46, %48 : vector<2x128xf32>
    %50 = arith.truncf %49 : vector<2x128xf32> to vector<2x128xbf16>
    %cst_34 = arith.constant 0.000000e+00 : bf16
    %51 = vector.broadcast %cst_34 : bf16 to vector<2x128xbf16>
    %52 = arith.cmpf ogt, %50, %51 : vector<2x128xbf16>
    %cst_35 = arith.constant 1.000980e-02 : bf16
    %53 = vector.broadcast %cst_35 : bf16 to vector<2x128xbf16>
    %54 = arith.mulf %50, %53 : vector<2x128xbf16>
    %55 = arith.select %52, %50, %54 : vector<2x128xi1>, vector<2x128xbf16>
    %c0_36 = arith.constant 0 : index
    %c0_37 = arith.constant 0 : index
    %56 = vector.load %arg11[%c0_36, %c0_37] : memref<128x128xbf16, #tpu.memory_space<vmem>>, vector<128x128xbf16>
    %cst_38 = arith.constant dense<0.000000e+00> : vector<2x128xf32>
    %57 = tpu.matmul %55, %56, %cst_38 {dimension_numbers = #tpu.dot_dimension_numbers<[1], [0], [0], [1], [0, 0, 1, 1], [], []>} : vector<2x128xbf16>, vector<128x128xbf16>, vector<2x128xf32> -> vector<2x128xf32>
    %c0_39 = arith.constant 0 : index
    %c0_40 = arith.constant 0 : index
    %58 = vector.load %arg12[%c0_39, %c0_40] : memref<1x128xf32, #tpu.memory_space<vmem>>, vector<1x128xf32>
    %59 = vector.broadcast %58 : vector<1x128xf32> to vector<2x128xf32>
    %60 = arith.addf %57, %59 : vector<2x128xf32>
    %cst_41 = arith.constant 0.000000e+00 : f32
    %61 = vector.broadcast %cst_41 : f32 to vector<2x128xf32>
    %62 = arith.cmpf ogt, %60, %61 : vector<2x128xf32>
    %cst_42 = arith.constant 0.00999999977 : f32
    %63 = vector.broadcast %cst_42 : f32 to vector<2x128xf32>
    %64 = arith.mulf %60, %63 : vector<2x128xf32>
    %65 = arith.select %62, %60, %64 : vector<2x128xi1>, vector<2x128xf32>
    %66 = arith.truncf %65 : vector<2x128xf32> to vector<2x128xbf16>
    %c0_43 = arith.constant 0 : index
    %c0_44 = arith.constant 0 : index
    %67 = vector.load %arg13[%c0_43, %c0_44] : memref<128x256xbf16, #tpu.memory_space<vmem>>, vector<128x256xbf16>
    %cst_45 = arith.constant dense<0.000000e+00> : vector<2x256xf32>
    %68 = tpu.matmul %66, %67, %cst_45 {dimension_numbers = #tpu.dot_dimension_numbers<[1], [0], [0], [1], [0, 0, 1, 1], [], []>} : vector<2x128xbf16>, vector<128x256xbf16>, vector<2x256xf32> -> vector<2x256xf32>
    %c0_46 = arith.constant 0 : index
    %c0_47 = arith.constant 0 : index
    %69 = vector.load %arg14[%c0_46, %c0_47] : memref<128x256xbf16, #tpu.memory_space<vmem>>, vector<128x256xbf16>
    %cst_48 = arith.constant dense<0.000000e+00> : vector<2x256xf32>
    %70 = tpu.matmul %50, %69, %cst_48 {dimension_numbers = #tpu.dot_dimension_numbers<[1], [0], [0], [1], [0, 0, 1, 1], [], []>} : vector<2x128xbf16>, vector<128x256xbf16>, vector<2x256xf32> -> vector<2x256xf32>
    %71 = arith.addf %68, %70 : vector<2x256xf32>
    %c0_49 = arith.constant 0 : index
    %c0_50 = arith.constant 0 : index
    %72 = vector.load %arg15[%c0_49, %c0_50] : memref<1x256xf32, #tpu.memory_space<vmem>>, vector<1x256xf32>
    %73 = vector.broadcast %72 : vector<1x256xf32> to vector<2x256xf32>
    %74 = arith.addf %71, %73 : vector<2x256xf32>
    %75 = arith.truncf %74 : vector<2x256xf32> to vector<2x256xbf16>
    %cst_51 = arith.constant 0.000000e+00 : bf16
    %76 = vector.broadcast %cst_51 : bf16 to vector<2x256xbf16>
    %77 = arith.cmpf ogt, %75, %76 : vector<2x256xbf16>
    %cst_52 = arith.constant 1.000980e-02 : bf16
    %78 = vector.broadcast %cst_52 : bf16 to vector<2x256xbf16>
    %79 = arith.mulf %75, %78 : vector<2x256xbf16>
    %80 = arith.select %77, %75, %79 : vector<2x256xi1>, vector<2x256xbf16>
    %c0_53 = arith.constant 0 : index
    %c0_54 = arith.constant 0 : index
    %81 = vector.load %arg16[%c0_53, %c0_54] : memref<256x256xbf16, #tpu.memory_space<vmem>>, vector<256x256xbf16>
    %cst_55 = arith.constant dense<0.000000e+00> : vector<2x256xf32>
    %82 = tpu.matmul %80, %81, %cst_55 {dimension_numbers = #tpu.dot_dimension_numbers<[1], [0], [0], [1], [0, 0, 1, 1], [], []>} : vector<2x256xbf16>, vector<256x256xbf16>, vector<2x256xf32> -> vector<2x256xf32>
    %c0_56 = arith.constant 0 : index
    %c0_57 = arith.constant 0 : index
    %83 = vector.load %arg17[%c0_56, %c0_57] : memref<1x256xf32, #tpu.memory_space<vmem>>, vector<1x256xf32>
    %84 = vector.broadcast %83 : vector<1x256xf32> to vector<2x256xf32>
    %85 = arith.addf %82, %84 : vector<2x256xf32>
    %cst_58 = arith.constant 0.000000e+00 : f32
    %86 = vector.broadcast %cst_58 : f32 to vector<2x256xf32>
    %87 = arith.cmpf ogt, %85, %86 : vector<2x256xf32>
    %cst_59 = arith.constant 0.00999999977 : f32
    %88 = vector.broadcast %cst_59 : f32 to vector<2x256xf32>
    %89 = arith.mulf %85, %88 : vector<2x256xf32>
    %90 = arith.select %87, %85, %89 : vector<2x256xi1>, vector<2x256xf32>
    %91 = arith.truncf %90 : vector<2x256xf32> to vector<2x256xbf16>
    %c0_60 = arith.constant 0 : index
    %c0_61 = arith.constant 0 : index
    %92 = vector.load %arg18[%c0_60, %c0_61] : memref<256x256xbf16, #tpu.memory_space<vmem>>, vector<256x256xbf16>
    %cst_62 = arith.constant dense<0.000000e+00> : vector<2x256xf32>
    %93 = tpu.matmul %91, %92, %cst_62 {dimension_numbers = #tpu.dot_dimension_numbers<[1], [0], [0], [1], [0, 0, 1, 1], [], []>} : vector<2x256xbf16>, vector<256x256xbf16>, vector<2x256xf32> -> vector<2x256xf32>
    %c0_63 = arith.constant 0 : index
    %c0_64 = arith.constant 0 : index
    %94 = vector.load %arg19[%c0_63, %c0_64] : memref<256x256xbf16, #tpu.memory_space<vmem>>, vector<256x256xbf16>
    %cst_65 = arith.constant dense<0.000000e+00> : vector<2x256xf32>
    %95 = tpu.matmul %75, %94, %cst_65 {dimension_numbers = #tpu.dot_dimension_numbers<[1], [0], [0], [1], [0, 0, 1, 1], [], []>} : vector<2x256xbf16>, vector<256x256xbf16>, vector<2x256xf32> -> vector<2x256xf32>
    %96 = arith.addf %93, %95 : vector<2x256xf32>
    %c0_66 = arith.constant 0 : index
    %c0_67 = arith.constant 0 : index
    %97 = vector.load %arg20[%c0_66, %c0_67] : memref<1x256xf32, #tpu.memory_space<vmem>>, vector<1x256xf32>
    %98 = vector.broadcast %97 : vector<1x256xf32> to vector<2x256xf32>
    %99 = arith.addf %96, %98 : vector<2x256xf32>
    %100 = arith.truncf %99 : vector<2x256xf32> to vector<2x256xbf16>
    %101 = arith.extf %100 : vector<2x256xbf16> to vector<2x256xf32>
    %c0_68 = arith.constant 0 : index
    %c0_69 = arith.constant 0 : index
    %102 = vector.load %arg21[%c0_68, %c0_69] : memref<1x256xf32, #tpu.memory_space<vmem>>, vector<1x256xf32>
    %103 = vector.broadcast %102 : vector<1x256xf32> to vector<2x256xf32>
    %104 = arith.mulf %101, %103 : vector<2x256xf32>
    %cst_70 = arith.constant dense<0.000000e+00> : vector<2xf32>
    %105 = vector.multi_reduction <add>, %104, %cst_70 [1] : vector<2x256xf32> to vector<2xf32>
    %106 = vector.shape_cast %105 : vector<2xf32> to vector<2x1xf32>
    %c0_71 = arith.constant 0 : index
    %c0_72 = arith.constant 0 : index
    %107 = vector.load %arg22[%c0_71, %c0_72] : memref<1x1xf32, #tpu.memory_space<vmem>>, vector<1x1xf32>
    %108 = vector.broadcast %107 : vector<1x1xf32> to vector<2x1xf32>
    %109 = arith.addf %106, %108 : vector<2x1xf32>
    %cst_73 = arith.constant 0.000000e+00 : f32
    %110 = vector.broadcast %cst_73 : f32 to vector<8x128xf32>
    %111 = vector.shape_cast %109 : vector<2x1xf32> to vector<1x2x1xf32>
    %cst_74 = arith.constant dense<0.000000e+00> : vector<1xf32>
    %112 = vector.multi_reduction <add>, %111, %cst_74 [1, 2] : vector<1x2x1xf32> to vector<1xf32>
    %113 = vector.shape_cast %112 : vector<1xf32> to vector<1x1x1xf32>
    %114 = vector.extract %113[0, 0, 0] : f32 from vector<1x1x1xf32>
    %115 = vector.broadcast %114 : f32 to vector<8x128xf32>
    %116 = arith.addf %110, %115 : vector<8x128xf32>
    %c0_75 = arith.constant 0 : index
    %c0_76 = arith.constant 0 : index
    %117 = vector.load %arg23[%c0_75, %c0_76] : memref<8x128xf32, #tpu.memory_space<vmem>>, vector<8x128xf32>
    tpu.vector_store %arg23[%c0_75, %c0_76], %116 {strides = array<i32>} : memref<8x128xf32, #tpu.memory_space<vmem>>, vector<8x128xf32>,
    return
  }
}

module attributes {stable_mosaic.version = 11 : i64} {
  func.func @_spatial_block_kernel(%arg0: memref<128x36xbf16, #tpu.memory_space<vmem>>, %arg1: memref<128x4xbf16, #tpu.memory_space<vmem>>, %arg2: memref<36x128xbf16, #tpu.memory_space<vmem>>, %arg3: memref<1x128xf32, #tpu.memory_space<vmem>>, %arg4: memref<128x128xbf16, #tpu.memory_space<vmem>>, %arg5: memref<4x128xbf16, #tpu.memory_space<vmem>>, %arg6: memref<1x128xf32, #tpu.memory_space<vmem>>, %arg7: memref<128x128xbf16, #tpu.memory_space<vmem>>) attributes {dimension_semantics = [], scalar_prefetch = 0 : i64, scratch_operands = 0 : i64, tpu.core_type = #tpu.core_type<tc>} {
    %c0 = arith.constant 0 : index
    %c0_0 = arith.constant 0 : index
    %0 = vector.load %arg0[%c0, %c0_0] : memref<128x36xbf16, #tpu.memory_space<vmem>>, vector<128x36xbf16>
    %cst = arith.constant 0.000000e+00 : bf16
    %1 = vector.broadcast %cst : bf16 to vector<128x36xbf16>
    %2 = arith.cmpf ogt, %0, %1 : vector<128x36xbf16>
    %cst_1 = arith.constant 1.000980e-02 : bf16
    %3 = vector.broadcast %cst_1 : bf16 to vector<128x36xbf16>
    %4 = arith.mulf %0, %3 : vector<128x36xbf16>
    %5 = arith.select %2, %0, %4 : vector<128x36xi1>, vector<128x36xbf16>
    %c0_2 = arith.constant 0 : index
    %c0_3 = arith.constant 0 : index
    %6 = vector.load %arg2[%c0_2, %c0_3] : memref<36x128xbf16, #tpu.memory_space<vmem>>, vector<36x128xbf16>
    %cst_4 = arith.constant dense<0.000000e+00> : vector<128x128xf32>
    %7 = tpu.matmul %5, %6, %cst_4 {dimension_numbers = #tpu.dot_dimension_numbers<[1], [0], [0], [1], [0, 0, 1, 1], [], []>} : vector<128x36xbf16>, vector<36x128xbf16>, vector<128x128xf32> -> vector<128x128xf32>
    %c0_5 = arith.constant 0 : index
    %c0_6 = arith.constant 0 : index
    %8 = vector.load %arg3[%c0_5, %c0_6] : memref<1x128xf32, #tpu.memory_space<vmem>>, vector<1x128xf32>
    %9 = vector.broadcast %8 : vector<1x128xf32> to vector<128x128xf32>
    %10 = arith.addf %7, %9 : vector<128x128xf32>
    %cst_7 = arith.constant 0.000000e+00 : f32
    %11 = vector.broadcast %cst_7 : f32 to vector<128x128xf32>
    %12 = arith.cmpf ogt, %10, %11 : vector<128x128xf32>
    %cst_8 = arith.constant 0.00999999977 : f32
    %13 = vector.broadcast %cst_8 : f32 to vector<128x128xf32>
    %14 = arith.mulf %10, %13 : vector<128x128xf32>
    %15 = arith.select %12, %10, %14 : vector<128x128xi1>, vector<128x128xf32>
    %16 = arith.truncf %15 : vector<128x128xf32> to vector<128x128xbf16>
    %c0_9 = arith.constant 0 : index
    %c0_10 = arith.constant 0 : index
    %17 = vector.load %arg4[%c0_9, %c0_10] : memref<128x128xbf16, #tpu.memory_space<vmem>>, vector<128x128xbf16>
    %cst_11 = arith.constant dense<0.000000e+00> : vector<128x128xf32>
    %18 = tpu.matmul %16, %17, %cst_11 {dimension_numbers = #tpu.dot_dimension_numbers<[1], [0], [0], [1], [0, 0, 1, 1], [], []>} : vector<128x128xbf16>, vector<128x128xbf16>, vector<128x128xf32> -> vector<128x128xf32>
    %c0_12 = arith.constant 0 : index
    %c0_13 = arith.constant 0 : index
    %19 = vector.load %arg1[%c0_12, %c0_13] : memref<128x4xbf16, #tpu.memory_space<vmem>>, vector<128x4xbf16>
    %c0_14 = arith.constant 0 : index
    %c0_15 = arith.constant 0 : index
    %20 = vector.load %arg5[%c0_14, %c0_15] : memref<4x128xbf16, #tpu.memory_space<vmem>>, vector<4x128xbf16>
    %cst_16 = arith.constant dense<0.000000e+00> : vector<128x128xf32>
    %21 = tpu.matmul %19, %20, %cst_16 {dimension_numbers = #tpu.dot_dimension_numbers<[1], [0], [0], [1], [0, 0, 1, 1], [], []>} : vector<128x4xbf16>, vector<4x128xbf16>, vector<128x128xf32> -> vector<128x128xf32>
    %22 = arith.addf %18, %21 : vector<128x128xf32>
    %c0_17 = arith.constant 0 : index
    %c0_18 = arith.constant 0 : index
    %23 = vector.load %arg6[%c0_17, %c0_18] : memref<1x128xf32, #tpu.memory_space<vmem>>, vector<1x128xf32>
    %24 = vector.broadcast %23 : vector<1x128xf32> to vector<128x128xf32>
    %25 = arith.addf %22, %24 : vector<128x128xf32>
    %26 = arith.truncf %25 : vector<128x128xf32> to vector<128x128xbf16>
    %c0_19 = arith.constant 0 : index
    %c0_20 = arith.constant 0 : index
    %27 = vector.load %arg7[%c0_19, %c0_20] : memref<128x128xbf16, #tpu.memory_space<vmem>>, vector<128x128xbf16>
    tpu.vector_store %arg7[%c0_19, %c0_20], %26 {strides = array<i32>} : memref<128x128xbf16, #tpu.memory_space<vmem>>, vector<128x128xbf16>,
    return
  }
}

module attributes {stable_mosaic.version = 11 : i64} {
  func.func @_spatial_block_kernel(%arg0: memref<32x1152xbf16, #tpu.memory_space<vmem>>, %arg1: memref<32x128xbf16, #tpu.memory_space<vmem>>, %arg2: memref<1152x128xbf16, #tpu.memory_space<vmem>>, %arg3: memref<1x128xf32, #tpu.memory_space<vmem>>, %arg4: memref<128x128xbf16, #tpu.memory_space<vmem>>, %arg5: memref<128x128xbf16, #tpu.memory_space<vmem>>, %arg6: memref<1x128xf32, #tpu.memory_space<vmem>>, %arg7: memref<32x128xbf16, #tpu.memory_space<vmem>>) attributes {dimension_semantics = [], scalar_prefetch = 0 : i64, scratch_operands = 0 : i64, tpu.core_type = #tpu.core_type<tc>} {
    %c0 = arith.constant 0 : index
    %c0_0 = arith.constant 0 : index
    %0 = vector.load %arg0[%c0, %c0_0] : memref<32x1152xbf16, #tpu.memory_space<vmem>>, vector<32x1152xbf16>
    %cst = arith.constant 0.000000e+00 : bf16
    %1 = vector.broadcast %cst : bf16 to vector<32x1152xbf16>
    %2 = arith.cmpf ogt, %0, %1 : vector<32x1152xbf16>
    %cst_1 = arith.constant 1.000980e-02 : bf16
    %3 = vector.broadcast %cst_1 : bf16 to vector<32x1152xbf16>
    %4 = arith.mulf %0, %3 : vector<32x1152xbf16>
    %5 = arith.select %2, %0, %4 : vector<32x1152xi1>, vector<32x1152xbf16>
    %c0_2 = arith.constant 0 : index
    %c0_3 = arith.constant 0 : index
    %6 = vector.load %arg2[%c0_2, %c0_3] : memref<1152x128xbf16, #tpu.memory_space<vmem>>, vector<1152x128xbf16>
    %cst_4 = arith.constant dense<0.000000e+00> : vector<32x128xf32>
    %7 = tpu.matmul %5, %6, %cst_4 {dimension_numbers = #tpu.dot_dimension_numbers<[1], [0], [0], [1], [0, 0, 1, 1], [], []>} : vector<32x1152xbf16>, vector<1152x128xbf16>, vector<32x128xf32> -> vector<32x128xf32>
    %c0_5 = arith.constant 0 : index
    %c0_6 = arith.constant 0 : index
    %8 = vector.load %arg3[%c0_5, %c0_6] : memref<1x128xf32, #tpu.memory_space<vmem>>, vector<1x128xf32>
    %9 = vector.broadcast %8 : vector<1x128xf32> to vector<32x128xf32>
    %10 = arith.addf %7, %9 : vector<32x128xf32>
    %cst_7 = arith.constant 0.000000e+00 : f32
    %11 = vector.broadcast %cst_7 : f32 to vector<32x128xf32>
    %12 = arith.cmpf ogt, %10, %11 : vector<32x128xf32>
    %cst_8 = arith.constant 0.00999999977 : f32
    %13 = vector.broadcast %cst_8 : f32 to vector<32x128xf32>
    %14 = arith.mulf %10, %13 : vector<32x128xf32>
    %15 = arith.select %12, %10, %14 : vector<32x128xi1>, vector<32x128xf32>
    %16 = arith.truncf %15 : vector<32x128xf32> to vector<32x128xbf16>
    %c0_9 = arith.constant 0 : index
    %c0_10 = arith.constant 0 : index
    %17 = vector.load %arg4[%c0_9, %c0_10] : memref<128x128xbf16, #tpu.memory_space<vmem>>, vector<128x128xbf16>
    %cst_11 = arith.constant dense<0.000000e+00> : vector<32x128xf32>
    %18 = tpu.matmul %16, %17, %cst_11 {dimension_numbers = #tpu.dot_dimension_numbers<[1], [0], [0], [1], [0, 0, 1, 1], [], []>} : vector<32x128xbf16>, vector<128x128xbf16>, vector<32x128xf32> -> vector<32x128xf32>
    %c0_12 = arith.constant 0 : index
    %c0_13 = arith.constant 0 : index
    %19 = vector.load %arg1[%c0_12, %c0_13] : memref<32x128xbf16, #tpu.memory_space<vmem>>, vector<32x128xbf16>
    %c0_14 = arith.constant 0 : index
    %c0_15 = arith.constant 0 : index
    %20 = vector.load %arg5[%c0_14, %c0_15] : memref<128x128xbf16, #tpu.memory_space<vmem>>, vector<128x128xbf16>
    %cst_16 = arith.constant dense<0.000000e+00> : vector<32x128xf32>
    %21 = tpu.matmul %19, %20, %cst_16 {dimension_numbers = #tpu.dot_dimension_numbers<[1], [0], [0], [1], [0, 0, 1, 1], [], []>} : vector<32x128xbf16>, vector<128x128xbf16>, vector<32x128xf32> -> vector<32x128xf32>
    %22 = arith.addf %18, %21 : vector<32x128xf32>
    %c0_17 = arith.constant 0 : index
    %c0_18 = arith.constant 0 : index
    %23 = vector.load %arg6[%c0_17, %c0_18] : memref<1x128xf32, #tpu.memory_space<vmem>>, vector<1x128xf32>
    %24 = vector.broadcast %23 : vector<1x128xf32> to vector<32x128xf32>
    %25 = arith.addf %22, %24 : vector<32x128xf32>
    %26 = arith.truncf %25 : vector<32x128xf32> to vector<32x128xbf16>
    %c0_19 = arith.constant 0 : index
    %c0_20 = arith.constant 0 : index
    %27 = vector.load %arg7[%c0_19, %c0_20] : memref<32x128xbf16, #tpu.memory_space<vmem>>, vector<32x128xbf16>
    tpu.vector_store %arg7[%c0_19, %c0_20], %26 {strides = array<i32>} : memref<32x128xbf16, #tpu.memory_space<vmem>>, vector<32x128xbf16>,
    return
  }
}

module attributes {stable_mosaic.version = 11 : i64} {
  func.func @kernel(%arg0: memref<2x128xbf16, #tpu.memory_space<vmem>>, %arg1: memref<128x128xbf16, #tpu.memory_space<vmem>>, %arg2: memref<1x128xf32, #tpu.memory_space<vmem>>, %arg3: memref<128x128xbf16, #tpu.memory_space<vmem>>, %arg4: memref<128x128xbf16, #tpu.memory_space<vmem>>, %arg5: memref<1x128xf32, #tpu.memory_space<vmem>>, %arg6: memref<128x128xbf16, #tpu.memory_space<vmem>>, %arg7: memref<1x128xf32, #tpu.memory_space<vmem>>, %arg8: memref<128x128xbf16, #tpu.memory_space<vmem>>, %arg9: memref<128x128xbf16, #tpu.memory_space<vmem>>, %arg10: memref<1x128xf32, #tpu.memory_space<vmem>>, %arg11: memref<128x128xbf16, #tpu.memory_space<vmem>>, %arg12: memref<1x128xf32, #tpu.memory_space<vmem>>, %arg13: memref<128x256xbf16, #tpu.memory_space<vmem>>, %arg14: memref<128x256xbf16, #tpu.memory_space<vmem>>, %arg15: memref<1x256xf32, #tpu.memory_space<vmem>>, %arg16: memref<256x256xbf16, #tpu.memory_space<vmem>>, %arg17: memref<1x256xf32, #tpu.memory_space<vmem>>, %arg18: memref<256x256xbf16, #tpu.memory_space<vmem>>, %arg19: memref<256x256xbf16, #tpu.memory_space<vmem>>, %arg20: memref<1x256xf32, #tpu.memory_space<vmem>>, %arg21: memref<1x256xf32, #tpu.memory_space<vmem>>, %arg22: memref<1x1xf32, #tpu.memory_space<vmem>>, %arg23: memref<8x128xf32, #tpu.memory_space<vmem>>) attributes {dimension_semantics = [], scalar_prefetch = 0 : i64, scratch_operands = 0 : i64, tpu.core_type = #tpu.core_type<tc>} {
    %c0 = arith.constant 0 : index
    %c0_0 = arith.constant 0 : index
    %0 = vector.load %arg0[%c0, %c0_0] : memref<2x128xbf16, #tpu.memory_space<vmem>>, vector<2x128xbf16>
    %cst = arith.constant 0.000000e+00 : bf16
    %1 = vector.broadcast %cst : bf16 to vector<2x128xbf16>
    %2 = arith.cmpf ogt, %0, %1 : vector<2x128xbf16>
    %cst_1 = arith.constant 1.000980e-02 : bf16
    %3 = vector.broadcast %cst_1 : bf16 to vector<2x128xbf16>
    %4 = arith.mulf %0, %3 : vector<2x128xbf16>
    %5 = arith.select %2, %0, %4 : vector<2x128xi1>, vector<2x128xbf16>
    %c0_2 = arith.constant 0 : index
    %c0_3 = arith.constant 0 : index
    %6 = vector.load %arg1[%c0_2, %c0_3] : memref<128x128xbf16, #tpu.memory_space<vmem>>, vector<128x128xbf16>
    %cst_4 = arith.constant dense<0.000000e+00> : vector<2x128xf32>
    %7 = tpu.matmul %5, %6, %cst_4 {dimension_numbers = #tpu.dot_dimension_numbers<[1], [0], [0], [1], [0, 0, 1, 1], [], []>} : vector<2x128xbf16>, vector<128x128xbf16>, vector<2x128xf32> -> vector<2x128xf32>
    %c0_5 = arith.constant 0 : index
    %c0_6 = arith.constant 0 : index
    %8 = vector.load %arg2[%c0_5, %c0_6] : memref<1x128xf32, #tpu.memory_space<vmem>>, vector<1x128xf32>
    %9 = vector.broadcast %8 : vector<1x128xf32> to vector<2x128xf32>
    %10 = arith.addf %7, %9 : vector<2x128xf32>
    %cst_7 = arith.constant 0.000000e+00 : f32
    %11 = vector.broadcast %cst_7 : f32 to vector<2x128xf32>
    %12 = arith.cmpf ogt, %10, %11 : vector<2x128xf32>
    %cst_8 = arith.constant 0.00999999977 : f32
    %13 = vector.broadcast %cst_8 : f32 to vector<2x128xf32>
    %14 = arith.mulf %10, %13 : vector<2x128xf32>
    %15 = arith.select %12, %10, %14 : vector<2x128xi1>, vector<2x128xf32>
    %16 = arith.truncf %15 : vector<2x128xf32> to vector<2x128xbf16>
    %c0_9 = arith.constant 0 : index
    %c0_10 = arith.constant 0 : index
    %17 = vector.load %arg3[%c0_9, %c0_10] : memref<128x128xbf16, #tpu.memory_space<vmem>>, vector<128x128xbf16>
    %cst_11 = arith.constant dense<0.000000e+00> : vector<2x128xf32>
    %18 = tpu.matmul %16, %17, %cst_11 {dimension_numbers = #tpu.dot_dimension_numbers<[1], [0], [0], [1], [0, 0, 1, 1], [], []>} : vector<2x128xbf16>, vector<128x128xbf16>, vector<2x128xf32> -> vector<2x128xf32>
    %c0_12 = arith.constant 0 : index
    %c0_13 = arith.constant 0 : index
    %19 = vector.load %arg4[%c0_12, %c0_13] : memref<128x128xbf16, #tpu.memory_space<vmem>>, vector<128x128xbf16>
    %cst_14 = arith.constant dense<0.000000e+00> : vector<2x128xf32>
    %20 = tpu.matmul %0, %19, %cst_14 {dimension_numbers = #tpu.dot_dimension_numbers<[1], [0], [0], [1], [0, 0, 1, 1], [], []>} : vector<2x128xbf16>, vector<128x128xbf16>, vector<2x128xf32> -> vector<2x128xf32>
    %21 = arith.addf %18, %20 : vector<2x128xf32>
    %c0_15 = arith.constant 0 : index
    %c0_16 = arith.constant 0 : index
    %22 = vector.load %arg5[%c0_15, %c0_16] : memref<1x128xf32, #tpu.memory_space<vmem>>, vector<1x128xf32>
    %23 = vector.broadcast %22 : vector<1x128xf32> to vector<2x128xf32>
    %24 = arith.addf %21, %23 : vector<2x128xf32>
    %25 = arith.truncf %24 : vector<2x128xf32> to vector<2x128xbf16>
    %cst_17 = arith.constant 0.000000e+00 : bf16
    %26 = vector.broadcast %cst_17 : bf16 to vector<2x128xbf16>
    %27 = arith.cmpf ogt, %25, %26 : vector<2x128xbf16>
    %cst_18 = arith.constant 1.000980e-02 : bf16
    %28 = vector.broadcast %cst_18 : bf16 to vector<2x128xbf16>
    %29 = arith.mulf %25, %28 : vector<2x128xbf16>
    %30 = arith.select %27, %25, %29 : vector<2x128xi1>, vector<2x128xbf16>
    %c0_19 = arith.constant 0 : index
    %c0_20 = arith.constant 0 : index
    %31 = vector.load %arg6[%c0_19, %c0_20] : memref<128x128xbf16, #tpu.memory_space<vmem>>, vector<128x128xbf16>
    %cst_21 = arith.constant dense<0.000000e+00> : vector<2x128xf32>
    %32 = tpu.matmul %30, %31, %cst_21 {dimension_numbers = #tpu.dot_dimension_numbers<[1], [0], [0], [1], [0, 0, 1, 1], [], []>} : vector<2x128xbf16>, vector<128x128xbf16>, vector<2x128xf32> -> vector<2x128xf32>
    %c0_22 = arith.constant 0 : index
    %c0_23 = arith.constant 0 : index
    %33 = vector.load %arg7[%c0_22, %c0_23] : memref<1x128xf32, #tpu.memory_space<vmem>>, vector<1x128xf32>
    %34 = vector.broadcast %33 : vector<1x128xf32> to vector<2x128xf32>
    %35 = arith.addf %32, %34 : vector<2x128xf32>
    %cst_24 = arith.constant 0.000000e+00 : f32
    %36 = vector.broadcast %cst_24 : f32 to vector<2x128xf32>
    %37 = arith.cmpf ogt, %35, %36 : vector<2x128xf32>
    %cst_25 = arith.constant 0.00999999977 : f32
    %38 = vector.broadcast %cst_25 : f32 to vector<2x128xf32>
    %39 = arith.mulf %35, %38 : vector<2x128xf32>
    %40 = arith.select %37, %35, %39 : vector<2x128xi1>, vector<2x128xf32>
    %41 = arith.truncf %40 : vector<2x128xf32> to vector<2x128xbf16>
    %c0_26 = arith.constant 0 : index
    %c0_27 = arith.constant 0 : index
    %42 = vector.load %arg8[%c0_26, %c0_27] : memref<128x128xbf16, #tpu.memory_space<vmem>>, vector<128x128xbf16>
    %cst_28 = arith.constant dense<0.000000e+00> : vector<2x128xf32>
    %43 = tpu.matmul %41, %42, %cst_28 {dimension_numbers = #tpu.dot_dimension_numbers<[1], [0], [0], [1], [0, 0, 1, 1], [], []>} : vector<2x128xbf16>, vector<128x128xbf16>, vector<2x128xf32> -> vector<2x128xf32>
    %c0_29 = arith.constant 0 : index
    %c0_30 = arith.constant 0 : index
    %44 = vector.load %arg9[%c0_29, %c0_30] : memref<128x128xbf16, #tpu.memory_space<vmem>>, vector<128x128xbf16>
    %cst_31 = arith.constant dense<0.000000e+00> : vector<2x128xf32>
    %45 = tpu.matmul %25, %44, %cst_31 {dimension_numbers = #tpu.dot_dimension_numbers<[1], [0], [0], [1], [0, 0, 1, 1], [], []>} : vector<2x128xbf16>, vector<128x128xbf16>, vector<2x128xf32> -> vector<2x128xf32>
    %46 = arith.addf %43, %45 : vector<2x128xf32>
    %c0_32 = arith.constant 0 : index
    %c0_33 = arith.constant 0 : index
    %47 = vector.load %arg10[%c0_32, %c0_33] : memref<1x128xf32, #tpu.memory_space<vmem>>, vector<1x128xf32>
    %48 = vector.broadcast %47 : vector<1x128xf32> to vector<2x128xf32>
    %49 = arith.addf %46, %48 : vector<2x128xf32>
    %50 = arith.truncf %49 : vector<2x128xf32> to vector<2x128xbf16>
    %cst_34 = arith.constant 0.000000e+00 : bf16
    %51 = vector.broadcast %cst_34 : bf16 to vector<2x128xbf16>
    %52 = arith.cmpf ogt, %50, %51 : vector<2x128xbf16>
    %cst_35 = arith.constant 1.000980e-02 : bf16
    %53 = vector.broadcast %cst_35 : bf16 to vector<2x128xbf16>
    %54 = arith.mulf %50, %53 : vector<2x128xbf16>
    %55 = arith.select %52, %50, %54 : vector<2x128xi1>, vector<2x128xbf16>
    %c0_36 = arith.constant 0 : index
    %c0_37 = arith.constant 0 : index
    %56 = vector.load %arg11[%c0_36, %c0_37] : memref<128x128xbf16, #tpu.memory_space<vmem>>, vector<128x128xbf16>
    %cst_38 = arith.constant dense<0.000000e+00> : vector<2x128xf32>
    %57 = tpu.matmul %55, %56, %cst_38 {dimension_numbers = #tpu.dot_dimension_numbers<[1], [0], [0], [1], [0, 0, 1, 1], [], []>} : vector<2x128xbf16>, vector<128x128xbf16>, vector<2x128xf32> -> vector<2x128xf32>
    %c0_39 = arith.constant 0 : index
    %c0_40 = arith.constant 0 : index
    %58 = vector.load %arg12[%c0_39, %c0_40] : memref<1x128xf32, #tpu.memory_space<vmem>>, vector<1x128xf32>
    %59 = vector.broadcast %58 : vector<1x128xf32> to vector<2x128xf32>
    %60 = arith.addf %57, %59 : vector<2x128xf32>
    %cst_41 = arith.constant 0.000000e+00 : f32
    %61 = vector.broadcast %cst_41 : f32 to vector<2x128xf32>
    %62 = arith.cmpf ogt, %60, %61 : vector<2x128xf32>
    %cst_42 = arith.constant 0.00999999977 : f32
    %63 = vector.broadcast %cst_42 : f32 to vector<2x128xf32>
    %64 = arith.mulf %60, %63 : vector<2x128xf32>
    %65 = arith.select %62, %60, %64 : vector<2x128xi1>, vector<2x128xf32>
    %66 = arith.truncf %65 : vector<2x128xf32> to vector<2x128xbf16>
    %c0_43 = arith.constant 0 : index
    %c0_44 = arith.constant 0 : index
    %67 = vector.load %arg13[%c0_43, %c0_44] : memref<128x256xbf16, #tpu.memory_space<vmem>>, vector<128x256xbf16>
    %cst_45 = arith.constant dense<0.000000e+00> : vector<2x256xf32>
    %68 = tpu.matmul %66, %67, %cst_45 {dimension_numbers = #tpu.dot_dimension_numbers<[1], [0], [0], [1], [0, 0, 1, 1], [], []>} : vector<2x128xbf16>, vector<128x256xbf16>, vector<2x256xf32> -> vector<2x256xf32>
    %c0_46 = arith.constant 0 : index
    %c0_47 = arith.constant 0 : index
    %69 = vector.load %arg14[%c0_46, %c0_47] : memref<128x256xbf16, #tpu.memory_space<vmem>>, vector<128x256xbf16>
    %cst_48 = arith.constant dense<0.000000e+00> : vector<2x256xf32>
    %70 = tpu.matmul %50, %69, %cst_48 {dimension_numbers = #tpu.dot_dimension_numbers<[1], [0], [0], [1], [0, 0, 1, 1], [], []>} : vector<2x128xbf16>, vector<128x256xbf16>, vector<2x256xf32> -> vector<2x256xf32>
    %71 = arith.addf %68, %70 : vector<2x256xf32>
    %c0_49 = arith.constant 0 : index
    %c0_50 = arith.constant 0 : index
    %72 = vector.load %arg15[%c0_49, %c0_50] : memref<1x256xf32, #tpu.memory_space<vmem>>, vector<1x256xf32>
    %73 = vector.broadcast %72 : vector<1x256xf32> to vector<2x256xf32>
    %74 = arith.addf %71, %73 : vector<2x256xf32>
    %75 = arith.truncf %74 : vector<2x256xf32> to vector<2x256xbf16>
    %cst_51 = arith.constant 0.000000e+00 : bf16
    %76 = vector.broadcast %cst_51 : bf16 to vector<2x256xbf16>
    %77 = arith.cmpf ogt, %75, %76 : vector<2x256xbf16>
    %cst_52 = arith.constant 1.000980e-02 : bf16
    %78 = vector.broadcast %cst_52 : bf16 to vector<2x256xbf16>
    %79 = arith.mulf %75, %78 : vector<2x256xbf16>
    %80 = arith.select %77, %75, %79 : vector<2x256xi1>, vector<2x256xbf16>
    %c0_53 = arith.constant 0 : index
    %c0_54 = arith.constant 0 : index
    %81 = vector.load %arg16[%c0_53, %c0_54] : memref<256x256xbf16, #tpu.memory_space<vmem>>, vector<256x256xbf16>
    %cst_55 = arith.constant dense<0.000000e+00> : vector<2x256xf32>
    %82 = tpu.matmul %80, %81, %cst_55 {dimension_numbers = #tpu.dot_dimension_numbers<[1], [0], [0], [1], [0, 0, 1, 1], [], []>} : vector<2x256xbf16>, vector<256x256xbf16>, vector<2x256xf32> -> vector<2x256xf32>
    %c0_56 = arith.constant 0 : index
    %c0_57 = arith.constant 0 : index
    %83 = vector.load %arg17[%c0_56, %c0_57] : memref<1x256xf32, #tpu.memory_space<vmem>>, vector<1x256xf32>
    %84 = vector.broadcast %83 : vector<1x256xf32> to vector<2x256xf32>
    %85 = arith.addf %82, %84 : vector<2x256xf32>
    %cst_58 = arith.constant 0.000000e+00 : f32
    %86 = vector.broadcast %cst_58 : f32 to vector<2x256xf32>
    %87 = arith.cmpf ogt, %85, %86 : vector<2x256xf32>
    %cst_59 = arith.constant 0.00999999977 : f32
    %88 = vector.broadcast %cst_59 : f32 to vector<2x256xf32>
    %89 = arith.mulf %85, %88 : vector<2x256xf32>
    %90 = arith.select %87, %85, %89 : vector<2x256xi1>, vector<2x256xf32>
    %91 = arith.truncf %90 : vector<2x256xf32> to vector<2x256xbf16>
    %c0_60 = arith.constant 0 : index
    %c0_61 = arith.constant 0 : index
    %92 = vector.load %arg18[%c0_60, %c0_61] : memref<256x256xbf16, #tpu.memory_space<vmem>>, vector<256x256xbf16>
    %cst_62 = arith.constant dense<0.000000e+00> : vector<2x256xf32>
    %93 = tpu.matmul %91, %92, %cst_62 {dimension_numbers = #tpu.dot_dimension_numbers<[1], [0], [0], [1], [0, 0, 1, 1], [], []>} : vector<2x256xbf16>, vector<256x256xbf16>, vector<2x256xf32> -> vector<2x256xf32>
    %c0_63 = arith.constant 0 : index
    %c0_64 = arith.constant 0 : index
    %94 = vector.load %arg19[%c0_63, %c0_64] : memref<256x256xbf16, #tpu.memory_space<vmem>>, vector<256x256xbf16>
    %cst_65 = arith.constant dense<0.000000e+00> : vector<2x256xf32>
    %95 = tpu.matmul %75, %94, %cst_65 {dimension_numbers = #tpu.dot_dimension_numbers<[1], [0], [0], [1], [0, 0, 1, 1], [], []>} : vector<2x256xbf16>, vector<256x256xbf16>, vector<2x256xf32> -> vector<2x256xf32>
    %96 = arith.addf %93, %95 : vector<2x256xf32>
    %c0_66 = arith.constant 0 : index
    %c0_67 = arith.constant 0 : index
    %97 = vector.load %arg20[%c0_66, %c0_67] : memref<1x256xf32, #tpu.memory_space<vmem>>, vector<1x256xf32>
    %98 = vector.broadcast %97 : vector<1x256xf32> to vector<2x256xf32>
    %99 = arith.addf %96, %98 : vector<2x256xf32>
    %100 = arith.truncf %99 : vector<2x256xf32> to vector<2x256xbf16>
    %101 = arith.extf %100 : vector<2x256xbf16> to vector<2x256xf32>
    %c0_68 = arith.constant 0 : index
    %c0_69 = arith.constant 0 : index
    %102 = vector.load %arg21[%c0_68, %c0_69] : memref<1x256xf32, #tpu.memory_space<vmem>>, vector<1x256xf32>
    %103 = vector.broadcast %102 : vector<1x256xf32> to vector<2x256xf32>
    %104 = arith.mulf %101, %103 : vector<2x256xf32>
    %cst_70 = arith.constant dense<0.000000e+00> : vector<2xf32>
    %105 = vector.multi_reduction <add>, %104, %cst_70 [1] : vector<2x256xf32> to vector<2xf32>
    %106 = vector.shape_cast %105 : vector<2xf32> to vector<2x1xf32>
    %c0_71 = arith.constant 0 : index
    %c0_72 = arith.constant 0 : index
    %107 = vector.load %arg22[%c0_71, %c0_72] : memref<1x1xf32, #tpu.memory_space<vmem>>, vector<1x1xf32>
    %108 = vector.broadcast %107 : vector<1x1xf32> to vector<2x1xf32>
    %109 = arith.addf %106, %108 : vector<2x1xf32>
    %cst_73 = arith.constant 0.000000e+00 : f32
    %110 = vector.broadcast %cst_73 : f32 to vector<8x128xf32>
    %111 = vector.shape_cast %109 : vector<2x1xf32> to vector<1x2x1xf32>
    %cst_74 = arith.constant dense<0.000000e+00> : vector<1xf32>
    %112 = vector.multi_reduction <add>, %111, %cst_74 [1, 2] : vector<1x2x1xf32> to vector<1xf32>
    %113 = vector.shape_cast %112 : vector<1xf32> to vector<1x1x1xf32>
    %114 = vector.extract %113[0, 0, 0] : f32 from vector<1x1x1xf32>
    %115 = vector.broadcast %114 : f32 to vector<8x128xf32>
    %116 = arith.addf %110, %115 : vector<8x128xf32>
    %c0_75 = arith.constant 0 : index
    %c0_76 = arith.constant 0 : index
    %117 = vector.load %arg23[%c0_75, %c0_76] : memref<8x128xf32, #tpu.memory_space<vmem>>, vector<8x128xf32>
    tpu.vector_store %arg23[%c0_75, %c0_76], %116 {strides = array<i32>} : memref<8x128xf32, #tpu.memory_space<vmem>>, vector<8x128xf32>,
    return
  }
}

</mosaic_0001>

<llo_original>
// kernel: msdiscriminator_forward.21
$region0: #{msdiscriminator_forward.21}
  #allocation0 [shape = 'u32[]', space=smem, size = 0x4, offset = 0x4, fixed_abs, tag = 'smem constant byte address 0x4 - core index']
  #allocation1 [shape = 'u32[144,128]{1,0:T(1,128)}', space=vmem, size = 0x12000, scoped, tag = 'internal scratch']
  %s0 = inlined_call_operand.vmem [shape: bf16[8,36], index: 0, kind: input, shape index: {}]
  %s1 = inlined_call_operand.vmem [shape: bf16[8,4], index: 1, kind: input, shape index: {}]
  %s2 = inlined_call_operand.vmem [shape: bf16[36,128], index: 2, kind: input, shape index: {}]
  %s3 = inlined_call_operand.vmem [shape: f32[1,128], index: 3, kind: input, shape index: {}]
  %s4 = inlined_call_operand.hbm [shape: bf16[128,128], index: 4, kind: input, shape index: {}]
  %s5 = inlined_call_operand.vmem [shape: bf16[4,128], index: 5, kind: input, shape index: {}]
  %s6 = inlined_call_operand.vmem [shape: f32[1,128], index: 6, kind: input, shape index: {}]
  %s7 = inlined_call_operand.vmem [shape: bf16[8,128], index: 7, kind: output, shape index: {}]
  %s8 = sld [smem:[#allocation0]]
  $region42: #{msdiscriminator_forward.21} parent=0
    _
  %s10 = ssub.s32 1, %s8
  %s11 = scalar_select 0, %s10, %s8
  $region1: #{msdiscriminator_forward.21} parent=0
    #allocation2 [shape = 'u8[32768]{0}', space=vmem, size = 0x8000, scoped, tag = 'input window, operand 4, single buffered']
    #allocation3 [shape = 's32[1]{0}', space=sflag, size = 0x4, scoped, tag = 'scoped memory for msdiscriminator_forward.21']
    %12 = vsyncpa [#allocation3], 0
    // Predicated region
    $region2: #{msdiscriminator_forward.21} parent=1 // pred_check
      _
    $region3: #{msdiscriminator_forward.21} parent=1 // pred_check_branch
      %14 = sbr.rel (0) target = $region5
    $region4: #{msdiscriminator_forward.21} parent=1 // pred_region
      _
    $region5: #{msdiscriminator_forward.21} parent=1 // pred_fallthru
      _
    // Predicated region
    $region6: #{msdiscriminator_forward.21} parent=1 // pred_check
      _
    $region7: #{msdiscriminator_forward.21} parent=1 // pred_check_branch
      %16 = sbr.rel (0) target = $region9
    $region8: #{msdiscriminator_forward.21} parent=1 // pred_region
      _
    $region9: #{msdiscriminator_forward.21} parent=1 // pred_fallthru
      _
    // Predicated region
    $region10: #{msdiscriminator_forward.21} parent=1 // pred_check
      _
    $region11: #{msdiscriminator_forward.21} parent=1 // pred_check_branch
      %18 = sbr.rel (0) target = $region13
    $region12: #{msdiscriminator_forward.21} parent=1 // pred_region
      _
    $region13: #{msdiscriminator_forward.21} parent=1 // pred_fallthru
      _
    // Predicated region
    $region14: #{msdiscriminator_forward.21} parent=1 // pred_check
      _
    $region15: #{msdiscriminator_forward.21} parent=1 // pred_check_branch
      %20 = sbr.rel (0) target = $region17
    $region16: #{msdiscriminator_forward.21} parent=1 // pred_region
      _
    $region17: #{msdiscriminator_forward.21} parent=1 // pred_fallthru
      _
    // Predicated region
    $region18: #{msdiscriminator_forward.21} parent=1 // pred_check
      _
    $region19: #{msdiscriminator_forward.21} parent=1 // pred_check_branch
      %22 = sbr.rel (0) target = $region21
    $region20: #{msdiscriminator_forward.21} parent=1 // pred_region
      %s24 = ssub.s32 1024, 1024
      %25 = vsyncadd [#allocation3], %s24
      %s26 = sshll.u32 [#allocation2], 4
      %s27 = int_to_ptr.vmem [resolvable:$true] %s26
      %32 = dma.hbm_to_vmem [thread:$0]  %s4, 1024, %s27, [#allocation3], 64, 64, 4
    $region21: #{msdiscriminator_forward.21} parent=1 // pred_fallthru
      _
    // Predicated region
    $region22: #{msdiscriminator_forward.21} parent=1 // pred_check
      _
    $region23: #{msdiscriminator_forward.21} parent=1 // pred_check_branch
      %34 = sbr.rel (0) target = $region25
    $region24: #{msdiscriminator_forward.21} parent=1 // pred_region
      _
    $region25: #{msdiscriminator_forward.21} parent=1 // pred_fallthru
      _
    // Predicated region
    $region26: #{msdiscriminator_forward.21} parent=1 // pred_check
      _
    $region27: #{msdiscriminator_forward.21} parent=1 // pred_check_branch
      %36 = sbr.rel (0) target = $region29
    $region28: #{msdiscriminator_forward.21} parent=1 // pred_region
      _
    $region29: #{msdiscriminator_forward.21} parent=1 // pred_fallthru
      _
    // Predicated region
    $region30: #{msdiscriminator_forward.21} parent=1 // pred_check
      _
    $region31: #{msdiscriminator_forward.21} parent=1 // pred_check_branch
      %38 = sbr.rel (0) target = $region33
    $region32: #{msdiscriminator_forward.21} parent=1 // pred_region
      %39 = dma.done [#allocation3], 1024
    $region33: #{msdiscriminator_forward.21} parent=1 // pred_fallthru
      _
    %v42 = vld [vmem:[%s0] sm:$0xf]
    %vm43 = vcmp.gt.bf16.partialorder %v42, 0
    %v44 = vmul.bf16 %v42, 1009007652
    %v45 = vsel %vm43, %v42, %v44
    %v46 = vld [vmem:[%s2] sm:$0xf]
    %v47 = vld [vmem:[%s2 + $0x4] sm:$0xf]
    %v48 = vld [vmem:[%s2 + $0x8] sm:$0xf]
    %v49 = vld [vmem:[%s2 + $0xc] sm:$0xf]
    %v50 = vld [vmem:[%s2 + $0x10] sm:$0x3]
    %v51 = vld [vmem:[%s3] sm:$0x1]
    %v53 = vlaneseq
    %v54 = vshrl.u32 %v53, 7
    %v55 = vsub.s32 0, %v54
    %v56 = vrot.slane %v51, %v55
    %v63 = vunpack.c.l.b16 %v46
    %v64 = vunpack.c.l.b16 %v47
    %v65 = vunpack.c.l.b16 %v48
    %v66 = vunpack.c.l.b16 %v49
    %v67 = vunpack.c.l.b16 %v50
    %v68 = vpack.c.b16 %v64, %v63
    %v69 = vpack.c.b16 %v66, %v65
    %v70 = vpack.c.b16 %v67, %v67
    %vm73 = vcmask 293888
    %v75 = vsel %vm73, %v45, 0
    %vm77 = vcmask 1041408
    %v79 = vsel %vm77, %v70, 0
    %81 = vmatprep.subr.bf16.mxu0 0
    %82 = vmatpush1.bf16.msra.mxu0 %v68
    %83 = vmatprep.subr.bf16.mxu0 0
    %84 = vmatpush1.bf16.msra.mxu0 %v69
    %85 = vmatprep.subr.bf16.mxu0 0
    %86 = vmatpush1.bf16.msra.mxu0 %v79
    %87 = vmatprep.subr.bf16.mxu0 0
    %88 = vmatpush1.bf16.msra.mxu0 0
    %89 = vmatprep.subr.bf16.mxu0 0
    %90 = vmatpush1.bf16.msra.mxu0 0
    %91 = vmatprep.subr.bf16.mxu0 0
    %92 = vmatpush1.bf16.msra.mxu0 0
    %93 = vmatprep.subr.bf16.mxu0 0
    %94 = vmatpush1.bf16.msra.mxu0 0
    %95 = vmatprep.subr.bf16.mxu0 0
    %96 = vmatpush1.bf16.msra.mxu0 0
    %97 = vmatprep.subr.bf16.mxu0 0
    %98 = vmatpush1.bf16.msra.mxu0 0
    %99 = vmatprep.subr.bf16.mxu0 0
    %100 = vmatpush1.bf16.msra.mxu0 0
    %101 = vmatprep.subr.bf16.mxu0 0
    %102 = vmatpush1.bf16.msra.mxu0 0
    %103 = vmatprep.subr.bf16.mxu0 0
    %104 = vmatpush1.bf16.msra.mxu0 0
    %105 = vmatprep.subr.bf16.mxu0 0
    %106 = vmatpush1.bf16.msra.mxu0 0
    %107 = vmatprep.subr.bf16.mxu0 0
    %108 = vmatpush1.bf16.msra.mxu0 0
    %109 = vmatprep.subr.bf16.mxu0 0
    %110 = vmatpush1.bf16.msra.mxu0 0
    %111 = vmatprep.subr.bf16.mxu0 0
    %112 = vmatpush1.bf16.msra.mxu0 0
    %113 = vmatprep.mubr.bf16.mxu0 0
    %114 = vmatmul.mubr.bf16.gmra.mrb[0].mxu0 %v75
    %v115 = vpop.f32.mrb[0].mxu0
    %v116 = vadd.f32 %v56, %v115
    %v117 = vpop.f32.mrb[0].mxu0
    %v118 = vpop.f32.mrb[0].mxu0
    %v119 = vpop.f32.mrb[0].mxu0
    %120 = vdwg.mxu0
    %vm121 = vcmp.gt.f32.partialorder %v116, 0.0
    %v122 = vmul.f32 %v116, 0.01
    %v123 = vsel %vm121, %v116, %v122
    %v124 = vpack.c.bf16 %v123, %v123
    %v125 = vld [vmem:[#allocation2] sm:$0xf]
    %v126 = vld [vmem:[#allocation2 + $0x4] sm:$0xf]
    %v127 = vld [vmem:[#allocation2 + $0x8] sm:$0xf]
    %v128 = vld [vmem:[#allocation2 + $0xc] sm:$0xf]
    %v129 = vld [vmem:[#allocation2 + $0x10] sm:$0xf]
    %v130 = vld [vmem:[#allocation2 + $0x14] sm:$0xf]
    %v131 = vld [vmem:[#allocation2 + $0x18] sm:$0xf]
    %v132 = vld [vmem:[#allocation2 + $0x1c] sm:$0xf]
    %v133 = vld [vmem:[#allocation2 + $0x20] sm:$0xf]
    %v134 = vld [vmem:[#allocation2 + $0x24] sm:$0xf]
    %v135 = vld [vmem:[#allocation2 + $0x28] sm:$0xf]
    %v136 = vld [vmem:[#allocation2 + $0x2c] sm:$0xf]
    %v137 = vld [vmem:[#allocation2 + $0x30] sm:$0xf]
    %v138 = vld [vmem:[#allocation2 + $0x34] sm:$0xf]
    %v139 = vld [vmem:[#allocation2 + $0x38] sm:$0xf]
    %v140 = vld [vmem:[#allocation2 + $0x3c] sm:$0xf]
    %v141 = vld [vmem:[%s1] sm:$0xf]
    %v142 = vld [vmem:[%s5] sm:$0x3]
    %vm143 = vcmask 31744
    %v145 = vsel %vm143, %v141, 0
    %v148 = vsel %vm77, %v142, 0
    %150 = vmatprep.subr.bf16.mxu0 0
    %151 = vmatpush1.bf16.msra.mxu0 %v148
    %152 = vmatprep.subr.bf16.mxu0 0
    %153 = vmatpush1.bf16.msra.mxu0 0
    %154 = vmatprep.subr.bf16.mxu0 0
    %155 = vmatpush1.bf16.msra.mxu0 0
    %156 = vmatprep.subr.bf16.mxu0 0
    %157 = vmatpush1.bf16.msra.mxu0 0
    %158 = vmatprep.subr.bf16.mxu0 0
    %159 = vmatpush1.bf16.msra.mxu0 0
    %160 = vmatprep.subr.bf16.mxu0 0
    %161 = vmatpush1.bf16.msra.mxu0 0
    %162 = vmatprep.subr.bf16.mxu0 0
    %163 = vmatpush1.bf16.msra.mxu0 0
    %164 = vmatprep.subr.bf16.mxu0 0
    %165 = vmatpush1.bf16.msra.mxu0 0
    %166 = vmatprep.subr.bf16.mxu0 0
    %167 = vmatpush1.bf16.msra.mxu0 0
    %168 = vmatprep.subr.bf16.mxu0 0
    %169 = vmatpush1.bf16.msra.mxu0 0
    %170 = vmatprep.subr.bf16.mxu0 0
    %171 = vmatpush1.bf16.msra.mxu0 0
    %172 = vmatprep.subr.bf16.mxu0 0
    %173 = vmatpush1.bf16.msra.mxu0 0
    %174 = vmatprep.subr.bf16.mxu0 0
    %175 = vmatpush1.bf16.msra.mxu0 0
    %176 = vmatprep.subr.bf16.mxu0 0
    %177 = vmatpush1.bf16.msra.mxu0 0
    %178 = vmatprep.subr.bf16.mxu0 0
    %179 = vmatpush1.bf16.msra.mxu0 0
    %180 = vmatprep.subr.bf16.mxu0 0
    %181 = vmatpush1.bf16.msra.mxu0 0
    %182 = vmatprep.mubr.bf16.mxu0 0
    %183 = vmatmul.mubr.bf16.gmra.mrb[0].mxu0 %v145
    %v184 = vpop.f32.mrb[0].mxu0
    %v185 = vadd.f32 0.0, %v184
    %v186 = vpop.f32.mrb[0].mxu0
    %v187 = vpop.f32.mrb[0].mxu0
    %v188 = vpop.f32.mrb[0].mxu0
    %189 = vdwg.mxu0
    %v206 = vunpack.c.l.b16 %v125
    %v207 = vunpack.c.l.b16 %v126
    %v208 = vunpack.c.l.b16 %v127
    %v209 = vunpack.c.l.b16 %v128
    %v210 = vunpack.c.l.b16 %v129
    %v211 = vunpack.c.l.b16 %v130
    %v212 = vunpack.c.l.b16 %v131
    %v213 = vunpack.c.l.b16 %v132
    %v214 = vunpack.c.l.b16 %v133
    %v215 = vunpack.c.l.b16 %v134
    %v216 = vunpack.c.l.b16 %v135
    %v217 = vunpack.c.l.b16 %v136
    %v218 = vunpack.c.l.b16 %v137
    %v219 = vunpack.c.l.b16 %v138
    %v220 = vunpack.c.l.b16 %v139
    %v221 = vunpack.c.l.b16 %v140
    %v222 = vpack.c.b16 %v207, %v206
    %v223 = vpack.c.b16 %v209, %v208
    %v224 = vpack.c.b16 %v211, %v210
    %v225 = vpack.c.b16 %v213, %v212
    %v226 = vpack.c.b16 %v215, %v214
    %v227 = vpack.c.b16 %v217, %v216
    %v228 = vpack.c.b16 %v219, %v218
    %v229 = vpack.c.b16 %v221, %v220
    %238 = vmatprep.subr.bf16.mxu0 0
    %239 = vmatpush1.bf16.msra.mxu0 %v222
    %240 = vmatprep.subr.bf16.mxu0 0
    %241 = vmatpush1.bf16.msra.mxu0 %v223
    %242 = vmatprep.subr.bf16.mxu0 0
    %243 = vmatpush1.bf16.msra.mxu0 %v224
    %244 = vmatprep.subr.bf16.mxu0 0
    %245 = vmatpush1.bf16.msra.mxu0 %v225
    %246 = vmatprep.subr.bf16.mxu0 0
    %247 = vmatpush1.bf16.msra.mxu0 %v226
    %248 = vmatprep.subr.bf16.mxu0 0
    %249 = vmatpush1.bf16.msra.mxu0 %v227
    %250 = vmatprep.subr.bf16.mxu0 0
    %251 = vmatpush1.bf16.msra.mxu0 %v228
    %252 = vmatprep.subr.bf16.mxu0 0
    %253 = vmatpush1.bf16.msra.mxu0 %v229
    %254 = vmatprep.subr.bf16.mxu0 0
    %255 = vmatpush1.bf16.msra.mxu0 0
    %256 = vmatprep.subr.bf16.mxu0 0
    %257 = vmatpush1.bf16.msra.mxu0 0
    %258 = vmatprep.subr.bf16.mxu0 0
    %259 = vmatpush1.bf16.msra.mxu0 0
    %260 = vmatprep.subr.bf16.mxu0 0
    %261 = vmatpush1.bf16.msra.mxu0 0
    %262 = vmatprep.subr.bf16.mxu0 0
    %263 = vmatpush1.bf16.msra.mxu0 0
    %264 = vmatprep.subr.bf16.mxu0 0
    %265 = vmatpush1.bf16.msra.mxu0 0
    %266 = vmatprep.subr.bf16.mxu0 0
    %267 = vmatpush1.bf16.msra.mxu0 0
    %268 = vmatprep.subr.bf16.mxu0 0
    %269 = vmatpush1.bf16.msra.mxu0 0
    %270 = vmatprep.mubr.bf16.mxu0 0
    %271 = vmatmul.mubr.bf16.gmra.mrb[0].mxu0 %v124
    %v272 = vpop.f32.mrb[0].mxu0
    %v273 = vadd.f32 %v185, %v272
    %v274 = vpop.f32.mrb[0].mxu0
    %v275 = vpop.f32.mrb[0].mxu0
    %v276 = vpop.f32.mrb[0].mxu0
    %277 = vdwg.mxu0
    %v278 = vld [vmem:[%s6] sm:$0x1]
    %v280 = vlaneseq
    %v281 = vshrl.u32 %v280, 7
    %v282 = vsub.s32 0, %v281
    %v283 = vrot.slane %v278, %v282
    %v285 = vadd.f32 %v273, %v283
    %v286 = vpack.c.bf16 %v285, %v285
    %287 = vst [vmem:[%s7] sm:$0xf] %v286
    // Predicated region
    $region34: #{msdiscriminator_forward.21} parent=1 // pred_check
      _
    $region35: #{msdiscriminator_forward.21} parent=1 // pred_check_branch
      %289 = sbr.rel (0) target = $region37
    $region36: #{msdiscriminator_forward.21} parent=1 // pred_region
      _
    $region37: #{msdiscriminator_forward.21} parent=1 // pred_fallthru
      _
    // Predicated region
    $region38: #{msdiscriminator_forward.21} parent=1 // pred_check
      _
    $region39: #{msdiscriminator_forward.21} parent=1 // pred_check_branch
      %291 = sbr.rel (0) target = $region41
    $region40: #{msdiscriminator_forward.21} parent=1 // pred_region
      _
    $region41: #{msdiscriminator_forward.21} parent=1 // pred_fallthru
      _
    %292 = vsyncpa [#allocation3], 1

// kernel: msdiscriminator_forward.22
$region0: #{msdiscriminator_forward.22}
  #allocation0 [shape = 'u32[]', space=smem, size = 0x4, offset = 0x4, fixed_abs, tag = 'smem constant byte address 0x4 - core index']
  #allocation1 [shape = 'u32[144,128]{1,0:T(1,128)}', space=vmem, size = 0x12000, scoped, tag = 'internal scratch']
  %s0 = inlined_call_operand.vmem [shape: bf16[2,1152], index: 0, kind: input, shape index: {}]
  %s1 = inlined_call_operand.vmem [shape: bf16[2,128], index: 1, kind: input, shape index: {}]
  %s2 = inlined_call_operand.vmem [shape: bf16[1152,128], index: 2, kind: input, shape index: {}]
  %s3 = inlined_call_operand.vmem [shape: f32[1,128], index: 3, kind: input, shape index: {}]
  %s4 = inlined_call_operand.vmem [shape: bf16[128,128], index: 4, kind: input, shape index: {}]
  %s5 = inlined_call_operand.vmem [shape: bf16[128,128], index: 5, kind: input, shape index: {}]
  %s6 = inlined_call_operand.vmem [shape: f32[1,128], index: 6, kind: input, shape index: {}]
  %s7 = inlined_call_operand.vmem [shape: bf16[2,128], index: 7, kind: output, shape index: {}]
  %s8 = sld [smem:[#allocation0]]
  $region38: #{msdiscriminator_forward.22} parent=0
    _
  %s10 = ssub.s32 1, %s8
  %s11 = scalar_select 0, %s10, %s8
  // Predicated region
  $region2: #{msdiscriminator_forward.22} parent=0 // pred_check
    _
  $region3: #{msdiscriminator_forward.22} parent=0 // pred_check_branch
    %13 = sbr.rel (0) target = $region5
  $region4: #{msdiscriminator_forward.22} parent=0 // pred_region
    _
  $region5: #{msdiscriminator_forward.22} parent=0 // pred_fallthru
    _
  // Predicated region
  $region6: #{msdiscriminator_forward.22} parent=0 // pred_check
    _
  $region7: #{msdiscriminator_forward.22} parent=0 // pred_check_branch
    %15 = sbr.rel (0) target = $region9
  $region8: #{msdiscriminator_forward.22} parent=0 // pred_region
    _
  $region9: #{msdiscriminator_forward.22} parent=0 // pred_fallthru
    _
  // Predicated region
  $region10: #{msdiscriminator_forward.22} parent=0 // pred_check
    _
  $region11: #{msdiscriminator_forward.22} parent=0 // pred_check_branch
    %17 = sbr.rel (0) target = $region13
  $region12: #{msdiscriminator_forward.22} parent=0 // pred_region
    _
  $region13: #{msdiscriminator_forward.22} parent=0 // pred_fallthru
    _
  // Predicated region
  $region14: #{msdiscriminator_forward.22} parent=0 // pred_check
    _
  $region15: #{msdiscriminator_forward.22} parent=0 // pred_check_branch
    %19 = sbr.rel (0) target = $region17
  $region16: #{msdiscriminator_forward.22} parent=0 // pred_region
    _
  $region17: #{msdiscriminator_forward.22} parent=0 // pred_fallthru
    _
  // Predicated region
  $region18: #{msdiscriminator_forward.22} parent=0 // pred_check
    _
  $region19: #{msdiscriminator_forward.22} parent=0 // pred_check_branch
    %21 = sbr.rel (0) target = $region21
  $region20: #{msdiscriminator_forward.22} parent=0 // pred_region
    _
  $region21: #{msdiscriminator_forward.22} parent=0 // pred_fallthru
    _
  // Predicated region
  $region22: #{msdiscriminator_forward.22} parent=0 // pred_check
    _
  $region23: #{msdiscriminator_forward.22} parent=0 // pred_check_branch
    %23 = sbr.rel (0) target = $region25
  $region24: #{msdiscriminator_forward.22} parent=0 // pred_region
    _
  $region25: #{msdiscriminator_forward.22} parent=0 // pred_fallthru
    _
  // Predicated region
  $region26: #{msdiscriminator_forward.22} parent=0 // pred_check
    _
  $region27: #{msdiscriminator_forward.22} parent=0 // pred_check_branch
    %25 = sbr.rel (0) target = $region29
  $region28: #{msdiscriminator_forward.22} parent=0 // pred_region
    _
  $region29: #{msdiscriminator_forward.22} parent=0 // pred_fallthru
    _
  %v28 = vld [vmem:[%s0] sm:$0xff]
  %v29 = vld [vmem:[%s0 + $0x8] sm:$0x1]
  %vm30 = vcmp.gt.bf16.partialorder %v28, 0
  %vm31 = vcmp.gt.bf16.partialorder %v29, 0
  %v32 = vmul.bf16 %v28, 1009007652
  %v33 = vmul.bf16 %v29, 1009007652
  %v34 = vsel %vm30, %v28, %v32
  %v35 = vsel %vm31, %v29, %v33
  %v36 = vld [vmem:[%s2] sm:$0xf]
  %v37 = vld [vmem:[%s2 + $0x4] sm:$0xf]
  %v38 = vld [vmem:[%s2 + $0x8] sm:$0xf]
  %v39 = vld [vmem:[%s2 + $0xc] sm:$0xf]
  %v40 = vld [vmem:[%s2 + $0x10] sm:$0xf]
  %v41 = vld [vmem:[%s2 + $0x14] sm:$0xf]
  %v42 = vld [vmem:[%s2 + $0x18] sm:$0xf]
  %v43 = vld [vmem:[%s2 + $0x1c] sm:$0xf]
  %v44 = vld [vmem:[%s2 + $0x20] sm:$0xf]
  %v45 = vld [vmem:[%s2 + $0x24] sm:$0xf]
  %v46 = vld [vmem:[%s2 + $0x28] sm:$0xf]
  %v47 = vld [vmem:[%s2 + $0x2c] sm:$0xf]
  %v48 = vld [vmem:[%s2 + $0x30] sm:$0xf]
  %v49 = vld [vmem:[%s2 + $0x34] sm:$0xf]
  %v50 = vld [vmem:[%s2 + $0x38] sm:$0xf]
  %v51 = vld [vmem:[%s2 + $0x3c] sm:$0xf]
  %v52 = vld [vmem:[%s2 + $0x40] sm:$0xf]
  %v53 = vld [vmem:[%s2 + $0x44] sm:$0xf]
  %v54 = vld [vmem:[%s2 + $0x48] sm:$0xf]
  %v55 = vld [vmem:[%s2 + $0x4c] sm:$0xf]
  %v56 = vld [vmem:[%s2 + $0x50] sm:$0xf]
  %v57 = vld [vmem:[%s2 + $0x54] sm:$0xf]
  %v58 = vld [vmem:[%s2 + $0x58] sm:$0xf]
  %v59 = vld [vmem:[%s2 + $0x5c] sm:$0xf]
  %v60 = vld [vmem:[%s2 + $0x60] sm:$0xf]
  %v61 = vld [vmem:[%s2 + $0x64] sm:$0xf]
  %v62 = vld [vmem:[%s2 + $0x68] sm:$0xf]
  %v63 = vld [vmem:[%s2 + $0x6c] sm:$0xf]
  %v64 = vld [vmem:[%s2 + $0x70] sm:$0xf]
  %v65 = vld [vmem:[%s2 + $0x74] sm:$0xf]
  %v66 = vld [vmem:[%s2 + $0x78] sm:$0xf]
  %v67 = vld [vmem:[%s2 + $0x7c] sm:$0xf]
  %v68 = vld [vmem:[%s2 + $0x80] sm:$0xf]
  %v69 = vld [vmem:[%s2 + $0x84] sm:$0xf]
  %v70 = vld [vmem:[%s2 + $0x88] sm:$0xf]
  %v71 = vld [vmem:[%s2 + $0x8c] sm:$0xf]
  %v72 = vld [vmem:[%s2 + $0x90] sm:$0xf]
  %v73 = vld [vmem:[%s2 + $0x94] sm:$0xf]
  %v74 = vld [vmem:[%s2 + $0x98] sm:$0xf]
  %v75 = vld [vmem:[%s2 + $0x9c] sm:$0xf]
  %v76 = vld [vmem:[%s2 + $0xa0] sm:$0xf]
  %v77 = vld [vmem:[%s2 + $0xa4] sm:$0xf]
  %v78 = vld [vmem:[%s2 + $0xa8] sm:$0xf]
  %v79 = vld [vmem:[%s2 + $0xac] sm:$0xf]
  %v80 = vld [vmem:[%s2 + $0xb0] sm:$0xf]
  %v81 = vld [vmem:[%s2 + $0xb4] sm:$0xf]
  %v82 = vld [vmem:[%s2 + $0xb8] sm:$0xf]
  %v83 = vld [vmem:[%s2 + $0xbc] sm:$0xf]
  %v84 = vld [vmem:[%s2 + $0xc0] sm:$0xf]
  %v85 = vld [vmem:[%s2 + $0xc4] sm:$0xf]
  %v86 = vld [vmem:[%s2 + $0xc8] sm:$0xf]
  %v87 = vld [vmem:[%s2 + $0xcc] sm:$0xf]
  %v88 = vld [vmem:[%s2 + $0xd0] sm:$0xf]
  %v89 = vld [vmem:[%s2 + $0xd4] sm:$0xf]
  %v90 = vld [vmem:[%s2 + $0xd8] sm:$0xf]
  %v91 = vld [vmem:[%s2 + $0xdc] sm:$0xf]
  %v92 = vld [vmem:[%s2 + $0xe0] sm:$0xf]
  %v93 = vld [vmem:[%s2 + $0xe4] sm:$0xf]
  %v94 = vld [vmem:[%s2 + $0xe8] sm:$0xf]
  %v95 = vld [vmem:[%s2 + $0xec] sm:$0xf]
  %v96 = vld [vmem:[%s2 + $0xf0] sm:$0xf]
  %v97 = vld [vmem:[%s2 + $0xf4] sm:$0xf]
  %v98 = vld [vmem:[%s2 + $0xf8] sm:$0xf]
  %v99 = vld [vmem:[%s2 + $0xfc] sm:$0xf]
  %v100 = vld [vmem:[%s2 + $0x100] sm:$0xf]
  %v101 = vld [vmem:[%s2 + $0x104] sm:$0xf]
  %v102 = vld [vmem:[%s2 + $0x108] sm:$0xf]
  %v103 = vld [vmem:[%s2 + $0x10c] sm:$0xf]
  %v104 = vld [vmem:[%s2 + $0x110] sm:$0xf]
  %v105 = vld [vmem:[%s2 + $0x114] sm:$0xf]
  %v106 = vld [vmem:[%s2 + $0x118] sm:$0xf]
  %v107 = vld [vmem:[%s2 + $0x11c] sm:$0xf]
  %v108 = vld [vmem:[%s2 + $0x120] sm:$0xf]
  %v109 = vld [vmem:[%s2 + $0x124] sm:$0xf]
  %v110 = vld [vmem:[%s2 + $0x128] sm:$0xf]
  %v111 = vld [vmem:[%s2 + $0x12c] sm:$0xf]
  %v112 = vld [vmem:[%s2 + $0x130] sm:$0xf]
  %v113 = vld [vmem:[%s2 + $0x134] sm:$0xf]
  %v114 = vld [vmem:[%s2 + $0x138] sm:$0xf]
  %v115 = vld [vmem:[%s2 + $0x13c] sm:$0xf]
  %v116 = vld [vmem:[%s2 + $0x140] sm:$0xf]
  %v117 = vld [vmem:[%s2 + $0x144] sm:$0xf]
  %v118 = vld [vmem:[%s2 + $0x148] sm:$0xf]
  %v119 = vld [vmem:[%s2 + $0x14c] sm:$0xf]
  %v120 = vld [vmem:[%s2 + $0x150] sm:$0xf]
  %v121 = vld [vmem:[%s2 + $0x154] sm:$0xf]
  %v122 = vld [vmem:[%s2 + $0x158] sm:$0xf]
  %v123 = vld [vmem:[%s2 + $0x15c] sm:$0xf]
  %v124 = vld [vmem:[%s2 + $0x160] sm:$0xf]
  %v125 = vld [vmem:[%s2 + $0x164] sm:$0xf]
  %v126 = vld [vmem:[%s2 + $0x168] sm:$0xf]
  %v127 = vld [vmem:[%s2 + $0x16c] sm:$0xf]
  %v128 = vld [vmem:[%s2 + $0x170] sm:$0xf]
  %v129 = vld [vmem:[%s2 + $0x174] sm:$0xf]
  %v130 = vld [vmem:[%s2 + $0x178] sm:$0xf]
  %v131 = vld [vmem:[%s2 + $0x17c] sm:$0xf]
  %v132 = vld [vmem:[%s2 + $0x180] sm:$0xf]
  %v133 = vld [vmem:[%s2 + $0x184] sm:$0xf]
  %v134 = vld [vmem:[%s2 + $0x188] sm:$0xf]
  %v135 = vld [vmem:[%s2 + $0x18c] sm:$0xf]
  %v136 = vld [vmem:[%s2 + $0x190] sm:$0xf]
  %v137 = vld [vmem:[%s2 + $0x194] sm:$0xf]
  %v138 = vld [vmem:[%s2 + $0x198] sm:$0xf]
  %v139 = vld [vmem:[%s2 + $0x19c] sm:$0xf]
  %v140 = vld [vmem:[%s2 + $0x1a0] sm:$0xf]
  %v141 = vld [vmem:[%s2 + $0x1a4] sm:$0xf]
  %v142 = vld [vmem:[%s2 + $0x1a8] sm:$0xf]
  %v143 = vld [vmem:[%s2 + $0x1ac] sm:$0xf]
  %v144 = vld [vmem:[%s2 + $0x1b0] sm:$0xf]
  %v145 = vld [vmem:[%s2 + $0x1b4] sm:$0xf]
  %v146 = vld [vmem:[%s2 + $0x1b8] sm:$0xf]
  %v147 = vld [vmem:[%s2 + $0x1bc] sm:$0xf]
  %v148 = vld [vmem:[%s2 + $0x1c0] sm:$0xf]
  %v149 = vld [vmem:[%s2 + $0x1c4] sm:$0xf]
  %v150 = vld [vmem:[%s2 + $0x1c8] sm:$0xf]
  %v151 = vld [vmem:[%s2 + $0x1cc] sm:$0xf]
  %v152 = vld [vmem:[%s2 + $0x1d0] sm:$0xf]
  %v153 = vld [vmem:[%s2 + $0x1d4] sm:$0xf]
  %v154 = vld [vmem:[%s2 + $0x1d8] sm:$0xf]
  %v155 = vld [vmem:[%s2 + $0x1dc] sm:$0xf]
  %v156 = vld [vmem:[%s2 + $0x1e0] sm:$0xf]
  %v157 = vld [vmem:[%s2 + $0x1e4] sm:$0xf]
  %v158 = vld [vmem:[%s2 + $0x1e8] sm:$0xf]
  %v159 = vld [vmem:[%s2 + $0x1ec] sm:$0xf]
  %v160 = vld [vmem:[%s2 + $0x1f0] sm:$0xf]
  %v161 = vld [vmem:[%s2 + $0x1f4] sm:$0xf]
  %v162 = vld [vmem:[%s2 + $0x1f8] sm:$0xf]
  %v163 = vld [vmem:[%s2 + $0x1fc] sm:$0xf]
  %v164 = vld [vmem:[%s2 + $0x200] sm:$0xf]
  %v165 = vld [vmem:[%s2 + $0x204] sm:$0xf]
  %v166 = vld [vmem:[%s2 + $0x208] sm:$0xf]
  %v167 = vld [vmem:[%s2 + $0x20c] sm:$0xf]
  %v168 = vld [vmem:[%s2 + $0x210] sm:$0xf]
  %v169 = vld [vmem:[%s2 + $0x214] sm:$0xf]
  %v170 = vld [vmem:[%s2 + $0x218] sm:$0xf]
  %v171 = vld [vmem:[%s2 + $0x21c] sm:$0xf]
  %v172 = vld [vmem:[%s2 + $0x220] sm:$0xf]
  %v173 = vld [vmem:[%s2 + $0x224] sm:$0xf]
  %v174 = vld [vmem:[%s2 + $0x228] sm:$0xf]
  %v175 = vld [vmem:[%s2 + $0x22c] sm:$0xf]
  %v176 = vld [vmem:[%s2 + $0x230] sm:$0xf]
  %v177 = vld [vmem:[%s2 + $0x234] sm:$0xf]
  %v178 = vld [vmem:[%s2 + $0x238] sm:$0xf]
  %v179 = vld [vmem:[%s2 + $0x23c] sm:$0xf]
  %v180 = vld [vmem:[%s3] sm:$0x1]
  %v182 = vlaneseq
  %v183 = vshrl.u32 %v182, 7
  %v184 = vsub.s32 0, %v183
  %v185 = vrot.slane %v180, %v184
  %v189 = vcombine.high %v34, %v34
  %v191 = vunpack.c.l.s4 1966171168
  %v192 = vunpack.c.0.s8 %v191
  %v193 = vlaneseq
  %v194 = vshrl.u32 %v193, 7
  %v195 = vsub.s32 %v192, %v194
  %v196 = vrot.slane %v34, %v195
  %v198 = vunpack.c.l.s4 1966171168
  %v199 = vunpack.c.0.s8 %v198
  %v200 = vlaneseq
  %v201 = vshrl.u32 %v200, 7
  %v202 = vsub.s32 %v199, %v201
  %v203 = vrot.slane %v189, %v202
  %v204 = vcombine.high %v196, %v196
  %v205 = vcombine.high %v203, %v203
  %v207 = vunpack.c.l.s4 1966171168
  %v208 = vunpack.c.0.s8 %v207
  %v209 = vlaneseq
  %v210 = vshrl.u32 %v209, 7
  %v211 = vsub.s32 %v208, %v210
  %v212 = vrot.slane %v196, %v211
  %v214 = vunpack.c.l.s4 1966171168
  %v215 = vunpack.c.0.s8 %v214
  %v216 = vlaneseq
  %v217 = vshrl.u32 %v216, 7
  %v218 = vsub.s32 %v215, %v217
  %v219 = vrot.slane %v203, %v218
  %v221 = vunpack.c.l.s4 1966171168
  %v222 = vunpack.c.0.s8 %v221
  %v223 = vlaneseq
  %v224 = vshrl.u32 %v223, 7
  %v225 = vsub.s32 %v222, %v224
  %v226 = vrot.slane %v204, %v225
  %v228 = vunpack.c.l.s4 1966171168
  %v229 = vunpack.c.0.s8 %v228
  %v230 = vlaneseq
  %v231 = vshrl.u32 %v230, 7
  %v232 = vsub.s32 %v229, %v231
  %v233 = vrot.slane %v205, %v232
  %v234 = vcombine.high %v212, %v212
  %v235 = vcombine.high %v219, %v219
  %v236 = vcombine.high %v226, %v226
  %v237 = vcombine.high %v233, %v233
  %v239 = vunpack.c.l.s4 1966171168
  %v240 = vunpack.c.0.s8 %v239
  %v241 = vlaneseq
  %v242 = vshrl.u32 %v241, 7
  %v243 = vsub.s32 %v240, %v242
  %v244 = vrot.slane %v35, %v243
  %v246 = vunpack.c.l.s4 1966171168
  %v247 = vunpack.c.0.s8 %v246
  %v248 = vlaneseq
  %v249 = vshrl.u32 %v248, 7
  %v250 = vsub.s32 %v247, %v249
  %v251 = vrot.slane %v244, %v250
  %v405 = vunpack.c.l.b16 %v36
  %v406 = vunpack.c.l.b16 %v37
  %v407 = vunpack.c.l.b16 %v38
  %v408 = vunpack.c.l.b16 %v39
  %v409 = vunpack.c.l.b16 %v40
  %v410 = vunpack.c.l.b16 %v41
  %v411 = vunpack.c.l.b16 %v42
  %v412 = vunpack.c.l.b16 %v43
  %v413 = vunpack.c.l.b16 %v44
  %v414 = vunpack.c.l.b16 %v45
  %v415 = vunpack.c.l.b16 %v46
  %v416 = vunpack.c.l.b16 %v47
  %v417 = vunpack.c.l.b16 %v48
  %v418 = vunpack.c.l.b16 %v49
  %v419 = vunpack.c.l.b16 %v50
  %v420 = vunpack.c.l.b16 %v51
  %v421 = vunpack.c.l.b16 %v52
  %v422 = vunpack.c.l.b16 %v53
  %v423 = vunpack.c.l.b16 %v54
  %v424 = vunpack.c.l.b16 %v55
  %v425 = vunpack.c.l.b16 %v56
  %v426 = vunpack.c.l.b16 %v57
  %v427 = vunpack.c.l.b16 %v58
  %v428 = vunpack.c.l.b16 %v59
  %v429 = vunpack.c.l.b16 %v60
  %v430 = vunpack.c.l.b16 %v61
  %v431 = vunpack.c.l.b16 %v62
  %v432 = vunpack.c.l.b16 %v63
  %v433 = vunpack.c.l.b16 %v64
  %v434 = vunpack.c.l.b16 %v65
  %v435 = vunpack.c.l.b16 %v66
  %v436 = vunpack.c.l.b16 %v67
  %v437 = vunpack.c.l.b16 %v68
  %v438 = vunpack.c.l.b16 %v69
  %v439 = vunpack.c.l.b16 %v70
  %v440 = vunpack.c.l.b16 %v71
  %v441 = vunpack.c.l.b16 %v72
  %v442 = vunpack.c.l.b16 %v73
  %v443 = vunpack.c.l.b16 %v74
  %v444 = vunpack.c.l.b16 %v75
  %v445 = vunpack.c.l.b16 %v76
  %v446 = vunpack.c.l.b16 %v77
  %v447 = vunpack.c.l.b16 %v78
  %v448 = vunpack.c.l.b16 %v79
  %v449 = vunpack.c.l.b16 %v80
  %v450 = vunpack.c.l.b16 %v81
  %v451 = vunpack.c.l.b16 %v82
  %v452 = vunpack.c.l.b16 %v83
  %v453 = vunpack.c.l.b16 %v84
  %v454 = vunpack.c.l.b16 %v85
  %v455 = vunpack.c.l.b16 %v86
  %v456 = vunpack.c.l.b16 %v87
  %v457 = vunpack.c.l.b16 %v88
  %v458 = vunpack.c.l.b16 %v89
  %v459 = vunpack.c.l.b16 %v90
  %v460 = vunpack.c.l.b16 %v91
  %v461 = vunpack.c.l.b16 %v92
  %v462 = vunpack.c.l.b16 %v93
  %v463 = vunpack.c.l.b16 %v94
  %v464 = vunpack.c.l.b16 %v95
  %v465 = vunpack.c.l.b16 %v96
  %v466 = vunpack.c.l.b16 %v97
  %v467 = vunpack.c.l.b16 %v98
  %v468 = vunpack.c.l.b16 %v99
  %v469 = vunpack.c.l.b16 %v100
  %v470 = vunpack.c.l.b16 %v101
  %v471 = vunpack.c.l.b16 %v102
  %v472 = vunpack.c.l.b16 %v103
  %v473 = vunpack.c.l.b16 %v104
  %v474 = vunpack.c.l.b16 %v105
  %v475 = vunpack.c.l.b16 %v106
  %v476 = vunpack.c.l.b16 %v107
  %v477 = vunpack.c.l.b16 %v108
  %v478 = vunpack.c.l.b16 %v109
  %v479 = vunpack.c.l.b16 %v110
  %v480 = vunpack.c.l.b16 %v111
  %v481 = vunpack.c.l.b16 %v112
  %v482 = vunpack.c.l.b16 %v113
  %v483 = vunpack.c.l.b16 %v114
  %v484 = vunpack.c.l.b16 %v115
  %v485 = vunpack.c.l.b16 %v116
  %v486 = vunpack.c.l.b16 %v117
  %v487 = vunpack.c.l.b16 %v118
  %v488 = vunpack.c.l.b16 %v119
  %v489 = vunpack.c.l.b16 %v120
  %v490 = vunpack.c.l.b16 %v121
  %v491 = vunpack.c.l.b16 %v122
  %v492 = vunpack.c.l.b16 %v123
  %v493 = vunpack.c.l.b16 %v124
  %v494 = vunpack.c.l.b16 %v125
  %v495 = vunpack.c.l.b16 %v126
  %v496 = vunpack.c.l.b16 %v127
  %v497 = vunpack.c.l.b16 %v128
  %v498 = vunpack.c.l.b16 %v129
  %v499 = vunpack.c.l.b16 %v130
  %v500 = vunpack.c.l.b16 %v131
  %v501 = vunpack.c.l.b16 %v132
  %v502 = vunpack.c.l.b16 %v133
  %v503 = vunpack.c.l.b16 %v134
  %v504 = vunpack.c.l.b16 %v135
  %v505 = vunpack.c.l.b16 %v136
  %v506 = vunpack.c.l.b16 %v137
  %v507 = vunpack.c.l.b16 %v138
  %v508 = vunpack.c.l.b16 %v139
  %v509 = vunpack.c.l.b16 %v140
  %v510 = vunpack.c.l.b16 %v141
  %v511 = vunpack.c.l.b16 %v142
  %v512 = vunpack.c.l.b16 %v143
  %v513 = vunpack.c.l.b16 %v144
  %v514 = vunpack.c.l.b16 %v145
  %v515 = vunpack.c.l.b16 %v146
  %v516 = vunpack.c.l.b16 %v147
  %v517 = vunpack.c.l.b16 %v148
  %v518 = vunpack.c.l.b16 %v149
  %v519 = vunpack.c.l.b16 %v150
  %v520 = vunpack.c.l.b16 %v151
  %v521 = vunpack.c.l.b16 %v152
  %v522 = vunpack.c.l.b16 %v153
  %v523 = vunpack.c.l.b16 %v154
  %v524 = vunpack.c.l.b16 %v155
  %v525 = vunpack.c.l.b16 %v156
  %v526 = vunpack.c.l.b16 %v157
  %v527 = vunpack.c.l.b16 %v158
  %v528 = vunpack.c.l.b16 %v159
  %v529 = vunpack.c.l.b16 %v160
  %v530 = vunpack.c.l.b16 %v161
  %v531 = vunpack.c.l.b16 %v162
  %v532 = vunpack.c.l.b16 %v163
  %v533 = vunpack.c.l.b16 %v164
  %v534 = vunpack.c.l.b16 %v165
  %v535 = vunpack.c.l.b16 %v166
  %v536 = vunpack.c.l.b16 %v167
  %v537 = vunpack.c.l.b16 %v168
  %v538 = vunpack.c.l.b16 %v169
  %v539 = vunpack.c.l.b16 %v170
  %v540 = vunpack.c.l.b16 %v171
  %v541 = vunpack.c.l.b16 %v172
  %v542 = vunpack.c.l.b16 %v173
  %v543 = vunpack.c.l.b16 %v174
  %v544 = vunpack.c.l.b16 %v175
  %v545 = vunpack.c.l.b16 %v176
  %v546 = vunpack.c.l.b16 %v177
  %v547 = vunpack.c.l.b16 %v178
  %v548 = vunpack.c.l.b16 %v179
  %v549 = vpack.c.b16 %v406, %v405
  %v550 = vpack.c.b16 %v408, %v407
  %v551 = vpack.c.b16 %v410, %v409
  %v552 = vpack.c.b16 %v412, %v411
  %v553 = vpack.c.b16 %v414, %v413
  %v554 = vpack.c.b16 %v416, %v415
  %v555 = vpack.c.b16 %v418, %v417
  %v556 = vpack.c.b16 %v420, %v419
  %v557 = vpack.c.b16 %v422, %v421
  %v558 = vpack.c.b16 %v424, %v423
  %v559 = vpack.c.b16 %v426, %v425
  %v560 = vpack.c.b16 %v428, %v427
  %v561 = vpack.c.b16 %v430, %v429
  %v562 = vpack.c.b16 %v432, %v431
  %v563 = vpack.c.b16 %v434, %v433
  %v564 = vpack.c.b16 %v436, %v435
  %v565 = vpack.c.b16 %v438, %v437
  %v566 = vpack.c.b16 %v440, %v439
  %v567 = vpack.c.b16 %v442, %v441
  %v568 = vpack.c.b16 %v444, %v443
  %v569 = vpack.c.b16 %v446, %v445
  %v570 = vpack.c.b16 %v448, %v447
  %v571 = vpack.c.b16 %v450, %v449
  %v572 = vpack.c.b16 %v452, %v451
  %v573 = vpack.c.b16 %v454, %v453
  %v574 = vpack.c.b16 %v456, %v455
  %v575 = vpack.c.b16 %v458, %v457
  %v576 = vpack.c.b16 %v460, %v459
  %v577 = vpack.c.b16 %v462, %v461
  %v578 = vpack.c.b16 %v464, %v463
  %v579 = vpack.c.b16 %v466, %v465
  %v580 = vpack.c.b16 %v468, %v467
  %v581 = vpack.c.b16 %v470, %v469
  %v582 = vpack.c.b16 %v472, %v471
  %v583 = vpack.c.b16 %v474, %v473
  %v584 = vpack.c.b16 %v476, %v475
  %v585 = vpack.c.b16 %v478, %v477
  %v586 = vpack.c.b16 %v480, %v479
  %v587 = vpack.c.b16 %v482, %v481
  %v588 = vpack.c.b16 %v484, %v483
  %v589 = vpack.c.b16 %v486, %v485
  %v590 = vpack.c.b16 %v488, %v487
  %v591 = vpack.c.b16 %v490, %v489
  %v592 = vpack.c.b16 %v492, %v491
  %v593 = vpack.c.b16 %v494, %v493
  %v594 = vpack.c.b16 %v496, %v495
  %v595 = vpack.c.b16 %v498, %v497
  %v596 = vpack.c.b16 %v500, %v499
  %v597 = vpack.c.b16 %v502, %v501
  %v598 = vpack.c.b16 %v504, %v503
  %v599 = vpack.c.b16 %v506, %v505
  %v600 = vpack.c.b16 %v508, %v507
  %v601 = vpack.c.b16 %v510, %v509
  %v602 = vpack.c.b16 %v512, %v511
  %v603 = vpack.c.b16 %v514, %v513
  %v604 = vpack.c.b16 %v516, %v515
  %v605 = vpack.c.b16 %v518, %v517
  %v606 = vpack.c.b16 %v520, %v519
  %v607 = vpack.c.b16 %v522, %v521
  %v608 = vpack.c.b16 %v524, %v523
  %v609 = vpack.c.b16 %v526, %v525
  %v610 = vpack.c.b16 %v528, %v527
  %v611 = vpack.c.b16 %v530, %v529
  %v612 = vpack.c.b16 %v532, %v531
  %v613 = vpack.c.b16 %v534, %v533
  %v614 = vpack.c.b16 %v536, %v535
  %v615 = vpack.c.b16 %v538, %v537
  %v616 = vpack.c.b16 %v540, %v539
  %v617 = vpack.c.b16 %v542, %v541
  %v618 = vpack.c.b16 %v544, %v543
  %v619 = vpack.c.b16 %v546, %v545
  %v620 = vpack.c.b16 %v548, %v547
  %693 = vmatprep.subr.bf16.mxu0 0
  %694 = vmatpush1.bf16.msra.mxu0 %v549
  %695 = vmatprep.subr.bf16.mxu0 0
  %696 = vmatpush1.bf16.msra.mxu0 %v550
  %697 = vmatprep.subr.bf16.mxu0 0
  %698 = vmatpush1.bf16.msra.mxu0 %v551
  %699 = vmatprep.subr.bf16.mxu0 0
  %700 = vmatpush1.bf16.msra.mxu0 %v552
  %701 = vmatprep.subr.bf16.mxu0 0
  %702 = vmatpush1.bf16.msra.mxu0 %v553
  %703 = vmatprep.subr.bf16.mxu0 0
  %704 = vmatpush1.bf16.msra.mxu0 %v554
  %705 = vmatprep.subr.bf16.mxu0 0
  %706 = vmatpush1.bf16.msra.mxu0 %v555
  %707 = vmatprep.subr.bf16.mxu0 0
  %708 = vmatpush1.bf16.msra.mxu0 %v556
  %709 = vmatprep.subr.bf16.mxu0 0
  %710 = vmatpush1.bf16.msra.mxu0 %v557
  %711 = vmatprep.subr.bf16.mxu0 0
  %712 = vmatpush1.bf16.msra.mxu0 %v558
  %713 = vmatprep.subr.bf16.mxu0 0
  %714 = vmatpush1.bf16.msra.mxu0 %v559
  %715 = vmatprep.subr.bf16.mxu0 0
  %716 = vmatpush1.bf16.msra.mxu0 %v560
  %717 = vmatprep.subr.bf16.mxu0 0
  %718 = vmatpush1.bf16.msra.mxu0 %v561
  %719 = vmatprep.subr.bf16.mxu0 0
  %720 = vmatpush1.bf16.msra.mxu0 %v562
  %721 = vmatprep.subr.bf16.mxu0 0
  %722 = vmatpush1.bf16.msra.mxu0 %v563
  %723 = vmatprep.subr.bf16.mxu0 0
  %724 = vmatpush1.bf16.msra.mxu0 %v564
  %725 = vmatprep.mubr.bf16.mxu0 %v226
  %726 = vmatmul.mubr.bf16.gmra.mrb[0].mxu0 %v212
  %v727 = vpop.f32.mrb[0].mxu0
  %v728 = vadd.f32 %v185, %v727
  %v729 = vpop.f32.mrb[0].mxu0
  %v730 = vpop.f32.mrb[0].mxu0
  %v731 = vpop.f32.mrb[0].mxu0
  %732 = vdwg.mxu0
  %733 = vmatprep.subr.bf16.mxu0 0
  %734 = vmatpush1.bf16.msra.mxu0 %v565
  %735 = vmatprep.subr.bf16.mxu0 0
  %736 = vmatpush1.bf16.msra.mxu0 %v566
  %737 = vmatprep.subr.bf16.mxu0 0
  %738 = vmatpush1.bf16.msra.mxu0 %v567
  %739 = vmatprep.subr.bf16.mxu0 0
  %740 = vmatpush1.bf16.msra.mxu0 %v568
  %741 = vmatprep.subr.bf16.mxu0 0
  %742 = vmatpush1.bf16.msra.mxu0 %v569
  %743 = vmatprep.subr.bf16.mxu0 0
  %744 = vmatpush1.bf16.msra.mxu0 %v570
  %745 = vmatprep.subr.bf16.mxu0 0
  %746 = vmatpush1.bf16.msra.mxu0 %v571
  %747 = vmatprep.subr.bf16.mxu0 0
  %748 = vmatpush1.bf16.msra.mxu0 %v572
  %749 = vmatprep.subr.bf16.mxu0 0
  %750 = vmatpush1.bf16.msra.mxu0 %v573
  %751 = vmatprep.subr.bf16.mxu0 0
  %752 = vmatpush1.bf16.msra.mxu0 %v574
  %753 = vmatprep.subr.bf16.mxu0 0
  %754 = vmatpush1.bf16.msra.mxu0 %v575
  %755 = vmatprep.subr.bf16.mxu0 0
  %756 = vmatpush1.bf16.msra.mxu0 %v576
  %757 = vmatprep.subr.bf16.mxu0 0
  %758 = vmatpush1.bf16.msra.mxu0 %v577
  %759 = vmatprep.subr.bf16.mxu0 0
  %760 = vmatpush1.bf16.msra.mxu0 %v578
  %761 = vmatprep.subr.bf16.mxu0 0
  %762 = vmatpush1.bf16.msra.mxu0 %v579
  %763 = vmatprep.subr.bf16.mxu0 0
  %764 = vmatpush1.bf16.msra.mxu0 %v580
  %765 = vmatprep.mubr.bf16.mxu0 %v236
  %766 = vmatmul.mubr.bf16.gmra.mrb[0].mxu0 %v234
  %v767 = vpop.f32.mrb[0].mxu0
  %v768 = vadd.f32 %v728, %v767
  %v769 = vpop.f32.mrb[0].mxu0
  %v770 = vpop.f32.mrb[0].mxu0
  %v771 = vpop.f32.mrb[0].mxu0
  %772 = vdwg.mxu0
  %773 = vmatprep.subr.bf16.mxu0 0
  %774 = vmatpush1.bf16.msra.mxu0 %v581
  %775 = vmatprep.subr.bf16.mxu0 0
  %776 = vmatpush1.bf16.msra.mxu0 %v582
  %777 = vmatprep.subr.bf16.mxu0 0
  %778 = vmatpush1.bf16.msra.mxu0 %v583
  %779 = vmatprep.subr.bf16.mxu0 0
  %780 = vmatpush1.bf16.msra.mxu0 %v584
  %781 = vmatprep.subr.bf16.mxu0 0
  %782 = vmatpush1.bf16.msra.mxu0 %v585
  %783 = vmatprep.subr.bf16.mxu0 0
  %784 = vmatpush1.bf16.msra.mxu0 %v586
  %785 = vmatprep.subr.bf16.mxu0 0
  %786 = vmatpush1.bf16.msra.mxu0 %v587
  %787 = vmatprep.subr.bf16.mxu0 0
  %788 = vmatpush1.bf16.msra.mxu0 %v588
  %789 = vmatprep.subr.bf16.mxu0 0
  %790 = vmatpush1.bf16.msra.mxu0 %v589
  %791 = vmatprep.subr.bf16.mxu0 0
  %792 = vmatpush1.bf16.msra.mxu0 %v590
  %793 = vmatprep.subr.bf16.mxu0 0
  %794 = vmatpush1.bf16.msra.mxu0 %v591
  %795 = vmatprep.subr.bf16.mxu0 0
  %796 = vmatpush1.bf16.msra.mxu0 %v592
  %797 = vmatprep.subr.bf16.mxu0 0
  %798 = vmatpush1.bf16.msra.mxu0 %v593
  %799 = vmatprep.subr.bf16.mxu0 0
  %800 = vmatpush1.bf16.msra.mxu0 %v594
  %801 = vmatprep.subr.bf16.mxu0 0
  %802 = vmatpush1.bf16.msra.mxu0 %v595
  %803 = vmatprep.subr.bf16.mxu0 0
  %804 = vmatpush1.bf16.msra.mxu0 %v596
  %805 = vmatprep.mubr.bf16.mxu0 %v233
  %806 = vmatmul.mubr.bf16.gmra.mrb[0].mxu0 %v219
  %v807 = vpop.f32.mrb[0].mxu0
  %v808 = vadd.f32 %v768, %v807
  %v809 = vpop.f32.mrb[0].mxu0
  %v810 = vpop.f32.mrb[0].mxu0
  %v811 = vpop.f32.mrb[0].mxu0
  %812 = vdwg.mxu0
  %813 = vmatprep.subr.bf16.mxu0 0
  %814 = vmatpush1.bf16.msra.mxu0 %v597
  %815 = vmatprep.subr.bf16.mxu0 0
  %816 = vmatpush1.bf16.msra.mxu0 %v598
  %817 = vmatprep.subr.bf16.mxu0 0
  %818 = vmatpush1.bf16.msra.mxu0 %v599
  %819 = vmatprep.subr.bf16.mxu0 0
  %820 = vmatpush1.bf16.msra.mxu0 %v600
  %821 = vmatprep.subr.bf16.mxu0 0
  %822 = vmatpush1.bf16.msra.mxu0 %v601
  %823 = vmatprep.subr.bf16.mxu0 0
  %824 = vmatpush1.bf16.msra.mxu0 %v602
  %825 = vmatprep.subr.bf16.mxu0 0
  %826 = vmatpush1.bf16.msra.mxu0 %v603
  %827 = vmatprep.subr.bf16.mxu0 0
  %828 = vmatpush1.bf16.msra.mxu0 %v604
  %829 = vmatprep.subr.bf16.mxu0 0
  %830 = vmatpush1.bf16.msra.mxu0 %v605
  %831 = vmatprep.subr.bf16.mxu0 0
  %832 = vmatpush1.bf16.msra.mxu0 %v606
  %833 = vmatprep.subr.bf16.mxu0 0
  %834 = vmatpush1.bf16.msra.mxu0 %v607
  %835 = vmatprep.subr.bf16.mxu0 0
  %836 = vmatpush1.bf16.msra.mxu0 %v608
  %837 = vmatprep.subr.bf16.mxu0 0
  %838 = vmatpush1.bf16.msra.mxu0 %v609
  %839 = vmatprep.subr.bf16.mxu0 0
  %840 = vmatpush1.bf16.msra.mxu0 %v610
  %841 = vmatprep.subr.bf16.mxu0 0
  %842 = vmatpush1.bf16.msra.mxu0 %v611
  %843 = vmatprep.subr.bf16.mxu0 0
  %844 = vmatpush1.bf16.msra.mxu0 %v612
  %845 = vmatprep.mubr.bf16.mxu0 %v237
  %846 = vmatmul.mubr.bf16.gmra.mrb[0].mxu0 %v235
  %v847 = vpop.f32.mrb[0].mxu0
  %v848 = vadd.f32 %v808, %v847
  %v849 = vpop.f32.mrb[0].mxu0
  %v850 = vpop.f32.mrb[0].mxu0
  %v851 = vpop.f32.mrb[0].mxu0
  %852 = vdwg.mxu0
  %853 = vmatprep.subr.bf16.mxu0 0
  %854 = vmatpush1.bf16.msra.mxu0 %v613
  %855 = vmatprep.subr.bf16.mxu0 0
  %856 = vmatpush1.bf16.msra.mxu0 %v614
  %857 = vmatprep.subr.bf16.mxu0 0
  %858 = vmatpush1.bf16.msra.mxu0 %v615
  %859 = vmatprep.subr.bf16.mxu0 0
  %860 = vmatpush1.bf16.msra.mxu0 %v616
  %861 = vmatprep.subr.bf16.mxu0 0
  %862 = vmatpush1.bf16.msra.mxu0 %v617
  %863 = vmatprep.subr.bf16.mxu0 0
  %864 = vmatpush1.bf16.msra.mxu0 %v618
  %865 = vmatprep.subr.bf16.mxu0 0
  %866 = vmatpush1.bf16.msra.mxu0 %v619
  %867 = vmatprep.subr.bf16.mxu0 0
  %868 = vmatpush1.bf16.msra.mxu0 %v620
  %869 = vmatprep.subr.bf16.mxu0 0
  %870 = vmatpush1.bf16.msra.mxu0 0
  %871 = vmatprep.subr.bf16.mxu0 0
  %872 = vmatpush1.bf16.msra.mxu0 0
  %873 = vmatprep.subr.bf16.mxu0 0
  %874 = vmatpush1.bf16.msra.mxu0 0
  %875 = vmatprep.subr.bf16.mxu0 0
  %876 = vmatpush1.bf16.msra.mxu0 0
  %877 = vmatprep.subr.bf16.mxu0 0
  %878 = vmatpush1.bf16.msra.mxu0 0
  %879 = vmatprep.subr.bf16.mxu0 0
  %880 = vmatpush1.bf16.msra.mxu0 0
  %881 = vmatprep.subr.bf16.mxu0 0
  %882 = vmatpush1.bf16.msra.mxu0 0
  %883 = vmatprep.subr.bf16.mxu0 0
  %884 = vmatpush1.bf16.msra.mxu0 0
  %885 = vmatprep.mubr.bf16.mxu0 0
  %886 = vmatmul.mubr.bf16.gmra.mrb[0].mxu0 %v251
  %v887 = vpop.f32.mrb[0].mxu0
  %v888 = vadd.f32 %v848, %v887
  %v889 = vpop.f32.mrb[0].mxu0
  %v890 = vpop.f32.mrb[0].mxu0
  %v891 = vpop.f32.mrb[0].mxu0
  %892 = vdwg.mxu0
  %vm893 = vcmp.gt.f32.partialorder %v888, 0.0
  %v894 = vmul.f32 %v888, 0.01
  %v895 = vsel %vm893, %v888, %v894
  %v896 = vpack.c.bf16 %v895, %v895
  %v897 = vld [vmem:[%s4] sm:$0xf]
  %v898 = vld [vmem:[%s4 + $0x4] sm:$0xf]
  %v899 = vld [vmem:[%s4 + $0x8] sm:$0xf]
  %v900 = vld [vmem:[%s4 + $0xc] sm:$0xf]
  %v901 = vld [vmem:[%s4 + $0x10] sm:$0xf]
  %v902 = vld [vmem:[%s4 + $0x14] sm:$0xf]
  %v903 = vld [vmem:[%s4 + $0x18] sm:$0xf]
  %v904 = vld [vmem:[%s4 + $0x1c] sm:$0xf]
  %v905 = vld [vmem:[%s4 + $0x20] sm:$0xf]
  %v906 = vld [vmem:[%s4 + $0x24] sm:$0xf]
  %v907 = vld [vmem:[%s4 + $0x28] sm:$0xf]
  %v908 = vld [vmem:[%s4 + $0x2c] sm:$0xf]
  %v909 = vld [vmem:[%s4 + $0x30] sm:$0xf]
  %v910 = vld [vmem:[%s4 + $0x34] sm:$0xf]
  %v911 = vld [vmem:[%s4 + $0x38] sm:$0xf]
  %v912 = vld [vmem:[%s4 + $0x3c] sm:$0xf]
  %v913 = vld [vmem:[%s1] sm:$0x1]
  %v914 = vld [vmem:[%s5] sm:$0xf]
  %v915 = vld [vmem:[%s5 + $0x4] sm:$0xf]
  %v916 = vld [vmem:[%s5 + $0x8] sm:$0xf]
  %v917 = vld [vmem:[%s5 + $0xc] sm:$0xf]
  %v918 = vld [vmem:[%s5 + $0x10] sm:$0xf]
  %v919 = vld [vmem:[%s5 + $0x14] sm:$0xf]
  %v920 = vld [vmem:[%s5 + $0x18] sm:$0xf]
  %v921 = vld [vmem:[%s5 + $0x1c] sm:$0xf]
  %v922 = vld [vmem:[%s5 + $0x20] sm:$0xf]
  %v923 = vld [vmem:[%s5 + $0x24] sm:$0xf]
  %v924 = vld [vmem:[%s5 + $0x28] sm:$0xf]
  %v925 = vld [vmem:[%s5 + $0x2c] sm:$0xf]
  %v926 = vld [vmem:[%s5 + $0x30] sm:$0xf]
  %v927 = vld [vmem:[%s5 + $0x34] sm:$0xf]
  %v928 = vld [vmem:[%s5 + $0x38] sm:$0xf]
  %v929 = vld [vmem:[%s5 + $0x3c] sm:$0xf]
  %v946 = vunpack.c.l.b16 %v914
  %v947 = vunpack.c.l.b16 %v915
  %v948 = vunpack.c.l.b16 %v916
  %v949 = vunpack.c.l.b16 %v917
  %v950 = vunpack.c.l.b16 %v918
  %v951 = vunpack.c.l.b16 %v919
  %v952 = vunpack.c.l.b16 %v920
  %v953 = vunpack.c.l.b16 %v921
  %v954 = vunpack.c.l.b16 %v922
  %v955 = vunpack.c.l.b16 %v923
  %v956 = vunpack.c.l.b16 %v924
  %v957 = vunpack.c.l.b16 %v925
  %v958 = vunpack.c.l.b16 %v926
  %v959 = vunpack.c.l.b16 %v927
  %v960 = vunpack.c.l.b16 %v928
  %v961 = vunpack.c.l.b16 %v929
  %v962 = vpack.c.b16 %v947, %v946
  %v963 = vpack.c.b16 %v949, %v948
  %v964 = vpack.c.b16 %v951, %v950
  %v965 = vpack.c.b16 %v953, %v952
  %v966 = vpack.c.b16 %v955, %v954
  %v967 = vpack.c.b16 %v957, %v956
  %v968 = vpack.c.b16 %v959, %v958
  %v969 = vpack.c.b16 %v961, %v960
  %978 = vmatprep.subr.bf16.mxu0 0
  %979 = vmatpush1.bf16.msra.mxu0 %v962
  %980 = vmatprep.subr.bf16.mxu0 0
  %981 = vmatpush1.bf16.msra.mxu0 %v963
  %982 = vmatprep.subr.bf16.mxu0 0
  %983 = vmatpush1.bf16.msra.mxu0 %v964
  %984 = vmatprep.subr.bf16.mxu0 0
  %985 = vmatpush1.bf16.msra.mxu0 %v965
  %986 = vmatprep.subr.bf16.mxu0 0
  %987 = vmatpush1.bf16.msra.mxu0 %v966
  %988 = vmatprep.subr.bf16.mxu0 0
  %989 = vmatpush1.bf16.msra.mxu0 %v967
  %990 = vmatprep.subr.bf16.mxu0 0
  %991 = vmatpush1.bf16.msra.mxu0 %v968
  %992 = vmatprep.subr.bf16.mxu0 0
  %993 = vmatpush1.bf16.msra.mxu0 %v969
  %994 = vmatprep.subr.bf16.mxu0 0
  %995 = vmatpush1.bf16.msra.mxu0 0
  %996 = vmatprep.subr.bf16.mxu0 0
  %997 = vmatpush1.bf16.msra.mxu0 0
  %998 = vmatprep.subr.bf16.mxu0 0
  %999 = vmatpush1.bf16.msra.mxu0 0
  %1000 = vmatprep.subr.bf16.mxu0 0
  %1001 = vmatpush1.bf16.msra.mxu0 0
  %1002 = vmatprep.subr.bf16.mxu0 0
  %1003 = vmatpush1.bf16.msra.mxu0 0
  %1004 = vmatprep.subr.bf16.mxu0 0
  %1005 = vmatpush1.bf16.msra.mxu0 0
  %1006 = vmatprep.subr.bf16.mxu0 0
  %1007 = vmatpush1.bf16.msra.mxu0 0
  %1008 = vmatprep.subr.bf16.mxu0 0
  %1009 = vmatpush1.bf16.msra.mxu0 0
  %1010 = vmatprep.mubr.bf16.mxu0 0
  %1011 = vmatmul.mubr.bf16.gmra.mrb[0].mxu0 %v913
  %v1012 = vpop.f32.mrb[0].mxu0
  %v1013 = vadd.f32 0.0, %v1012
  %v1014 = vpop.f32.mrb[0].mxu0
  %v1015 = vpop.f32.mrb[0].mxu0
  %v1016 = vpop.f32.mrb[0].mxu0
  %1017 = vdwg.mxu0
  %v1034 = vunpack.c.l.b16 %v897
  %v1035 = vunpack.c.l.b16 %v898
  %v1036 = vunpack.c.l.b16 %v899
  %v1037 = vunpack.c.l.b16 %v900
  %v1038 = vunpack.c.l.b16 %v901
  %v1039 = vunpack.c.l.b16 %v902
  %v1040 = vunpack.c.l.b16 %v903
  %v1041 = vunpack.c.l.b16 %v904
  %v1042 = vunpack.c.l.b16 %v905
  %v1043 = vunpack.c.l.b16 %v906
  %v1044 = vunpack.c.l.b16 %v907
  %v1045 = vunpack.c.l.b16 %v908
  %v1046 = vunpack.c.l.b16 %v909
  %v1047 = vunpack.c.l.b16 %v910
  %v1048 = vunpack.c.l.b16 %v911
  %v1049 = vunpack.c.l.b16 %v912
  %v1050 = vpack.c.b16 %v1035, %v1034
  %v1051 = vpack.c.b16 %v1037, %v1036
  %v1052 = vpack.c.b16 %v1039, %v1038
  %v1053 = vpack.c.b16 %v1041, %v1040
  %v1054 = vpack.c.b16 %v1043, %v1042
  %v1055 = vpack.c.b16 %v1045, %v1044
  %v1056 = vpack.c.b16 %v1047, %v1046
  %v1057 = vpack.c.b16 %v1049, %v1048
  %1066 = vmatprep.subr.bf16.mxu0 0
  %1067 = vmatpush1.bf16.msra.mxu0 %v1050
  %1068 = vmatprep.subr.bf16.mxu0 0
  %1069 = vmatpush1.bf16.msra.mxu0 %v1051
  %1070 = vmatprep.subr.bf16.mxu0 0
  %1071 = vmatpush1.bf16.msra.mxu0 %v1052
  %1072 = vmatprep.subr.bf16.mxu0 0
  %1073 = vmatpush1.bf16.msra.mxu0 %v1053
  %1074 = vmatprep.subr.bf16.mxu0 0
  %1075 = vmatpush1.bf16.msra.mxu0 %v1054
  %1076 = vmatprep.subr.bf16.mxu0 0
  %1077 = vmatpush1.bf16.msra.mxu0 %v1055
  %1078 = vmatprep.subr.bf16.mxu0 0
  %1079 = vmatpush1.bf16.msra.mxu0 %v1056
  %1080 = vmatprep.subr.bf16.mxu0 0
  %1081 = vmatpush1.bf16.msra.mxu0 %v1057
  %1082 = vmatprep.subr.bf16.mxu0 0
  %1083 = vmatpush1.bf16.msra.mxu0 0
  %1084 = vmatprep.subr.bf16.mxu0 0
  %1085 = vmatpush1.bf16.msra.mxu0 0
  %1086 = vmatprep.subr.bf16.mxu0 0
  %1087 = vmatpush1.bf16.msra.mxu0 0
  %1088 = vmatprep.subr.bf16.mxu0 0
  %1089 = vmatpush1.bf16.msra.mxu0 0
  %1090 = vmatprep.subr.bf16.mxu0 0
  %1091 = vmatpush1.bf16.msra.mxu0 0
  %1092 = vmatprep.subr.bf16.mxu0 0
  %1093 = vmatpush1.bf16.msra.mxu0 0
  %1094 = vmatprep.subr.bf16.mxu0 0
  %1095 = vmatpush1.bf16.msra.mxu0 0
  %1096 = vmatprep.subr.bf16.mxu0 0
  %1097 = vmatpush1.bf16.msra.mxu0 0
  %1098 = vmatprep.mubr.bf16.mxu0 0
  %1099 = vmatmul.mubr.bf16.gmra.mrb[0].mxu0 %v896
  %v1100 = vpop.f32.mrb[0].mxu0
  %v1101 = vadd.f32 %v1013, %v1100
  %v1102 = vpop.f32.mrb[0].mxu0
  %v1103 = vpop.f32.mrb[0].mxu0
  %v1104 = vpop.f32.mrb[0].mxu0
  %1105 = vdwg.mxu0
  %v1106 = vld [vmem:[%s6] sm:$0x1]
  %v1108 = vlaneseq
  %v1109 = vshrl.u32 %v1108, 7
  %v1110 = vsub.s32 0, %v1109
  %v1111 = vrot.slane %v1106, %v1110
  %v1113 = vadd.f32 %v1101, %v1111
  %v1114 = vpack.c.bf16 %v1113, %v1113
  %1115 = vst [vmem:[%s7] sm:$0x1] %v1114
  // Predicated region
  $region30: #{msdiscriminator_forward.22} parent=0 // pred_check
    _
  $region31: #{msdiscriminator_forward.22} parent=0 // pred_check_branch
    %1117 = sbr.rel (0) target = $region33
  $region32: #{msdiscriminator_forward.22} parent=0 // pred_region
    _
  $region33: #{msdiscriminator_forward.22} parent=0 // pred_fallthru
    _
  // Predicated region
  $region34: #{msdiscriminator_forward.22} parent=0 // pred_check
    _
  $region35: #{msdiscriminator_forward.22} parent=0 // pred_check_branch
    %1119 = sbr.rel (0) target = $region37
  $region36: #{msdiscriminator_forward.22} parent=0 // pred_region
    _
  $region37: #{msdiscriminator_forward.22} parent=0 // pred_fallthru
    _

// kernel: msdiscriminator_forward.23
$region0: #{msdiscriminator_forward.23}
  #allocation0 [shape = 'u32[]', space=smem, size = 0x4, offset = 0x4, fixed_abs, tag = 'smem constant byte address 0x4 - core index']
  #allocation1 [shape = 'u32[144,128]{1,0:T(1,128)}', space=vmem, size = 0x12000, scoped, tag = 'internal scratch']
  #allocation2 [shape = 'f32[1,1]{1,0:T(1,128)S(1)}', space=vmem, size = 0x200, scoped, tag = 'scoped memory for msdiscriminator_forward.23']
  %s0 = inlined_call_operand.vmem [shape: bf16[2,128], index: 0, kind: input, shape index: {}]
  %s1 = inlined_call_operand.hbm [shape: bf16[128,128], index: 1, kind: input, shape index: {}]
  %s2 = inlined_call_operand.hbm [shape: f32[1,128], index: 2, kind: input, shape index: {}]
  %s3 = inlined_call_operand.hbm [shape: bf16[128,128], index: 3, kind: input, shape index: {}]
  %s4 = inlined_call_operand.hbm [shape: bf16[128,128], index: 4, kind: input, shape index: {}]
  %s5 = inlined_call_operand.hbm [shape: f32[1,128], index: 5, kind: input, shape index: {}]
  %s6 = inlined_call_operand.hbm [shape: bf16[128,128], index: 6, kind: input, shape index: {}]
  %s7 = inlined_call_operand.hbm [shape: f32[1,128], index: 7, kind: input, shape index: {}]
  %s8 = inlined_call_operand.hbm [shape: bf16[128,128], index: 8, kind: input, shape index: {}]
  %s9 = inlined_call_operand.hbm [shape: bf16[128,128], index: 9, kind: input, shape index: {}]
  %s10 = inlined_call_operand.hbm [shape: f32[1,128], index: 10, kind: input, shape index: {}]
  %s11 = inlined_call_operand.hbm [shape: bf16[128,128], index: 11, kind: input, shape index: {}]
  %s12 = inlined_call_operand.hbm [shape: f32[1,128], index: 12, kind: input, shape index: {}]
  %s13 = inlined_call_operand.vmem [shape: bf16[128,256], index: 13, kind: input, shape index: {}]
  %s14 = inlined_call_operand.vmem [shape: bf16[128,256], index: 14, kind: input, shape index: {}]
  %s15 = inlined_call_operand.hbm [shape: f32[1,256], index: 15, kind: input, shape index: {}]
  %s16 = inlined_call_operand.vmem [shape: bf16[256,256], index: 16, kind: input, shape index: {}]
  %s17 = inlined_call_operand.hbm [shape: f32[1,256], index: 17, kind: input, shape index: {}]
  %s18 = inlined_call_operand.vmem [shape: bf16[256,256], index: 18, kind: input, shape index: {}]
  %s19 = inlined_call_operand.vmem [shape: bf16[256,256], index: 19, kind: input, shape index: {}]
  %s20 = inlined_call_operand.hbm [shape: f32[1,256], index: 20, kind: input, shape index: {}]
  %s21 = inlined_call_operand.hbm [shape: f32[1,256], index: 21, kind: input, shape index: {}]
  %s22 = inlined_call_operand.<no memory space> [shape: f32[1,1], index: 22, kind: input, shape index: {}]
  %s23 = inlined_call_operand.vmem [shape: f32[8,128], index: 23, kind: output, shape index: {}]
  %s24 = sld [smem:[#allocation0]]
  $region166: #{msdiscriminator_forward.23} parent=0
    _
  %s26 = ssub.s32 1, %s24
  %s27 = scalar_select 0, %s26, %s24
  %v28 = vstv %s22
  %29 = vst [vmem:[#allocation2] sm:$0x1] %v28
  $region1: #{msdiscriminator_forward.23} parent=0
    #allocation3 [shape = 'u8[32768]{0}', space=vmem, size = 0x8000, scoped, tag = 'input window, operand 1, single buffered']
    #allocation4 [shape = 's32[1]{0}', space=sflag, size = 0x4, scoped, tag = 'scoped memory for msdiscriminator_forward.23']
    #allocation5 [shape = 'u8[512]{0}', space=vmem, size = 0x400, scoped, tag = 'input window, operand 2, single buffered']
    #allocation6 [shape = 's32[1]{0}', space=sflag, size = 0x4, scoped, tag = 'scoped memory for msdiscriminator_forward.23']
    #allocation7 [shape = 'u8[32768]{0}', space=vmem, size = 0x8000, scoped, tag = 'input window, operand 3, single buffered']
    #allocation8 [shape = 'u8[32768]{0}', space=vmem, size = 0x8000, scoped, tag = 'input window, operand 4, single buffered']
    #allocation9 [shape = 's32[1]{0}', space=sflag, size = 0x4, scoped, tag = 'scoped memory for msdiscriminator_forward.23']
    #allocation10 [shape = 'u8[512]{0}', space=vmem, size = 0x400, scoped, tag = 'input window, operand 5, single buffered']
    #allocation11 [shape = 'u8[32768]{0}', space=vmem, size = 0x8000, scoped, tag = 'input window, operand 6, single buffered']
    #allocation12 [shape = 's32[1]{0}', space=sflag, size = 0x4, scoped, tag = 'scoped memory for msdiscriminator_forward.23']
    #allocation13 [shape = 'u8[512]{0}', space=vmem, size = 0x400, scoped, tag = 'input window, operand 7, single buffered']
    #allocation14 [shape = 'u8[32768]{0}', space=vmem, size = 0x8000, scoped, tag = 'input window, operand 8, single buffered']
    #allocation15 [shape = 's32[1]{0}', space=sflag, size = 0x4, scoped, tag = 'scoped memory for msdiscriminator_forward.23']
    #allocation16 [shape = 'u8[32768]{0}', space=vmem, size = 0x8000, scoped, tag = 'input window, operand 9, single buffered']
    #allocation17 [shape = 'u8[512]{0}', space=vmem, size = 0x400, scoped, tag = 'input window, operand 10, single buffered']
    #allocation18 [shape = 's32[1]{0}', space=sflag, size = 0x4, scoped, tag = 'scoped memory for msdiscriminator_forward.23']
    #allocation19 [shape = 'u8[32768]{0}', space=vmem, size = 0x8000, scoped, tag = 'input window, operand 11, single buffered']
    #allocation20 [shape = 'u8[512]{0}', space=vmem, size = 0x400, scoped, tag = 'input window, operand 12, single buffered']
    #allocation21 [shape = 's32[1]{0}', space=sflag, size = 0x4, scoped, tag = 'scoped memory for msdiscriminator_forward.23']
    #allocation22 [shape = 'u8[1024]{0}', space=vmem, size = 0x400, scoped, tag = 'input window, operand 15, single buffered']
    #allocation23 [shape = 'u8[1024]{0}', space=vmem, size = 0x400, scoped, tag = 'input window, operand 17, single buffered']
    #allocation24 [shape = 's32[1]{0}', space=sflag, size = 0x4, scoped, tag = 'scoped memory for msdiscriminator_forward.23']
    #allocation25 [shape = 'u8[1024]{0}', space=vmem, size = 0x400, scoped, tag = 'input window, operand 20, single buffered']
    #allocation26 [shape = 'u8[1024]{0}', space=vmem, size = 0x400, scoped, tag = 'input window, operand 21, single buffered']
    #allocation27 [shape = 's32[1]{0}', space=sflag, size = 0x4, scoped, tag = 'scoped memory for msdiscriminator_forward.23']
    %30 = vsyncpa [#allocation4], 0
    %31 = vsyncpa [#allocation6], 0
    %32 = vsyncpa [#allocation9], 0
    %33 = vsyncpa [#allocation12], 0
    %34 = vsyncpa [#allocation15], 0
    %35 = vsyncpa [#allocation18], 0
    %36 = vsyncpa [#allocation21], 0
    %37 = vsyncpa [#allocation24], 0
    %38 = vsyncpa [#allocation27], 0
    // Predicated region
    $region2: #{msdiscriminator_forward.23} parent=1 // pred_check
      _
    $region3: #{msdiscriminator_forward.23} parent=1 // pred_check_branch
      %40 = sbr.rel (0) target = $region5
    $region4: #{msdiscriminator_forward.23} parent=1 // pred_region
      _
    $region5: #{msdiscriminator_forward.23} parent=1 // pred_fallthru
      _
    // Predicated region
    $region6: #{msdiscriminator_forward.23} parent=1 // pred_check
      _
    $region7: #{msdiscriminator_forward.23} parent=1 // pred_check_branch
      %42 = sbr.rel (0) target = $region9
    $region8: #{msdiscriminator_forward.23} parent=1 // pred_region
      %s44 = ssub.s32 1024, 1024
      %45 = vsyncadd [#allocation4], %s44
      %s46 = sshll.u32 [#allocation3], 4
      %s47 = int_to_ptr.vmem [resolvable:$true] %s46
      %52 = dma.hbm_to_vmem [thread:$0]  %s1, 1024, %s47, [#allocation4], 64, 64, 4
    $region9: #{msdiscriminator_forward.23} parent=1 // pred_fallthru
      _
    // Predicated region
    $region10: #{msdiscriminator_forward.23} parent=1 // pred_check
      _
    $region11: #{msdiscriminator_forward.23} parent=1 // pred_check_branch
      %54 = sbr.rel (0) target = $region13
    $region12: #{msdiscriminator_forward.23} parent=1 // pred_region
      %s56 = ssub.s32 16, 16
      %57 = vsyncadd [#allocation6], %s56
      %s59 = sshll.u32 [#allocation5], 4
      %s60 = int_to_ptr.vmem [resolvable:$true] %s59
      %62 = dma.hbm_to_vmem [thread:$0]  %s2, 16, %s60, [#allocation6]
    $region13: #{msdiscriminator_forward.23} parent=1 // pred_fallthru
      _
    // Predicated region
    $region14: #{msdiscriminator_forward.23} parent=1 // pred_check
      _
    $region15: #{msdiscriminator_forward.23} parent=1 // pred_check_branch
      %64 = sbr.rel (0) target = $region17
    $region16: #{msdiscriminator_forward.23} parent=1 // pred_region
      %s66 = ssub.s32 1024, 1024
      %67 = vsyncadd [#allocation6], %s66
      %s68 = sshll.u32 [#allocation7], 4
      %s69 = int_to_ptr.vmem [resolvable:$true] %s68
      %74 = dma.hbm_to_vmem [thread:$0]  %s3, 1024, %s69, [#allocation6], 64, 64, 4
    $region17: #{msdiscriminator_forward.23} parent=1 // pred_fallthru
      _
    // Predicated region
    $region18: #{msdiscriminator_forward.23} parent=1 // pred_check
      _
    $region19: #{msdiscriminator_forward.23} parent=1 // pred_check_branch
      %76 = sbr.rel (0) target = $region21
    $region20: #{msdiscriminator_forward.23} parent=1 // pred_region
      %s78 = ssub.s32 1024, 1024
      %79 = vsyncadd [#allocation9], %s78
      %s80 = sshll.u32 [#allocation8], 4
      %s81 = int_to_ptr.vmem [resolvable:$true] %s80
      %86 = dma.hbm_to_vmem [thread:$0]  %s4, 1024, %s81, [#allocation9], 64, 64, 4
    $region21: #{msdiscriminator_forward.23} parent=1 // pred_fallthru
      _
    // Predicated region
    $region22: #{msdiscriminator_forward.23} parent=1 // pred_check
      _
    $region23: #{msdiscriminator_forward.23} parent=1 // pred_check_branch
      %88 = sbr.rel (0) target = $region25
    $region24: #{msdiscriminator_forward.23} parent=1 // pred_region
      %s90 = ssub.s32 16, 16
      %91 = vsyncadd [#allocation9], %s90
      %s93 = sshll.u32 [#allocation10], 4
      %s94 = int_to_ptr.vmem [resolvable:$true] %s93
      %96 = dma.hbm_to_vmem [thread:$0]  %s5, 16, %s94, [#allocation9]
    $region25: #{msdiscriminator_forward.23} parent=1 // pred_fallthru
      _
    // Predicated region
    $region26: #{msdiscriminator_forward.23} parent=1 // pred_check
      _
    $region27: #{msdiscriminator_forward.23} parent=1 // pred_check_branch
      %98 = sbr.rel (0) target = $region29
    $region28: #{msdiscriminator_forward.23} parent=1 // pred_region
      %s100 = ssub.s32 1024, 1024
      %101 = vsyncadd [#allocation12], %s100
      %s102 = sshll.u32 [#allocation11], 4
      %s103 = int_to_ptr.vmem [resolvable:$true] %s102
      %108 = dma.hbm_to_vmem [thread:$0]  %s6, 1024, %s103, [#allocation12], 64, 64, 4
    $region29: #{msdiscriminator_forward.23} parent=1 // pred_fallthru
      _
    // Predicated region
    $region30: #{msdiscriminator_forward.23} parent=1 // pred_check
      _
    $region31: #{msdiscriminator_forward.23} parent=1 // pred_check_branch
      %110 = sbr.rel (0) target = $region33
    $region32: #{msdiscriminator_forward.23} parent=1 // pred_region
      %s112 = ssub.s32 16, 16
      %113 = vsyncadd [#allocation12], %s112
      %s115 = sshll.u32 [#allocation13], 4
      %s116 = int_to_ptr.vmem [resolvable:$true] %s115
      %118 = dma.hbm_to_vmem [thread:$0]  %s7, 16, %s116, [#allocation12]
    $region33: #{msdiscriminator_forward.23} parent=1 // pred_fallthru
      _
    // Predicated region
    $region34: #{msdiscriminator_forward.23} parent=1 // pred_check
      _
    $region35: #{msdiscriminator_forward.23} parent=1 // pred_check_branch
      %120 = sbr.rel (0) target = $region37
    $region36: #{msdiscriminator_forward.23} parent=1 // pred_region
      %s122 = ssub.s32 1024, 1024
      %123 = vsyncadd [#allocation15], %s122
      %s124 = sshll.u32 [#allocation14], 4
      %s125 = int_to_ptr.vmem [resolvable:$true] %s124
      %130 = dma.hbm_to_vmem [thread:$0]  %s8, 1024, %s125, [#allocation15], 64, 64, 4
    $region37: #{msdiscriminator_forward.23} parent=1 // pred_fallthru
      _
    // Predicated region
    $region38: #{msdiscriminator_forward.23} parent=1 // pred_check
      _
    $region39: #{msdiscriminator_forward.23} parent=1 // pred_check_branch
      %132 = sbr.rel (0) target = $region41
    $region40: #{msdiscriminator_forward.23} parent=1 // pred_region
      %s134 = ssub.s32 1024, 1024
      %135 = vsyncadd [#allocation15], %s134
      %s136 = sshll.u32 [#allocation16], 4
      %s137 = int_to_ptr.vmem [resolvable:$true] %s136
      %142 = dma.hbm_to_vmem [thread:$0]  %s9, 1024, %s137, [#allocation15], 64, 64, 4
    $region41: #{msdiscriminator_forward.23} parent=1 // pred_fallthru
      _
    // Predicated region
    $region42: #{msdiscriminator_forward.23} parent=1 // pred_check
      _
    $region43: #{msdiscriminator_forward.23} parent=1 // pred_check_branch
      %144 = sbr.rel (0) target = $region45
    $region44: #{msdiscriminator_forward.23} parent=1 // pred_region
      %s146 = ssub.s32 16, 16
      %147 = vsyncadd [#allocation18], %s146
      %s149 = sshll.u32 [#allocation17], 4
      %s150 = int_to_ptr.vmem [resolvable:$true] %s149
      %152 = dma.hbm_to_vmem [thread:$0]  %s10, 16, %s150, [#allocation18]
    $region45: #{msdiscriminator_forward.23} parent=1 // pred_fallthru
      _
    // Predicated region
    $region46: #{msdiscriminator_forward.23} parent=1 // pred_check
      _
    $region47: #{msdiscriminator_forward.23} parent=1 // pred_check_branch
      %154 = sbr.rel (0) target = $region49
    $region48: #{msdiscriminator_forward.23} parent=1 // pred_region
      %s156 = ssub.s32 1024, 1024
      %157 = vsyncadd [#allocation18], %s156
      %s158 = sshll.u32 [#allocation19], 4
      %s159 = int_to_ptr.vmem [resolvable:$true] %s158
      %164 = dma.hbm_to_vmem [thread:$0]  %s11, 1024, %s159, [#allocation18], 64, 64, 4
    $region49: #{msdiscriminator_forward.23} parent=1 // pred_fallthru
      _
    // Predicated region
    $region50: #{msdiscriminator_forward.23} parent=1 // pred_check
      _
    $region51: #{msdiscriminator_forward.23} parent=1 // pred_check_branch
      %166 = sbr.rel (0) target = $region53
    $region52: #{msdiscriminator_forward.23} parent=1 // pred_region
      %s168 = ssub.s32 16, 16
      %169 = vsyncadd [#allocation21], %s168
      %s171 = sshll.u32 [#allocation20], 4
      %s172 = int_to_ptr.vmem [resolvable:$true] %s171
      %174 = dma.hbm_to_vmem [thread:$0]  %s12, 16, %s172, [#allocation21]
    $region53: #{msdiscriminator_forward.23} parent=1 // pred_fallthru
      _
    // Predicated region
    $region54: #{msdiscriminator_forward.23} parent=1 // pred_check
      _
    $region55: #{msdiscriminator_forward.23} parent=1 // pred_check_branch
      %176 = sbr.rel (0) target = $region57
    $region56: #{msdiscriminator_forward.23} parent=1 // pred_region
      _
    $region57: #{msdiscriminator_forward.23} parent=1 // pred_fallthru
      _
    // Predicated region
    $region58: #{msdiscriminator_forward.23} parent=1 // pred_check
      _
    $region59: #{msdiscriminator_forward.23} parent=1 // pred_check_branch
      %178 = sbr.rel (0) target = $region61
    $region60: #{msdiscriminator_forward.23} parent=1 // pred_region
      _
    $region61: #{msdiscriminator_forward.23} parent=1 // pred_fallthru
      _
    // Predicated region
    $region62: #{msdiscriminator_forward.23} parent=1 // pred_check
      _
    $region63: #{msdiscriminator_forward.23} parent=1 // pred_check_branch
      %180 = sbr.rel (0) target = $region65
    $region64: #{msdiscriminator_forward.23} parent=1 // pred_region
      %s182 = ssub.s32 32, 32
      %183 = vsyncadd [#allocation21], %s182
      %s185 = sshll.u32 [#allocation22], 4
      %s186 = int_to_ptr.vmem [resolvable:$true] %s185
      %188 = dma.hbm_to_vmem [thread:$0]  %s15, 32, %s186, [#allocation21]
    $region65: #{msdiscriminator_forward.23} parent=1 // pred_fallthru
      _
    // Predicated region
    $region66: #{msdiscriminator_forward.23} parent=1 // pred_check
      _
    $region67: #{msdiscriminator_forward.23} parent=1 // pred_check_branch
      %190 = sbr.rel (0) target = $region69
    $region68: #{msdiscriminator_forward.23} parent=1 // pred_region
      _
    $region69: #{msdiscriminator_forward.23} parent=1 // pred_fallthru
      _
    // Predicated region
    $region70: #{msdiscriminator_forward.23} parent=1 // pred_check
      _
    $region71: #{msdiscriminator_forward.23} parent=1 // pred_check_branch
      %192 = sbr.rel (0) target = $region73
    $region72: #{msdiscriminator_forward.23} parent=1 // pred_region
      %s194 = ssub.s32 32, 32
      %195 = vsyncadd [#allocation24], %s194
      %s197 = sshll.u32 [#allocation23], 4
      %s198 = int_to_ptr.vmem [resolvable:$true] %s197
      %200 = dma.hbm_to_vmem [thread:$0]  %s17, 32, %s198, [#allocation24]
    $region73: #{msdiscriminator_forward.23} parent=1 // pred_fallthru
      _
    // Predicated region
    $region74: #{msdiscriminator_forward.23} parent=1 // pred_check
      _
    $region75: #{msdiscriminator_forward.23} parent=1 // pred_check_branch
      %202 = sbr.rel (0) target = $region77
    $region76: #{msdiscriminator_forward.23} parent=1 // pred_region
      _
    $region77: #{msdiscriminator_forward.23} parent=1 // pred_fallthru
      _
    // Predicated region
    $region78: #{msdiscriminator_forward.23} parent=1 // pred_check
      _
    $region79: #{msdiscriminator_forward.23} parent=1 // pred_check_branch
      %204 = sbr.rel (0) target = $region81
    $region80: #{msdiscriminator_forward.23} parent=1 // pred_region
      _
    $region81: #{msdiscriminator_forward.23} parent=1 // pred_fallthru
      _
    // Predicated region
    $region82: #{msdiscriminator_forward.23} parent=1 // pred_check
      _
    $region83: #{msdiscriminator_forward.23} parent=1 // pred_check_branch
      %206 = sbr.rel (0) target = $region85
    $region84: #{msdiscriminator_forward.23} parent=1 // pred_region
      %s208 = ssub.s32 32, 32
      %209 = vsyncadd [#allocation24], %s208
      %s211 = sshll.u32 [#allocation25], 4
      %s212 = int_to_ptr.vmem [resolvable:$true] %s211
      %214 = dma.hbm_to_vmem [thread:$0]  %s20, 32, %s212, [#allocation24]
    $region85: #{msdiscriminator_forward.23} parent=1 // pred_fallthru
      _
    // Predicated region
    $region86: #{msdiscriminator_forward.23} parent=1 // pred_check
      _
    $region87: #{msdiscriminator_forward.23} parent=1 // pred_check_branch
      %216 = sbr.rel (0) target = $region89
    $region88: #{msdiscriminator_forward.23} parent=1 // pred_region
      %s218 = ssub.s32 32, 32
      %219 = vsyncadd [#allocation27], %s218
      %s221 = sshll.u32 [#allocation26], 4
      %s222 = int_to_ptr.vmem [resolvable:$true] %s221
      %224 = dma.hbm_to_vmem [thread:$0]  %s21, 32, %s222, [#allocation27]
    $region89: #{msdiscriminator_forward.23} parent=1 // pred_fallthru
      _
    // Predicated region
    $region90: #{msdiscriminator_forward.23} parent=1 // pred_check
      _
    $region91: #{msdiscriminator_forward.23} parent=1 // pred_check_branch
      %226 = sbr.rel (0) target = $region93
    $region92: #{msdiscriminator_forward.23} parent=1 // pred_region
      _
    $region93: #{msdiscriminator_forward.23} parent=1 // pred_fallthru
      _
    // Predicated region
    $region94: #{msdiscriminator_forward.23} parent=1 // pred_check
      _
    $region95: #{msdiscriminator_forward.23} parent=1 // pred_check_branch
      %228 = sbr.rel (0) target = $region97
    $region96: #{msdiscriminator_forward.23} parent=1 // pred_region
      %229 = dma.done [#allocation4], 1024
    $region97: #{msdiscriminator_forward.23} parent=1 // pred_fallthru
      _
    // Predicated region
    $region98: #{msdiscriminator_forward.23} parent=1 // pred_check
      _
    $region99: #{msdiscriminator_forward.23} parent=1 // pred_check_branch
      %231 = sbr.rel (0) target = $region101
    $region100: #{msdiscriminator_forward.23} parent=1 // pred_region
      %232 = dma.done [#allocation6], 16
    $region101: #{msdiscriminator_forward.23} parent=1 // pred_fallthru
      _
    // Predicated region
    $region102: #{msdiscriminator_forward.23} parent=1 // pred_check
      _
    $region103: #{msdiscriminator_forward.23} parent=1 // pred_check_branch
      %234 = sbr.rel (0) target = $region105
    $region104: #{msdiscriminator_forward.23} parent=1 // pred_region
      %235 = dma.done [#allocation6], 1024
    $region105: #{msdiscriminator_forward.23} parent=1 // pred_fallthru
      _
    // Predicated region
    $region106: #{msdiscriminator_forward.23} parent=1 // pred_check
      _
    $region107: #{msdiscriminator_forward.23} parent=1 // pred_check_branch
      %237 = sbr.rel (0) target = $region109
    $region108: #{msdiscriminator_forward.23} parent=1 // pred_region
      %238 = dma.done [#allocation9], 1024
    $region109: #{msdiscriminator_forward.23} parent=1 // pred_fallthru
      _
    // Predicated region
    $region110: #{msdiscriminator_forward.23} parent=1 // pred_check
      _
    $region111: #{msdiscriminator_forward.23} parent=1 // pred_check_branch
      %240 = sbr.rel (0) target = $region113
    $region112: #{msdiscriminator_forward.23} parent=1 // pred_region
      %241 = dma.done [#allocation9], 16
    $region113: #{msdiscriminator_forward.23} parent=1 // pred_fallthru
      _
    // Predicated region
    $region114: #{msdiscriminator_forward.23} parent=1 // pred_check
      _
    $region115: #{msdiscriminator_forward.23} parent=1 // pred_check_branch
      %243 = sbr.rel (0) target = $region117
    $region116: #{msdiscriminator_forward.23} parent=1 // pred_region
      %244 = dma.done [#allocation12], 1024
    $region117: #{msdiscriminator_forward.23} parent=1 // pred_fallthru
      _
    // Predicated region
    $region118: #{msdiscriminator_forward.23} parent=1 // pred_check
      _
    $region119: #{msdiscriminator_forward.23} parent=1 // pred_check_branch
      %246 = sbr.rel (0) target = $region121
    $region120: #{msdiscriminator_forward.23} parent=1 // pred_region
      %247 = dma.done [#allocation12], 16
    $region121: #{msdiscriminator_forward.23} parent=1 // pred_fallthru
      _
    // Predicated region
    $region122: #{msdiscriminator_forward.23} parent=1 // pred_check
      _
    $region123: #{msdiscriminator_forward.23} parent=1 // pred_check_branch
      %249 = sbr.rel (0) target = $region125
    $region124: #{msdiscriminator_forward.23} parent=1 // pred_region
      %250 = dma.done [#allocation15], 1024
    $region125: #{msdiscriminator_forward.23} parent=1 // pred_fallthru
      _
    // Predicated region
    $region126: #{msdiscriminator_forward.23} parent=1 // pred_check
      _
    $region127: #{msdiscriminator_forward.23} parent=1 // pred_check_branch
      %252 = sbr.rel (0) target = $region129
    $region128: #{msdiscriminator_forward.23} parent=1 // pred_region
      %253 = dma.done [#allocation15], 1024
    $region129: #{msdiscriminator_forward.23} parent=1 // pred_fallthru
      _
    // Predicated region
    $region130: #{msdiscriminator_forward.23} parent=1 // pred_check
      _
    $region131: #{msdiscriminator_forward.23} parent=1 // pred_check_branch
      %255 = sbr.rel (0) target = $region133
    $region132: #{msdiscriminator_forward.23} parent=1 // pred_region
      %256 = dma.done [#allocation18], 16
    $region133: #{msdiscriminator_forward.23} parent=1 // pred_fallthru
      _
    // Predicated region
    $region134: #{msdiscriminator_forward.23} parent=1 // pred_check
      _
    $region135: #{msdiscriminator_forward.23} parent=1 // pred_check_branch
      %258 = sbr.rel (0) target = $region137
    $region136: #{msdiscriminator_forward.23} parent=1 // pred_region
      %259 = dma.done [#allocation18], 1024
    $region137: #{msdiscriminator_forward.23} parent=1 // pred_fallthru
      _
    // Predicated region
    $region138: #{msdiscriminator_forward.23} parent=1 // pred_check
      _
    $region139: #{msdiscriminator_forward.23} parent=1 // pred_check_branch
      %261 = sbr.rel (0) target = $region141
    $region140: #{msdiscriminator_forward.23} parent=1 // pred_region
      %262 = dma.done [#allocation21], 16
    $region141: #{msdiscriminator_forward.23} parent=1 // pred_fallthru
      _
    // Predicated region
    $region142: #{msdiscriminator_forward.23} parent=1 // pred_check
      _
    $region143: #{msdiscriminator_forward.23} parent=1 // pred_check_branch
      %264 = sbr.rel (0) target = $region145
    $region144: #{msdiscriminator_forward.23} parent=1 // pred_region
      %265 = dma.done [#allocation21], 32
    $region145: #{msdiscriminator_forward.23} parent=1 // pred_fallthru
      _
    // Predicated region
    $region146: #{msdiscriminator_forward.23} parent=1 // pred_check
      _
    $region147: #{msdiscriminator_forward.23} parent=1 // pred_check_branch
      %267 = sbr.rel (0) target = $region149
    $region148: #{msdiscriminator_forward.23} parent=1 // pred_region
      %268 = dma.done [#allocation24], 32
    $region149: #{msdiscriminator_forward.23} parent=1 // pred_fallthru
      _
    // Predicated region
    $region150: #{msdiscriminator_forward.23} parent=1 // pred_check
      _
    $region151: #{msdiscriminator_forward.23} parent=1 // pred_check_branch
      %270 = sbr.rel (0) target = $region153
    $region152: #{msdiscriminator_forward.23} parent=1 // pred_region
      %271 = dma.done [#allocation24], 32
    $region153: #{msdiscriminator_forward.23} parent=1 // pred_fallthru
      _
    // Predicated region
    $region154: #{msdiscriminator_forward.23} parent=1 // pred_check
      _
    $region155: #{msdiscriminator_forward.23} parent=1 // pred_check_branch
      %273 = sbr.rel (0) target = $region157
    $region156: #{msdiscriminator_forward.23} parent=1 // pred_region
      %274 = dma.done [#allocation27], 32
    $region157: #{msdiscriminator_forward.23} parent=1 // pred_fallthru
      _
    %v277 = vld [vmem:[%s0] sm:$0x1]
    %vm278 = vcmp.gt.bf16.partialorder %v277, 0
    %v279 = vmul.bf16 %v277, 1009007652
    %v280 = vsel %vm278, %v277, %v279
    %v281 = vld [vmem:[#allocation3] sm:$0xf]
    %v282 = vld [vmem:[#allocation3 + $0x4] sm:$0xf]
    %v283 = vld [vmem:[#allocation3 + $0x8] sm:$0xf]
    %v284 = vld [vmem:[#allocation3 + $0xc] sm:$0xf]
    %v285 = vld [vmem:[#allocation3 + $0x10] sm:$0xf]
    %v286 = vld [vmem:[#allocation3 + $0x14] sm:$0xf]
    %v287 = vld [vmem:[#allocation3 + $0x18] sm:$0xf]
    %v288 = vld [vmem:[#allocation3 + $0x1c] sm:$0xf]
    %v289 = vld [vmem:[#allocation3 + $0x20] sm:$0xf]
    %v290 = vld [vmem:[#allocation3 + $0x24] sm:$0xf]
    %v291 = vld [vmem:[#allocation3 + $0x28] sm:$0xf]
    %v292 = vld [vmem:[#allocation3 + $0x2c] sm:$0xf]
    %v293 = vld [vmem:[#allocation3 + $0x30] sm:$0xf]
    %v294 = vld [vmem:[#allocation3 + $0x34] sm:$0xf]
    %v295 = vld [vmem:[#allocation3 + $0x38] sm:$0xf]
    %v296 = vld [vmem:[#allocation3 + $0x3c] sm:$0xf]
    %v297 = vld [vmem:[#allocation5] sm:$0x1]
    %v299 = vlaneseq
    %v300 = vshrl.u32 %v299, 7
    %v301 = vsub.s32 0, %v300
    %v302 = vrot.slane %v297, %v301
    %v320 = vunpack.c.l.b16 %v281
    %v321 = vunpack.c.l.b16 %v282
    %v322 = vunpack.c.l.b16 %v283
    %v323 = vunpack.c.l.b16 %v284
    %v324 = vunpack.c.l.b16 %v285
    %v325 = vunpack.c.l.b16 %v286
    %v326 = vunpack.c.l.b16 %v287
    %v327 = vunpack.c.l.b16 %v288
    %v328 = vunpack.c.l.b16 %v289
    %v329 = vunpack.c.l.b16 %v290
    %v330 = vunpack.c.l.b16 %v291
    %v331 = vunpack.c.l.b16 %v292
    %v332 = vunpack.c.l.b16 %v293
    %v333 = vunpack.c.l.b16 %v294
    %v334 = vunpack.c.l.b16 %v295
    %v335 = vunpack.c.l.b16 %v296
    %v336 = vpack.c.b16 %v321, %v320
    %v337 = vpack.c.b16 %v323, %v322
    %v338 = vpack.c.b16 %v325, %v324
    %v339 = vpack.c.b16 %v327, %v326
    %v340 = vpack.c.b16 %v329, %v328
    %v341 = vpack.c.b16 %v331, %v330
    %v342 = vpack.c.b16 %v333, %v332
    %v343 = vpack.c.b16 %v335, %v334
    %352 = vmatprep.subr.bf16.mxu0 0
    %353 = vmatpush1.bf16.msra.mxu0 %v336
    %354 = vmatprep.subr.bf16.mxu0 0
    %355 = vmatpush1.bf16.msra.mxu0 %v337
    %356 = vmatprep.subr.bf16.mxu0 0
    %357 = vmatpush1.bf16.msra.mxu0 %v338
    %358 = vmatprep.subr.bf16.mxu0 0
    %359 = vmatpush1.bf16.msra.mxu0 %v339
    %360 = vmatprep.subr.bf16.mxu0 0
    %361 = vmatpush1.bf16.msra.mxu0 %v340
    %362 = vmatprep.subr.bf16.mxu0 0
    %363 = vmatpush1.bf16.msra.mxu0 %v341
    %364 = vmatprep.subr.bf16.mxu0 0
    %365 = vmatpush1.bf16.msra.mxu0 %v342
    %366 = vmatprep.subr.bf16.mxu0 0
    %367 = vmatpush1.bf16.msra.mxu0 %v343
    %368 = vmatprep.subr.bf16.mxu0 0
    %369 = vmatpush1.bf16.msra.mxu0 0
    %370 = vmatprep.subr.bf16.mxu0 0
    %371 = vmatpush1.bf16.msra.mxu0 0
    %372 = vmatprep.subr.bf16.mxu0 0
    %373 = vmatpush1.bf16.msra.mxu0 0
    %374 = vmatprep.subr.bf16.mxu0 0
    %375 = vmatpush1.bf16.msra.mxu0 0
    %376 = vmatprep.subr.bf16.mxu0 0
    %377 = vmatpush1.bf16.msra.mxu0 0
    %378 = vmatprep.subr.bf16.mxu0 0
    %379 = vmatpush1.bf16.msra.mxu0 0
    %380 = vmatprep.subr.bf16.mxu0 0
    %381 = vmatpush1.bf16.msra.mxu0 0
    %382 = vmatprep.subr.bf16.mxu0 0
    %383 = vmatpush1.bf16.msra.mxu0 0
    %384 = vmatprep.mubr.bf16.mxu0 0
    %385 = vmatmul.mubr.bf16.gmra.mrb[0].mxu0 %v280
    %v386 = vpop.f32.mrb[0].mxu0
    %v387 = vadd.f32 %v302, %v386
    %v388 = vpop.f32.mrb[0].mxu0
    %v389 = vpop.f32.mrb[0].mxu0
    %v390 = vpop.f32.mrb[0].mxu0
    %391 = vdwg.mxu0
    %vm392 = vcmp.gt.f32.partialorder %v387, 0.0
    %v393 = vmul.f32 %v387, 0.01
    %v394 = vsel %vm392, %v387, %v393
    %v395 = vpack.c.bf16 %v394, %v394
    %v396 = vld [vmem:[#allocation7] sm:$0xf]
    %v397 = vld [vmem:[#allocation7 + $0x4] sm:$0xf]
    %v398 = vld [vmem:[#allocation7 + $0x8] sm:$0xf]
    %v399 = vld [vmem:[#allocation7 + $0xc] sm:$0xf]
    %v400 = vld [vmem:[#allocation7 + $0x10] sm:$0xf]
    %v401 = vld [vmem:[#allocation7 + $0x14] sm:$0xf]
    %v402 = vld [vmem:[#allocation7 + $0x18] sm:$0xf]
    %v403 = vld [vmem:[#allocation7 + $0x1c] sm:$0xf]
    %v404 = vld [vmem:[#allocation7 + $0x20] sm:$0xf]
    %v405 = vld [vmem:[#allocation7 + $0x24] sm:$0xf]
    %v406 = vld [vmem:[#allocation7 + $0x28] sm:$0xf]
    %v407 = vld [vmem:[#allocation7 + $0x2c] sm:$0xf]
    %v408 = vld [vmem:[#allocation7 + $0x30] sm:$0xf]
    %v409 = vld [vmem:[#allocation7 + $0x34] sm:$0xf]
    %v410 = vld [vmem:[#allocation7 + $0x38] sm:$0xf]
    %v411 = vld [vmem:[#allocation7 + $0x3c] sm:$0xf]
    %v412 = vld [vmem:[#allocation8] sm:$0xf]
    %v413 = vld [vmem:[#allocation8 + $0x4] sm:$0xf]
    %v414 = vld [vmem:[#allocation8 + $0x8] sm:$0xf]
    %v415 = vld [vmem:[#allocation8 + $0xc] sm:$0xf]
    %v416 = vld [vmem:[#allocation8 + $0x10] sm:$0xf]
    %v417 = vld [vmem:[#allocation8 + $0x14] sm:$0xf]
    %v418 = vld [vmem:[#allocation8 + $0x18] sm:$0xf]
    %v419 = vld [vmem:[#allocation8 + $0x1c] sm:$0xf]
    %v420 = vld [vmem:[#allocation8 + $0x20] sm:$0xf]
    %v421 = vld [vmem:[#allocation8 + $0x24] sm:$0xf]
    %v422 = vld [vmem:[#allocation8 + $0x28] sm:$0xf]
    %v423 = vld [vmem:[#allocation8 + $0x2c] sm:$0xf]
    %v424 = vld [vmem:[#allocation8 + $0x30] sm:$0xf]
    %v425 = vld [vmem:[#allocation8 + $0x34] sm:$0xf]
    %v426 = vld [vmem:[#allocation8 + $0x38] sm:$0xf]
    %v427 = vld [vmem:[#allocation8 + $0x3c] sm:$0xf]
    %v444 = vunpack.c.l.b16 %v412
    %v445 = vunpack.c.l.b16 %v413
    %v446 = vunpack.c.l.b16 %v414
    %v447 = vunpack.c.l.b16 %v415
    %v448 = vunpack.c.l.b16 %v416
    %v449 = vunpack.c.l.b16 %v417
    %v450 = vunpack.c.l.b16 %v418
    %v451 = vunpack.c.l.b16 %v419
    %v452 = vunpack.c.l.b16 %v420
    %v453 = vunpack.c.l.b16 %v421
    %v454 = vunpack.c.l.b16 %v422
    %v455 = vunpack.c.l.b16 %v423
    %v456 = vunpack.c.l.b16 %v424
    %v457 = vunpack.c.l.b16 %v425
    %v458 = vunpack.c.l.b16 %v426
    %v459 = vunpack.c.l.b16 %v427
    %v460 = vpack.c.b16 %v445, %v444
    %v461 = vpack.c.b16 %v447, %v446
    %v462 = vpack.c.b16 %v449, %v448
    %v463 = vpack.c.b16 %v451, %v450
    %v464 = vpack.c.b16 %v453, %v452
    %v465 = vpack.c.b16 %v455, %v454
    %v466 = vpack.c.b16 %v457, %v456
    %v467 = vpack.c.b16 %v459, %v458
    %476 = vmatprep.subr.bf16.mxu0 0
    %477 = vmatpush1.bf16.msra.mxu0 %v460
    %478 = vmatprep.subr.bf16.mxu0 0
    %479 = vmatpush1.bf16.msra.mxu0 %v461
    %480 = vmatprep.subr.bf16.mxu0 0
    %481 = vmatpush1.bf16.msra.mxu0 %v462
    %482 = vmatprep.subr.bf16.mxu0 0
    %483 = vmatpush1.bf16.msra.mxu0 %v463
    %484 = vmatprep.subr.bf16.mxu0 0
    %485 = vmatpush1.bf16.msra.mxu0 %v464
    %486 = vmatprep.subr.bf16.mxu0 0
    %487 = vmatpush1.bf16.msra.mxu0 %v465
    %488 = vmatprep.subr.bf16.mxu0 0
    %489 = vmatpush1.bf16.msra.mxu0 %v466
    %490 = vmatprep.subr.bf16.mxu0 0
    %491 = vmatpush1.bf16.msra.mxu0 %v467
    %492 = vmatprep.subr.bf16.mxu0 0
    %493 = vmatpush1.bf16.msra.mxu0 0
    %494 = vmatprep.subr.bf16.mxu0 0
    %495 = vmatpush1.bf16.msra.mxu0 0
    %496 = vmatprep.subr.bf16.mxu0 0
    %497 = vmatpush1.bf16.msra.mxu0 0
    %498 = vmatprep.subr.bf16.mxu0 0
    %499 = vmatpush1.bf16.msra.mxu0 0
    %500 = vmatprep.subr.bf16.mxu0 0
    %501 = vmatpush1.bf16.msra.mxu0 0
    %502 = vmatprep.subr.bf16.mxu0 0
    %503 = vmatpush1.bf16.msra.mxu0 0
    %504 = vmatprep.subr.bf16.mxu0 0
    %505 = vmatpush1.bf16.msra.mxu0 0
    %506 = vmatprep.subr.bf16.mxu0 0
    %507 = vmatpush1.bf16.msra.mxu0 0
    %508 = vmatprep.mubr.bf16.mxu0 0
    %509 = vmatmul.mubr.bf16.gmra.mrb[0].mxu0 %v277
    %v510 = vpop.f32.mrb[0].mxu0
    %v511 = vadd.f32 0.0, %v510
    %v512 = vpop.f32.mrb[0].mxu0
    %v513 = vpop.f32.mrb[0].mxu0
    %v514 = vpop.f32.mrb[0].mxu0
    %515 = vdwg.mxu0
    %v532 = vunpack.c.l.b16 %v396
    %v533 = vunpack.c.l.b16 %v397
    %v534 = vunpack.c.l.b16 %v398
    %v535 = vunpack.c.l.b16 %v399
    %v536 = vunpack.c.l.b16 %v400
    %v537 = vunpack.c.l.b16 %v401
    %v538 = vunpack.c.l.b16 %v402
    %v539 = vunpack.c.l.b16 %v403
    %v540 = vunpack.c.l.b16 %v404
    %v541 = vunpack.c.l.b16 %v405
    %v542 = vunpack.c.l.b16 %v406
    %v543 = vunpack.c.l.b16 %v407
    %v544 = vunpack.c.l.b16 %v408
    %v545 = vunpack.c.l.b16 %v409
    %v546 = vunpack.c.l.b16 %v410
    %v547 = vunpack.c.l.b16 %v411
    %v548 = vpack.c.b16 %v533, %v532
    %v549 = vpack.c.b16 %v535, %v534
    %v550 = vpack.c.b16 %v537, %v536
    %v551 = vpack.c.b16 %v539, %v538
    %v552 = vpack.c.b16 %v541, %v540
    %v553 = vpack.c.b16 %v543, %v542
    %v554 = vpack.c.b16 %v545, %v544
    %v555 = vpack.c.b16 %v547, %v546
    %564 = vmatprep.subr.bf16.mxu0 0
    %565 = vmatpush1.bf16.msra.mxu0 %v548
    %566 = vmatprep.subr.bf16.mxu0 0
    %567 = vmatpush1.bf16.msra.mxu0 %v549
    %568 = vmatprep.subr.bf16.mxu0 0
    %569 = vmatpush1.bf16.msra.mxu0 %v550
    %570 = vmatprep.subr.bf16.mxu0 0
    %571 = vmatpush1.bf16.msra.mxu0 %v551
    %572 = vmatprep.subr.bf16.mxu0 0
    %573 = vmatpush1.bf16.msra.mxu0 %v552
    %574 = vmatprep.subr.bf16.mxu0 0
    %575 = vmatpush1.bf16.msra.mxu0 %v553
    %576 = vmatprep.subr.bf16.mxu0 0
    %577 = vmatpush1.bf16.msra.mxu0 %v554
    %578 = vmatprep.subr.bf16.mxu0 0
    %579 = vmatpush1.bf16.msra.mxu0 %v555
    %580 = vmatprep.subr.bf16.mxu0 0
    %581 = vmatpush1.bf16.msra.mxu0 0
    %582 = vmatprep.subr.bf16.mxu0 0
    %583 = vmatpush1.bf16.msra.mxu0 0
    %584 = vmatprep.subr.bf16.mxu0 0
    %585 = vmatpush1.bf16.msra.mxu0 0
    %586 = vmatprep.subr.bf16.mxu0 0
    %587 = vmatpush1.bf16.msra.mxu0 0
    %588 = vmatprep.subr.bf16.mxu0 0
    %589 = vmatpush1.bf16.msra.mxu0 0
    %590 = vmatprep.subr.bf16.mxu0 0
    %591 = vmatpush1.bf16.msra.mxu0 0
    %592 = vmatprep.subr.bf16.mxu0 0
    %593 = vmatpush1.bf16.msra.mxu0 0
    %594 = vmatprep.subr.bf16.mxu0 0
    %595 = vmatpush1.bf16.msra.mxu0 0
    %596 = vmatprep.mubr.bf16.mxu0 0
    %597 = vmatmul.mubr.bf16.gmra.mrb[0].mxu0 %v395
    %v598 = vpop.f32.mrb[0].mxu0
    %v599 = vadd.f32 %v511, %v598
    %v600 = vpop.f32.mrb[0].mxu0
    %v601 = vpop.f32.mrb[0].mxu0
    %v602 = vpop.f32.mrb[0].mxu0
    %603 = vdwg.mxu0
    %v604 = vld [vmem:[#allocation10] sm:$0x1]
    %v606 = vlaneseq
    %v607 = vshrl.u32 %v606, 7
    %v608 = vsub.s32 0, %v607
    %v609 = vrot.slane %v604, %v608
    %v611 = vadd.f32 %v599, %v609
    %v612 = vpack.c.bf16 %v611, %v611
    %vm613 = vcmp.gt.bf16.partialorder %v612, 0
    %v614 = vmul.bf16 %v612, 1009007652
    %v615 = vsel %vm613, %v612, %v614
    %v616 = vld [vmem:[#allocation11] sm:$0xf]
    %v617 = vld [vmem:[#allocation11 + $0x4] sm:$0xf]
    %v618 = vld [vmem:[#allocation11 + $0x8] sm:$0xf]
    %v619 = vld [vmem:[#allocation11 + $0xc] sm:$0xf]
    %v620 = vld [vmem:[#allocation11 + $0x10] sm:$0xf]
    %v621 = vld [vmem:[#allocation11 + $0x14] sm:$0xf]
    %v622 = vld [vmem:[#allocation11 + $0x18] sm:$0xf]
    %v623 = vld [vmem:[#allocation11 + $0x1c] sm:$0xf]
    %v624 = vld [vmem:[#allocation11 + $0x20] sm:$0xf]
    %v625 = vld [vmem:[#allocation11 + $0x24] sm:$0xf]
    %v626 = vld [vmem:[#allocation11 + $0x28] sm:$0xf]
    %v627 = vld [vmem:[#allocation11 + $0x2c] sm:$0xf]
    %v628 = vld [vmem:[#allocation11 + $0x30] sm:$0xf]
    %v629 = vld [vmem:[#allocation11 + $0x34] sm:$0xf]
    %v630 = vld [vmem:[#allocation11 + $0x38] sm:$0xf]
    %v631 = vld [vmem:[#allocation11 + $0x3c] sm:$0xf]
    %v632 = vld [vmem:[#allocation13] sm:$0x1]
    %v634 = vlaneseq
    %v635 = vshrl.u32 %v634, 7
    %v636 = vsub.s32 0, %v635
    %v637 = vrot.slane %v632, %v636
    %v655 = vunpack.c.l.b16 %v616
    %v656 = vunpack.c.l.b16 %v617
    %v657 = vunpack.c.l.b16 %v618
    %v658 = vunpack.c.l.b16 %v619
    %v659 = vunpack.c.l.b16 %v620
    %v660 = vunpack.c.l.b16 %v621
    %v661 = vunpack.c.l.b16 %v622
    %v662 = vunpack.c.l.b16 %v623
    %v663 = vunpack.c.l.b16 %v624
    %v664 = vunpack.c.l.b16 %v625
    %v665 = vunpack.c.l.b16 %v626
    %v666 = vunpack.c.l.b16 %v627
    %v667 = vunpack.c.l.b16 %v628
    %v668 = vunpack.c.l.b16 %v629
    %v669 = vunpack.c.l.b16 %v630
    %v670 = vunpack.c.l.b16 %v631
    %v671 = vpack.c.b16 %v656, %v655
    %v672 = vpack.c.b16 %v658, %v657
    %v673 = vpack.c.b16 %v660, %v659
    %v674 = vpack.c.b16 %v662, %v661
    %v675 = vpack.c.b16 %v664, %v663
    %v676 = vpack.c.b16 %v666, %v665
    %v677 = vpack.c.b16 %v668, %v667
    %v678 = vpack.c.b16 %v670, %v669
    %687 = vmatprep.subr.bf16.mxu0 0
    %688 = vmatpush1.bf16.msra.mxu0 %v671
    %689 = vmatprep.subr.bf16.mxu0 0
    %690 = vmatpush1.bf16.msra.mxu0 %v672
    %691 = vmatprep.subr.bf16.mxu0 0
    %692 = vmatpush1.bf16.msra.mxu0 %v673
    %693 = vmatprep.subr.bf16.mxu0 0
    %694 = vmatpush1.bf16.msra.mxu0 %v674
    %695 = vmatprep.subr.bf16.mxu0 0
    %696 = vmatpush1.bf16.msra.mxu0 %v675
    %697 = vmatprep.subr.bf16.mxu0 0
    %698 = vmatpush1.bf16.msra.mxu0 %v676
    %699 = vmatprep.subr.bf16.mxu0 0
    %700 = vmatpush1.bf16.msra.mxu0 %v677
    %701 = vmatprep.subr.bf16.mxu0 0
    %702 = vmatpush1.bf16.msra.mxu0 %v678
    %703 = vmatprep.subr.bf16.mxu0 0
    %704 = vmatpush1.bf16.msra.mxu0 0
    %705 = vmatprep.subr.bf16.mxu0 0
    %706 = vmatpush1.bf16.msra.mxu0 0
    %707 = vmatprep.subr.bf16.mxu0 0
    %708 = vmatpush1.bf16.msra.mxu0 0
    %709 = vmatprep.subr.bf16.mxu0 0
    %710 = vmatpush1.bf16.msra.mxu0 0
    %711 = vmatprep.subr.bf16.mxu0 0
    %712 = vmatpush1.bf16.msra.mxu0 0
    %713 = vmatprep.subr.bf16.mxu0 0
    %714 = vmatpush1.bf16.msra.mxu0 0
    %715 = vmatprep.subr.bf16.mxu0 0
    %716 = vmatpush1.bf16.msra.mxu0 0
    %717 = vmatprep.subr.bf16.mxu0 0
    %718 = vmatpush1.bf16.msra.mxu0 0
    %719 = vmatprep.mubr.bf16.mxu0 0
    %720 = vmatmul.mubr.bf16.gmra.mrb[0].mxu0 %v615
    %v721 = vpop.f32.mrb[0].mxu0
    %v722 = vadd.f32 %v637, %v721
    %v723 = vpop.f32.mrb[0].mxu0
    %v724 = vpop.f32.mrb[0].mxu0
    %v725 = vpop.f32.mrb[0].mxu0
    %726 = vdwg.mxu0
    %vm727 = vcmp.gt.f32.partialorder %v722, 0.0
    %v728 = vmul.f32 %v722, 0.01
    %v729 = vsel %vm727, %v722, %v728
    %v730 = vpack.c.bf16 %v729, %v729
    %v731 = vld [vmem:[#allocation14] sm:$0xf]
    %v732 = vld [vmem:[#allocation14 + $0x4] sm:$0xf]
    %v733 = vld [vmem:[#allocation14 + $0x8] sm:$0xf]
    %v734 = vld [vmem:[#allocation14 + $0xc] sm:$0xf]
    %v735 = vld [vmem:[#allocation14 + $0x10] sm:$0xf]
    %v736 = vld [vmem:[#allocation14 + $0x14] sm:$0xf]
    %v737 = vld [vmem:[#allocation14 + $0x18] sm:$0xf]
    %v738 = vld [vmem:[#allocation14 + $0x1c] sm:$0xf]
    %v739 = vld [vmem:[#allocation14 + $0x20] sm:$0xf]
    %v740 = vld [vmem:[#allocation14 + $0x24] sm:$0xf]
    %v741 = vld [vmem:[#allocation14 + $0x28] sm:$0xf]
    %v742 = vld [vmem:[#allocation14 + $0x2c] sm:$0xf]
    %v743 = vld [vmem:[#allocation14 + $0x30] sm:$0xf]
    %v744 = vld [vmem:[#allocation14 + $0x34] sm:$0xf]
    %v745 = vld [vmem:[#allocation14 + $0x38] sm:$0xf]
    %v746 = vld [vmem:[#allocation14 + $0x3c] sm:$0xf]
    %v747 = vld [vmem:[#allocation16] sm:$0xf]
    %v748 = vld [vmem:[#allocation16 + $0x4] sm:$0xf]
    %v749 = vld [vmem:[#allocation16 + $0x8] sm:$0xf]
    %v750 = vld [vmem:[#allocation16 + $0xc] sm:$0xf]
    %v751 = vld [vmem:[#allocation16 + $0x10] sm:$0xf]
    %v752 = vld [vmem:[#allocation16 + $0x14] sm:$0xf]
    %v753 = vld [vmem:[#allocation16 + $0x18] sm:$0xf]
    %v754 = vld [vmem:[#allocation16 + $0x1c] sm:$0xf]
    %v755 = vld [vmem:[#allocation16 + $0x20] sm:$0xf]
    %v756 = vld [vmem:[#allocation16 + $0x24] sm:$0xf]
    %v757 = vld [vmem:[#allocation16 + $0x28] sm:$0xf]
    %v758 = vld [vmem:[#allocation16 + $0x2c] sm:$0xf]
    %v759 = vld [vmem:[#allocation16 + $0x30] sm:$0xf]
    %v760 = vld [vmem:[#allocation16 + $0x34] sm:$0xf]
    %v761 = vld [vmem:[#allocation16 + $0x38] sm:$0xf]
    %v762 = vld [vmem:[#allocation16 + $0x3c] sm:$0xf]
    %v779 = vunpack.c.l.b16 %v747
    %v780 = vunpack.c.l.b16 %v748
    %v781 = vunpack.c.l.b16 %v749
    %v782 = vunpack.c.l.b16 %v750
    %v783 = vunpack.c.l.b16 %v751
    %v784 = vunpack.c.l.b16 %v752
    %v785 = vunpack.c.l.b16 %v753
    %v786 = vunpack.c.l.b16 %v754
    %v787 = vunpack.c.l.b16 %v755
    %v788 = vunpack.c.l.b16 %v756
    %v789 = vunpack.c.l.b16 %v757
    %v790 = vunpack.c.l.b16 %v758
    %v791 = vunpack.c.l.b16 %v759
    %v792 = vunpack.c.l.b16 %v760
    %v793 = vunpack.c.l.b16 %v761
    %v794 = vunpack.c.l.b16 %v762
    %v795 = vpack.c.b16 %v780, %v779
    %v796 = vpack.c.b16 %v782, %v781
    %v797 = vpack.c.b16 %v784, %v783
    %v798 = vpack.c.b16 %v786, %v785
    %v799 = vpack.c.b16 %v788, %v787
    %v800 = vpack.c.b16 %v790, %v789
    %v801 = vpack.c.b16 %v792, %v791
    %v802 = vpack.c.b16 %v794, %v793
    %811 = vmatprep.subr.bf16.mxu0 0
    %812 = vmatpush1.bf16.msra.mxu0 %v795
    %813 = vmatprep.subr.bf16.mxu0 0
    %814 = vmatpush1.bf16.msra.mxu0 %v796
    %815 = vmatprep.subr.bf16.mxu0 0
    %816 = vmatpush1.bf16.msra.mxu0 %v797
    %817 = vmatprep.subr.bf16.mxu0 0
    %818 = vmatpush1.bf16.msra.mxu0 %v798
    %819 = vmatprep.subr.bf16.mxu0 0
    %820 = vmatpush1.bf16.msra.mxu0 %v799
    %821 = vmatprep.subr.bf16.mxu0 0
    %822 = vmatpush1.bf16.msra.mxu0 %v800
    %823 = vmatprep.subr.bf16.mxu0 0
    %824 = vmatpush1.bf16.msra.mxu0 %v801
    %825 = vmatprep.subr.bf16.mxu0 0
    %826 = vmatpush1.bf16.msra.mxu0 %v802
    %827 = vmatprep.subr.bf16.mxu0 0
    %828 = vmatpush1.bf16.msra.mxu0 0
    %829 = vmatprep.subr.bf16.mxu0 0
    %830 = vmatpush1.bf16.msra.mxu0 0
    %831 = vmatprep.subr.bf16.mxu0 0
    %832 = vmatpush1.bf16.msra.mxu0 0
    %833 = vmatprep.subr.bf16.mxu0 0
    %834 = vmatpush1.bf16.msra.mxu0 0
    %835 = vmatprep.subr.bf16.mxu0 0
    %836 = vmatpush1.bf16.msra.mxu0 0
    %837 = vmatprep.subr.bf16.mxu0 0
    %838 = vmatpush1.bf16.msra.mxu0 0
    %839 = vmatprep.subr.bf16.mxu0 0
    %840 = vmatpush1.bf16.msra.mxu0 0
    %841 = vmatprep.subr.bf16.mxu0 0
    %842 = vmatpush1.bf16.msra.mxu0 0
    %843 = vmatprep.mubr.bf16.mxu0 0
    %844 = vmatmul.mubr.bf16.gmra.mrb[0].mxu0 %v612
    %v845 = vpop.f32.mrb[0].mxu0
    %v846 = vadd.f32 0.0, %v845
    %v847 = vpop.f32.mrb[0].mxu0
    %v848 = vpop.f32.mrb[0].mxu0
    %v849 = vpop.f32.mrb[0].mxu0
    %850 = vdwg.mxu0
    %v867 = vunpack.c.l.b16 %v731
    %v868 = vunpack.c.l.b16 %v732
    %v869 = vunpack.c.l.b16 %v733
    %v870 = vunpack.c.l.b16 %v734
    %v871 = vunpack.c.l.b16 %v735
    %v872 = vunpack.c.l.b16 %v736
    %v873 = vunpack.c.l.b16 %v737
    %v874 = vunpack.c.l.b16 %v738
    %v875 = vunpack.c.l.b16 %v739
    %v876 = vunpack.c.l.b16 %v740
    %v877 = vunpack.c.l.b16 %v741
    %v878 = vunpack.c.l.b16 %v742
    %v879 = vunpack.c.l.b16 %v743
    %v880 = vunpack.c.l.b16 %v744
    %v881 = vunpack.c.l.b16 %v745
    %v882 = vunpack.c.l.b16 %v746
    %v883 = vpack.c.b16 %v868, %v867
    %v884 = vpack.c.b16 %v870, %v869
    %v885 = vpack.c.b16 %v872, %v871
    %v886 = vpack.c.b16 %v874, %v873
    %v887 = vpack.c.b16 %v876, %v875
    %v888 = vpack.c.b16 %v878, %v877
    %v889 = vpack.c.b16 %v880, %v879
    %v890 = vpack.c.b16 %v882, %v881
    %899 = vmatprep.subr.bf16.mxu0 0
    %900 = vmatpush1.bf16.msra.mxu0 %v883
    %901 = vmatprep.subr.bf16.mxu0 0
    %902 = vmatpush1.bf16.msra.mxu0 %v884
    %903 = vmatprep.subr.bf16.mxu0 0
    %904 = vmatpush1.bf16.msra.mxu0 %v885
    %905 = vmatprep.subr.bf16.mxu0 0
    %906 = vmatpush1.bf16.msra.mxu0 %v886
    %907 = vmatprep.subr.bf16.mxu0 0
    %908 = vmatpush1.bf16.msra.mxu0 %v887
    %909 = vmatprep.subr.bf16.mxu0 0
    %910 = vmatpush1.bf16.msra.mxu0 %v888
    %911 = vmatprep.subr.bf16.mxu0 0
    %912 = vmatpush1.bf16.msra.mxu0 %v889
    %913 = vmatprep.subr.bf16.mxu0 0
    %914 = vmatpush1.bf16.msra.mxu0 %v890
    %915 = vmatprep.subr.bf16.mxu0 0
    %916 = vmatpush1.bf16.msra.mxu0 0
    %917 = vmatprep.subr.bf16.mxu0 0
    %918 = vmatpush1.bf16.msra.mxu0 0
    %919 = vmatprep.subr.bf16.mxu0 0
    %920 = vmatpush1.bf16.msra.mxu0 0
    %921 = vmatprep.subr.bf16.mxu0 0
    %922 = vmatpush1.bf16.msra.mxu0 0
    %923 = vmatprep.subr.bf16.mxu0 0
    %924 = vmatpush1.bf16.msra.mxu0 0
    %925 = vmatprep.subr.bf16.mxu0 0
    %926 = vmatpush1.bf16.msra.mxu0 0
    %927 = vmatprep.subr.bf16.mxu0 0
    %928 = vmatpush1.bf16.msra.mxu0 0
    %929 = vmatprep.subr.bf16.mxu0 0
    %930 = vmatpush1.bf16.msra.mxu0 0
    %931 = vmatprep.mubr.bf16.mxu0 0
    %932 = vmatmul.mubr.bf16.gmra.mrb[0].mxu0 %v730
    %v933 = vpop.f32.mrb[0].mxu0
    %v934 = vadd.f32 %v846, %v933
    %v935 = vpop.f32.mrb[0].mxu0
    %v936 = vpop.f32.mrb[0].mxu0
    %v937 = vpop.f32.mrb[0].mxu0
    %938 = vdwg.mxu0
    %v939 = vld [vmem:[#allocation17] sm:$0x1]
    %v941 = vlaneseq
    %v942 = vshrl.u32 %v941, 7
    %v943 = vsub.s32 0, %v942
    %v944 = vrot.slane %v939, %v943
    %v946 = vadd.f32 %v934, %v944
    %v947 = vpack.c.bf16 %v946, %v946
    %vm948 = vcmp.gt.bf16.partialorder %v947, 0
    %v949 = vmul.bf16 %v947, 1009007652
    %v950 = vsel %vm948, %v947, %v949
    %v951 = vld [vmem:[#allocation19] sm:$0xf]
    %v952 = vld [vmem:[#allocation19 + $0x4] sm:$0xf]
    %v953 = vld [vmem:[#allocation19 + $0x8] sm:$0xf]
    %v954 = vld [vmem:[#allocation19 + $0xc] sm:$0xf]
    %v955 = vld [vmem:[#allocation19 + $0x10] sm:$0xf]
    %v956 = vld [vmem:[#allocation19 + $0x14] sm:$0xf]
    %v957 = vld [vmem:[#allocation19 + $0x18] sm:$0xf]
    %v958 = vld [vmem:[#allocation19 + $0x1c] sm:$0xf]
    %v959 = vld [vmem:[#allocation19 + $0x20] sm:$0xf]
    %v960 = vld [vmem:[#allocation19 + $0x24] sm:$0xf]
    %v961 = vld [vmem:[#allocation19 + $0x28] sm:$0xf]
    %v962 = vld [vmem:[#allocation19 + $0x2c] sm:$0xf]
    %v963 = vld [vmem:[#allocation19 + $0x30] sm:$0xf]
    %v964 = vld [vmem:[#allocation19 + $0x34] sm:$0xf]
    %v965 = vld [vmem:[#allocation19 + $0x38] sm:$0xf]
    %v966 = vld [vmem:[#allocation19 + $0x3c] sm:$0xf]
    %v967 = vld [vmem:[#allocation20] sm:$0x1]
    %v969 = vlaneseq
    %v970 = vshrl.u32 %v969, 7
    %v971 = vsub.s32 0, %v970
    %v972 = vrot.slane %v967, %v971
    %v990 = vunpack.c.l.b16 %v951
    %v991 = vunpack.c.l.b16 %v952
    %v992 = vunpack.c.l.b16 %v953
    %v993 = vunpack.c.l.b16 %v954
    %v994 = vunpack.c.l.b16 %v955
    %v995 = vunpack.c.l.b16 %v956
    %v996 = vunpack.c.l.b16 %v957
    %v997 = vunpack.c.l.b16 %v958
    %v998 = vunpack.c.l.b16 %v959
    %v999 = vunpack.c.l.b16 %v960
    %v1000 = vunpack.c.l.b16 %v961
    %v1001 = vunpack.c.l.b16 %v962
    %v1002 = vunpack.c.l.b16 %v963
    %v1003 = vunpack.c.l.b16 %v964
    %v1004 = vunpack.c.l.b16 %v965
    %v1005 = vunpack.c.l.b16 %v966
    %v1006 = vpack.c.b16 %v991, %v990
    %v1007 = vpack.c.b16 %v993, %v992
    %v1008 = vpack.c.b16 %v995, %v994
    %v1009 = vpack.c.b16 %v997, %v996
    %v1010 = vpack.c.b16 %v999, %v998
    %v1011 = vpack.c.b16 %v1001, %v1000
    %v1012 = vpack.c.b16 %v1003, %v1002
    %v1013 = vpack.c.b16 %v1005, %v1004
    %1022 = vmatprep.subr.bf16.mxu0 0
    %1023 = vmatpush1.bf16.msra.mxu0 %v1006
    %1024 = vmatprep.subr.bf16.mxu0 0
    %1025 = vmatpush1.bf16.msra.mxu0 %v1007
    %1026 = vmatprep.subr.bf16.mxu0 0
    %1027 = vmatpush1.bf16.msra.mxu0 %v1008
    %1028 = vmatprep.subr.bf16.mxu0 0
    %1029 = vmatpush1.bf16.msra.mxu0 %v1009
    %1030 = vmatprep.subr.bf16.mxu0 0
    %1031 = vmatpush1.bf16.msra.mxu0 %v1010
    %1032 = vmatprep.subr.bf16.mxu0 0
    %1033 = vmatpush1.bf16.msra.mxu0 %v1011
    %1034 = vmatprep.subr.bf16.mxu0 0
    %1035 = vmatpush1.bf16.msra.mxu0 %v1012
    %1036 = vmatprep.subr.bf16.mxu0 0
    %1037 = vmatpush1.bf16.msra.mxu0 %v1013
    %1038 = vmatprep.subr.bf16.mxu0 0
    %1039 = vmatpush1.bf16.msra.mxu0 0
    %1040 = vmatprep.subr.bf16.mxu0 0
    %1041 = vmatpush1.bf16.msra.mxu0 0
    %1042 = vmatprep.subr.bf16.mxu0 0
    %1043 = vmatpush1.bf16.msra.mxu0 0
    %1044 = vmatprep.subr.bf16.mxu0 0
    %1045 = vmatpush1.bf16.msra.mxu0 0
    %1046 = vmatprep.subr.bf16.mxu0 0
    %1047 = vmatpush1.bf16.msra.mxu0 0
    %1048 = vmatprep.subr.bf16.mxu0 0
    %1049 = vmatpush1.bf16.msra.mxu0 0
    %1050 = vmatprep.subr.bf16.mxu0 0
    %1051 = vmatpush1.bf16.msra.mxu0 0
    %1052 = vmatprep.subr.bf16.mxu0 0
    %1053 = vmatpush1.bf16.msra.mxu0 0
    %1054 = vmatprep.mubr.bf16.mxu0 0
    %1055 = vmatmul.mubr.bf16.gmra.mrb[0].mxu0 %v950
    %v1056 = vpop.f32.mrb[0].mxu0
    %v1057 = vadd.f32 %v972, %v1056
    %v1058 = vpop.f32.mrb[0].mxu0
    %v1059 = vpop.f32.mrb[0].mxu0
    %v1060 = vpop.f32.mrb[0].mxu0
    %1061 = vdwg.mxu0
    %vm1062 = vcmp.gt.f32.partialorder %v1057, 0.0
    %v1063 = vmul.f32 %v1057, 0.01
    %v1064 = vsel %vm1062, %v1057, %v1063
    %v1065 = vpack.c.bf16 %v1064, %v1064
    %v1066 = vld [vmem:[%s13] sm:$0xff]
    %v1067 = vld [vmem:[%s13 + $0x8] sm:$0xff]
    %v1068 = vld [vmem:[%s13 + $0x10] sm:$0xff]
    %v1069 = vld [vmem:[%s13 + $0x18] sm:$0xff]
    %v1070 = vld [vmem:[%s13 + $0x20] sm:$0xff]
    %v1071 = vld [vmem:[%s13 + $0x28] sm:$0xff]
    %v1072 = vld [vmem:[%s13 + $0x30] sm:$0xff]
    %v1073 = vld [vmem:[%s13 + $0x38] sm:$0xff]
    %v1074 = vld [vmem:[%s13 + $0x40] sm:$0xff]
    %v1075 = vld [vmem:[%s13 + $0x48] sm:$0xff]
    %v1076 = vld [vmem:[%s13 + $0x50] sm:$0xff]
    %v1077 = vld [vmem:[%s13 + $0x58] sm:$0xff]
    %v1078 = vld [vmem:[%s13 + $0x60] sm:$0xff]
    %v1079 = vld [vmem:[%s13 + $0x68] sm:$0xff]
    %v1080 = vld [vmem:[%s13 + $0x70] sm:$0xff]
    %v1081 = vld [vmem:[%s13 + $0x78] sm:$0xff]
    %v1082 = vld [vmem:[%s14] sm:$0xff]
    %v1083 = vld [vmem:[%s14 + $0x8] sm:$0xff]
    %v1084 = vld [vmem:[%s14 + $0x10] sm:$0xff]
    %v1085 = vld [vmem:[%s14 + $0x18] sm:$0xff]
    %v1086 = vld [vmem:[%s14 + $0x20] sm:$0xff]
    %v1087 = vld [vmem:[%s14 + $0x28] sm:$0xff]
    %v1088 = vld [vmem:[%s14 + $0x30] sm:$0xff]
    %v1089 = vld [vmem:[%s14 + $0x38] sm:$0xff]
    %v1090 = vld [vmem:[%s14 + $0x40] sm:$0xff]
    %v1091 = vld [vmem:[%s14 + $0x48] sm:$0xff]
    %v1092 = vld [vmem:[%s14 + $0x50] sm:$0xff]
    %v1093 = vld [vmem:[%s14 + $0x58] sm:$0xff]
    %v1094 = vld [vmem:[%s14 + $0x60] sm:$0xff]
    %v1095 = vld [vmem:[%s14 + $0x68] sm:$0xff]
    %v1096 = vld [vmem:[%s14 + $0x70] sm:$0xff]
    %v1097 = vld [vmem:[%s14 + $0x78] sm:$0xff]
    %v1114 = vunpack.c.l.b16 %v1082
    %v1115 = vunpack.c.h.b16 %v1082
    %v1116 = vunpack.c.l.b16 %v1083
    %v1117 = vunpack.c.h.b16 %v1083
    %v1118 = vunpack.c.l.b16 %v1084
    %v1119 = vunpack.c.h.b16 %v1084
    %v1120 = vunpack.c.l.b16 %v1085
    %v1121 = vunpack.c.h.b16 %v1085
    %v1122 = vunpack.c.l.b16 %v1086
    %v1123 = vunpack.c.h.b16 %v1086
    %v1124 = vunpack.c.l.b16 %v1087
    %v1125 = vunpack.c.h.b16 %v1087
    %v1126 = vunpack.c.l.b16 %v1088
    %v1127 = vunpack.c.h.b16 %v1088
    %v1128 = vunpack.c.l.b16 %v1089
    %v1129 = vunpack.c.h.b16 %v1089
    %v1130 = vunpack.c.l.b16 %v1090
    %v1131 = vunpack.c.h.b16 %v1090
    %v1132 = vunpack.c.l.b16 %v1091
    %v1133 = vunpack.c.h.b16 %v1091
    %v1134 = vunpack.c.l.b16 %v1092
    %v1135 = vunpack.c.h.b16 %v1092
    %v1136 = vunpack.c.l.b16 %v1093
    %v1137 = vunpack.c.h.b16 %v1093
    %v1138 = vunpack.c.l.b16 %v1094
    %v1139 = vunpack.c.h.b16 %v1094
    %v1140 = vunpack.c.l.b16 %v1095
    %v1141 = vunpack.c.h.b16 %v1095
    %v1142 = vunpack.c.l.b16 %v1096
    %v1143 = vunpack.c.h.b16 %v1096
    %v1144 = vunpack.c.l.b16 %v1097
    %v1145 = vunpack.c.h.b16 %v1097
    %v1146 = vpack.c.b16 %v1116, %v1114
    %v1147 = vpack.c.b16 %v1117, %v1115
    %v1148 = vpack.c.b16 %v1120, %v1118
    %v1149 = vpack.c.b16 %v1121, %v1119
    %v1150 = vpack.c.b16 %v1124, %v1122
    %v1151 = vpack.c.b16 %v1125, %v1123
    %v1152 = vpack.c.b16 %v1128, %v1126
    %v1153 = vpack.c.b16 %v1129, %v1127
    %v1154 = vpack.c.b16 %v1132, %v1130
    %v1155 = vpack.c.b16 %v1133, %v1131
    %v1156 = vpack.c.b16 %v1136, %v1134
    %v1157 = vpack.c.b16 %v1137, %v1135
    %v1158 = vpack.c.b16 %v1140, %v1138
    %v1159 = vpack.c.b16 %v1141, %v1139
    %v1160 = vpack.c.b16 %v1144, %v1142
    %v1161 = vpack.c.b16 %v1145, %v1143
    %1178 = vmatprep.subr.bf16.mxu0 %v1147
    %1179 = vmatpush1.bf16.msra.mxu0 %v1146
    %1180 = vmatprep.subr.bf16.mxu0 %v1149
    %1181 = vmatpush1.bf16.msra.mxu0 %v1148
    %1182 = vmatprep.subr.bf16.mxu0 %v1151
    %1183 = vmatpush1.bf16.msra.mxu0 %v1150
    %1184 = vmatprep.subr.bf16.mxu0 %v1153
    %1185 = vmatpush1.bf16.msra.mxu0 %v1152
    %1186 = vmatprep.subr.bf16.mxu0 %v1155
    %1187 = vmatpush1.bf16.msra.mxu0 %v1154
    %1188 = vmatprep.subr.bf16.mxu0 %v1157
    %1189 = vmatpush1.bf16.msra.mxu0 %v1156
    %1190 = vmatprep.subr.bf16.mxu0 %v1159
    %1191 = vmatpush1.bf16.msra.mxu0 %v1158
    %1192 = vmatprep.subr.bf16.mxu0 %v1161
    %1193 = vmatpush1.bf16.msra.mxu0 %v1160
    %1194 = vmatprep.subr.bf16.mxu0 0
    %1195 = vmatpush1.bf16.msra.mxu0 0
    %1196 = vmatprep.subr.bf16.mxu0 0
    %1197 = vmatpush1.bf16.msra.mxu0 0
    %1198 = vmatprep.subr.bf16.mxu0 0
    %1199 = vmatpush1.bf16.msra.mxu0 0
    %1200 = vmatprep.subr.bf16.mxu0 0
    %1201 = vmatpush1.bf16.msra.mxu0 0
    %1202 = vmatprep.subr.bf16.mxu0 0
    %1203 = vmatpush1.bf16.msra.mxu0 0
    %1204 = vmatprep.subr.bf16.mxu0 0
    %1205 = vmatpush1.bf16.msra.mxu0 0
    %1206 = vmatprep.subr.bf16.mxu0 0
    %1207 = vmatpush1.bf16.msra.mxu0 0
    %1208 = vmatprep.subr.bf16.mxu0 0
    %1209 = vmatpush1.bf16.msra.mxu0 0
    %1210 = vmatprep.mubr.bf16.mxu0 0
    %1211 = vmatmul.mubr.bf16.gmra.mrb[0].mxu0 %v947
    %v1212 = vpop.f32.mrb[0].mxu0
    %v1213 = vadd.f32 0.0, %v1212
    %v1214 = vpop.f32.mrb[0].mxu0
    %v1215 = vadd.f32 0.0, %v1214
    %v1216 = vpop.f32.mrb[0].mxu0
    %v1217 = vpop.f32.mrb[0].mxu0
    %1218 = vdwg.mxu0
    %v1235 = vunpack.c.l.b16 %v1066
    %v1236 = vunpack.c.h.b16 %v1066
    %v1237 = vunpack.c.l.b16 %v1067
    %v1238 = vunpack.c.h.b16 %v1067
    %v1239 = vunpack.c.l.b16 %v1068
    %v1240 = vunpack.c.h.b16 %v1068
    %v1241 = vunpack.c.l.b16 %v1069
    %v1242 = vunpack.c.h.b16 %v1069
    %v1243 = vunpack.c.l.b16 %v1070
    %v1244 = vunpack.c.h.b16 %v1070
    %v1245 = vunpack.c.l.b16 %v1071
    %v1246 = vunpack.c.h.b16 %v1071
    %v1247 = vunpack.c.l.b16 %v1072
    %v1248 = vunpack.c.h.b16 %v1072
    %v1249 = vunpack.c.l.b16 %v1073
    %v1250 = vunpack.c.h.b16 %v1073
    %v1251 = vunpack.c.l.b16 %v1074
    %v1252 = vunpack.c.h.b16 %v1074
    %v1253 = vunpack.c.l.b16 %v1075
    %v1254 = vunpack.c.h.b16 %v1075
    %v1255 = vunpack.c.l.b16 %v1076
    %v1256 = vunpack.c.h.b16 %v1076
    %v1257 = vunpack.c.l.b16 %v1077
    %v1258 = vunpack.c.h.b16 %v1077
    %v1259 = vunpack.c.l.b16 %v1078
    %v1260 = vunpack.c.h.b16 %v1078
    %v1261 = vunpack.c.l.b16 %v1079
    %v1262 = vunpack.c.h.b16 %v1079
    %v1263 = vunpack.c.l.b16 %v1080
    %v1264 = vunpack.c.h.b16 %v1080
    %v1265 = vunpack.c.l.b16 %v1081
    %v1266 = vunpack.c.h.b16 %v1081
    %v1267 = vpack.c.b16 %v1237, %v1235
    %v1268 = vpack.c.b16 %v1238, %v1236
    %v1269 = vpack.c.b16 %v1241, %v1239
    %v1270 = vpack.c.b16 %v1242, %v1240
    %v1271 = vpack.c.b16 %v1245, %v1243
    %v1272 = vpack.c.b16 %v1246, %v1244
    %v1273 = vpack.c.b16 %v1249, %v1247
    %v1274 = vpack.c.b16 %v1250, %v1248
    %v1275 = vpack.c.b16 %v1253, %v1251
    %v1276 = vpack.c.b16 %v1254, %v1252
    %v1277 = vpack.c.b16 %v1257, %v1255
    %v1278 = vpack.c.b16 %v1258, %v1256
    %v1279 = vpack.c.b16 %v1261, %v1259
    %v1280 = vpack.c.b16 %v1262, %v1260
    %v1281 = vpack.c.b16 %v1265, %v1263
    %v1282 = vpack.c.b16 %v1266, %v1264
    %1299 = vmatprep.subr.bf16.mxu0 %v1268
    %1300 = vmatpush1.bf16.msra.mxu0 %v1267
    %1301 = vmatprep.subr.bf16.mxu0 %v1270
    %1302 = vmatpush1.bf16.msra.mxu0 %v1269
    %1303 = vmatprep.subr.bf16.mxu0 %v1272
    %1304 = vmatpush1.bf16.msra.mxu0 %v1271
    %1305 = vmatprep.subr.bf16.mxu0 %v1274
    %1306 = vmatpush1.bf16.msra.mxu0 %v1273
    %1307 = vmatprep.subr.bf16.mxu0 %v1276
    %1308 = vmatpush1.bf16.msra.mxu0 %v1275
    %1309 = vmatprep.subr.bf16.mxu0 %v1278
    %1310 = vmatpush1.bf16.msra.mxu0 %v1277
    %1311 = vmatprep.subr.bf16.mxu0 %v1280
    %1312 = vmatpush1.bf16.msra.mxu0 %v1279
    %1313 = vmatprep.subr.bf16.mxu0 %v1282
    %1314 = vmatpush1.bf16.msra.mxu0 %v1281
    %1315 = vmatprep.subr.bf16.mxu0 0
    %1316 = vmatpush1.bf16.msra.mxu0 0
    %1317 = vmatprep.subr.bf16.mxu0 0
    %1318 = vmatpush1.bf16.msra.mxu0 0
    %1319 = vmatprep.subr.bf16.mxu0 0
    %1320 = vmatpush1.bf16.msra.mxu0 0
    %1321 = vmatprep.subr.bf16.mxu0 0
    %1322 = vmatpush1.bf16.msra.mxu0 0
    %1323 = vmatprep.subr.bf16.mxu0 0
    %1324 = vmatpush1.bf16.msra.mxu0 0
    %1325 = vmatprep.subr.bf16.mxu0 0
    %1326 = vmatpush1.bf16.msra.mxu0 0
    %1327 = vmatprep.subr.bf16.mxu0 0
    %1328 = vmatpush1.bf16.msra.mxu0 0
    %1329 = vmatprep.subr.bf16.mxu0 0
    %1330 = vmatpush1.bf16.msra.mxu0 0
    %1331 = vmatprep.mubr.bf16.mxu0 0
    %1332 = vmatmul.mubr.bf16.gmra.mrb[0].mxu0 %v1065
    %v1333 = vpop.f32.mrb[0].mxu0
    %v1334 = vadd.f32 %v1213, %v1333
    %v1335 = vpop.f32.mrb[0].mxu0
    %v1336 = vadd.f32 %v1215, %v1335
    %v1337 = vpop.f32.mrb[0].mxu0
    %v1338 = vpop.f32.mrb[0].mxu0
    %1339 = vdwg.mxu0
    %v1340 = vld [vmem:[#allocation22] sm:$0x3]
    %v1342 = vlaneseq
    %v1343 = vshrl.u32 %v1342, 7
    %v1344 = vsub.s32 0, %v1343
    %v1345 = vrot.slane %v1340, %v1344
    %v1346 = vlaneseq
    %v1347 = vshrl.u32 %v1346, 7
    %v1348 = vsub.s32 1, %v1347
    %v1349 = vrot.slane %v1340, %v1348
    %v1352 = vadd.f32 %v1334, %v1345
    %v1353 = vadd.f32 %v1336, %v1349
    %v1354 = vpack.c.bf16 %v1352, %v1352
    %v1355 = vpack.c.bf16 %v1353, %v1353
    %vm1356 = vcmp.gt.bf16.partialorder %v1354, 0
    %vm1357 = vcmp.gt.bf16.partialorder %v1355, 0
    %v1358 = vmul.bf16 %v1354, 1009007652
    %v1359 = vmul.bf16 %v1355, 1009007652
    %v1360 = vsel %vm1356, %v1354, %v1358
    %v1361 = vsel %vm1357, %v1355, %v1359
    %v1362 = vld [vmem:[%s16] sm:$0xff]
    %v1363 = vld [vmem:[%s16 + $0x8] sm:$0xff]
    %v1364 = vld [vmem:[%s16 + $0x10] sm:$0xff]
    %v1365 = vld [vmem:[%s16 + $0x18] sm:$0xff]
    %v1366 = vld [vmem:[%s16 + $0x20] sm:$0xff]
    %v1367 = vld [vmem:[%s16 + $0x28] sm:$0xff]
    %v1368 = vld [vmem:[%s16 + $0x30] sm:$0xff]
    %v1369 = vld [vmem:[%s16 + $0x38] sm:$0xff]
    %v1370 = vld [vmem:[%s16 + $0x40] sm:$0xff]
    %v1371 = vld [vmem:[%s16 + $0x48] sm:$0xff]
    %v1372 = vld [vmem:[%s16 + $0x50] sm:$0xff]
    %v1373 = vld [vmem:[%s16 + $0x58] sm:$0xff]
    %v1374 = vld [vmem:[%s16 + $0x60] sm:$0xff]
    %v1375 = vld [vmem:[%s16 + $0x68] sm:$0xff]
    %v1376 = vld [vmem:[%s16 + $0x70] sm:$0xff]
    %v1377 = vld [vmem:[%s16 + $0x78] sm:$0xff]
    %v1378 = vld [vmem:[%s16 + $0x80] sm:$0xff]
    %v1379 = vld [vmem:[%s16 + $0x88] sm:$0xff]
    %v1380 = vld [vmem:[%s16 + $0x90] sm:$0xff]
    %v1381 = vld [vmem:[%s16 + $0x98] sm:$0xff]
    %v1382 = vld [vmem:[%s16 + $0xa0] sm:$0xff]
    %v1383 = vld [vmem:[%s16 + $0xa8] sm:$0xff]
    %v1384 = vld [vmem:[%s16 + $0xb0] sm:$0xff]
    %v1385 = vld [vmem:[%s16 + $0xb8] sm:$0xff]
    %v1386 = vld [vmem:[%s16 + $0xc0] sm:$0xff]
    %v1387 = vld [vmem:[%s16 + $0xc8] sm:$0xff]
    %v1388 = vld [vmem:[%s16 + $0xd0] sm:$0xff]
    %v1389 = vld [vmem:[%s16 + $0xd8] sm:$0xff]
    %v1390 = vld [vmem:[%s16 + $0xe0] sm:$0xff]
    %v1391 = vld [vmem:[%s16 + $0xe8] sm:$0xff]
    %v1392 = vld [vmem:[%s16 + $0xf0] sm:$0xff]
    %v1393 = vld [vmem:[%s16 + $0xf8] sm:$0xff]
    %v1394 = vld [vmem:[#allocation23] sm:$0x3]
    %v1396 = vlaneseq
    %v1397 = vshrl.u32 %v1396, 7
    %v1398 = vsub.s32 0, %v1397
    %v1399 = vrot.slane %v1394, %v1398
    %v1400 = vlaneseq
    %v1401 = vshrl.u32 %v1400, 7
    %v1402 = vsub.s32 1, %v1401
    %v1403 = vrot.slane %v1394, %v1402
    %v1438 = vunpack.c.l.b16 %v1362
    %v1439 = vunpack.c.h.b16 %v1362
    %v1440 = vunpack.c.l.b16 %v1363
    %v1441 = vunpack.c.h.b16 %v1363
    %v1442 = vunpack.c.l.b16 %v1364
    %v1443 = vunpack.c.h.b16 %v1364
    %v1444 = vunpack.c.l.b16 %v1365
    %v1445 = vunpack.c.h.b16 %v1365
    %v1446 = vunpack.c.l.b16 %v1366
    %v1447 = vunpack.c.h.b16 %v1366
    %v1448 = vunpack.c.l.b16 %v1367
    %v1449 = vunpack.c.h.b16 %v1367
    %v1450 = vunpack.c.l.b16 %v1368
    %v1451 = vunpack.c.h.b16 %v1368
    %v1452 = vunpack.c.l.b16 %v1369
    %v1453 = vunpack.c.h.b16 %v1369
    %v1454 = vunpack.c.l.b16 %v1370
    %v1455 = vunpack.c.h.b16 %v1370
    %v1456 = vunpack.c.l.b16 %v1371
    %v1457 = vunpack.c.h.b16 %v1371
    %v1458 = vunpack.c.l.b16 %v1372
    %v1459 = vunpack.c.h.b16 %v1372
    %v1460 = vunpack.c.l.b16 %v1373
    %v1461 = vunpack.c.h.b16 %v1373
    %v1462 = vunpack.c.l.b16 %v1374
    %v1463 = vunpack.c.h.b16 %v1374
    %v1464 = vunpack.c.l.b16 %v1375
    %v1465 = vunpack.c.h.b16 %v1375
    %v1466 = vunpack.c.l.b16 %v1376
    %v1467 = vunpack.c.h.b16 %v1376
    %v1468 = vunpack.c.l.b16 %v1377
    %v1469 = vunpack.c.h.b16 %v1377
    %v1470 = vunpack.c.l.b16 %v1378
    %v1471 = vunpack.c.h.b16 %v1378
    %v1472 = vunpack.c.l.b16 %v1379
    %v1473 = vunpack.c.h.b16 %v1379
    %v1474 = vunpack.c.l.b16 %v1380
    %v1475 = vunpack.c.h.b16 %v1380
    %v1476 = vunpack.c.l.b16 %v1381
    %v1477 = vunpack.c.h.b16 %v1381
    %v1478 = vunpack.c.l.b16 %v1382
    %v1479 = vunpack.c.h.b16 %v1382
    %v1480 = vunpack.c.l.b16 %v1383
    %v1481 = vunpack.c.h.b16 %v1383
    %v1482 = vunpack.c.l.b16 %v1384
    %v1483 = vunpack.c.h.b16 %v1384
    %v1484 = vunpack.c.l.b16 %v1385
    %v1485 = vunpack.c.h.b16 %v1385
    %v1486 = vunpack.c.l.b16 %v1386
    %v1487 = vunpack.c.h.b16 %v1386
    %v1488 = vunpack.c.l.b16 %v1387
    %v1489 = vunpack.c.h.b16 %v1387
    %v1490 = vunpack.c.l.b16 %v1388
    %v1491 = vunpack.c.h.b16 %v1388
    %v1492 = vunpack.c.l.b16 %v1389
    %v1493 = vunpack.c.h.b16 %v1389
    %v1494 = vunpack.c.l.b16 %v1390
    %v1495 = vunpack.c.h.b16 %v1390
    %v1496 = vunpack.c.l.b16 %v1391
    %v1497 = vunpack.c.h.b16 %v1391
    %v1498 = vunpack.c.l.b16 %v1392
    %v1499 = vunpack.c.h.b16 %v1392
    %v1500 = vunpack.c.l.b16 %v1393
    %v1501 = vunpack.c.h.b16 %v1393
    %v1502 = vpack.c.b16 %v1440, %v1438
    %v1503 = vpack.c.b16 %v1441, %v1439
    %v1504 = vpack.c.b16 %v1444, %v1442
    %v1505 = vpack.c.b16 %v1445, %v1443
    %v1506 = vpack.c.b16 %v1448, %v1446
    %v1507 = vpack.c.b16 %v1449, %v1447
    %v1508 = vpack.c.b16 %v1452, %v1450
    %v1509 = vpack.c.b16 %v1453, %v1451
    %v1510 = vpack.c.b16 %v1456, %v1454
    %v1511 = vpack.c.b16 %v1457, %v1455
    %v1512 = vpack.c.b16 %v1460, %v1458
    %v1513 = vpack.c.b16 %v1461, %v1459
    %v1514 = vpack.c.b16 %v1464, %v1462
    %v1515 = vpack.c.b16 %v1465, %v1463
    %v1516 = vpack.c.b16 %v1468, %v1466
    %v1517 = vpack.c.b16 %v1469, %v1467
    %v1518 = vpack.c.b16 %v1472, %v1470
    %v1519 = vpack.c.b16 %v1473, %v1471
    %v1520 = vpack.c.b16 %v1476, %v1474
    %v1521 = vpack.c.b16 %v1477, %v1475
    %v1522 = vpack.c.b16 %v1480, %v1478
    %v1523 = vpack.c.b16 %v1481, %v1479
    %v1524 = vpack.c.b16 %v1484, %v1482
    %v1525 = vpack.c.b16 %v1485, %v1483
    %v1526 = vpack.c.b16 %v1488, %v1486
    %v1527 = vpack.c.b16 %v1489, %v1487
    %v1528 = vpack.c.b16 %v1492, %v1490
    %v1529 = vpack.c.b16 %v1493, %v1491
    %v1530 = vpack.c.b16 %v1496, %v1494
    %v1531 = vpack.c.b16 %v1497, %v1495
    %v1532 = vpack.c.b16 %v1500, %v1498
    %v1533 = vpack.c.b16 %v1501, %v1499
    %1566 = vmatprep.subr.bf16.mxu0 %v1503
    %1567 = vmatpush1.bf16.msra.mxu0 %v1502
    %1568 = vmatprep.subr.bf16.mxu0 %v1505
    %1569 = vmatpush1.bf16.msra.mxu0 %v1504
    %1570 = vmatprep.subr.bf16.mxu0 %v1507
    %1571 = vmatpush1.bf16.msra.mxu0 %v1506
    %1572 = vmatprep.subr.bf16.mxu0 %v1509
    %1573 = vmatpush1.bf16.msra.mxu0 %v1508
    %1574 = vmatprep.subr.bf16.mxu0 %v1511
    %1575 = vmatpush1.bf16.msra.mxu0 %v1510
    %1576 = vmatprep.subr.bf16.mxu0 %v1513
    %1577 = vmatpush1.bf16.msra.mxu0 %v1512
    %1578 = vmatprep.subr.bf16.mxu0 %v1515
    %1579 = vmatpush1.bf16.msra.mxu0 %v1514
    %1580 = vmatprep.subr.bf16.mxu0 %v1517
    %1581 = vmatpush1.bf16.msra.mxu0 %v1516
    %1582 = vmatprep.subr.bf16.mxu0 %v1519
    %1583 = vmatpush1.bf16.msra.mxu0 %v1518
    %1584 = vmatprep.subr.bf16.mxu0 %v1521
    %1585 = vmatpush1.bf16.msra.mxu0 %v1520
    %1586 = vmatprep.subr.bf16.mxu0 %v1523
    %1587 = vmatpush1.bf16.msra.mxu0 %v1522
    %1588 = vmatprep.subr.bf16.mxu0 %v1525
    %1589 = vmatpush1.bf16.msra.mxu0 %v1524
    %1590 = vmatprep.subr.bf16.mxu0 %v1527
    %1591 = vmatpush1.bf16.msra.mxu0 %v1526
    %1592 = vmatprep.subr.bf16.mxu0 %v1529
    %1593 = vmatpush1.bf16.msra.mxu0 %v1528
    %1594 = vmatprep.subr.bf16.mxu0 %v1531
    %1595 = vmatpush1.bf16.msra.mxu0 %v1530
    %1596 = vmatprep.subr.bf16.mxu0 %v1533
    %1597 = vmatpush1.bf16.msra.mxu0 %v1532
    %1598 = vmatprep.mubr.bf16.mxu0 %v1361
    %1599 = vmatmul.mubr.bf16.gmra.mrb[0].mxu0 %v1360
    %v1600 = vpop.f32.mrb[0].mxu0
    %v1601 = vadd.f32 %v1399, %v1600
    %v1602 = vpop.f32.mrb[0].mxu0
    %v1603 = vadd.f32 %v1403, %v1602
    %v1604 = vpop.f32.mrb[0].mxu0
    %v1605 = vpop.f32.mrb[0].mxu0
    %1606 = vdwg.mxu0
    %vm1607 = vcmp.gt.f32.partialorder %v1601, 0.0
    %vm1608 = vcmp.gt.f32.partialorder %v1603, 0.0
    %v1609 = vmul.f32 %v1601, 0.01
    %v1610 = vmul.f32 %v1603, 0.01
    %v1611 = vsel %vm1607, %v1601, %v1609
    %v1612 = vsel %vm1608, %v1603, %v1610
    %v1613 = vpack.c.bf16 %v1611, %v1611
    %v1614 = vpack.c.bf16 %v1612, %v1612
    %v1615 = vld [vmem:[%s18] sm:$0xff]
    %v1616 = vld [vmem:[%s18 + $0x8] sm:$0xff]
    %v1617 = vld [vmem:[%s18 + $0x10] sm:$0xff]
    %v1618 = vld [vmem:[%s18 + $0x18] sm:$0xff]
    %v1619 = vld [vmem:[%s18 + $0x20] sm:$0xff]
    %v1620 = vld [vmem:[%s18 + $0x28] sm:$0xff]
    %v1621 = vld [vmem:[%s18 + $0x30] sm:$0xff]
    %v1622 = vld [vmem:[%s18 + $0x38] sm:$0xff]
    %v1623 = vld [vmem:[%s18 + $0x40] sm:$0xff]
    %v1624 = vld [vmem:[%s18 + $0x48] sm:$0xff]
    %v1625 = vld [vmem:[%s18 + $0x50] sm:$0xff]
    %v1626 = vld [vmem:[%s18 + $0x58] sm:$0xff]
    %v1627 = vld [vmem:[%s18 + $0x60] sm:$0xff]
    %v1628 = vld [vmem:[%s18 + $0x68] sm:$0xff]
    %v1629 = vld [vmem:[%s18 + $0x70] sm:$0xff]
    %v1630 = vld [vmem:[%s18 + $0x78] sm:$0xff]
    %v1631 = vld [vmem:[%s18 + $0x80] sm:$0xff]
    %v1632 = vld [vmem:[%s18 + $0x88] sm:$0xff]
    %v1633 = vld [vmem:[%s18 + $0x90] sm:$0xff]
    %v1634 = vld [vmem:[%s18 + $0x98] sm:$0xff]
    %v1635 = vld [vmem:[%s18 + $0xa0] sm:$0xff]
    %v1636 = vld [vmem:[%s18 + $0xa8] sm:$0xff]
    %v1637 = vld [vmem:[%s18 + $0xb0] sm:$0xff]
    %v1638 = vld [vmem:[%s18 + $0xb8] sm:$0xff]
    %v1639 = vld [vmem:[%s18 + $0xc0] sm:$0xff]
    %v1640 = vld [vmem:[%s18 + $0xc8] sm:$0xff]
    %v1641 = vld [vmem:[%s18 + $0xd0] sm:$0xff]
    %v1642 = vld [vmem:[%s18 + $0xd8] sm:$0xff]
    %v1643 = vld [vmem:[%s18 + $0xe0] sm:$0xff]
    %v1644 = vld [vmem:[%s18 + $0xe8] sm:$0xff]
    %v1645 = vld [vmem:[%s18 + $0xf0] sm:$0xff]
    %v1646 = vld [vmem:[%s18 + $0xf8] sm:$0xff]
    %v1647 = vld [vmem:[%s19] sm:$0xff]
    %v1648 = vld [vmem:[%s19 + $0x8] sm:$0xff]
    %v1649 = vld [vmem:[%s19 + $0x10] sm:$0xff]
    %v1650 = vld [vmem:[%s19 + $0x18] sm:$0xff]
    %v1651 = vld [vmem:[%s19 + $0x20] sm:$0xff]
    %v1652 = vld [vmem:[%s19 + $0x28] sm:$0xff]
    %v1653 = vld [vmem:[%s19 + $0x30] sm:$0xff]
    %v1654 = vld [vmem:[%s19 + $0x38] sm:$0xff]
    %v1655 = vld [vmem:[%s19 + $0x40] sm:$0xff]
    %v1656 = vld [vmem:[%s19 + $0x48] sm:$0xff]
    %v1657 = vld [vmem:[%s19 + $0x50] sm:$0xff]
    %v1658 = vld [vmem:[%s19 + $0x58] sm:$0xff]
    %v1659 = vld [vmem:[%s19 + $0x60] sm:$0xff]
    %v1660 = vld [vmem:[%s19 + $0x68] sm:$0xff]
    %v1661 = vld [vmem:[%s19 + $0x70] sm:$0xff]
    %v1662 = vld [vmem:[%s19 + $0x78] sm:$0xff]
    %v1663 = vld [vmem:[%s19 + $0x80] sm:$0xff]
    %v1664 = vld [vmem:[%s19 + $0x88] sm:$0xff]
    %v1665 = vld [vmem:[%s19 + $0x90] sm:$0xff]
    %v1666 = vld [vmem:[%s19 + $0x98] sm:$0xff]
    %v1667 = vld [vmem:[%s19 + $0xa0] sm:$0xff]
    %v1668 = vld [vmem:[%s19 + $0xa8] sm:$0xff]
    %v1669 = vld [vmem:[%s19 + $0xb0] sm:$0xff]
    %v1670 = vld [vmem:[%s19 + $0xb8] sm:$0xff]
    %v1671 = vld [vmem:[%s19 + $0xc0] sm:$0xff]
    %v1672 = vld [vmem:[%s19 + $0xc8] sm:$0xff]
    %v1673 = vld [vmem:[%s19 + $0xd0] sm:$0xff]
    %v1674 = vld [vmem:[%s19 + $0xd8] sm:$0xff]
    %v1675 = vld [vmem:[%s19 + $0xe0] sm:$0xff]
    %v1676 = vld [vmem:[%s19 + $0xe8] sm:$0xff]
    %v1677 = vld [vmem:[%s19 + $0xf0] sm:$0xff]
    %v1678 = vld [vmem:[%s19 + $0xf8] sm:$0xff]
    %v1711 = vunpack.c.l.b16 %v1647
    %v1712 = vunpack.c.h.b16 %v1647
    %v1713 = vunpack.c.l.b16 %v1648
    %v1714 = vunpack.c.h.b16 %v1648
    %v1715 = vunpack.c.l.b16 %v1649
    %v1716 = vunpack.c.h.b16 %v1649
    %v1717 = vunpack.c.l.b16 %v1650
    %v1718 = vunpack.c.h.b16 %v1650
    %v1719 = vunpack.c.l.b16 %v1651
    %v1720 = vunpack.c.h.b16 %v1651
    %v1721 = vunpack.c.l.b16 %v1652
    %v1722 = vunpack.c.h.b16 %v1652
    %v1723 = vunpack.c.l.b16 %v1653
    %v1724 = vunpack.c.h.b16 %v1653
    %v1725 = vunpack.c.l.b16 %v1654
    %v1726 = vunpack.c.h.b16 %v1654
    %v1727 = vunpack.c.l.b16 %v1655
    %v1728 = vunpack.c.h.b16 %v1655
    %v1729 = vunpack.c.l.b16 %v1656
    %v1730 = vunpack.c.h.b16 %v1656
    %v1731 = vunpack.c.l.b16 %v1657
    %v1732 = vunpack.c.h.b16 %v1657
    %v1733 = vunpack.c.l.b16 %v1658
    %v1734 = vunpack.c.h.b16 %v1658
    %v1735 = vunpack.c.l.b16 %v1659
    %v1736 = vunpack.c.h.b16 %v1659
    %v1737 = vunpack.c.l.b16 %v1660
    %v1738 = vunpack.c.h.b16 %v1660
    %v1739 = vunpack.c.l.b16 %v1661
    %v1740 = vunpack.c.h.b16 %v1661
    %v1741 = vunpack.c.l.b16 %v1662
    %v1742 = vunpack.c.h.b16 %v1662
    %v1743 = vunpack.c.l.b16 %v1663
    %v1744 = vunpack.c.h.b16 %v1663
    %v1745 = vunpack.c.l.b16 %v1664
    %v1746 = vunpack.c.h.b16 %v1664
    %v1747 = vunpack.c.l.b16 %v1665
    %v1748 = vunpack.c.h.b16 %v1665
    %v1749 = vunpack.c.l.b16 %v1666
    %v1750 = vunpack.c.h.b16 %v1666
    %v1751 = vunpack.c.l.b16 %v1667
    %v1752 = vunpack.c.h.b16 %v1667
    %v1753 = vunpack.c.l.b16 %v1668
    %v1754 = vunpack.c.h.b16 %v1668
    %v1755 = vunpack.c.l.b16 %v1669
    %v1756 = vunpack.c.h.b16 %v1669
    %v1757 = vunpack.c.l.b16 %v1670
    %v1758 = vunpack.c.h.b16 %v1670
    %v1759 = vunpack.c.l.b16 %v1671
    %v1760 = vunpack.c.h.b16 %v1671
    %v1761 = vunpack.c.l.b16 %v1672
    %v1762 = vunpack.c.h.b16 %v1672
    %v1763 = vunpack.c.l.b16 %v1673
    %v1764 = vunpack.c.h.b16 %v1673
    %v1765 = vunpack.c.l.b16 %v1674
    %v1766 = vunpack.c.h.b16 %v1674
    %v1767 = vunpack.c.l.b16 %v1675
    %v1768 = vunpack.c.h.b16 %v1675
    %v1769 = vunpack.c.l.b16 %v1676
    %v1770 = vunpack.c.h.b16 %v1676
    %v1771 = vunpack.c.l.b16 %v1677
    %v1772 = vunpack.c.h.b16 %v1677
    %v1773 = vunpack.c.l.b16 %v1678
    %v1774 = vunpack.c.h.b16 %v1678
    %v1775 = vpack.c.b16 %v1713, %v1711
    %v1776 = vpack.c.b16 %v1714, %v1712
    %v1777 = vpack.c.b16 %v1717, %v1715
    %v1778 = vpack.c.b16 %v1718, %v1716
    %v1779 = vpack.c.b16 %v1721, %v1719
    %v1780 = vpack.c.b16 %v1722, %v1720
    %v1781 = vpack.c.b16 %v1725, %v1723
    %v1782 = vpack.c.b16 %v1726, %v1724
    %v1783 = vpack.c.b16 %v1729, %v1727
    %v1784 = vpack.c.b16 %v1730, %v1728
    %v1785 = vpack.c.b16 %v1733, %v1731
    %v1786 = vpack.c.b16 %v1734, %v1732
    %v1787 = vpack.c.b16 %v1737, %v1735
    %v1788 = vpack.c.b16 %v1738, %v1736
    %v1789 = vpack.c.b16 %v1741, %v1739
    %v1790 = vpack.c.b16 %v1742, %v1740
    %v1791 = vpack.c.b16 %v1745, %v1743
    %v1792 = vpack.c.b16 %v1746, %v1744
    %v1793 = vpack.c.b16 %v1749, %v1747
    %v1794 = vpack.c.b16 %v1750, %v1748
    %v1795 = vpack.c.b16 %v1753, %v1751
    %v1796 = vpack.c.b16 %v1754, %v1752
    %v1797 = vpack.c.b16 %v1757, %v1755
    %v1798 = vpack.c.b16 %v1758, %v1756
    %v1799 = vpack.c.b16 %v1761, %v1759
    %v1800 = vpack.c.b16 %v1762, %v1760
    %v1801 = vpack.c.b16 %v1765, %v1763
    %v1802 = vpack.c.b16 %v1766, %v1764
    %v1803 = vpack.c.b16 %v1769, %v1767
    %v1804 = vpack.c.b16 %v1770, %v1768
    %v1805 = vpack.c.b16 %v1773, %v1771
    %v1806 = vpack.c.b16 %v1774, %v1772
    %1839 = vmatprep.subr.bf16.mxu0 %v1776
    %1840 = vmatpush1.bf16.msra.mxu0 %v1775
    %1841 = vmatprep.subr.bf16.mxu0 %v1778
    %1842 = vmatpush1.bf16.msra.mxu0 %v1777
    %1843 = vmatprep.subr.bf16.mxu0 %v1780
    %1844 = vmatpush1.bf16.msra.mxu0 %v1779
    %1845 = vmatprep.subr.bf16.mxu0 %v1782
    %1846 = vmatpush1.bf16.msra.mxu0 %v1781
    %1847 = vmatprep.subr.bf16.mxu0 %v1784
    %1848 = vmatpush1.bf16.msra.mxu0 %v1783
    %1849 = vmatprep.subr.bf16.mxu0 %v1786
    %1850 = vmatpush1.bf16.msra.mxu0 %v1785
    %1851 = vmatprep.subr.bf16.mxu0 %v1788
    %1852 = vmatpush1.bf16.msra.mxu0 %v1787
    %1853 = vmatprep.subr.bf16.mxu0 %v1790
    %1854 = vmatpush1.bf16.msra.mxu0 %v1789
    %1855 = vmatprep.subr.bf16.mxu0 %v1792
    %1856 = vmatpush1.bf16.msra.mxu0 %v1791
    %1857 = vmatprep.subr.bf16.mxu0 %v1794
    %1858 = vmatpush1.bf16.msra.mxu0 %v1793
    %1859 = vmatprep.subr.bf16.mxu0 %v1796
    %1860 = vmatpush1.bf16.msra.mxu0 %v1795
    %1861 = vmatprep.subr.bf16.mxu0 %v1798
    %1862 = vmatpush1.bf16.msra.mxu0 %v1797
    %1863 = vmatprep.subr.bf16.mxu0 %v1800
    %1864 = vmatpush1.bf16.msra.mxu0 %v1799
    %1865 = vmatprep.subr.bf16.mxu0 %v1802
    %1866 = vmatpush1.bf16.msra.mxu0 %v1801
    %1867 = vmatprep.subr.bf16.mxu0 %v1804
    %1868 = vmatpush1.bf16.msra.mxu0 %v1803
    %1869 = vmatprep.subr.bf16.mxu0 %v1806
    %1870 = vmatpush1.bf16.msra.mxu0 %v1805
    %1871 = vmatprep.mubr.bf16.mxu0 %v1355
    %1872 = vmatmul.mubr.bf16.gmra.mrb[0].mxu0 %v1354
    %v1873 = vpop.f32.mrb[0].mxu0
    %v1874 = vadd.f32 0.0, %v1873
    %v1875 = vpop.f32.mrb[0].mxu0
    %v1876 = vadd.f32 0.0, %v1875
    %v1877 = vpop.f32.mrb[0].mxu0
    %v1878 = vpop.f32.mrb[0].mxu0
    %1879 = vdwg.mxu0
    %v1912 = vunpack.c.l.b16 %v1615
    %v1913 = vunpack.c.h.b16 %v1615
    %v1914 = vunpack.c.l.b16 %v1616
    %v1915 = vunpack.c.h.b16 %v1616
    %v1916 = vunpack.c.l.b16 %v1617
    %v1917 = vunpack.c.h.b16 %v1617
    %v1918 = vunpack.c.l.b16 %v1618
    %v1919 = vunpack.c.h.b16 %v1618
    %v1920 = vunpack.c.l.b16 %v1619
    %v1921 = vunpack.c.h.b16 %v1619
    %v1922 = vunpack.c.l.b16 %v1620
    %v1923 = vunpack.c.h.b16 %v1620
    %v1924 = vunpack.c.l.b16 %v1621
    %v1925 = vunpack.c.h.b16 %v1621
    %v1926 = vunpack.c.l.b16 %v1622
    %v1927 = vunpack.c.h.b16 %v1622
    %v1928 = vunpack.c.l.b16 %v1623
    %v1929 = vunpack.c.h.b16 %v1623
    %v1930 = vunpack.c.l.b16 %v1624
    %v1931 = vunpack.c.h.b16 %v1624
    %v1932 = vunpack.c.l.b16 %v1625
    %v1933 = vunpack.c.h.b16 %v1625
    %v1934 = vunpack.c.l.b16 %v1626
    %v1935 = vunpack.c.h.b16 %v1626
    %v1936 = vunpack.c.l.b16 %v1627
    %v1937 = vunpack.c.h.b16 %v1627
    %v1938 = vunpack.c.l.b16 %v1628
    %v1939 = vunpack.c.h.b16 %v1628
    %v1940 = vunpack.c.l.b16 %v1629
    %v1941 = vunpack.c.h.b16 %v1629
    %v1942 = vunpack.c.l.b16 %v1630
    %v1943 = vunpack.c.h.b16 %v1630
    %v1944 = vunpack.c.l.b16 %v1631
    %v1945 = vunpack.c.h.b16 %v1631
    %v1946 = vunpack.c.l.b16 %v1632
    %v1947 = vunpack.c.h.b16 %v1632
    %v1948 = vunpack.c.l.b16 %v1633
    %v1949 = vunpack.c.h.b16 %v1633
    %v1950 = vunpack.c.l.b16 %v1634
    %v1951 = vunpack.c.h.b16 %v1634
    %v1952 = vunpack.c.l.b16 %v1635
    %v1953 = vunpack.c.h.b16 %v1635
    %v1954 = vunpack.c.l.b16 %v1636
    %v1955 = vunpack.c.h.b16 %v1636
    %v1956 = vunpack.c.l.b16 %v1637
    %v1957 = vunpack.c.h.b16 %v1637
    %v1958 = vunpack.c.l.b16 %v1638
    %v1959 = vunpack.c.h.b16 %v1638
    %v1960 = vunpack.c.l.b16 %v1639
    %v1961 = vunpack.c.h.b16 %v1639
    %v1962 = vunpack.c.l.b16 %v1640
    %v1963 = vunpack.c.h.b16 %v1640
    %v1964 = vunpack.c.l.b16 %v1641
    %v1965 = vunpack.c.h.b16 %v1641
    %v1966 = vunpack.c.l.b16 %v1642
    %v1967 = vunpack.c.h.b16 %v1642
    %v1968 = vunpack.c.l.b16 %v1643
    %v1969 = vunpack.c.h.b16 %v1643
    %v1970 = vunpack.c.l.b16 %v1644
    %v1971 = vunpack.c.h.b16 %v1644
    %v1972 = vunpack.c.l.b16 %v1645
    %v1973 = vunpack.c.h.b16 %v1645
    %v1974 = vunpack.c.l.b16 %v1646
    %v1975 = vunpack.c.h.b16 %v1646
    %v1976 = vpack.c.b16 %v1914, %v1912
    %v1977 = vpack.c.b16 %v1915, %v1913
    %v1978 = vpack.c.b16 %v1918, %v1916
    %v1979 = vpack.c.b16 %v1919, %v1917
    %v1980 = vpack.c.b16 %v1922, %v1920
    %v1981 = vpack.c.b16 %v1923, %v1921
    %v1982 = vpack.c.b16 %v1926, %v1924
    %v1983 = vpack.c.b16 %v1927, %v1925
    %v1984 = vpack.c.b16 %v1930, %v1928
    %v1985 = vpack.c.b16 %v1931, %v1929
    %v1986 = vpack.c.b16 %v1934, %v1932
    %v1987 = vpack.c.b16 %v1935, %v1933
    %v1988 = vpack.c.b16 %v1938, %v1936
    %v1989 = vpack.c.b16 %v1939, %v1937
    %v1990 = vpack.c.b16 %v1942, %v1940
    %v1991 = vpack.c.b16 %v1943, %v1941
    %v1992 = vpack.c.b16 %v1946, %v1944
    %v1993 = vpack.c.b16 %v1947, %v1945
    %v1994 = vpack.c.b16 %v1950, %v1948
    %v1995 = vpack.c.b16 %v1951, %v1949
    %v1996 = vpack.c.b16 %v1954, %v1952
    %v1997 = vpack.c.b16 %v1955, %v1953
    %v1998 = vpack.c.b16 %v1958, %v1956
    %v1999 = vpack.c.b16 %v1959, %v1957
    %v2000 = vpack.c.b16 %v1962, %v1960
    %v2001 = vpack.c.b16 %v1963, %v1961
    %v2002 = vpack.c.b16 %v1966, %v1964
    %v2003 = vpack.c.b16 %v1967, %v1965
    %v2004 = vpack.c.b16 %v1970, %v1968
    %v2005 = vpack.c.b16 %v1971, %v1969
    %v2006 = vpack.c.b16 %v1974, %v1972
    %v2007 = vpack.c.b16 %v1975, %v1973
    %2040 = vmatprep.subr.bf16.mxu0 %v1977
    %2041 = vmatpush1.bf16.msra.mxu0 %v1976
    %2042 = vmatprep.subr.bf16.mxu0 %v1979
    %2043 = vmatpush1.bf16.msra.mxu0 %v1978
    %2044 = vmatprep.subr.bf16.mxu0 %v1981
    %2045 = vmatpush1.bf16.msra.mxu0 %v1980
    %2046 = vmatprep.subr.bf16.mxu0 %v1983
    %2047 = vmatpush1.bf16.msra.mxu0 %v1982
    %2048 = vmatprep.subr.bf16.mxu0 %v1985
    %2049 = vmatpush1.bf16.msra.mxu0 %v1984
    %2050 = vmatprep.subr.bf16.mxu0 %v1987
    %2051 = vmatpush1.bf16.msra.mxu0 %v1986
    %2052 = vmatprep.subr.bf16.mxu0 %v1989
    %2053 = vmatpush1.bf16.msra.mxu0 %v1988
    %2054 = vmatprep.subr.bf16.mxu0 %v1991
    %2055 = vmatpush1.bf16.msra.mxu0 %v1990
    %2056 = vmatprep.subr.bf16.mxu0 %v1993
    %2057 = vmatpush1.bf16.msra.mxu0 %v1992
    %2058 = vmatprep.subr.bf16.mxu0 %v1995
    %2059 = vmatpush1.bf16.msra.mxu0 %v1994
    %2060 = vmatprep.subr.bf16.mxu0 %v1997
    %2061 = vmatpush1.bf16.msra.mxu0 %v1996
    %2062 = vmatprep.subr.bf16.mxu0 %v1999
    %2063 = vmatpush1.bf16.msra.mxu0 %v1998
    %2064 = vmatprep.subr.bf16.mxu0 %v2001
    %2065 = vmatpush1.bf16.msra.mxu0 %v2000
    %2066 = vmatprep.subr.bf16.mxu0 %v2003
    %2067 = vmatpush1.bf16.msra.mxu0 %v2002
    %2068 = vmatprep.subr.bf16.mxu0 %v2005
    %2069 = vmatpush1.bf16.msra.mxu0 %v2004
    %2070 = vmatprep.subr.bf16.mxu0 %v2007
    %2071 = vmatpush1.bf16.msra.mxu0 %v2006
    %2072 = vmatprep.mubr.bf16.mxu0 %v1614
    %2073 = vmatmul.mubr.bf16.gmra.mrb[0].mxu0 %v1613
    %v2074 = vpop.f32.mrb[0].mxu0
    %v2075 = vadd.f32 %v1874, %v2074
    %v2076 = vpop.f32.mrb[0].mxu0
    %v2077 = vadd.f32 %v1876, %v2076
    %v2078 = vpop.f32.mrb[0].mxu0
    %v2079 = vpop.f32.mrb[0].mxu0
    %2080 = vdwg.mxu0
    %v2081 = vld [vmem:[#allocation25] sm:$0x3]
    %v2083 = vlaneseq
    %v2084 = vshrl.u32 %v2083, 7
    %v2085 = vsub.s32 0, %v2084
    %v2086 = vrot.slane %v2081, %v2085
    %v2087 = vlaneseq
    %v2088 = vshrl.u32 %v2087, 7
    %v2089 = vsub.s32 1, %v2088
    %v2090 = vrot.slane %v2081, %v2089
    %v2093 = vadd.f32 %v2075, %v2086
    %v2094 = vadd.f32 %v2077, %v2090
    %v2095 = vpack.c.bf16 %v2093, %v2093
    %v2096 = vpack.c.bf16 %v2094, %v2094
    %v2097 = vunpack.c.l.bf16 %v2095
    %v2098 = vunpack.c.l.bf16 %v2096
    %v2099 = vld [vmem:[#allocation26] sm:$0x3]
    %v2101 = vlaneseq
    %v2102 = vshrl.u32 %v2101, 7
    %v2103 = vsub.s32 0, %v2102
    %v2104 = vrot.slane %v2099, %v2103
    %v2105 = vlaneseq
    %v2106 = vshrl.u32 %v2105, 7
    %v2107 = vsub.s32 1, %v2106
    %v2108 = vrot.slane %v2099, %v2107
    %v2111 = vmul.f32 %v2097, %v2104
    %v2112 = vmul.f32 %v2098, %v2108
    %vm2113 = vcmask 1041408
    %v2114 = vsel %vm2113, %v2111, 0.0
    %v2115 = vsel %vm2113, %v2112, 0.0
    %v2116 = vadd.f32 %v2114, %v2115
    %2117 = vadd.xlane.f32.xlu0 %v2116
    %v2118 = vpop.xlane.xlu0 %2117
    %v2119 = vld [vmem:[#allocation2] sm:$0x1]
    %v2121 = vlaneseq
    %v2122 = vshrl.u32 %v2121, 7
    %v2123 = vsub.s32 0, %v2122
    %v2124 = vrot.slane %v2119, %v2123
    %v2126 = vadd.f32 %v2118, %v2124
    %vm2127 = vcmask 1024
    %v2128 = vsel %vm2127, %v2126, 0.0
    %2129 = vadd.xlane.f32.xlu0 %v2128
    %v2130 = vpop.xlane.xlu0 %2129
    %v2131 = vrot.slane %v2130, 4
    %v2132 = vadd.f32 %v2130, %v2131
    %v2133 = vrot.slane %v2132, 2
    %v2134 = vadd.f32 %v2132, %v2133
    %v2135 = vrot.slane %v2134, 1
    %v2136 = vadd.f32 %v2134, %v2135
    %s2137 = vtos %v2136
    %v2138 = vstv %s2137
    %v2139 = vadd.f32 %v2138, 0.0
    %2140 = vst [vmem:[%s23] sm:$0xff] %v2139
    // Predicated region
    $region158: #{msdiscriminator_forward.23} parent=1 // pred_check
      _
    $region159: #{msdiscriminator_forward.23} parent=1 // pred_check_branch
      %2142 = sbr.rel (0) target = $region161
    $region160: #{msdiscriminator_forward.23} parent=1 // pred_region
      _
    $region161: #{msdiscriminator_forward.23} parent=1 // pred_fallthru
      _
    // Predicated region
    $region162: #{msdiscriminator_forward.23} parent=1 // pred_check
      _
    $region163: #{msdiscriminator_forward.23} parent=1 // pred_check_branch
      %2144 = sbr.rel (0) target = $region165
    $region164: #{msdiscriminator_forward.23} parent=1 // pred_region
      _
    $region165: #{msdiscriminator_forward.23} parent=1 // pred_fallthru
      _
    %2145 = vsyncpa [#allocation4], 1
    %2146 = vsyncpa [#allocation6], 1
    %2147 = vsyncpa [#allocation9], 1
    %2148 = vsyncpa [#allocation12], 1
    %2149 = vsyncpa [#allocation15], 1
    %2150 = vsyncpa [#allocation18], 1
    %2151 = vsyncpa [#allocation21], 1
    %2152 = vsyncpa [#allocation24], 1
    %2153 = vsyncpa [#allocation27], 1

// kernel: msdiscriminator_forward.17
$region0: #{msdiscriminator_forward.17}
  #allocation0 [shape = 'u32[]', space=smem, size = 0x4, offset = 0x4, fixed_abs, tag = 'smem constant byte address 0x4 - core index']
  #allocation1 [shape = 'u32[144,128]{1,0:T(1,128)}', space=vmem, size = 0x12000, scoped, tag = 'internal scratch']
  %s0 = inlined_call_operand.vmem [shape: bf16[32,36], index: 0, kind: input, shape index: {}]
  %s1 = inlined_call_operand.vmem [shape: bf16[32,4], index: 1, kind: input, shape index: {}]
  %s2 = inlined_call_operand.vmem [shape: bf16[36,128], index: 2, kind: input, shape index: {}]
  %s3 = inlined_call_operand.vmem [shape: f32[1,128], index: 3, kind: input, shape index: {}]
  %s4 = inlined_call_operand.vmem [shape: bf16[128,128], index: 4, kind: input, shape index: {}]
  %s5 = inlined_call_operand.vmem [shape: bf16[4,128], index: 5, kind: input, shape index: {}]
  %s6 = inlined_call_operand.vmem [shape: f32[1,128], index: 6, kind: input, shape index: {}]
  %s7 = inlined_call_operand.vmem [shape: bf16[32,128], index: 7, kind: output, shape index: {}]
  %s8 = sld [smem:[#allocation0]]
  $region38: #{msdiscriminator_forward.17} parent=0
    _
  %s10 = ssub.s32 1, %s8
  %s11 = scalar_select 0, %s10, %s8
  // Predicated region
  $region2: #{msdiscriminator_forward.17} parent=0 // pred_check
    _
  $region3: #{msdiscriminator_forward.17} parent=0 // pred_check_branch
    %13 = sbr.rel (0) target = $region5
  $region4: #{msdiscriminator_forward.17} parent=0 // pred_region
    _
  $region5: #{msdiscriminator_forward.17} parent=0 // pred_fallthru
    _
  // Predicated region
  $region6: #{msdiscriminator_forward.17} parent=0 // pred_check
    _
  $region7: #{msdiscriminator_forward.17} parent=0 // pred_check_branch
    %15 = sbr.rel (0) target = $region9
  $region8: #{msdiscriminator_forward.17} parent=0 // pred_region
    _
  $region9: #{msdiscriminator_forward.17} parent=0 // pred_fallthru
    _
  // Predicated region
  $region10: #{msdiscriminator_forward.17} parent=0 // pred_check
    _
  $region11: #{msdiscriminator_forward.17} parent=0 // pred_check_branch
    %17 = sbr.rel (0) target = $region13
  $region12: #{msdiscriminator_forward.17} parent=0 // pred_region
    _
  $region13: #{msdiscriminator_forward.17} parent=0 // pred_fallthru
    _
  // Predicated region
  $region14: #{msdiscriminator_forward.17} parent=0 // pred_check
    _
  $region15: #{msdiscriminator_forward.17} parent=0 // pred_check_branch
    %19 = sbr.rel (0) target = $region17
  $region16: #{msdiscriminator_forward.17} parent=0 // pred_region
    _
  $region17: #{msdiscriminator_forward.17} parent=0 // pred_fallthru
    _
  // Predicated region
  $region18: #{msdiscriminator_forward.17} parent=0 // pred_check
    _
  $region19: #{msdiscriminator_forward.17} parent=0 // pred_check_branch
    %21 = sbr.rel (0) target = $region21
  $region20: #{msdiscriminator_forward.17} parent=0 // pred_region
    _
  $region21: #{msdiscriminator_forward.17} parent=0 // pred_fallthru
    _
  // Predicated region
  $region22: #{msdiscriminator_forward.17} parent=0 // pred_check
    _
  $region23: #{msdiscriminator_forward.17} parent=0 // pred_check_branch
    %23 = sbr.rel (0) target = $region25
  $region24: #{msdiscriminator_forward.17} parent=0 // pred_region
    _
  $region25: #{msdiscriminator_forward.17} parent=0 // pred_fallthru
    _
  // Predicated region
  $region26: #{msdiscriminator_forward.17} parent=0 // pred_check
    _
  $region27: #{msdiscriminator_forward.17} parent=0 // pred_check_branch
    %25 = sbr.rel (0) target = $region29
  $region28: #{msdiscriminator_forward.17} parent=0 // pred_region
    _
  $region29: #{msdiscriminator_forward.17} parent=0 // pred_fallthru
    _
  %v28 = vld [vmem:[%s0] sm:$0xf]
  %v29 = vld [vmem:[%s0 + $0x4] sm:$0xf]
  %v30 = vld [vmem:[%s0 + $0x8] sm:$0xf]
  %v31 = vld [vmem:[%s0 + $0xc] sm:$0xf]
  %vm32 = vcmp.gt.bf16.partialorder %v28, 0
  %vm33 = vcmp.gt.bf16.partialorder %v29, 0
  %vm34 = vcmp.gt.bf16.partialorder %v30, 0
  %vm35 = vcmp.gt.bf16.partialorder %v31, 0
  %v36 = vmul.bf16 %v28, 1009007652
  %v37 = vmul.bf16 %v29, 1009007652
  %v38 = vmul.bf16 %v30, 1009007652
  %v39 = vmul.bf16 %v31, 1009007652
  %v40 = vsel %vm32, %v28, %v36
  %v41 = vsel %vm33, %v29, %v37
  %v42 = vsel %vm34, %v30, %v38
  %v43 = vsel %vm35, %v31, %v39
  %v44 = vld [vmem:[%s2] sm:$0xf]
  %v45 = vld [vmem:[%s2 + $0x4] sm:$0xf]
  %v46 = vld [vmem:[%s2 + $0x8] sm:$0xf]
  %v47 = vld [vmem:[%s2 + $0xc] sm:$0xf]
  %v48 = vld [vmem:[%s2 + $0x10] sm:$0x3]
  %v49 = vld [vmem:[%s3] sm:$0x1]
  %v51 = vlaneseq
  %v52 = vshrl.u32 %v51, 7
  %v53 = vsub.s32 0, %v52
  %v54 = vrot.slane %v49, %v53
  %v60 = vunpack.c.l.b16 %v40
  %v61 = vunpack.c.l.b16 %v41
  %v62 = vunpack.c.l.b16 %v42
  %v63 = vunpack.c.l.b16 %v43
  %v64 = vpack.c.b16 %v61, %v60
  %v65 = vpack.c.b16 %v63, %v62
  %v71 = vunpack.c.l.b16 %v44
  %v72 = vunpack.c.l.b16 %v45
  %v73 = vunpack.c.l.b16 %v46
  %v74 = vunpack.c.l.b16 %v47
  %v75 = vunpack.c.l.b16 %v48
  %v76 = vpack.c.b16 %v72, %v71
  %v77 = vpack.c.b16 %v74, %v73
  %v78 = vpack.c.b16 %v75, %v75
  %vm81 = vcmask 293888
  %v83 = vsel %vm81, %v64, 0
  %v86 = vsel %vm81, %v65, 0
  %vm88 = vcmask 1041408
  %v90 = vsel %vm88, %v78, 0
  %92 = vmatprep.subr.bf16.mxu0 0
  %93 = vmatpush1.bf16.msra.mxu0 %v76
  %94 = vmatprep.subr.bf16.mxu0 0
  %95 = vmatpush1.bf16.msra.mxu0 %v77
  %96 = vmatprep.subr.bf16.mxu0 0
  %97 = vmatpush1.bf16.msra.mxu0 %v90
  %98 = vmatprep.subr.bf16.mxu0 0
  %99 = vmatpush1.bf16.msra.mxu0 0
  %100 = vmatprep.subr.bf16.mxu0 0
  %101 = vmatpush1.bf16.msra.mxu0 0
  %102 = vmatprep.subr.bf16.mxu0 0
  %103 = vmatpush1.bf16.msra.mxu0 0
  %104 = vmatprep.subr.bf16.mxu0 0
  %105 = vmatpush1.bf16.msra.mxu0 0
  %106 = vmatprep.subr.bf16.mxu0 0
  %107 = vmatpush1.bf16.msra.mxu0 0
  %108 = vmatprep.subr.bf16.mxu0 0
  %109 = vmatpush1.bf16.msra.mxu0 0
  %110 = vmatprep.subr.bf16.mxu0 0
  %111 = vmatpush1.bf16.msra.mxu0 0
  %112 = vmatprep.subr.bf16.mxu0 0
  %113 = vmatpush1.bf16.msra.mxu0 0
  %114 = vmatprep.subr.bf16.mxu0 0
  %115 = vmatpush1.bf16.msra.mxu0 0
  %116 = vmatprep.subr.bf16.mxu0 0
  %117 = vmatpush1.bf16.msra.mxu0 0
  %118 = vmatprep.subr.bf16.mxu0 0
  %119 = vmatpush1.bf16.msra.mxu0 0
  %120 = vmatprep.subr.bf16.mxu0 0
  %121 = vmatpush1.bf16.msra.mxu0 0
  %122 = vmatprep.subr.bf16.mxu0 0
  %123 = vmatpush1.bf16.msra.mxu0 0
  %124 = vmatprep.mubr.bf16.mxu0 0
  %125 = vmatmul.mubr.bf16.gmra.mrb[0].mxu0 %v83
  %v126 = vpop.f32.mrb[0].mxu0
  %v127 = vadd.f32 %v54, %v126
  %v128 = vpop.f32.mrb[0].mxu0
  %v129 = vpop.f32.mrb[0].mxu0
  %v130 = vadd.f32 %v54, %v129
  %v131 = vpop.f32.mrb[0].mxu0
  %132 = vmatprep.mubr.bf16.mxu0 0
  %133 = vmatmul.mubr.bf16.gmra.mrb[0].mxu0 %v86
  %v134 = vpop.f32.mrb[0].mxu0
  %v135 = vadd.f32 %v54, %v134
  %v136 = vpop.f32.mrb[0].mxu0
  %v137 = vpop.f32.mrb[0].mxu0
  %v138 = vadd.f32 %v54, %v137
  %v139 = vpop.f32.mrb[0].mxu0
  %140 = vdwg.mxu0
  %vm141 = vcmp.gt.f32.partialorder %v127, 0.0
  %vm142 = vcmp.gt.f32.partialorder %v130, 0.0
  %vm143 = vcmp.gt.f32.partialorder %v135, 0.0
  %vm144 = vcmp.gt.f32.partialorder %v138, 0.0
  %v145 = vmul.f32 %v127, 0.01
  %v146 = vmul.f32 %v130, 0.01
  %v147 = vmul.f32 %v135, 0.01
  %v148 = vmul.f32 %v138, 0.01
  %v149 = vsel %vm141, %v127, %v145
  %v150 = vsel %vm142, %v130, %v146
  %v151 = vsel %vm143, %v135, %v147
  %v152 = vsel %vm144, %v138, %v148
  %v153 = vpack.c.bf16 %v150, %v149
  %v154 = vpack.c.bf16 %v152, %v151
  %v155 = vld [vmem:[%s4] sm:$0xf]
  %v156 = vld [vmem:[%s4 + $0x4] sm:$0xf]
  %v157 = vld [vmem:[%s4 + $0x8] sm:$0xf]
  %v158 = vld [vmem:[%s4 + $0xc] sm:$0xf]
  %v159 = vld [vmem:[%s4 + $0x10] sm:$0xf]
  %v160 = vld [vmem:[%s4 + $0x14] sm:$0xf]
  %v161 = vld [vmem:[%s4 + $0x18] sm:$0xf]
  %v162 = vld [vmem:[%s4 + $0x1c] sm:$0xf]
  %v163 = vld [vmem:[%s4 + $0x20] sm:$0xf]
  %v164 = vld [vmem:[%s4 + $0x24] sm:$0xf]
  %v165 = vld [vmem:[%s4 + $0x28] sm:$0xf]
  %v166 = vld [vmem:[%s4 + $0x2c] sm:$0xf]
  %v167 = vld [vmem:[%s4 + $0x30] sm:$0xf]
  %v168 = vld [vmem:[%s4 + $0x34] sm:$0xf]
  %v169 = vld [vmem:[%s4 + $0x38] sm:$0xf]
  %v170 = vld [vmem:[%s4 + $0x3c] sm:$0xf]
  %v171 = vld [vmem:[%s1] sm:$0xf]
  %v172 = vld [vmem:[%s1 + $0x4] sm:$0xf]
  %v173 = vld [vmem:[%s1 + $0x8] sm:$0xf]
  %v174 = vld [vmem:[%s1 + $0xc] sm:$0xf]
  %v175 = vld [vmem:[%s5] sm:$0x3]
  %v180 = vunpack.c.l.b16 %v171
  %v181 = vunpack.c.l.b16 %v172
  %v182 = vunpack.c.l.b16 %v173
  %v183 = vunpack.c.l.b16 %v174
  %v184 = vpack.c.b16 %v181, %v180
  %v185 = vpack.c.b16 %v183, %v182
  %vm186 = vcmask 31744
  %v188 = vsel %vm186, %v184, 0
  %v191 = vsel %vm186, %v185, 0
  %v194 = vsel %vm88, %v175, 0
  %196 = vmatprep.subr.bf16.mxu0 0
  %197 = vmatpush1.bf16.msra.mxu0 %v194
  %198 = vmatprep.subr.bf16.mxu0 0
  %199 = vmatpush1.bf16.msra.mxu0 0
  %200 = vmatprep.subr.bf16.mxu0 0
  %201 = vmatpush1.bf16.msra.mxu0 0
  %202 = vmatprep.subr.bf16.mxu0 0
  %203 = vmatpush1.bf16.msra.mxu0 0
  %204 = vmatprep.subr.bf16.mxu0 0
  %205 = vmatpush1.bf16.msra.mxu0 0
  %206 = vmatprep.subr.bf16.mxu0 0
  %207 = vmatpush1.bf16.msra.mxu0 0
  %208 = vmatprep.subr.bf16.mxu0 0
  %209 = vmatpush1.bf16.msra.mxu0 0
  %210 = vmatprep.subr.bf16.mxu0 0
  %211 = vmatpush1.bf16.msra.mxu0 0
  %212 = vmatprep.subr.bf16.mxu0 0
  %213 = vmatpush1.bf16.msra.mxu0 0
  %214 = vmatprep.subr.bf16.mxu0 0
  %215 = vmatpush1.bf16.msra.mxu0 0
  %216 = vmatprep.subr.bf16.mxu0 0
  %217 = vmatpush1.bf16.msra.mxu0 0
  %218 = vmatprep.subr.bf16.mxu0 0
  %219 = vmatpush1.bf16.msra.mxu0 0
  %220 = vmatprep.subr.bf16.mxu0 0
  %221 = vmatpush1.bf16.msra.mxu0 0
  %222 = vmatprep.subr.bf16.mxu0 0
  %223 = vmatpush1.bf16.msra.mxu0 0
  %224 = vmatprep.subr.bf16.mxu0 0
  %225 = vmatpush1.bf16.msra.mxu0 0
  %226 = vmatprep.subr.bf16.mxu0 0
  %227 = vmatpush1.bf16.msra.mxu0 0
  %228 = vmatprep.mubr.bf16.mxu0 0
  %229 = vmatmul.mubr.bf16.gmra.mrb[0].mxu0 %v188
  %v230 = vpop.f32.mrb[0].mxu0
  %v231 = vadd.f32 0.0, %v230
  %v232 = vpop.f32.mrb[0].mxu0
  %v233 = vpop.f32.mrb[0].mxu0
  %v234 = vadd.f32 0.0, %v233
  %v235 = vpop.f32.mrb[0].mxu0
  %236 = vmatprep.mubr.bf16.mxu0 0
  %237 = vmatmul.mubr.bf16.gmra.mrb[0].mxu0 %v191
  %v238 = vpop.f32.mrb[0].mxu0
  %v239 = vadd.f32 0.0, %v238
  %v240 = vpop.f32.mrb[0].mxu0
  %v241 = vpop.f32.mrb[0].mxu0
  %v242 = vadd.f32 0.0, %v241
  %v243 = vpop.f32.mrb[0].mxu0
  %244 = vdwg.mxu0
  %v261 = vunpack.c.l.b16 %v155
  %v262 = vunpack.c.l.b16 %v156
  %v263 = vunpack.c.l.b16 %v157
  %v264 = vunpack.c.l.b16 %v158
  %v265 = vunpack.c.l.b16 %v159
  %v266 = vunpack.c.l.b16 %v160
  %v267 = vunpack.c.l.b16 %v161
  %v268 = vunpack.c.l.b16 %v162
  %v269 = vunpack.c.l.b16 %v163
  %v270 = vunpack.c.l.b16 %v164
  %v271 = vunpack.c.l.b16 %v165
  %v272 = vunpack.c.l.b16 %v166
  %v273 = vunpack.c.l.b16 %v167
  %v274 = vunpack.c.l.b16 %v168
  %v275 = vunpack.c.l.b16 %v169
  %v276 = vunpack.c.l.b16 %v170
  %v277 = vpack.c.b16 %v262, %v261
  %v278 = vpack.c.b16 %v264, %v263
  %v279 = vpack.c.b16 %v266, %v265
  %v280 = vpack.c.b16 %v268, %v267
  %v281 = vpack.c.b16 %v270, %v269
  %v282 = vpack.c.b16 %v272, %v271
  %v283 = vpack.c.b16 %v274, %v273
  %v284 = vpack.c.b16 %v276, %v275
  %293 = vmatprep.subr.bf16.mxu0 0
  %294 = vmatpush1.bf16.msra.mxu0 %v277
  %295 = vmatprep.subr.bf16.mxu0 0
  %296 = vmatpush1.bf16.msra.mxu0 %v278
  %297 = vmatprep.subr.bf16.mxu0 0
  %298 = vmatpush1.bf16.msra.mxu0 %v279
  %299 = vmatprep.subr.bf16.mxu0 0
  %300 = vmatpush1.bf16.msra.mxu0 %v280
  %301 = vmatprep.subr.bf16.mxu0 0
  %302 = vmatpush1.bf16.msra.mxu0 %v281
  %303 = vmatprep.subr.bf16.mxu0 0
  %304 = vmatpush1.bf16.msra.mxu0 %v282
  %305 = vmatprep.subr.bf16.mxu0 0
  %306 = vmatpush1.bf16.msra.mxu0 %v283
  %307 = vmatprep.subr.bf16.mxu0 0
  %308 = vmatpush1.bf16.msra.mxu0 %v284
  %309 = vmatprep.subr.bf16.mxu0 0
  %310 = vmatpush1.bf16.msra.mxu0 0
  %311 = vmatprep.subr.bf16.mxu0 0
  %312 = vmatpush1.bf16.msra.mxu0 0
  %313 = vmatprep.subr.bf16.mxu0 0
  %314 = vmatpush1.bf16.msra.mxu0 0
  %315 = vmatprep.subr.bf16.mxu0 0
  %316 = vmatpush1.bf16.msra.mxu0 0
  %317 = vmatprep.subr.bf16.mxu0 0
  %318 = vmatpush1.bf16.msra.mxu0 0
  %319 = vmatprep.subr.bf16.mxu0 0
  %320 = vmatpush1.bf16.msra.mxu0 0
  %321 = vmatprep.subr.bf16.mxu0 0
  %322 = vmatpush1.bf16.msra.mxu0 0
  %323 = vmatprep.subr.bf16.mxu0 0
  %324 = vmatpush1.bf16.msra.mxu0 0
  %325 = vmatprep.mubr.bf16.mxu0 0
  %326 = vmatmul.mubr.bf16.gmra.mrb[0].mxu0 %v153
  %v327 = vpop.f32.mrb[0].mxu0
  %v328 = vadd.f32 %v231, %v327
  %v329 = vpop.f32.mrb[0].mxu0
  %v330 = vpop.f32.mrb[0].mxu0
  %v331 = vadd.f32 %v234, %v330
  %v332 = vpop.f32.mrb[0].mxu0
  %333 = vmatprep.mubr.bf16.mxu0 0
  %334 = vmatmul.mubr.bf16.gmra.mrb[0].mxu0 %v154
  %v335 = vpop.f32.mrb[0].mxu0
  %v336 = vadd.f32 %v239, %v335
  %v337 = vpop.f32.mrb[0].mxu0
  %v338 = vpop.f32.mrb[0].mxu0
  %v339 = vadd.f32 %v242, %v338
  %v340 = vpop.f32.mrb[0].mxu0
  %341 = vdwg.mxu0
  %v342 = vld [vmem:[%s6] sm:$0x1]
  %v344 = vlaneseq
  %v345 = vshrl.u32 %v344, 7
  %v346 = vsub.s32 0, %v345
  %v347 = vrot.slane %v342, %v346
  %v349 = vadd.f32 %v328, %v347
  %v350 = vadd.f32 %v331, %v347
  %v351 = vadd.f32 %v336, %v347
  %v352 = vadd.f32 %v339, %v347
  %v353 = vpack.c.bf16 %v350, %v349
  %v354 = vpack.c.bf16 %v352, %v351
  %v357 = vunpack.c.l.b16 %v353
  %v358 = vunpack.c.h.b16 %v353
  %v359 = vunpack.c.l.b16 %v354
  %v360 = vunpack.c.h.b16 %v354
  %v361 = vpack.c.b16 %v357, %v357
  %v362 = vpack.c.b16 %v358, %v358
  %v363 = vpack.c.b16 %v359, %v359
  %v364 = vpack.c.b16 %v360, %v360
  %369 = vst [vmem:[%s7] sm:$0xf] %v361
  %370 = vst [vmem:[%s7 + $0x4] sm:$0xf] %v362
  %371 = vst [vmem:[%s7 + $0x8] sm:$0xf] %v363
  %372 = vst [vmem:[%s7 + $0xc] sm:$0xf] %v364
  // Predicated region
  $region30: #{msdiscriminator_forward.17} parent=0 // pred_check
    _
  $region31: #{msdiscriminator_forward.17} parent=0 // pred_check_branch
    %374 = sbr.rel (0) target = $region33
  $region32: #{msdiscriminator_forward.17} parent=0 // pred_region
    _
  $region33: #{msdiscriminator_forward.17} parent=0 // pred_fallthru
    _
  // Predicated region
  $region34: #{msdiscriminator_forward.17} parent=0 // pred_check
    _
  $region35: #{msdiscriminator_forward.17} parent=0 // pred_check_branch
    %376 = sbr.rel (0) target = $region37
  $region36: #{msdiscriminator_forward.17} parent=0 // pred_region
    _
  $region37: #{msdiscriminator_forward.17} parent=0 // pred_fallthru
    _

// kernel: msdiscriminator_forward.18
$region0: #{msdiscriminator_forward.18}
  #allocation0 [shape = 'u32[]', space=smem, size = 0x4, offset = 0x4, fixed_abs, tag = 'smem constant byte address 0x4 - core index']
  #allocation1 [shape = 'u32[144,128]{1,0:T(1,128)}', space=vmem, size = 0x12000, scoped, tag = 'internal scratch']
  %s0 = inlined_call_operand.vmem [shape: bf16[8,1152], index: 0, kind: input, shape index: {}]
  %s1 = inlined_call_operand.vmem [shape: bf16[8,128], index: 1, kind: input, shape index: {}]
  %s2 = inlined_call_operand.vmem [shape: bf16[1152,128], index: 2, kind: input, shape index: {}]
  %s3 = inlined_call_operand.vmem [shape: f32[1,128], index: 3, kind: input, shape index: {}]
  %s4 = inlined_call_operand.vmem [shape: bf16[128,128], index: 4, kind: input, shape index: {}]
  %s5 = inlined_call_operand.vmem [shape: bf16[128,128], index: 5, kind: input, shape index: {}]
  %s6 = inlined_call_operand.vmem [shape: f32[1,128], index: 6, kind: input, shape index: {}]
  %s7 = inlined_call_operand.vmem [shape: bf16[8,128], index: 7, kind: output, shape index: {}]
  %s8 = sld [smem:[#allocation0]]
  $region38: #{msdiscriminator_forward.18} parent=0
    _
  %s10 = ssub.s32 1, %s8
  %s11 = scalar_select 0, %s10, %s8
  // Predicated region
  $region2: #{msdiscriminator_forward.18} parent=0 // pred_check
    _
  $region3: #{msdiscriminator_forward.18} parent=0 // pred_check_branch
    %13 = sbr.rel (0) target = $region5
  $region4: #{msdiscriminator_forward.18} parent=0 // pred_region
    _
  $region5: #{msdiscriminator_forward.18} parent=0 // pred_fallthru
    _
  // Predicated region
  $region6: #{msdiscriminator_forward.18} parent=0 // pred_check
    _
  $region7: #{msdiscriminator_forward.18} parent=0 // pred_check_branch
    %15 = sbr.rel (0) target = $region9
  $region8: #{msdiscriminator_forward.18} parent=0 // pred_region
    _
  $region9: #{msdiscriminator_forward.18} parent=0 // pred_fallthru
    _
  // Predicated region
  $region10: #{msdiscriminator_forward.18} parent=0 // pred_check
    _
  $region11: #{msdiscriminator_forward.18} parent=0 // pred_check_branch
    %17 = sbr.rel (0) target = $region13
  $region12: #{msdiscriminator_forward.18} parent=0 // pred_region
    _
  $region13: #{msdiscriminator_forward.18} parent=0 // pred_fallthru
    _
  // Predicated region
  $region14: #{msdiscriminator_forward.18} parent=0 // pred_check
    _
  $region15: #{msdiscriminator_forward.18} parent=0 // pred_check_branch
    %19 = sbr.rel (0) target = $region17
  $region16: #{msdiscriminator_forward.18} parent=0 // pred_region
    _
  $region17: #{msdiscriminator_forward.18} parent=0 // pred_fallthru
    _
  // Predicated region
  $region18: #{msdiscriminator_forward.18} parent=0 // pred_check
    _
  $region19: #{msdiscriminator_forward.18} parent=0 // pred_check_branch
    %21 = sbr.rel (0) target = $region21
  $region20: #{msdiscriminator_forward.18} parent=0 // pred_region
    _
  $region21: #{msdiscriminator_forward.18} parent=0 // pred_fallthru
    _
  // Predicated region
  $region22: #{msdiscriminator_forward.18} parent=0 // pred_check
    _
  $region23: #{msdiscriminator_forward.18} parent=0 // pred_check_branch
    %23 = sbr.rel (0) target = $region25
  $region24: #{msdiscriminator_forward.18} parent=0 // pred_region
    _
  $region25: #{msdiscriminator_forward.18} parent=0 // pred_fallthru
    _
  // Predicated region
  $region26: #{msdiscriminator_forward.18} parent=0 // pred_check
    _
  $region27: #{msdiscriminator_forward.18} parent=0 // pred_check_branch
    %25 = sbr.rel (0) target = $region29
  $region28: #{msdiscriminator_forward.18} parent=0 // pred_region
    _
  $region29: #{msdiscriminator_forward.18} parent=0 // pred_fallthru
    _
  %v28 = vld [vmem:[%s0] sm:$0xff]
  %v29 = vld [vmem:[%s0 + $0x8] sm:$0xff]
  %v30 = vld [vmem:[%s0 + $0x10] sm:$0xff]
  %v31 = vld [vmem:[%s0 + $0x18] sm:$0xff]
  %v32 = vld [vmem:[%s0 + $0x20] sm:$0xf]
  %vm33 = vcmp.gt.bf16.partialorder %v28, 0
  %vm34 = vcmp.gt.bf16.partialorder %v29, 0
  %vm35 = vcmp.gt.bf16.partialorder %v30, 0
  %vm36 = vcmp.gt.bf16.partialorder %v31, 0
  %vm37 = vcmp.gt.bf16.partialorder %v32, 0
  %v38 = vmul.bf16 %v28, 1009007652
  %v39 = vmul.bf16 %v29, 1009007652
  %v40 = vmul.bf16 %v30, 1009007652
  %v41 = vmul.bf16 %v31, 1009007652
  %v42 = vmul.bf16 %v32, 1009007652
  %v43 = vsel %vm33, %v28, %v38
  %v44 = vsel %vm34, %v29, %v39
  %v45 = vsel %vm35, %v30, %v40
  %v46 = vsel %vm36, %v31, %v41
  %v47 = vsel %vm37, %v32, %v42
  %v48 = vld [vmem:[%s2] sm:$0xf]
  %v49 = vld [vmem:[%s2 + $0x4] sm:$0xf]
  %v50 = vld [vmem:[%s2 + $0x8] sm:$0xf]
  %v51 = vld [vmem:[%s2 + $0xc] sm:$0xf]
  %v52 = vld [vmem:[%s2 + $0x10] sm:$0xf]
  %v53 = vld [vmem:[%s2 + $0x14] sm:$0xf]
  %v54 = vld [vmem:[%s2 + $0x18] sm:$0xf]
  %v55 = vld [vmem:[%s2 + $0x1c] sm:$0xf]
  %v56 = vld [vmem:[%s2 + $0x20] sm:$0xf]
  %v57 = vld [vmem:[%s2 + $0x24] sm:$0xf]
  %v58 = vld [vmem:[%s2 + $0x28] sm:$0xf]
  %v59 = vld [vmem:[%s2 + $0x2c] sm:$0xf]
  %v60 = vld [vmem:[%s2 + $0x30] sm:$0xf]
  %v61 = vld [vmem:[%s2 + $0x34] sm:$0xf]
  %v62 = vld [vmem:[%s2 + $0x38] sm:$0xf]
  %v63 = vld [vmem:[%s2 + $0x3c] sm:$0xf]
  %v64 = vld [vmem:[%s2 + $0x40] sm:$0xf]
  %v65 = vld [vmem:[%s2 + $0x44] sm:$0xf]
  %v66 = vld [vmem:[%s2 + $0x48] sm:$0xf]
  %v67 = vld [vmem:[%s2 + $0x4c] sm:$0xf]
  %v68 = vld [vmem:[%s2 + $0x50] sm:$0xf]
  %v69 = vld [vmem:[%s2 + $0x54] sm:$0xf]
  %v70 = vld [vmem:[%s2 + $0x58] sm:$0xf]
  %v71 = vld [vmem:[%s2 + $0x5c] sm:$0xf]
  %v72 = vld [vmem:[%s2 + $0x60] sm:$0xf]
  %v73 = vld [vmem:[%s2 + $0x64] sm:$0xf]
  %v74 = vld [vmem:[%s2 + $0x68] sm:$0xf]
  %v75 = vld [vmem:[%s2 + $0x6c] sm:$0xf]
  %v76 = vld [vmem:[%s2 + $0x70] sm:$0xf]
  %v77 = vld [vmem:[%s2 + $0x74] sm:$0xf]
  %v78 = vld [vmem:[%s2 + $0x78] sm:$0xf]
  %v79 = vld [vmem:[%s2 + $0x7c] sm:$0xf]
  %v80 = vld [vmem:[%s2 + $0x80] sm:$0xf]
  %v81 = vld [vmem:[%s2 + $0x84] sm:$0xf]
  %v82 = vld [vmem:[%s2 + $0x88] sm:$0xf]
  %v83 = vld [vmem:[%s2 + $0x8c] sm:$0xf]
  %v84 = vld [vmem:[%s2 + $0x90] sm:$0xf]
  %v85 = vld [vmem:[%s2 + $0x94] sm:$0xf]
  %v86 = vld [vmem:[%s2 + $0x98] sm:$0xf]
  %v87 = vld [vmem:[%s2 + $0x9c] sm:$0xf]
  %v88 = vld [vmem:[%s2 + $0xa0] sm:$0xf]
  %v89 = vld [vmem:[%s2 + $0xa4] sm:$0xf]
  %v90 = vld [vmem:[%s2 + $0xa8] sm:$0xf]
  %v91 = vld [vmem:[%s2 + $0xac] sm:$0xf]
  %v92 = vld [vmem:[%s2 + $0xb0] sm:$0xf]
  %v93 = vld [vmem:[%s2 + $0xb4] sm:$0xf]
  %v94 = vld [vmem:[%s2 + $0xb8] sm:$0xf]
  %v95 = vld [vmem:[%s2 + $0xbc] sm:$0xf]
  %v96 = vld [vmem:[%s2 + $0xc0] sm:$0xf]
  %v97 = vld [vmem:[%s2 + $0xc4] sm:$0xf]
  %v98 = vld [vmem:[%s2 + $0xc8] sm:$0xf]
  %v99 = vld [vmem:[%s2 + $0xcc] sm:$0xf]
  %v100 = vld [vmem:[%s2 + $0xd0] sm:$0xf]
  %v101 = vld [vmem:[%s2 + $0xd4] sm:$0xf]
  %v102 = vld [vmem:[%s2 + $0xd8] sm:$0xf]
  %v103 = vld [vmem:[%s2 + $0xdc] sm:$0xf]
  %v104 = vld [vmem:[%s2 + $0xe0] sm:$0xf]
  %v105 = vld [vmem:[%s2 + $0xe4] sm:$0xf]
  %v106 = vld [vmem:[%s2 + $0xe8] sm:$0xf]
  %v107 = vld [vmem:[%s2 + $0xec] sm:$0xf]
  %v108 = vld [vmem:[%s2 + $0xf0] sm:$0xf]
  %v109 = vld [vmem:[%s2 + $0xf4] sm:$0xf]
  %v110 = vld [vmem:[%s2 + $0xf8] sm:$0xf]
  %v111 = vld [vmem:[%s2 + $0xfc] sm:$0xf]
  %v112 = vld [vmem:[%s2 + $0x100] sm:$0xf]
  %v113 = vld [vmem:[%s2 + $0x104] sm:$0xf]
  %v114 = vld [vmem:[%s2 + $0x108] sm:$0xf]
  %v115 = vld [vmem:[%s2 + $0x10c] sm:$0xf]
  %v116 = vld [vmem:[%s2 + $0x110] sm:$0xf]
  %v117 = vld [vmem:[%s2 + $0x114] sm:$0xf]
  %v118 = vld [vmem:[%s2 + $0x118] sm:$0xf]
  %v119 = vld [vmem:[%s2 + $0x11c] sm:$0xf]
  %v120 = vld [vmem:[%s2 + $0x120] sm:$0xf]
  %v121 = vld [vmem:[%s2 + $0x124] sm:$0xf]
  %v122 = vld [vmem:[%s2 + $0x128] sm:$0xf]
  %v123 = vld [vmem:[%s2 + $0x12c] sm:$0xf]
  %v124 = vld [vmem:[%s2 + $0x130] sm:$0xf]
  %v125 = vld [vmem:[%s2 + $0x134] sm:$0xf]
  %v126 = vld [vmem:[%s2 + $0x138] sm:$0xf]
  %v127 = vld [vmem:[%s2 + $0x13c] sm:$0xf]
  %v128 = vld [vmem:[%s2 + $0x140] sm:$0xf]
  %v129 = vld [vmem:[%s2 + $0x144] sm:$0xf]
  %v130 = vld [vmem:[%s2 + $0x148] sm:$0xf]
  %v131 = vld [vmem:[%s2 + $0x14c] sm:$0xf]
  %v132 = vld [vmem:[%s2 + $0x150] sm:$0xf]
  %v133 = vld [vmem:[%s2 + $0x154] sm:$0xf]
  %v134 = vld [vmem:[%s2 + $0x158] sm:$0xf]
  %v135 = vld [vmem:[%s2 + $0x15c] sm:$0xf]
  %v136 = vld [vmem:[%s2 + $0x160] sm:$0xf]
  %v137 = vld [vmem:[%s2 + $0x164] sm:$0xf]
  %v138 = vld [vmem:[%s2 + $0x168] sm:$0xf]
  %v139 = vld [vmem:[%s2 + $0x16c] sm:$0xf]
  %v140 = vld [vmem:[%s2 + $0x170] sm:$0xf]
  %v141 = vld [vmem:[%s2 + $0x174] sm:$0xf]
  %v142 = vld [vmem:[%s2 + $0x178] sm:$0xf]
  %v143 = vld [vmem:[%s2 + $0x17c] sm:$0xf]
  %v144 = vld [vmem:[%s2 + $0x180] sm:$0xf]
  %v145 = vld [vmem:[%s2 + $0x184] sm:$0xf]
  %v146 = vld [vmem:[%s2 + $0x188] sm:$0xf]
  %v147 = vld [vmem:[%s2 + $0x18c] sm:$0xf]
  %v148 = vld [vmem:[%s2 + $0x190] sm:$0xf]
  %v149 = vld [vmem:[%s2 + $0x194] sm:$0xf]
  %v150 = vld [vmem:[%s2 + $0x198] sm:$0xf]
  %v151 = vld [vmem:[%s2 + $0x19c] sm:$0xf]
  %v152 = vld [vmem:[%s2 + $0x1a0] sm:$0xf]
  %v153 = vld [vmem:[%s2 + $0x1a4] sm:$0xf]
  %v154 = vld [vmem:[%s2 + $0x1a8] sm:$0xf]
  %v155 = vld [vmem:[%s2 + $0x1ac] sm:$0xf]
  %v156 = vld [vmem:[%s2 + $0x1b0] sm:$0xf]
  %v157 = vld [vmem:[%s2 + $0x1b4] sm:$0xf]
  %v158 = vld [vmem:[%s2 + $0x1b8] sm:$0xf]
  %v159 = vld [vmem:[%s2 + $0x1bc] sm:$0xf]
  %v160 = vld [vmem:[%s2 + $0x1c0] sm:$0xf]
  %v161 = vld [vmem:[%s2 + $0x1c4] sm:$0xf]
  %v162 = vld [vmem:[%s2 + $0x1c8] sm:$0xf]
  %v163 = vld [vmem:[%s2 + $0x1cc] sm:$0xf]
  %v164 = vld [vmem:[%s2 + $0x1d0] sm:$0xf]
  %v165 = vld [vmem:[%s2 + $0x1d4] sm:$0xf]
  %v166 = vld [vmem:[%s2 + $0x1d8] sm:$0xf]
  %v167 = vld [vmem:[%s2 + $0x1dc] sm:$0xf]
  %v168 = vld [vmem:[%s2 + $0x1e0] sm:$0xf]
  %v169 = vld [vmem:[%s2 + $0x1e4] sm:$0xf]
  %v170 = vld [vmem:[%s2 + $0x1e8] sm:$0xf]
  %v171 = vld [vmem:[%s2 + $0x1ec] sm:$0xf]
  %v172 = vld [vmem:[%s2 + $0x1f0] sm:$0xf]
  %v173 = vld [vmem:[%s2 + $0x1f4] sm:$0xf]
  %v174 = vld [vmem:[%s2 + $0x1f8] sm:$0xf]
  %v175 = vld [vmem:[%s2 + $0x1fc] sm:$0xf]
  %v176 = vld [vmem:[%s2 + $0x200] sm:$0xf]
  %v177 = vld [vmem:[%s2 + $0x204] sm:$0xf]
  %v178 = vld [vmem:[%s2 + $0x208] sm:$0xf]
  %v179 = vld [vmem:[%s2 + $0x20c] sm:$0xf]
  %v180 = vld [vmem:[%s2 + $0x210] sm:$0xf]
  %v181 = vld [vmem:[%s2 + $0x214] sm:$0xf]
  %v182 = vld [vmem:[%s2 + $0x218] sm:$0xf]
  %v183 = vld [vmem:[%s2 + $0x21c] sm:$0xf]
  %v184 = vld [vmem:[%s2 + $0x220] sm:$0xf]
  %v185 = vld [vmem:[%s2 + $0x224] sm:$0xf]
  %v186 = vld [vmem:[%s2 + $0x228] sm:$0xf]
  %v187 = vld [vmem:[%s2 + $0x22c] sm:$0xf]
  %v188 = vld [vmem:[%s2 + $0x230] sm:$0xf]
  %v189 = vld [vmem:[%s2 + $0x234] sm:$0xf]
  %v190 = vld [vmem:[%s2 + $0x238] sm:$0xf]
  %v191 = vld [vmem:[%s2 + $0x23c] sm:$0xf]
  %v192 = vld [vmem:[%s3] sm:$0x1]
  %v194 = vlaneseq
  %v195 = vshrl.u32 %v194, 7
  %v196 = vsub.s32 0, %v195
  %v197 = vrot.slane %v192, %v196
  %v204 = vunpack.c.l.b16 %v43
  %v205 = vunpack.c.h.b16 %v43
  %v206 = vunpack.c.l.b16 %v44
  %v207 = vunpack.c.h.b16 %v44
  %v208 = vunpack.c.l.b16 %v45
  %v209 = vunpack.c.h.b16 %v45
  %v210 = vunpack.c.l.b16 %v46
  %v211 = vunpack.c.h.b16 %v46
  %v212 = vunpack.c.l.b16 %v47
  %v213 = vpack.c.b16 %v204, %v204
  %v214 = vpack.c.b16 %v205, %v205
  %v215 = vpack.c.b16 %v206, %v206
  %v216 = vpack.c.b16 %v207, %v207
  %v217 = vpack.c.b16 %v208, %v208
  %v218 = vpack.c.b16 %v209, %v209
  %v219 = vpack.c.b16 %v210, %v210
  %v220 = vpack.c.b16 %v211, %v211
  %v221 = vpack.c.b16 %v212, %v212
  %v375 = vunpack.c.l.b16 %v48
  %v376 = vunpack.c.l.b16 %v49
  %v377 = vunpack.c.l.b16 %v50
  %v378 = vunpack.c.l.b16 %v51
  %v379 = vunpack.c.l.b16 %v52
  %v380 = vunpack.c.l.b16 %v53
  %v381 = vunpack.c.l.b16 %v54
  %v382 = vunpack.c.l.b16 %v55
  %v383 = vunpack.c.l.b16 %v56
  %v384 = vunpack.c.l.b16 %v57
  %v385 = vunpack.c.l.b16 %v58
  %v386 = vunpack.c.l.b16 %v59
  %v387 = vunpack.c.l.b16 %v60
  %v388 = vunpack.c.l.b16 %v61
  %v389 = vunpack.c.l.b16 %v62
  %v390 = vunpack.c.l.b16 %v63
  %v391 = vunpack.c.l.b16 %v64
  %v392 = vunpack.c.l.b16 %v65
  %v393 = vunpack.c.l.b16 %v66
  %v394 = vunpack.c.l.b16 %v67
  %v395 = vunpack.c.l.b16 %v68
  %v396 = vunpack.c.l.b16 %v69
  %v397 = vunpack.c.l.b16 %v70
  %v398 = vunpack.c.l.b16 %v71
  %v399 = vunpack.c.l.b16 %v72
  %v400 = vunpack.c.l.b16 %v73
  %v401 = vunpack.c.l.b16 %v74
  %v402 = vunpack.c.l.b16 %v75
  %v403 = vunpack.c.l.b16 %v76
  %v404 = vunpack.c.l.b16 %v77
  %v405 = vunpack.c.l.b16 %v78
  %v406 = vunpack.c.l.b16 %v79
  %v407 = vunpack.c.l.b16 %v80
  %v408 = vunpack.c.l.b16 %v81
  %v409 = vunpack.c.l.b16 %v82
  %v410 = vunpack.c.l.b16 %v83
  %v411 = vunpack.c.l.b16 %v84
  %v412 = vunpack.c.l.b16 %v85
  %v413 = vunpack.c.l.b16 %v86
  %v414 = vunpack.c.l.b16 %v87
  %v415 = vunpack.c.l.b16 %v88
  %v416 = vunpack.c.l.b16 %v89
  %v417 = vunpack.c.l.b16 %v90
  %v418 = vunpack.c.l.b16 %v91
  %v419 = vunpack.c.l.b16 %v92
  %v420 = vunpack.c.l.b16 %v93
  %v421 = vunpack.c.l.b16 %v94
  %v422 = vunpack.c.l.b16 %v95
  %v423 = vunpack.c.l.b16 %v96
  %v424 = vunpack.c.l.b16 %v97
  %v425 = vunpack.c.l.b16 %v98
  %v426 = vunpack.c.l.b16 %v99
  %v427 = vunpack.c.l.b16 %v100
  %v428 = vunpack.c.l.b16 %v101
  %v429 = vunpack.c.l.b16 %v102
  %v430 = vunpack.c.l.b16 %v103
  %v431 = vunpack.c.l.b16 %v104
  %v432 = vunpack.c.l.b16 %v105
  %v433 = vunpack.c.l.b16 %v106
  %v434 = vunpack.c.l.b16 %v107
  %v435 = vunpack.c.l.b16 %v108
  %v436 = vunpack.c.l.b16 %v109
  %v437 = vunpack.c.l.b16 %v110
  %v438 = vunpack.c.l.b16 %v111
  %v439 = vunpack.c.l.b16 %v112
  %v440 = vunpack.c.l.b16 %v113
  %v441 = vunpack.c.l.b16 %v114
  %v442 = vunpack.c.l.b16 %v115
  %v443 = vunpack.c.l.b16 %v116
  %v444 = vunpack.c.l.b16 %v117
  %v445 = vunpack.c.l.b16 %v118
  %v446 = vunpack.c.l.b16 %v119
  %v447 = vunpack.c.l.b16 %v120
  %v448 = vunpack.c.l.b16 %v121
  %v449 = vunpack.c.l.b16 %v122
  %v450 = vunpack.c.l.b16 %v123
  %v451 = vunpack.c.l.b16 %v124
  %v452 = vunpack.c.l.b16 %v125
  %v453 = vunpack.c.l.b16 %v126
  %v454 = vunpack.c.l.b16 %v127
  %v455 = vunpack.c.l.b16 %v128
  %v456 = vunpack.c.l.b16 %v129
  %v457 = vunpack.c.l.b16 %v130
  %v458 = vunpack.c.l.b16 %v131
  %v459 = vunpack.c.l.b16 %v132
  %v460 = vunpack.c.l.b16 %v133
  %v461 = vunpack.c.l.b16 %v134
  %v462 = vunpack.c.l.b16 %v135
  %v463 = vunpack.c.l.b16 %v136
  %v464 = vunpack.c.l.b16 %v137
  %v465 = vunpack.c.l.b16 %v138
  %v466 = vunpack.c.l.b16 %v139
  %v467 = vunpack.c.l.b16 %v140
  %v468 = vunpack.c.l.b16 %v141
  %v469 = vunpack.c.l.b16 %v142
  %v470 = vunpack.c.l.b16 %v143
  %v471 = vunpack.c.l.b16 %v144
  %v472 = vunpack.c.l.b16 %v145
  %v473 = vunpack.c.l.b16 %v146
  %v474 = vunpack.c.l.b16 %v147
  %v475 = vunpack.c.l.b16 %v148
  %v476 = vunpack.c.l.b16 %v149
  %v477 = vunpack.c.l.b16 %v150
  %v478 = vunpack.c.l.b16 %v151
  %v479 = vunpack.c.l.b16 %v152
  %v480 = vunpack.c.l.b16 %v153
  %v481 = vunpack.c.l.b16 %v154
  %v482 = vunpack.c.l.b16 %v155
  %v483 = vunpack.c.l.b16 %v156
  %v484 = vunpack.c.l.b16 %v157
  %v485 = vunpack.c.l.b16 %v158
  %v486 = vunpack.c.l.b16 %v159
  %v487 = vunpack.c.l.b16 %v160
  %v488 = vunpack.c.l.b16 %v161
  %v489 = vunpack.c.l.b16 %v162
  %v490 = vunpack.c.l.b16 %v163
  %v491 = vunpack.c.l.b16 %v164
  %v492 = vunpack.c.l.b16 %v165
  %v493 = vunpack.c.l.b16 %v166
  %v494 = vunpack.c.l.b16 %v167
  %v495 = vunpack.c.l.b16 %v168
  %v496 = vunpack.c.l.b16 %v169
  %v497 = vunpack.c.l.b16 %v170
  %v498 = vunpack.c.l.b16 %v171
  %v499 = vunpack.c.l.b16 %v172
  %v500 = vunpack.c.l.b16 %v173
  %v501 = vunpack.c.l.b16 %v174
  %v502 = vunpack.c.l.b16 %v175
  %v503 = vunpack.c.l.b16 %v176
  %v504 = vunpack.c.l.b16 %v177
  %v505 = vunpack.c.l.b16 %v178
  %v506 = vunpack.c.l.b16 %v179
  %v507 = vunpack.c.l.b16 %v180
  %v508 = vunpack.c.l.b16 %v181
  %v509 = vunpack.c.l.b16 %v182
  %v510 = vunpack.c.l.b16 %v183
  %v511 = vunpack.c.l.b16 %v184
  %v512 = vunpack.c.l.b16 %v185
  %v513 = vunpack.c.l.b16 %v186
  %v514 = vunpack.c.l.b16 %v187
  %v515 = vunpack.c.l.b16 %v188
  %v516 = vunpack.c.l.b16 %v189
  %v517 = vunpack.c.l.b16 %v190
  %v518 = vunpack.c.l.b16 %v191
  %v519 = vpack.c.b16 %v376, %v375
  %v520 = vpack.c.b16 %v378, %v377
  %v521 = vpack.c.b16 %v380, %v379
  %v522 = vpack.c.b16 %v382, %v381
  %v523 = vpack.c.b16 %v384, %v383
  %v524 = vpack.c.b16 %v386, %v385
  %v525 = vpack.c.b16 %v388, %v387
  %v526 = vpack.c.b16 %v390, %v389
  %v527 = vpack.c.b16 %v392, %v391
  %v528 = vpack.c.b16 %v394, %v393
  %v529 = vpack.c.b16 %v396, %v395
  %v530 = vpack.c.b16 %v398, %v397
  %v531 = vpack.c.b16 %v400, %v399
  %v532 = vpack.c.b16 %v402, %v401
  %v533 = vpack.c.b16 %v404, %v403
  %v534 = vpack.c.b16 %v406, %v405
  %v535 = vpack.c.b16 %v408, %v407
  %v536 = vpack.c.b16 %v410, %v409
  %v537 = vpack.c.b16 %v412, %v411
  %v538 = vpack.c.b16 %v414, %v413
  %v539 = vpack.c.b16 %v416, %v415
  %v540 = vpack.c.b16 %v418, %v417
  %v541 = vpack.c.b16 %v420, %v419
  %v542 = vpack.c.b16 %v422, %v421
  %v543 = vpack.c.b16 %v424, %v423
  %v544 = vpack.c.b16 %v426, %v425
  %v545 = vpack.c.b16 %v428, %v427
  %v546 = vpack.c.b16 %v430, %v429
  %v547 = vpack.c.b16 %v432, %v431
  %v548 = vpack.c.b16 %v434, %v433
  %v549 = vpack.c.b16 %v436, %v435
  %v550 = vpack.c.b16 %v438, %v437
  %v551 = vpack.c.b16 %v440, %v439
  %v552 = vpack.c.b16 %v442, %v441
  %v553 = vpack.c.b16 %v444, %v443
  %v554 = vpack.c.b16 %v446, %v445
  %v555 = vpack.c.b16 %v448, %v447
  %v556 = vpack.c.b16 %v450, %v449
  %v557 = vpack.c.b16 %v452, %v451
  %v558 = vpack.c.b16 %v454, %v453
  %v559 = vpack.c.b16 %v456, %v455
  %v560 = vpack.c.b16 %v458, %v457
  %v561 = vpack.c.b16 %v460, %v459
  %v562 = vpack.c.b16 %v462, %v461
  %v563 = vpack.c.b16 %v464, %v463
  %v564 = vpack.c.b16 %v466, %v465
  %v565 = vpack.c.b16 %v468, %v467
  %v566 = vpack.c.b16 %v470, %v469
  %v567 = vpack.c.b16 %v472, %v471
  %v568 = vpack.c.b16 %v474, %v473
  %v569 = vpack.c.b16 %v476, %v475
  %v570 = vpack.c.b16 %v478, %v477
  %v571 = vpack.c.b16 %v480, %v479
  %v572 = vpack.c.b16 %v482, %v481
  %v573 = vpack.c.b16 %v484, %v483
  %v574 = vpack.c.b16 %v486, %v485
  %v575 = vpack.c.b16 %v488, %v487
  %v576 = vpack.c.b16 %v490, %v489
  %v577 = vpack.c.b16 %v492, %v491
  %v578 = vpack.c.b16 %v494, %v493
  %v579 = vpack.c.b16 %v496, %v495
  %v580 = vpack.c.b16 %v498, %v497
  %v581 = vpack.c.b16 %v500, %v499
  %v582 = vpack.c.b16 %v502, %v501
  %v583 = vpack.c.b16 %v504, %v503
  %v584 = vpack.c.b16 %v506, %v505
  %v585 = vpack.c.b16 %v508, %v507
  %v586 = vpack.c.b16 %v510, %v509
  %v587 = vpack.c.b16 %v512, %v511
  %v588 = vpack.c.b16 %v514, %v513
  %v589 = vpack.c.b16 %v516, %v515
  %v590 = vpack.c.b16 %v518, %v517
  %663 = vmatprep.subr.bf16.mxu0 0
  %664 = vmatpush1.bf16.msra.mxu0 %v519
  %665 = vmatprep.subr.bf16.mxu0 0
  %666 = vmatpush1.bf16.msra.mxu0 %v520
  %667 = vmatprep.subr.bf16.mxu0 0
  %668 = vmatpush1.bf16.msra.mxu0 %v521
  %669 = vmatprep.subr.bf16.mxu0 0
  %670 = vmatpush1.bf16.msra.mxu0 %v522
  %671 = vmatprep.subr.bf16.mxu0 0
  %672 = vmatpush1.bf16.msra.mxu0 %v523
  %673 = vmatprep.subr.bf16.mxu0 0
  %674 = vmatpush1.bf16.msra.mxu0 %v524
  %675 = vmatprep.subr.bf16.mxu0 0
  %676 = vmatpush1.bf16.msra.mxu0 %v525
  %677 = vmatprep.subr.bf16.mxu0 0
  %678 = vmatpush1.bf16.msra.mxu0 %v526
  %679 = vmatprep.subr.bf16.mxu0 0
  %680 = vmatpush1.bf16.msra.mxu0 %v527
  %681 = vmatprep.subr.bf16.mxu0 0
  %682 = vmatpush1.bf16.msra.mxu0 %v528
  %683 = vmatprep.subr.bf16.mxu0 0
  %684 = vmatpush1.bf16.msra.mxu0 %v529
  %685 = vmatprep.subr.bf16.mxu0 0
  %686 = vmatpush1.bf16.msra.mxu0 %v530
  %687 = vmatprep.subr.bf16.mxu0 0
  %688 = vmatpush1.bf16.msra.mxu0 %v531
  %689 = vmatprep.subr.bf16.mxu0 0
  %690 = vmatpush1.bf16.msra.mxu0 %v532
  %691 = vmatprep.subr.bf16.mxu0 0
  %692 = vmatpush1.bf16.msra.mxu0 %v533
  %693 = vmatprep.subr.bf16.mxu0 0
  %694 = vmatpush1.bf16.msra.mxu0 %v534
  %695 = vmatprep.mubr.bf16.mxu0 %v214
  %696 = vmatmul.mubr.bf16.gmra.mrb[0].mxu0 %v213
  %v697 = vpop.f32.mrb[0].mxu0
  %v698 = vadd.f32 %v197, %v697
  %v699 = vpop.f32.mrb[0].mxu0
  %v700 = vpop.f32.mrb[0].mxu0
  %v701 = vpop.f32.mrb[0].mxu0
  %702 = vdwg.mxu0
  %703 = vmatprep.subr.bf16.mxu0 0
  %704 = vmatpush1.bf16.msra.mxu0 %v535
  %705 = vmatprep.subr.bf16.mxu0 0
  %706 = vmatpush1.bf16.msra.mxu0 %v536
  %707 = vmatprep.subr.bf16.mxu0 0
  %708 = vmatpush1.bf16.msra.mxu0 %v537
  %709 = vmatprep.subr.bf16.mxu0 0
  %710 = vmatpush1.bf16.msra.mxu0 %v538
  %711 = vmatprep.subr.bf16.mxu0 0
  %712 = vmatpush1.bf16.msra.mxu0 %v539
  %713 = vmatprep.subr.bf16.mxu0 0
  %714 = vmatpush1.bf16.msra.mxu0 %v540
  %715 = vmatprep.subr.bf16.mxu0 0
  %716 = vmatpush1.bf16.msra.mxu0 %v541
  %717 = vmatprep.subr.bf16.mxu0 0
  %718 = vmatpush1.bf16.msra.mxu0 %v542
  %719 = vmatprep.subr.bf16.mxu0 0
  %720 = vmatpush1.bf16.msra.mxu0 %v543
  %721 = vmatprep.subr.bf16.mxu0 0
  %722 = vmatpush1.bf16.msra.mxu0 %v544
  %723 = vmatprep.subr.bf16.mxu0 0
  %724 = vmatpush1.bf16.msra.mxu0 %v545
  %725 = vmatprep.subr.bf16.mxu0 0
  %726 = vmatpush1.bf16.msra.mxu0 %v546
  %727 = vmatprep.subr.bf16.mxu0 0
  %728 = vmatpush1.bf16.msra.mxu0 %v547
  %729 = vmatprep.subr.bf16.mxu0 0
  %730 = vmatpush1.bf16.msra.mxu0 %v548
  %731 = vmatprep.subr.bf16.mxu0 0
  %732 = vmatpush1.bf16.msra.mxu0 %v549
  %733 = vmatprep.subr.bf16.mxu0 0
  %734 = vmatpush1.bf16.msra.mxu0 %v550
  %735 = vmatprep.mubr.bf16.mxu0 %v216
  %736 = vmatmul.mubr.bf16.gmra.mrb[0].mxu0 %v215
  %v737 = vpop.f32.mrb[0].mxu0
  %v738 = vadd.f32 %v698, %v737
  %v739 = vpop.f32.mrb[0].mxu0
  %v740 = vpop.f32.mrb[0].mxu0
  %v741 = vpop.f32.mrb[0].mxu0
  %742 = vdwg.mxu0
  %743 = vmatprep.subr.bf16.mxu0 0
  %744 = vmatpush1.bf16.msra.mxu0 %v551
  %745 = vmatprep.subr.bf16.mxu0 0
  %746 = vmatpush1.bf16.msra.mxu0 %v552
  %747 = vmatprep.subr.bf16.mxu0 0
  %748 = vmatpush1.bf16.msra.mxu0 %v553
  %749 = vmatprep.subr.bf16.mxu0 0
  %750 = vmatpush1.bf16.msra.mxu0 %v554
  %751 = vmatprep.subr.bf16.mxu0 0
  %752 = vmatpush1.bf16.msra.mxu0 %v555
  %753 = vmatprep.subr.bf16.mxu0 0
  %754 = vmatpush1.bf16.msra.mxu0 %v556
  %755 = vmatprep.subr.bf16.mxu0 0
  %756 = vmatpush1.bf16.msra.mxu0 %v557
  %757 = vmatprep.subr.bf16.mxu0 0
  %758 = vmatpush1.bf16.msra.mxu0 %v558
  %759 = vmatprep.subr.bf16.mxu0 0
  %760 = vmatpush1.bf16.msra.mxu0 %v559
  %761 = vmatprep.subr.bf16.mxu0 0
  %762 = vmatpush1.bf16.msra.mxu0 %v560
  %763 = vmatprep.subr.bf16.mxu0 0
  %764 = vmatpush1.bf16.msra.mxu0 %v561
  %765 = vmatprep.subr.bf16.mxu0 0
  %766 = vmatpush1.bf16.msra.mxu0 %v562
  %767 = vmatprep.subr.bf16.mxu0 0
  %768 = vmatpush1.bf16.msra.mxu0 %v563
  %769 = vmatprep.subr.bf16.mxu0 0
  %770 = vmatpush1.bf16.msra.mxu0 %v564
  %771 = vmatprep.subr.bf16.mxu0 0
  %772 = vmatpush1.bf16.msra.mxu0 %v565
  %773 = vmatprep.subr.bf16.mxu0 0
  %774 = vmatpush1.bf16.msra.mxu0 %v566
  %775 = vmatprep.mubr.bf16.mxu0 %v218
  %776 = vmatmul.mubr.bf16.gmra.mrb[0].mxu0 %v217
  %v777 = vpop.f32.mrb[0].mxu0
  %v778 = vadd.f32 %v738, %v777
  %v779 = vpop.f32.mrb[0].mxu0
  %v780 = vpop.f32.mrb[0].mxu0
  %v781 = vpop.f32.mrb[0].mxu0
  %782 = vdwg.mxu0
  %783 = vmatprep.subr.bf16.mxu0 0
  %784 = vmatpush1.bf16.msra.mxu0 %v567
  %785 = vmatprep.subr.bf16.mxu0 0
  %786 = vmatpush1.bf16.msra.mxu0 %v568
  %787 = vmatprep.subr.bf16.mxu0 0
  %788 = vmatpush1.bf16.msra.mxu0 %v569
  %789 = vmatprep.subr.bf16.mxu0 0
  %790 = vmatpush1.bf16.msra.mxu0 %v570
  %791 = vmatprep.subr.bf16.mxu0 0
  %792 = vmatpush1.bf16.msra.mxu0 %v571
  %793 = vmatprep.subr.bf16.mxu0 0
  %794 = vmatpush1.bf16.msra.mxu0 %v572
  %795 = vmatprep.subr.bf16.mxu0 0
  %796 = vmatpush1.bf16.msra.mxu0 %v573
  %797 = vmatprep.subr.bf16.mxu0 0
  %798 = vmatpush1.bf16.msra.mxu0 %v574
  %799 = vmatprep.subr.bf16.mxu0 0
  %800 = vmatpush1.bf16.msra.mxu0 %v575
  %801 = vmatprep.subr.bf16.mxu0 0
  %802 = vmatpush1.bf16.msra.mxu0 %v576
  %803 = vmatprep.subr.bf16.mxu0 0
  %804 = vmatpush1.bf16.msra.mxu0 %v577
  %805 = vmatprep.subr.bf16.mxu0 0
  %806 = vmatpush1.bf16.msra.mxu0 %v578
  %807 = vmatprep.subr.bf16.mxu0 0
  %808 = vmatpush1.bf16.msra.mxu0 %v579
  %809 = vmatprep.subr.bf16.mxu0 0
  %810 = vmatpush1.bf16.msra.mxu0 %v580
  %811 = vmatprep.subr.bf16.mxu0 0
  %812 = vmatpush1.bf16.msra.mxu0 %v581
  %813 = vmatprep.subr.bf16.mxu0 0
  %814 = vmatpush1.bf16.msra.mxu0 %v582
  %815 = vmatprep.mubr.bf16.mxu0 %v220
  %816 = vmatmul.mubr.bf16.gmra.mrb[0].mxu0 %v219
  %v817 = vpop.f32.mrb[0].mxu0
  %v818 = vadd.f32 %v778, %v817
  %v819 = vpop.f32.mrb[0].mxu0
  %v820 = vpop.f32.mrb[0].mxu0
  %v821 = vpop.f32.mrb[0].mxu0
  %822 = vdwg.mxu0
  %823 = vmatprep.subr.bf16.mxu0 0
  %824 = vmatpush1.bf16.msra.mxu0 %v583
  %825 = vmatprep.subr.bf16.mxu0 0
  %826 = vmatpush1.bf16.msra.mxu0 %v584
  %827 = vmatprep.subr.bf16.mxu0 0
  %828 = vmatpush1.bf16.msra.mxu0 %v585
  %829 = vmatprep.subr.bf16.mxu0 0
  %830 = vmatpush1.bf16.msra.mxu0 %v586
  %831 = vmatprep.subr.bf16.mxu0 0
  %832 = vmatpush1.bf16.msra.mxu0 %v587
  %833 = vmatprep.subr.bf16.mxu0 0
  %834 = vmatpush1.bf16.msra.mxu0 %v588
  %835 = vmatprep.subr.bf16.mxu0 0
  %836 = vmatpush1.bf16.msra.mxu0 %v589
  %837 = vmatprep.subr.bf16.mxu0 0
  %838 = vmatpush1.bf16.msra.mxu0 %v590
  %839 = vmatprep.subr.bf16.mxu0 0
  %840 = vmatpush1.bf16.msra.mxu0 0
  %841 = vmatprep.subr.bf16.mxu0 0
  %842 = vmatpush1.bf16.msra.mxu0 0
  %843 = vmatprep.subr.bf16.mxu0 0
  %844 = vmatpush1.bf16.msra.mxu0 0
  %845 = vmatprep.subr.bf16.mxu0 0
  %846 = vmatpush1.bf16.msra.mxu0 0
  %847 = vmatprep.subr.bf16.mxu0 0
  %848 = vmatpush1.bf16.msra.mxu0 0
  %849 = vmatprep.subr.bf16.mxu0 0
  %850 = vmatpush1.bf16.msra.mxu0 0
  %851 = vmatprep.subr.bf16.mxu0 0
  %852 = vmatpush1.bf16.msra.mxu0 0
  %853 = vmatprep.subr.bf16.mxu0 0
  %854 = vmatpush1.bf16.msra.mxu0 0
  %855 = vmatprep.mubr.bf16.mxu0 0
  %856 = vmatmul.mubr.bf16.gmra.mrb[0].mxu0 %v221
  %v857 = vpop.f32.mrb[0].mxu0
  %v858 = vadd.f32 %v818, %v857
  %v859 = vpop.f32.mrb[0].mxu0
  %v860 = vpop.f32.mrb[0].mxu0
  %v861 = vpop.f32.mrb[0].mxu0
  %862 = vdwg.mxu0
  %vm863 = vcmp.gt.f32.partialorder %v858, 0.0
  %v864 = vmul.f32 %v858, 0.01
  %v865 = vsel %vm863, %v858, %v864
  %v866 = vpack.c.bf16 %v865, %v865
  %v867 = vld [vmem:[%s4] sm:$0xf]
  %v868 = vld [vmem:[%s4 + $0x4] sm:$0xf]
  %v869 = vld [vmem:[%s4 + $0x8] sm:$0xf]
  %v870 = vld [vmem:[%s4 + $0xc] sm:$0xf]
  %v871 = vld [vmem:[%s4 + $0x10] sm:$0xf]
  %v872 = vld [vmem:[%s4 + $0x14] sm:$0xf]
  %v873 = vld [vmem:[%s4 + $0x18] sm:$0xf]
  %v874 = vld [vmem:[%s4 + $0x1c] sm:$0xf]
  %v875 = vld [vmem:[%s4 + $0x20] sm:$0xf]
  %v876 = vld [vmem:[%s4 + $0x24] sm:$0xf]
  %v877 = vld [vmem:[%s4 + $0x28] sm:$0xf]
  %v878 = vld [vmem:[%s4 + $0x2c] sm:$0xf]
  %v879 = vld [vmem:[%s4 + $0x30] sm:$0xf]
  %v880 = vld [vmem:[%s4 + $0x34] sm:$0xf]
  %v881 = vld [vmem:[%s4 + $0x38] sm:$0xf]
  %v882 = vld [vmem:[%s4 + $0x3c] sm:$0xf]
  %v883 = vld [vmem:[%s1] sm:$0xf]
  %v884 = vld [vmem:[%s5] sm:$0xf]
  %v885 = vld [vmem:[%s5 + $0x4] sm:$0xf]
  %v886 = vld [vmem:[%s5 + $0x8] sm:$0xf]
  %v887 = vld [vmem:[%s5 + $0xc] sm:$0xf]
  %v888 = vld [vmem:[%s5 + $0x10] sm:$0xf]
  %v889 = vld [vmem:[%s5 + $0x14] sm:$0xf]
  %v890 = vld [vmem:[%s5 + $0x18] sm:$0xf]
  %v891 = vld [vmem:[%s5 + $0x1c] sm:$0xf]
  %v892 = vld [vmem:[%s5 + $0x20] sm:$0xf]
  %v893 = vld [vmem:[%s5 + $0x24] sm:$0xf]
  %v894 = vld [vmem:[%s5 + $0x28] sm:$0xf]
  %v895 = vld [vmem:[%s5 + $0x2c] sm:$0xf]
  %v896 = vld [vmem:[%s5 + $0x30] sm:$0xf]
  %v897 = vld [vmem:[%s5 + $0x34] sm:$0xf]
  %v898 = vld [vmem:[%s5 + $0x38] sm:$0xf]
  %v899 = vld [vmem:[%s5 + $0x3c] sm:$0xf]
  %v916 = vunpack.c.l.b16 %v884
  %v917 = vunpack.c.l.b16 %v885
  %v918 = vunpack.c.l.b16 %v886
  %v919 = vunpack.c.l.b16 %v887
  %v920 = vunpack.c.l.b16 %v888
  %v921 = vunpack.c.l.b16 %v889
  %v922 = vunpack.c.l.b16 %v890
  %v923 = vunpack.c.l.b16 %v891
  %v924 = vunpack.c.l.b16 %v892
  %v925 = vunpack.c.l.b16 %v893
  %v926 = vunpack.c.l.b16 %v894
  %v927 = vunpack.c.l.b16 %v895
  %v928 = vunpack.c.l.b16 %v896
  %v929 = vunpack.c.l.b16 %v897
  %v930 = vunpack.c.l.b16 %v898
  %v931 = vunpack.c.l.b16 %v899
  %v932 = vpack.c.b16 %v917, %v916
  %v933 = vpack.c.b16 %v919, %v918
  %v934 = vpack.c.b16 %v921, %v920
  %v935 = vpack.c.b16 %v923, %v922
  %v936 = vpack.c.b16 %v925, %v924
  %v937 = vpack.c.b16 %v927, %v926
  %v938 = vpack.c.b16 %v929, %v928
  %v939 = vpack.c.b16 %v931, %v930
  %948 = vmatprep.subr.bf16.mxu0 0
  %949 = vmatpush1.bf16.msra.mxu0 %v932
  %950 = vmatprep.subr.bf16.mxu0 0
  %951 = vmatpush1.bf16.msra.mxu0 %v933
  %952 = vmatprep.subr.bf16.mxu0 0
  %953 = vmatpush1.bf16.msra.mxu0 %v934
  %954 = vmatprep.subr.bf16.mxu0 0
  %955 = vmatpush1.bf16.msra.mxu0 %v935
  %956 = vmatprep.subr.bf16.mxu0 0
  %957 = vmatpush1.bf16.msra.mxu0 %v936
  %958 = vmatprep.subr.bf16.mxu0 0
  %959 = vmatpush1.bf16.msra.mxu0 %v937
  %960 = vmatprep.subr.bf16.mxu0 0
  %961 = vmatpush1.bf16.msra.mxu0 %v938
  %962 = vmatprep.subr.bf16.mxu0 0
  %963 = vmatpush1.bf16.msra.mxu0 %v939
  %964 = vmatprep.subr.bf16.mxu0 0
  %965 = vmatpush1.bf16.msra.mxu0 0
  %966 = vmatprep.subr.bf16.mxu0 0
  %967 = vmatpush1.bf16.msra.mxu0 0
  %968 = vmatprep.subr.bf16.mxu0 0
  %969 = vmatpush1.bf16.msra.mxu0 0
  %970 = vmatprep.subr.bf16.mxu0 0
  %971 = vmatpush1.bf16.msra.mxu0 0
  %972 = vmatprep.subr.bf16.mxu0 0
  %973 = vmatpush1.bf16.msra.mxu0 0
  %974 = vmatprep.subr.bf16.mxu0 0
  %975 = vmatpush1.bf16.msra.mxu0 0
  %976 = vmatprep.subr.bf16.mxu0 0
  %977 = vmatpush1.bf16.msra.mxu0 0
  %978 = vmatprep.subr.bf16.mxu0 0
  %979 = vmatpush1.bf16.msra.mxu0 0
  %980 = vmatprep.mubr.bf16.mxu0 0
  %981 = vmatmul.mubr.bf16.gmra.mrb[0].mxu0 %v883
  %v982 = vpop.f32.mrb[0].mxu0
  %v983 = vadd.f32 0.0, %v982
  %v984 = vpop.f32.mrb[0].mxu0
  %v985 = vpop.f32.mrb[0].mxu0
  %v986 = vpop.f32.mrb[0].mxu0
  %987 = vdwg.mxu0
  %v1004 = vunpack.c.l.b16 %v867
  %v1005 = vunpack.c.l.b16 %v868
  %v1006 = vunpack.c.l.b16 %v869
  %v1007 = vunpack.c.l.b16 %v870
  %v1008 = vunpack.c.l.b16 %v871
  %v1009 = vunpack.c.l.b16 %v872
  %v1010 = vunpack.c.l.b16 %v873
  %v1011 = vunpack.c.l.b16 %v874
  %v1012 = vunpack.c.l.b16 %v875
  %v1013 = vunpack.c.l.b16 %v876
  %v1014 = vunpack.c.l.b16 %v877
  %v1015 = vunpack.c.l.b16 %v878
  %v1016 = vunpack.c.l.b16 %v879
  %v1017 = vunpack.c.l.b16 %v880
  %v1018 = vunpack.c.l.b16 %v881
  %v1019 = vunpack.c.l.b16 %v882
  %v1020 = vpack.c.b16 %v1005, %v1004
  %v1021 = vpack.c.b16 %v1007, %v1006
  %v1022 = vpack.c.b16 %v1009, %v1008
  %v1023 = vpack.c.b16 %v1011, %v1010
  %v1024 = vpack.c.b16 %v1013, %v1012
  %v1025 = vpack.c.b16 %v1015, %v1014
  %v1026 = vpack.c.b16 %v1017, %v1016
  %v1027 = vpack.c.b16 %v1019, %v1018
  %1036 = vmatprep.subr.bf16.mxu0 0
  %1037 = vmatpush1.bf16.msra.mxu0 %v1020
  %1038 = vmatprep.subr.bf16.mxu0 0
  %1039 = vmatpush1.bf16.msra.mxu0 %v1021
  %1040 = vmatprep.subr.bf16.mxu0 0
  %1041 = vmatpush1.bf16.msra.mxu0 %v1022
  %1042 = vmatprep.subr.bf16.mxu0 0
  %1043 = vmatpush1.bf16.msra.mxu0 %v1023
  %1044 = vmatprep.subr.bf16.mxu0 0
  %1045 = vmatpush1.bf16.msra.mxu0 %v1024
  %1046 = vmatprep.subr.bf16.mxu0 0
  %1047 = vmatpush1.bf16.msra.mxu0 %v1025
  %1048 = vmatprep.subr.bf16.mxu0 0
  %1049 = vmatpush1.bf16.msra.mxu0 %v1026
  %1050 = vmatprep.subr.bf16.mxu0 0
  %1051 = vmatpush1.bf16.msra.mxu0 %v1027
  %1052 = vmatprep.subr.bf16.mxu0 0
  %1053 = vmatpush1.bf16.msra.mxu0 0
  %1054 = vmatprep.subr.bf16.mxu0 0
  %1055 = vmatpush1.bf16.msra.mxu0 0
  %1056 = vmatprep.subr.bf16.mxu0 0
  %1057 = vmatpush1.bf16.msra.mxu0 0
  %1058 = vmatprep.subr.bf16.mxu0 0
  %1059 = vmatpush1.bf16.msra.mxu0 0
  %1060 = vmatprep.subr.bf16.mxu0 0
  %1061 = vmatpush1.bf16.msra.mxu0 0
  %1062 = vmatprep.subr.bf16.mxu0 0
  %1063 = vmatpush1.bf16.msra.mxu0 0
  %1064 = vmatprep.subr.bf16.mxu0 0
  %1065 = vmatpush1.bf16.msra.mxu0 0
  %1066 = vmatprep.subr.bf16.mxu0 0
  %1067 = vmatpush1.bf16.msra.mxu0 0
  %1068 = vmatprep.mubr.bf16.mxu0 0
  %1069 = vmatmul.mubr.bf16.gmra.mrb[0].mxu0 %v866
  %v1070 = vpop.f32.mrb[0].mxu0
  %v1071 = vadd.f32 %v983, %v1070
  %v1072 = vpop.f32.mrb[0].mxu0
  %v1073 = vpop.f32.mrb[0].mxu0
  %v1074 = vpop.f32.mrb[0].mxu0
  %1075 = vdwg.mxu0
  %v1076 = vld [vmem:[%s6] sm:$0x1]
  %v1078 = vlaneseq
  %v1079 = vshrl.u32 %v1078, 7
  %v1080 = vsub.s32 0, %v1079
  %v1081 = vrot.slane %v1076, %v1080
  %v1083 = vadd.f32 %v1071, %v1081
  %v1084 = vpack.c.bf16 %v1083, %v1083
  %1085 = vst [vmem:[%s7] sm:$0xf] %v1084
  // Predicated region
  $region30: #{msdiscriminator_forward.18} parent=0 // pred_check
    _
  $region31: #{msdiscriminator_forward.18} parent=0 // pred_check_branch
    %1087 = sbr.rel (0) target = $region33
  $region32: #{msdiscriminator_forward.18} parent=0 // pred_region
    _
  $region33: #{msdiscriminator_forward.18} parent=0 // pred_fallthru
    _
  // Predicated region
  $region34: #{msdiscriminator_forward.18} parent=0 // pred_check
    _
  $region35: #{msdiscriminator_forward.18} parent=0 // pred_check_branch
    %1089 = sbr.rel (0) target = $region37
  $region36: #{msdiscriminator_forward.18} parent=0 // pred_region
    _
  $region37: #{msdiscriminator_forward.18} parent=0 // pred_fallthru
    _

// kernel: msdiscriminator_forward.20
$region0: #{msdiscriminator_forward.20}
  #allocation0 [shape = 'u32[]', space=smem, size = 0x4, offset = 0x4, fixed_abs, tag = 'smem constant byte address 0x4 - core index']
  #allocation1 [shape = 'u32[144,128]{1,0:T(1,128)}', space=vmem, size = 0x12000, scoped, tag = 'internal scratch']
  #allocation2 [shape = 'f32[1,1]{1,0:T(1,128)S(1)}', space=vmem, size = 0x200, scoped, tag = 'scoped memory for msdiscriminator_forward.20']
  %s0 = inlined_call_operand.vmem [shape: bf16[2,128], index: 0, kind: input, shape index: {}]
  %s1 = inlined_call_operand.vmem [shape: bf16[128,128], index: 1, kind: input, shape index: {}]
  %s2 = inlined_call_operand.vmem [shape: f32[1,128], index: 2, kind: input, shape index: {}]
  %s3 = inlined_call_operand.vmem [shape: bf16[128,128], index: 3, kind: input, shape index: {}]
  %s4 = inlined_call_operand.vmem [shape: bf16[128,128], index: 4, kind: input, shape index: {}]
  %s5 = inlined_call_operand.vmem [shape: f32[1,128], index: 5, kind: input, shape index: {}]
  %s6 = inlined_call_operand.vmem [shape: bf16[128,128], index: 6, kind: input, shape index: {}]
  %s7 = inlined_call_operand.vmem [shape: f32[1,128], index: 7, kind: input, shape index: {}]
  %s8 = inlined_call_operand.vmem [shape: bf16[128,128], index: 8, kind: input, shape index: {}]
  %s9 = inlined_call_operand.vmem [shape: bf16[128,128], index: 9, kind: input, shape index: {}]
  %s10 = inlined_call_operand.vmem [shape: f32[1,128], index: 10, kind: input, shape index: {}]
  %s11 = inlined_call_operand.vmem [shape: bf16[128,128], index: 11, kind: input, shape index: {}]
  %s12 = inlined_call_operand.hbm [shape: f32[1,128], index: 12, kind: input, shape index: {}]
  %s13 = inlined_call_operand.vmem [shape: bf16[128,256], index: 13, kind: input, shape index: {}]
  %s14 = inlined_call_operand.vmem [shape: bf16[128,256], index: 14, kind: input, shape index: {}]
  %s15 = inlined_call_operand.vmem [shape: f32[1,256], index: 15, kind: input, shape index: {}]
  %s16 = inlined_call_operand.vmem [shape: bf16[256,256], index: 16, kind: input, shape index: {}]
  %s17 = inlined_call_operand.vmem [shape: f32[1,256], index: 17, kind: input, shape index: {}]
  %s18 = inlined_call_operand.vmem [shape: bf16[256,256], index: 18, kind: input, shape index: {}]
  %s19 = inlined_call_operand.vmem [shape: bf16[256,256], index: 19, kind: input, shape index: {}]
  %s20 = inlined_call_operand.vmem [shape: f32[1,256], index: 20, kind: input, shape index: {}]
  %s21 = inlined_call_operand.vmem [shape: f32[1,256], index: 21, kind: input, shape index: {}]
  %s22 = inlined_call_operand.<no memory space> [shape: f32[1,1], index: 22, kind: input, shape index: {}]
  %s23 = inlined_call_operand.vmem [shape: f32[8,128], index: 23, kind: output, shape index: {}]
  %s24 = sld [smem:[#allocation0]]
  $region106: #{msdiscriminator_forward.20} parent=0
    _
  %s26 = ssub.s32 1, %s24
  %s27 = scalar_select 0, %s26, %s24
  %v28 = vstv %s22
  %29 = vst [vmem:[#allocation2] sm:$0x1] %v28
  $region1: #{msdiscriminator_forward.20} parent=0
    #allocation3 [shape = 'u8[512]{0}', space=vmem, size = 0x400, scoped, tag = 'input window, operand 12, single buffered']
    #allocation4 [shape = 's32[1]{0}', space=sflag, size = 0x4, scoped, tag = 'scoped memory for msdiscriminator_forward.20']
    %30 = vsyncpa [#allocation4], 0
    // Predicated region
    $region2: #{msdiscriminator_forward.20} parent=1 // pred_check
      _
    $region3: #{msdiscriminator_forward.20} parent=1 // pred_check_branch
      %32 = sbr.rel (0) target = $region5
    $region4: #{msdiscriminator_forward.20} parent=1 // pred_region
      _
    $region5: #{msdiscriminator_forward.20} parent=1 // pred_fallthru
      _
    // Predicated region
    $region6: #{msdiscriminator_forward.20} parent=1 // pred_check
      _
    $region7: #{msdiscriminator_forward.20} parent=1 // pred_check_branch
      %34 = sbr.rel (0) target = $region9
    $region8: #{msdiscriminator_forward.20} parent=1 // pred_region
      _
    $region9: #{msdiscriminator_forward.20} parent=1 // pred_fallthru
      _
    // Predicated region
    $region10: #{msdiscriminator_forward.20} parent=1 // pred_check
      _
    $region11: #{msdiscriminator_forward.20} parent=1 // pred_check_branch
      %36 = sbr.rel (0) target = $region13
    $region12: #{msdiscriminator_forward.20} parent=1 // pred_region
      _
    $region13: #{msdiscriminator_forward.20} parent=1 // pred_fallthru
      _
    // Predicated region
    $region14: #{msdiscriminator_forward.20} parent=1 // pred_check
      _
    $region15: #{msdiscriminator_forward.20} parent=1 // pred_check_branch
      %38 = sbr.rel (0) target = $region17
    $region16: #{msdiscriminator_forward.20} parent=1 // pred_region
      _
    $region17: #{msdiscriminator_forward.20} parent=1 // pred_fallthru
      _
    // Predicated region
    $region18: #{msdiscriminator_forward.20} parent=1 // pred_check
      _
    $region19: #{msdiscriminator_forward.20} parent=1 // pred_check_branch
      %40 = sbr.rel (0) target = $region21
    $region20: #{msdiscriminator_forward.20} parent=1 // pred_region
      _
    $region21: #{msdiscriminator_forward.20} parent=1 // pred_fallthru
      _
    // Predicated region
    $region22: #{msdiscriminator_forward.20} parent=1 // pred_check
      _
    $region23: #{msdiscriminator_forward.20} parent=1 // pred_check_branch
      %42 = sbr.rel (0) target = $region25
    $region24: #{msdiscriminator_forward.20} parent=1 // pred_region
      _
    $region25: #{msdiscriminator_forward.20} parent=1 // pred_fallthru
      _
    // Predicated region
    $region26: #{msdiscriminator_forward.20} parent=1 // pred_check
      _
    $region27: #{msdiscriminator_forward.20} parent=1 // pred_check_branch
      %44 = sbr.rel (0) target = $region29
    $region28: #{msdiscriminator_forward.20} parent=1 // pred_region
      _
    $region29: #{msdiscriminator_forward.20} parent=1 // pred_fallthru
      _
    // Predicated region
    $region30: #{msdiscriminator_forward.20} parent=1 // pred_check
      _
    $region31: #{msdiscriminator_forward.20} parent=1 // pred_check_branch
      %46 = sbr.rel (0) target = $region33
    $region32: #{msdiscriminator_forward.20} parent=1 // pred_region
      _
    $region33: #{msdiscriminator_forward.20} parent=1 // pred_fallthru
      _
    // Predicated region
    $region34: #{msdiscriminator_forward.20} parent=1 // pred_check
      _
    $region35: #{msdiscriminator_forward.20} parent=1 // pred_check_branch
      %48 = sbr.rel (0) target = $region37
    $region36: #{msdiscriminator_forward.20} parent=1 // pred_region
      _
    $region37: #{msdiscriminator_forward.20} parent=1 // pred_fallthru
      _
    // Predicated region
    $region38: #{msdiscriminator_forward.20} parent=1 // pred_check
      _
    $region39: #{msdiscriminator_forward.20} parent=1 // pred_check_branch
      %50 = sbr.rel (0) target = $region41
    $region40: #{msdiscriminator_forward.20} parent=1 // pred_region
      _
    $region41: #{msdiscriminator_forward.20} parent=1 // pred_fallthru
      _
    // Predicated region
    $region42: #{msdiscriminator_forward.20} parent=1 // pred_check
      _
    $region43: #{msdiscriminator_forward.20} parent=1 // pred_check_branch
      %52 = sbr.rel (0) target = $region45
    $region44: #{msdiscriminator_forward.20} parent=1 // pred_region
      _
    $region45: #{msdiscriminator_forward.20} parent=1 // pred_fallthru
      _
    // Predicated region
    $region46: #{msdiscriminator_forward.20} parent=1 // pred_check
      _
    $region47: #{msdiscriminator_forward.20} parent=1 // pred_check_branch
      %54 = sbr.rel (0) target = $region49
    $region48: #{msdiscriminator_forward.20} parent=1 // pred_region
      _
    $region49: #{msdiscriminator_forward.20} parent=1 // pred_fallthru
      _
    // Predicated region
    $region50: #{msdiscriminator_forward.20} parent=1 // pred_check
      _
    $region51: #{msdiscriminator_forward.20} parent=1 // pred_check_branch
      %56 = sbr.rel (0) target = $region53
    $region52: #{msdiscriminator_forward.20} parent=1 // pred_region
      %s58 = ssub.s32 16, 16
      %59 = vsyncadd [#allocation4], %s58
      %s61 = sshll.u32 [#allocation3], 4
      %s62 = int_to_ptr.vmem [resolvable:$true] %s61
      %64 = dma.hbm_to_vmem [thread:$0]  %s12, 16, %s62, [#allocation4]
    $region53: #{msdiscriminator_forward.20} parent=1 // pred_fallthru
      _
    // Predicated region
    $region54: #{msdiscriminator_forward.20} parent=1 // pred_check
      _
    $region55: #{msdiscriminator_forward.20} parent=1 // pred_check_branch
      %66 = sbr.rel (0) target = $region57
    $region56: #{msdiscriminator_forward.20} parent=1 // pred_region
      _
    $region57: #{msdiscriminator_forward.20} parent=1 // pred_fallthru
      _
    // Predicated region
    $region58: #{msdiscriminator_forward.20} parent=1 // pred_check
      _
    $region59: #{msdiscriminator_forward.20} parent=1 // pred_check_branch
      %68 = sbr.rel (0) target = $region61
    $region60: #{msdiscriminator_forward.20} parent=1 // pred_region
      _
    $region61: #{msdiscriminator_forward.20} parent=1 // pred_fallthru
      _
    // Predicated region
    $region62: #{msdiscriminator_forward.20} parent=1 // pred_check
      _
    $region63: #{msdiscriminator_forward.20} parent=1 // pred_check_branch
      %70 = sbr.rel (0) target = $region65
    $region64: #{msdiscriminator_forward.20} parent=1 // pred_region
      _
    $region65: #{msdiscriminator_forward.20} parent=1 // pred_fallthru
      _
    // Predicated region
    $region66: #{msdiscriminator_forward.20} parent=1 // pred_check
      _
    $region67: #{msdiscriminator_forward.20} parent=1 // pred_check_branch
      %72 = sbr.rel (0) target = $region69
    $region68: #{msdiscriminator_forward.20} parent=1 // pred_region
      _
    $region69: #{msdiscriminator_forward.20} parent=1 // pred_fallthru
      _
    // Predicated region
    $region70: #{msdiscriminator_forward.20} parent=1 // pred_check
      _
    $region71: #{msdiscriminator_forward.20} parent=1 // pred_check_branch
      %74 = sbr.rel (0) target = $region73
    $region72: #{msdiscriminator_forward.20} parent=1 // pred_region
      _
    $region73: #{msdiscriminator_forward.20} parent=1 // pred_fallthru
      _
    // Predicated region
    $region74: #{msdiscriminator_forward.20} parent=1 // pred_check
      _
    $region75: #{msdiscriminator_forward.20} parent=1 // pred_check_branch
      %76 = sbr.rel (0) target = $region77
    $region76: #{msdiscriminator_forward.20} parent=1 // pred_region
      _
    $region77: #{msdiscriminator_forward.20} parent=1 // pred_fallthru
      _
    // Predicated region
    $region78: #{msdiscriminator_forward.20} parent=1 // pred_check
      _
    $region79: #{msdiscriminator_forward.20} parent=1 // pred_check_branch
      %78 = sbr.rel (0) target = $region81
    $region80: #{msdiscriminator_forward.20} parent=1 // pred_region
      _
    $region81: #{msdiscriminator_forward.20} parent=1 // pred_fallthru
      _
    // Predicated region
    $region82: #{msdiscriminator_forward.20} parent=1 // pred_check
      _
    $region83: #{msdiscriminator_forward.20} parent=1 // pred_check_branch
      %80 = sbr.rel (0) target = $region85
    $region84: #{msdiscriminator_forward.20} parent=1 // pred_region
      _
    $region85: #{msdiscriminator_forward.20} parent=1 // pred_fallthru
      _
    // Predicated region
    $region86: #{msdiscriminator_forward.20} parent=1 // pred_check
      _
    $region87: #{msdiscriminator_forward.20} parent=1 // pred_check_branch
      %82 = sbr.rel (0) target = $region89
    $region88: #{msdiscriminator_forward.20} parent=1 // pred_region
      _
    $region89: #{msdiscriminator_forward.20} parent=1 // pred_fallthru
      _
    // Predicated region
    $region90: #{msdiscriminator_forward.20} parent=1 // pred_check
      _
    $region91: #{msdiscriminator_forward.20} parent=1 // pred_check_branch
      %84 = sbr.rel (0) target = $region93
    $region92: #{msdiscriminator_forward.20} parent=1 // pred_region
      _
    $region93: #{msdiscriminator_forward.20} parent=1 // pred_fallthru
      _
    // Predicated region
    $region94: #{msdiscriminator_forward.20} parent=1 // pred_check
      _
    $region95: #{msdiscriminator_forward.20} parent=1 // pred_check_branch
      %86 = sbr.rel (0) target = $region97
    $region96: #{msdiscriminator_forward.20} parent=1 // pred_region
      %87 = dma.done [#allocation4], 16
    $region97: #{msdiscriminator_forward.20} parent=1 // pred_fallthru
      _
    %v90 = vld [vmem:[%s0] sm:$0x1]
    %vm91 = vcmp.gt.bf16.partialorder %v90, 0
    %v92 = vmul.bf16 %v90, 1009007652
    %v93 = vsel %vm91, %v90, %v92
    %v94 = vld [vmem:[%s1] sm:$0xf]
    %v95 = vld [vmem:[%s1 + $0x4] sm:$0xf]
    %v96 = vld [vmem:[%s1 + $0x8] sm:$0xf]
    %v97 = vld [vmem:[%s1 + $0xc] sm:$0xf]
    %v98 = vld [vmem:[%s1 + $0x10] sm:$0xf]
    %v99 = vld [vmem:[%s1 + $0x14] sm:$0xf]
    %v100 = vld [vmem:[%s1 + $0x18] sm:$0xf]
    %v101 = vld [vmem:[%s1 + $0x1c] sm:$0xf]
    %v102 = vld [vmem:[%s1 + $0x20] sm:$0xf]
    %v103 = vld [vmem:[%s1 + $0x24] sm:$0xf]
    %v104 = vld [vmem:[%s1 + $0x28] sm:$0xf]
    %v105 = vld [vmem:[%s1 + $0x2c] sm:$0xf]
    %v106 = vld [vmem:[%s1 + $0x30] sm:$0xf]
    %v107 = vld [vmem:[%s1 + $0x34] sm:$0xf]
    %v108 = vld [vmem:[%s1 + $0x38] sm:$0xf]
    %v109 = vld [vmem:[%s1 + $0x3c] sm:$0xf]
    %v110 = vld [vmem:[%s2] sm:$0x1]
    %v112 = vlaneseq
    %v113 = vshrl.u32 %v112, 7
    %v114 = vsub.s32 0, %v113
    %v115 = vrot.slane %v110, %v114
    %v133 = vunpack.c.l.b16 %v94
    %v134 = vunpack.c.l.b16 %v95
    %v135 = vunpack.c.l.b16 %v96
    %v136 = vunpack.c.l.b16 %v97
    %v137 = vunpack.c.l.b16 %v98
    %v138 = vunpack.c.l.b16 %v99
    %v139 = vunpack.c.l.b16 %v100
    %v140 = vunpack.c.l.b16 %v101
    %v141 = vunpack.c.l.b16 %v102
    %v142 = vunpack.c.l.b16 %v103
    %v143 = vunpack.c.l.b16 %v104
    %v144 = vunpack.c.l.b16 %v105
    %v145 = vunpack.c.l.b16 %v106
    %v146 = vunpack.c.l.b16 %v107
    %v147 = vunpack.c.l.b16 %v108
    %v148 = vunpack.c.l.b16 %v109
    %v149 = vpack.c.b16 %v134, %v133
    %v150 = vpack.c.b16 %v136, %v135
    %v151 = vpack.c.b16 %v138, %v137
    %v152 = vpack.c.b16 %v140, %v139
    %v153 = vpack.c.b16 %v142, %v141
    %v154 = vpack.c.b16 %v144, %v143
    %v155 = vpack.c.b16 %v146, %v145
    %v156 = vpack.c.b16 %v148, %v147
    %165 = vmatprep.subr.bf16.mxu0 0
    %166 = vmatpush1.bf16.msra.mxu0 %v149
    %167 = vmatprep.subr.bf16.mxu0 0
    %168 = vmatpush1.bf16.msra.mxu0 %v150
    %169 = vmatprep.subr.bf16.mxu0 0
    %170 = vmatpush1.bf16.msra.mxu0 %v151
    %171 = vmatprep.subr.bf16.mxu0 0
    %172 = vmatpush1.bf16.msra.mxu0 %v152
    %173 = vmatprep.subr.bf16.mxu0 0
    %174 = vmatpush1.bf16.msra.mxu0 %v153
    %175 = vmatprep.subr.bf16.mxu0 0
    %176 = vmatpush1.bf16.msra.mxu0 %v154
    %177 = vmatprep.subr.bf16.mxu0 0
    %178 = vmatpush1.bf16.msra.mxu0 %v155
    %179 = vmatprep.subr.bf16.mxu0 0
    %180 = vmatpush1.bf16.msra.mxu0 %v156
    %181 = vmatprep.subr.bf16.mxu0 0
    %182 = vmatpush1.bf16.msra.mxu0 0
    %183 = vmatprep.subr.bf16.mxu0 0
    %184 = vmatpush1.bf16.msra.mxu0 0
    %185 = vmatprep.subr.bf16.mxu0 0
    %186 = vmatpush1.bf16.msra.mxu0 0
    %187 = vmatprep.subr.bf16.mxu0 0
    %188 = vmatpush1.bf16.msra.mxu0 0
    %189 = vmatprep.subr.bf16.mxu0 0
    %190 = vmatpush1.bf16.msra.mxu0 0
    %191 = vmatprep.subr.bf16.mxu0 0
    %192 = vmatpush1.bf16.msra.mxu0 0
    %193 = vmatprep.subr.bf16.mxu0 0
    %194 = vmatpush1.bf16.msra.mxu0 0
    %195 = vmatprep.subr.bf16.mxu0 0
    %196 = vmatpush1.bf16.msra.mxu0 0
    %197 = vmatprep.mubr.bf16.mxu0 0
    %198 = vmatmul.mubr.bf16.gmra.mrb[0].mxu0 %v93
    %v199 = vpop.f32.mrb[0].mxu0
    %v200 = vadd.f32 %v115, %v199
    %v201 = vpop.f32.mrb[0].mxu0
    %v202 = vpop.f32.mrb[0].mxu0
    %v203 = vpop.f32.mrb[0].mxu0
    %204 = vdwg.mxu0
    %vm205 = vcmp.gt.f32.partialorder %v200, 0.0
    %v206 = vmul.f32 %v200, 0.01
    %v207 = vsel %vm205, %v200, %v206
    %v208 = vpack.c.bf16 %v207, %v207
    %v209 = vld [vmem:[%s3] sm:$0xf]
    %v210 = vld [vmem:[%s3 + $0x4] sm:$0xf]
    %v211 = vld [vmem:[%s3 + $0x8] sm:$0xf]
    %v212 = vld [vmem:[%s3 + $0xc] sm:$0xf]
    %v213 = vld [vmem:[%s3 + $0x10] sm:$0xf]
    %v214 = vld [vmem:[%s3 + $0x14] sm:$0xf]
    %v215 = vld [vmem:[%s3 + $0x18] sm:$0xf]
    %v216 = vld [vmem:[%s3 + $0x1c] sm:$0xf]
    %v217 = vld [vmem:[%s3 + $0x20] sm:$0xf]
    %v218 = vld [vmem:[%s3 + $0x24] sm:$0xf]
    %v219 = vld [vmem:[%s3 + $0x28] sm:$0xf]
    %v220 = vld [vmem:[%s3 + $0x2c] sm:$0xf]
    %v221 = vld [vmem:[%s3 + $0x30] sm:$0xf]
    %v222 = vld [vmem:[%s3 + $0x34] sm:$0xf]
    %v223 = vld [vmem:[%s3 + $0x38] sm:$0xf]
    %v224 = vld [vmem:[%s3 + $0x3c] sm:$0xf]
    %v225 = vld [vmem:[%s4] sm:$0xf]
    %v226 = vld [vmem:[%s4 + $0x4] sm:$0xf]
    %v227 = vld [vmem:[%s4 + $0x8] sm:$0xf]
    %v228 = vld [vmem:[%s4 + $0xc] sm:$0xf]
    %v229 = vld [vmem:[%s4 + $0x10] sm:$0xf]
    %v230 = vld [vmem:[%s4 + $0x14] sm:$0xf]
    %v231 = vld [vmem:[%s4 + $0x18] sm:$0xf]
    %v232 = vld [vmem:[%s4 + $0x1c] sm:$0xf]
    %v233 = vld [vmem:[%s4 + $0x20] sm:$0xf]
    %v234 = vld [vmem:[%s4 + $0x24] sm:$0xf]
    %v235 = vld [vmem:[%s4 + $0x28] sm:$0xf]
    %v236 = vld [vmem:[%s4 + $0x2c] sm:$0xf]
    %v237 = vld [vmem:[%s4 + $0x30] sm:$0xf]
    %v238 = vld [vmem:[%s4 + $0x34] sm:$0xf]
    %v239 = vld [vmem:[%s4 + $0x38] sm:$0xf]
    %v240 = vld [vmem:[%s4 + $0x3c] sm:$0xf]
    %v257 = vunpack.c.l.b16 %v225
    %v258 = vunpack.c.l.b16 %v226
    %v259 = vunpack.c.l.b16 %v227
    %v260 = vunpack.c.l.b16 %v228
    %v261 = vunpack.c.l.b16 %v229
    %v262 = vunpack.c.l.b16 %v230
    %v263 = vunpack.c.l.b16 %v231
    %v264 = vunpack.c.l.b16 %v232
    %v265 = vunpack.c.l.b16 %v233
    %v266 = vunpack.c.l.b16 %v234
    %v267 = vunpack.c.l.b16 %v235
    %v268 = vunpack.c.l.b16 %v236
    %v269 = vunpack.c.l.b16 %v237
    %v270 = vunpack.c.l.b16 %v238
    %v271 = vunpack.c.l.b16 %v239
    %v272 = vunpack.c.l.b16 %v240
    %v273 = vpack.c.b16 %v258, %v257
    %v274 = vpack.c.b16 %v260, %v259
    %v275 = vpack.c.b16 %v262, %v261
    %v276 = vpack.c.b16 %v264, %v263
    %v277 = vpack.c.b16 %v266, %v265
    %v278 = vpack.c.b16 %v268, %v267
    %v279 = vpack.c.b16 %v270, %v269
    %v280 = vpack.c.b16 %v272, %v271
    %289 = vmatprep.subr.bf16.mxu0 0
    %290 = vmatpush1.bf16.msra.mxu0 %v273
    %291 = vmatprep.subr.bf16.mxu0 0
    %292 = vmatpush1.bf16.msra.mxu0 %v274
    %293 = vmatprep.subr.bf16.mxu0 0
    %294 = vmatpush1.bf16.msra.mxu0 %v275
    %295 = vmatprep.subr.bf16.mxu0 0
    %296 = vmatpush1.bf16.msra.mxu0 %v276
    %297 = vmatprep.subr.bf16.mxu0 0
    %298 = vmatpush1.bf16.msra.mxu0 %v277
    %299 = vmatprep.subr.bf16.mxu0 0
    %300 = vmatpush1.bf16.msra.mxu0 %v278
    %301 = vmatprep.subr.bf16.mxu0 0
    %302 = vmatpush1.bf16.msra.mxu0 %v279
    %303 = vmatprep.subr.bf16.mxu0 0
    %304 = vmatpush1.bf16.msra.mxu0 %v280
    %305 = vmatprep.subr.bf16.mxu0 0
    %306 = vmatpush1.bf16.msra.mxu0 0
    %307 = vmatprep.subr.bf16.mxu0 0
    %308 = vmatpush1.bf16.msra.mxu0 0
    %309 = vmatprep.subr.bf16.mxu0 0
    %310 = vmatpush1.bf16.msra.mxu0 0
    %311 = vmatprep.subr.bf16.mxu0 0
    %312 = vmatpush1.bf16.msra.mxu0 0
    %313 = vmatprep.subr.bf16.mxu0 0
    %314 = vmatpush1.bf16.msra.mxu0 0
    %315 = vmatprep.subr.bf16.mxu0 0
    %316 = vmatpush1.bf16.msra.mxu0 0
    %317 = vmatprep.subr.bf16.mxu0 0
    %318 = vmatpush1.bf16.msra.mxu0 0
    %319 = vmatprep.subr.bf16.mxu0 0
    %320 = vmatpush1.bf16.msra.mxu0 0
    %321 = vmatprep.mubr.bf16.mxu0 0
    %322 = vmatmul.mubr.bf16.gmra.mrb[0].mxu0 %v90
    %v323 = vpop.f32.mrb[0].mxu0
    %v324 = vadd.f32 0.0, %v323
    %v325 = vpop.f32.mrb[0].mxu0
    %v326 = vpop.f32.mrb[0].mxu0
    %v327 = vpop.f32.mrb[0].mxu0
    %328 = vdwg.mxu0
    %v345 = vunpack.c.l.b16 %v209
    %v346 = vunpack.c.l.b16 %v210
    %v347 = vunpack.c.l.b16 %v211
    %v348 = vunpack.c.l.b16 %v212
    %v349 = vunpack.c.l.b16 %v213
    %v350 = vunpack.c.l.b16 %v214
    %v351 = vunpack.c.l.b16 %v215
    %v352 = vunpack.c.l.b16 %v216
    %v353 = vunpack.c.l.b16 %v217
    %v354 = vunpack.c.l.b16 %v218
    %v355 = vunpack.c.l.b16 %v219
    %v356 = vunpack.c.l.b16 %v220
    %v357 = vunpack.c.l.b16 %v221
    %v358 = vunpack.c.l.b16 %v222
    %v359 = vunpack.c.l.b16 %v223
    %v360 = vunpack.c.l.b16 %v224
    %v361 = vpack.c.b16 %v346, %v345
    %v362 = vpack.c.b16 %v348, %v347
    %v363 = vpack.c.b16 %v350, %v349
    %v364 = vpack.c.b16 %v352, %v351
    %v365 = vpack.c.b16 %v354, %v353
    %v366 = vpack.c.b16 %v356, %v355
    %v367 = vpack.c.b16 %v358, %v357
    %v368 = vpack.c.b16 %v360, %v359
    %377 = vmatprep.subr.bf16.mxu0 0
    %378 = vmatpush1.bf16.msra.mxu0 %v361
    %379 = vmatprep.subr.bf16.mxu0 0
    %380 = vmatpush1.bf16.msra.mxu0 %v362
    %381 = vmatprep.subr.bf16.mxu0 0
    %382 = vmatpush1.bf16.msra.mxu0 %v363
    %383 = vmatprep.subr.bf16.mxu0 0
    %384 = vmatpush1.bf16.msra.mxu0 %v364
    %385 = vmatprep.subr.bf16.mxu0 0
    %386 = vmatpush1.bf16.msra.mxu0 %v365
    %387 = vmatprep.subr.bf16.mxu0 0
    %388 = vmatpush1.bf16.msra.mxu0 %v366
    %389 = vmatprep.subr.bf16.mxu0 0
    %390 = vmatpush1.bf16.msra.mxu0 %v367
    %391 = vmatprep.subr.bf16.mxu0 0
    %392 = vmatpush1.bf16.msra.mxu0 %v368
    %393 = vmatprep.subr.bf16.mxu0 0
    %394 = vmatpush1.bf16.msra.mxu0 0
    %395 = vmatprep.subr.bf16.mxu0 0
    %396 = vmatpush1.bf16.msra.mxu0 0
    %397 = vmatprep.subr.bf16.mxu0 0
    %398 = vmatpush1.bf16.msra.mxu0 0
    %399 = vmatprep.subr.bf16.mxu0 0
    %400 = vmatpush1.bf16.msra.mxu0 0
    %401 = vmatprep.subr.bf16.mxu0 0
    %402 = vmatpush1.bf16.msra.mxu0 0
    %403 = vmatprep.subr.bf16.mxu0 0
    %404 = vmatpush1.bf16.msra.mxu0 0
    %405 = vmatprep.subr.bf16.mxu0 0
    %406 = vmatpush1.bf16.msra.mxu0 0
    %407 = vmatprep.subr.bf16.mxu0 0
    %408 = vmatpush1.bf16.msra.mxu0 0
    %409 = vmatprep.mubr.bf16.mxu0 0
    %410 = vmatmul.mubr.bf16.gmra.mrb[0].mxu0 %v208
    %v411 = vpop.f32.mrb[0].mxu0
    %v412 = vadd.f32 %v324, %v411
    %v413 = vpop.f32.mrb[0].mxu0
    %v414 = vpop.f32.mrb[0].mxu0
    %v415 = vpop.f32.mrb[0].mxu0
    %416 = vdwg.mxu0
    %v417 = vld [vmem:[%s5] sm:$0x1]
    %v419 = vlaneseq
    %v420 = vshrl.u32 %v419, 7
    %v421 = vsub.s32 0, %v420
    %v422 = vrot.slane %v417, %v421
    %v424 = vadd.f32 %v412, %v422
    %v425 = vpack.c.bf16 %v424, %v424
    %vm426 = vcmp.gt.bf16.partialorder %v425, 0
    %v427 = vmul.bf16 %v425, 1009007652
    %v428 = vsel %vm426, %v425, %v427
    %v429 = vld [vmem:[%s6] sm:$0xf]
    %v430 = vld [vmem:[%s6 + $0x4] sm:$0xf]
    %v431 = vld [vmem:[%s6 + $0x8] sm:$0xf]
    %v432 = vld [vmem:[%s6 + $0xc] sm:$0xf]
    %v433 = vld [vmem:[%s6 + $0x10] sm:$0xf]
    %v434 = vld [vmem:[%s6 + $0x14] sm:$0xf]
    %v435 = vld [vmem:[%s6 + $0x18] sm:$0xf]
    %v436 = vld [vmem:[%s6 + $0x1c] sm:$0xf]
    %v437 = vld [vmem:[%s6 + $0x20] sm:$0xf]
    %v438 = vld [vmem:[%s6 + $0x24] sm:$0xf]
    %v439 = vld [vmem:[%s6 + $0x28] sm:$0xf]
    %v440 = vld [vmem:[%s6 + $0x2c] sm:$0xf]
    %v441 = vld [vmem:[%s6 + $0x30] sm:$0xf]
    %v442 = vld [vmem:[%s6 + $0x34] sm:$0xf]
    %v443 = vld [vmem:[%s6 + $0x38] sm:$0xf]
    %v444 = vld [vmem:[%s6 + $0x3c] sm:$0xf]
    %v445 = vld [vmem:[%s7] sm:$0x1]
    %v447 = vlaneseq
    %v448 = vshrl.u32 %v447, 7
    %v449 = vsub.s32 0, %v448
    %v450 = vrot.slane %v445, %v449
    %v468 = vunpack.c.l.b16 %v429
    %v469 = vunpack.c.l.b16 %v430
    %v470 = vunpack.c.l.b16 %v431
    %v471 = vunpack.c.l.b16 %v432
    %v472 = vunpack.c.l.b16 %v433
    %v473 = vunpack.c.l.b16 %v434
    %v474 = vunpack.c.l.b16 %v435
    %v475 = vunpack.c.l.b16 %v436
    %v476 = vunpack.c.l.b16 %v437
    %v477 = vunpack.c.l.b16 %v438
    %v478 = vunpack.c.l.b16 %v439
    %v479 = vunpack.c.l.b16 %v440
    %v480 = vunpack.c.l.b16 %v441
    %v481 = vunpack.c.l.b16 %v442
    %v482 = vunpack.c.l.b16 %v443
    %v483 = vunpack.c.l.b16 %v444
    %v484 = vpack.c.b16 %v469, %v468
    %v485 = vpack.c.b16 %v471, %v470
    %v486 = vpack.c.b16 %v473, %v472
    %v487 = vpack.c.b16 %v475, %v474
    %v488 = vpack.c.b16 %v477, %v476
    %v489 = vpack.c.b16 %v479, %v478
    %v490 = vpack.c.b16 %v481, %v480
    %v491 = vpack.c.b16 %v483, %v482
    %500 = vmatprep.subr.bf16.mxu0 0
    %501 = vmatpush1.bf16.msra.mxu0 %v484
    %502 = vmatprep.subr.bf16.mxu0 0
    %503 = vmatpush1.bf16.msra.mxu0 %v485
    %504 = vmatprep.subr.bf16.mxu0 0
    %505 = vmatpush1.bf16.msra.mxu0 %v486
    %506 = vmatprep.subr.bf16.mxu0 0
    %507 = vmatpush1.bf16.msra.mxu0 %v487
    %508 = vmatprep.subr.bf16.mxu0 0
    %509 = vmatpush1.bf16.msra.mxu0 %v488
    %510 = vmatprep.subr.bf16.mxu0 0
    %511 = vmatpush1.bf16.msra.mxu0 %v489
    %512 = vmatprep.subr.bf16.mxu0 0
    %513 = vmatpush1.bf16.msra.mxu0 %v490
    %514 = vmatprep.subr.bf16.mxu0 0
    %515 = vmatpush1.bf16.msra.mxu0 %v491
    %516 = vmatprep.subr.bf16.mxu0 0
    %517 = vmatpush1.bf16.msra.mxu0 0
    %518 = vmatprep.subr.bf16.mxu0 0
    %519 = vmatpush1.bf16.msra.mxu0 0
    %520 = vmatprep.subr.bf16.mxu0 0
    %521 = vmatpush1.bf16.msra.mxu0 0
    %522 = vmatprep.subr.bf16.mxu0 0
    %523 = vmatpush1.bf16.msra.mxu0 0
    %524 = vmatprep.subr.bf16.mxu0 0
    %525 = vmatpush1.bf16.msra.mxu0 0
    %526 = vmatprep.subr.bf16.mxu0 0
    %527 = vmatpush1.bf16.msra.mxu0 0
    %528 = vmatprep.subr.bf16.mxu0 0
    %529 = vmatpush1.bf16.msra.mxu0 0
    %530 = vmatprep.subr.bf16.mxu0 0
    %531 = vmatpush1.bf16.msra.mxu0 0
    %532 = vmatprep.mubr.bf16.mxu0 0
    %533 = vmatmul.mubr.bf16.gmra.mrb[0].mxu0 %v428
    %v534 = vpop.f32.mrb[0].mxu0
    %v535 = vadd.f32 %v450, %v534
    %v536 = vpop.f32.mrb[0].mxu0
    %v537 = vpop.f32.mrb[0].mxu0
    %v538 = vpop.f32.mrb[0].mxu0
    %539 = vdwg.mxu0
    %vm540 = vcmp.gt.f32.partialorder %v535, 0.0
    %v541 = vmul.f32 %v535, 0.01
    %v542 = vsel %vm540, %v535, %v541
    %v543 = vpack.c.bf16 %v542, %v542
    %v544 = vld [vmem:[%s8] sm:$0xf]
    %v545 = vld [vmem:[%s8 + $0x4] sm:$0xf]
    %v546 = vld [vmem:[%s8 + $0x8] sm:$0xf]
    %v547 = vld [vmem:[%s8 + $0xc] sm:$0xf]
    %v548 = vld [vmem:[%s8 + $0x10] sm:$0xf]
    %v549 = vld [vmem:[%s8 + $0x14] sm:$0xf]
    %v550 = vld [vmem:[%s8 + $0x18] sm:$0xf]
    %v551 = vld [vmem:[%s8 + $0x1c] sm:$0xf]
    %v552 = vld [vmem:[%s8 + $0x20] sm:$0xf]
    %v553 = vld [vmem:[%s8 + $0x24] sm:$0xf]
    %v554 = vld [vmem:[%s8 + $0x28] sm:$0xf]
    %v555 = vld [vmem:[%s8 + $0x2c] sm:$0xf]
    %v556 = vld [vmem:[%s8 + $0x30] sm:$0xf]
    %v557 = vld [vmem:[%s8 + $0x34] sm:$0xf]
    %v558 = vld [vmem:[%s8 + $0x38] sm:$0xf]
    %v559 = vld [vmem:[%s8 + $0x3c] sm:$0xf]
    %v560 = vld [vmem:[%s9] sm:$0xf]
    %v561 = vld [vmem:[%s9 + $0x4] sm:$0xf]
    %v562 = vld [vmem:[%s9 + $0x8] sm:$0xf]
    %v563 = vld [vmem:[%s9 + $0xc] sm:$0xf]
    %v564 = vld [vmem:[%s9 + $0x10] sm:$0xf]
    %v565 = vld [vmem:[%s9 + $0x14] sm:$0xf]
    %v566 = vld [vmem:[%s9 + $0x18] sm:$0xf]
    %v567 = vld [vmem:[%s9 + $0x1c] sm:$0xf]
    %v568 = vld [vmem:[%s9 + $0x20] sm:$0xf]
    %v569 = vld [vmem:[%s9 + $0x24] sm:$0xf]
    %v570 = vld [vmem:[%s9 + $0x28] sm:$0xf]
    %v571 = vld [vmem:[%s9 + $0x2c] sm:$0xf]
    %v572 = vld [vmem:[%s9 + $0x30] sm:$0xf]
    %v573 = vld [vmem:[%s9 + $0x34] sm:$0xf]
    %v574 = vld [vmem:[%s9 + $0x38] sm:$0xf]
    %v575 = vld [vmem:[%s9 + $0x3c] sm:$0xf]
    %v592 = vunpack.c.l.b16 %v560
    %v593 = vunpack.c.l.b16 %v561
    %v594 = vunpack.c.l.b16 %v562
    %v595 = vunpack.c.l.b16 %v563
    %v596 = vunpack.c.l.b16 %v564
    %v597 = vunpack.c.l.b16 %v565
    %v598 = vunpack.c.l.b16 %v566
    %v599 = vunpack.c.l.b16 %v567
    %v600 = vunpack.c.l.b16 %v568
    %v601 = vunpack.c.l.b16 %v569
    %v602 = vunpack.c.l.b16 %v570
    %v603 = vunpack.c.l.b16 %v571
    %v604 = vunpack.c.l.b16 %v572
    %v605 = vunpack.c.l.b16 %v573
    %v606 = vunpack.c.l.b16 %v574
    %v607 = vunpack.c.l.b16 %v575
    %v608 = vpack.c.b16 %v593, %v592
    %v609 = vpack.c.b16 %v595, %v594
    %v610 = vpack.c.b16 %v597, %v596
    %v611 = vpack.c.b16 %v599, %v598
    %v612 = vpack.c.b16 %v601, %v600
    %v613 = vpack.c.b16 %v603, %v602
    %v614 = vpack.c.b16 %v605, %v604
    %v615 = vpack.c.b16 %v607, %v606
    %624 = vmatprep.subr.bf16.mxu0 0
    %625 = vmatpush1.bf16.msra.mxu0 %v608
    %626 = vmatprep.subr.bf16.mxu0 0
    %627 = vmatpush1.bf16.msra.mxu0 %v609
    %628 = vmatprep.subr.bf16.mxu0 0
    %629 = vmatpush1.bf16.msra.mxu0 %v610
    %630 = vmatprep.subr.bf16.mxu0 0
    %631 = vmatpush1.bf16.msra.mxu0 %v611
    %632 = vmatprep.subr.bf16.mxu0 0
    %633 = vmatpush1.bf16.msra.mxu0 %v612
    %634 = vmatprep.subr.bf16.mxu0 0
    %635 = vmatpush1.bf16.msra.mxu0 %v613
    %636 = vmatprep.subr.bf16.mxu0 0
    %637 = vmatpush1.bf16.msra.mxu0 %v614
    %638 = vmatprep.subr.bf16.mxu0 0
    %639 = vmatpush1.bf16.msra.mxu0 %v615
    %640 = vmatprep.subr.bf16.mxu0 0
    %641 = vmatpush1.bf16.msra.mxu0 0
    %642 = vmatprep.subr.bf16.mxu0 0
    %643 = vmatpush1.bf16.msra.mxu0 0
    %644 = vmatprep.subr.bf16.mxu0 0
    %645 = vmatpush1.bf16.msra.mxu0 0
    %646 = vmatprep.subr.bf16.mxu0 0
    %647 = vmatpush1.bf16.msra.mxu0 0
    %648 = vmatprep.subr.bf16.mxu0 0
    %649 = vmatpush1.bf16.msra.mxu0 0
    %650 = vmatprep.subr.bf16.mxu0 0
    %651 = vmatpush1.bf16.msra.mxu0 0
    %652 = vmatprep.subr.bf16.mxu0 0
    %653 = vmatpush1.bf16.msra.mxu0 0
    %654 = vmatprep.subr.bf16.mxu0 0
    %655 = vmatpush1.bf16.msra.mxu0 0
    %656 = vmatprep.mubr.bf16.mxu0 0
    %657 = vmatmul.mubr.bf16.gmra.mrb[0].mxu0 %v425
    %v658 = vpop.f32.mrb[0].mxu0
    %v659 = vadd.f32 0.0, %v658
    %v660 = vpop.f32.mrb[0].mxu0
    %v661 = vpop.f32.mrb[0].mxu0
    %v662 = vpop.f32.mrb[0].mxu0
    %663 = vdwg.mxu0
    %v680 = vunpack.c.l.b16 %v544
    %v681 = vunpack.c.l.b16 %v545
    %v682 = vunpack.c.l.b16 %v546
    %v683 = vunpack.c.l.b16 %v547
    %v684 = vunpack.c.l.b16 %v548
    %v685 = vunpack.c.l.b16 %v549
    %v686 = vunpack.c.l.b16 %v550
    %v687 = vunpack.c.l.b16 %v551
    %v688 = vunpack.c.l.b16 %v552
    %v689 = vunpack.c.l.b16 %v553
    %v690 = vunpack.c.l.b16 %v554
    %v691 = vunpack.c.l.b16 %v555
    %v692 = vunpack.c.l.b16 %v556
    %v693 = vunpack.c.l.b16 %v557
    %v694 = vunpack.c.l.b16 %v558
    %v695 = vunpack.c.l.b16 %v559
    %v696 = vpack.c.b16 %v681, %v680
    %v697 = vpack.c.b16 %v683, %v682
    %v698 = vpack.c.b16 %v685, %v684
    %v699 = vpack.c.b16 %v687, %v686
    %v700 = vpack.c.b16 %v689, %v688
    %v701 = vpack.c.b16 %v691, %v690
    %v702 = vpack.c.b16 %v693, %v692
    %v703 = vpack.c.b16 %v695, %v694
    %712 = vmatprep.subr.bf16.mxu0 0
    %713 = vmatpush1.bf16.msra.mxu0 %v696
    %714 = vmatprep.subr.bf16.mxu0 0
    %715 = vmatpush1.bf16.msra.mxu0 %v697
    %716 = vmatprep.subr.bf16.mxu0 0
    %717 = vmatpush1.bf16.msra.mxu0 %v698
    %718 = vmatprep.subr.bf16.mxu0 0
    %719 = vmatpush1.bf16.msra.mxu0 %v699
    %720 = vmatprep.subr.bf16.mxu0 0
    %721 = vmatpush1.bf16.msra.mxu0 %v700
    %722 = vmatprep.subr.bf16.mxu0 0
    %723 = vmatpush1.bf16.msra.mxu0 %v701
    %724 = vmatprep.subr.bf16.mxu0 0
    %725 = vmatpush1.bf16.msra.mxu0 %v702
    %726 = vmatprep.subr.bf16.mxu0 0
    %727 = vmatpush1.bf16.msra.mxu0 %v703
    %728 = vmatprep.subr.bf16.mxu0 0
    %729 = vmatpush1.bf16.msra.mxu0 0
    %730 = vmatprep.subr.bf16.mxu0 0
    %731 = vmatpush1.bf16.msra.mxu0 0
    %732 = vmatprep.subr.bf16.mxu0 0
    %733 = vmatpush1.bf16.msra.mxu0 0
    %734 = vmatprep.subr.bf16.mxu0 0
    %735 = vmatpush1.bf16.msra.mxu0 0
    %736 = vmatprep.subr.bf16.mxu0 0
    %737 = vmatpush1.bf16.msra.mxu0 0
    %738 = vmatprep.subr.bf16.mxu0 0
    %739 = vmatpush1.bf16.msra.mxu0 0
    %740 = vmatprep.subr.bf16.mxu0 0
    %741 = vmatpush1.bf16.msra.mxu0 0
    %742 = vmatprep.subr.bf16.mxu0 0
    %743 = vmatpush1.bf16.msra.mxu0 0
    %744 = vmatprep.mubr.bf16.mxu0 0
    %745 = vmatmul.mubr.bf16.gmra.mrb[0].mxu0 %v543
    %v746 = vpop.f32.mrb[0].mxu0
    %v747 = vadd.f32 %v659, %v746
    %v748 = vpop.f32.mrb[0].mxu0
    %v749 = vpop.f32.mrb[0].mxu0
    %v750 = vpop.f32.mrb[0].mxu0
    %751 = vdwg.mxu0
    %v752 = vld [vmem:[%s10] sm:$0x1]
    %v754 = vlaneseq
    %v755 = vshrl.u32 %v754, 7
    %v756 = vsub.s32 0, %v755
    %v757 = vrot.slane %v752, %v756
    %v759 = vadd.f32 %v747, %v757
    %v760 = vpack.c.bf16 %v759, %v759
    %vm761 = vcmp.gt.bf16.partialorder %v760, 0
    %v762 = vmul.bf16 %v760, 1009007652
    %v763 = vsel %vm761, %v760, %v762
    %v764 = vld [vmem:[%s11] sm:$0xf]
    %v765 = vld [vmem:[%s11 + $0x4] sm:$0xf]
    %v766 = vld [vmem:[%s11 + $0x8] sm:$0xf]
    %v767 = vld [vmem:[%s11 + $0xc] sm:$0xf]
    %v768 = vld [vmem:[%s11 + $0x10] sm:$0xf]
    %v769 = vld [vmem:[%s11 + $0x14] sm:$0xf]
    %v770 = vld [vmem:[%s11 + $0x18] sm:$0xf]
    %v771 = vld [vmem:[%s11 + $0x1c] sm:$0xf]
    %v772 = vld [vmem:[%s11 + $0x20] sm:$0xf]
    %v773 = vld [vmem:[%s11 + $0x24] sm:$0xf]
    %v774 = vld [vmem:[%s11 + $0x28] sm:$0xf]
    %v775 = vld [vmem:[%s11 + $0x2c] sm:$0xf]
    %v776 = vld [vmem:[%s11 + $0x30] sm:$0xf]
    %v777 = vld [vmem:[%s11 + $0x34] sm:$0xf]
    %v778 = vld [vmem:[%s11 + $0x38] sm:$0xf]
    %v779 = vld [vmem:[%s11 + $0x3c] sm:$0xf]
    %v780 = vld [vmem:[#allocation3] sm:$0x1]
    %v782 = vlaneseq
    %v783 = vshrl.u32 %v782, 7
    %v784 = vsub.s32 0, %v783
    %v785 = vrot.slane %v780, %v784
    %v803 = vunpack.c.l.b16 %v764
    %v804 = vunpack.c.l.b16 %v765
    %v805 = vunpack.c.l.b16 %v766
    %v806 = vunpack.c.l.b16 %v767
    %v807 = vunpack.c.l.b16 %v768
    %v808 = vunpack.c.l.b16 %v769
    %v809 = vunpack.c.l.b16 %v770
    %v810 = vunpack.c.l.b16 %v771
    %v811 = vunpack.c.l.b16 %v772
    %v812 = vunpack.c.l.b16 %v773
    %v813 = vunpack.c.l.b16 %v774
    %v814 = vunpack.c.l.b16 %v775
    %v815 = vunpack.c.l.b16 %v776
    %v816 = vunpack.c.l.b16 %v777
    %v817 = vunpack.c.l.b16 %v778
    %v818 = vunpack.c.l.b16 %v779
    %v819 = vpack.c.b16 %v804, %v803
    %v820 = vpack.c.b16 %v806, %v805
    %v821 = vpack.c.b16 %v808, %v807
    %v822 = vpack.c.b16 %v810, %v809
    %v823 = vpack.c.b16 %v812, %v811
    %v824 = vpack.c.b16 %v814, %v813
    %v825 = vpack.c.b16 %v816, %v815
    %v826 = vpack.c.b16 %v818, %v817
    %835 = vmatprep.subr.bf16.mxu0 0
    %836 = vmatpush1.bf16.msra.mxu0 %v819
    %837 = vmatprep.subr.bf16.mxu0 0
    %838 = vmatpush1.bf16.msra.mxu0 %v820
    %839 = vmatprep.subr.bf16.mxu0 0
    %840 = vmatpush1.bf16.msra.mxu0 %v821
    %841 = vmatprep.subr.bf16.mxu0 0
    %842 = vmatpush1.bf16.msra.mxu0 %v822
    %843 = vmatprep.subr.bf16.mxu0 0
    %844 = vmatpush1.bf16.msra.mxu0 %v823
    %845 = vmatprep.subr.bf16.mxu0 0
    %846 = vmatpush1.bf16.msra.mxu0 %v824
    %847 = vmatprep.subr.bf16.mxu0 0
    %848 = vmatpush1.bf16.msra.mxu0 %v825
    %849 = vmatprep.subr.bf16.mxu0 0
    %850 = vmatpush1.bf16.msra.mxu0 %v826
    %851 = vmatprep.subr.bf16.mxu0 0
    %852 = vmatpush1.bf16.msra.mxu0 0
    %853 = vmatprep.subr.bf16.mxu0 0
    %854 = vmatpush1.bf16.msra.mxu0 0
    %855 = vmatprep.subr.bf16.mxu0 0
    %856 = vmatpush1.bf16.msra.mxu0 0
    %857 = vmatprep.subr.bf16.mxu0 0
    %858 = vmatpush1.bf16.msra.mxu0 0
    %859 = vmatprep.subr.bf16.mxu0 0
    %860 = vmatpush1.bf16.msra.mxu0 0
    %861 = vmatprep.subr.bf16.mxu0 0
    %862 = vmatpush1.bf16.msra.mxu0 0
    %863 = vmatprep.subr.bf16.mxu0 0
    %864 = vmatpush1.bf16.msra.mxu0 0
    %865 = vmatprep.subr.bf16.mxu0 0
    %866 = vmatpush1.bf16.msra.mxu0 0
    %867 = vmatprep.mubr.bf16.mxu0 0
    %868 = vmatmul.mubr.bf16.gmra.mrb[0].mxu0 %v763
    %v869 = vpop.f32.mrb[0].mxu0
    %v870 = vadd.f32 %v785, %v869
    %v871 = vpop.f32.mrb[0].mxu0
    %v872 = vpop.f32.mrb[0].mxu0
    %v873 = vpop.f32.mrb[0].mxu0
    %874 = vdwg.mxu0
    %vm875 = vcmp.gt.f32.partialorder %v870, 0.0
    %v876 = vmul.f32 %v870, 0.01
    %v877 = vsel %vm875, %v870, %v876
    %v878 = vpack.c.bf16 %v877, %v877
    %v879 = vld [vmem:[%s13] sm:$0xff]
    %v880 = vld [vmem:[%s13 + $0x8] sm:$0xff]
    %v881 = vld [vmem:[%s13 + $0x10] sm:$0xff]
    %v882 = vld [vmem:[%s13 + $0x18] sm:$0xff]
    %v883 = vld [vmem:[%s13 + $0x20] sm:$0xff]
    %v884 = vld [vmem:[%s13 + $0x28] sm:$0xff]
    %v885 = vld [vmem:[%s13 + $0x30] sm:$0xff]
    %v886 = vld [vmem:[%s13 + $0x38] sm:$0xff]
    %v887 = vld [vmem:[%s13 + $0x40] sm:$0xff]
    %v888 = vld [vmem:[%s13 + $0x48] sm:$0xff]
    %v889 = vld [vmem:[%s13 + $0x50] sm:$0xff]
    %v890 = vld [vmem:[%s13 + $0x58] sm:$0xff]
    %v891 = vld [vmem:[%s13 + $0x60] sm:$0xff]
    %v892 = vld [vmem:[%s13 + $0x68] sm:$0xff]
    %v893 = vld [vmem:[%s13 + $0x70] sm:$0xff]
    %v894 = vld [vmem:[%s13 + $0x78] sm:$0xff]
    %v895 = vld [vmem:[%s14] sm:$0xff]
    %v896 = vld [vmem:[%s14 + $0x8] sm:$0xff]
    %v897 = vld [vmem:[%s14 + $0x10] sm:$0xff]
    %v898 = vld [vmem:[%s14 + $0x18] sm:$0xff]
    %v899 = vld [vmem:[%s14 + $0x20] sm:$0xff]
    %v900 = vld [vmem:[%s14 + $0x28] sm:$0xff]
    %v901 = vld [vmem:[%s14 + $0x30] sm:$0xff]
    %v902 = vld [vmem:[%s14 + $0x38] sm:$0xff]
    %v903 = vld [vmem:[%s14 + $0x40] sm:$0xff]
    %v904 = vld [vmem:[%s14 + $0x48] sm:$0xff]
    %v905 = vld [vmem:[%s14 + $0x50] sm:$0xff]
    %v906 = vld [vmem:[%s14 + $0x58] sm:$0xff]
    %v907 = vld [vmem:[%s14 + $0x60] sm:$0xff]
    %v908 = vld [vmem:[%s14 + $0x68] sm:$0xff]
    %v909 = vld [vmem:[%s14 + $0x70] sm:$0xff]
    %v910 = vld [vmem:[%s14 + $0x78] sm:$0xff]
    %v927 = vunpack.c.l.b16 %v895
    %v928 = vunpack.c.h.b16 %v895
    %v929 = vunpack.c.l.b16 %v896
    %v930 = vunpack.c.h.b16 %v896
    %v931 = vunpack.c.l.b16 %v897
    %v932 = vunpack.c.h.b16 %v897
    %v933 = vunpack.c.l.b16 %v898
    %v934 = vunpack.c.h.b16 %v898
    %v935 = vunpack.c.l.b16 %v899
    %v936 = vunpack.c.h.b16 %v899
    %v937 = vunpack.c.l.b16 %v900
    %v938 = vunpack.c.h.b16 %v900
    %v939 = vunpack.c.l.b16 %v901
    %v940 = vunpack.c.h.b16 %v901
    %v941 = vunpack.c.l.b16 %v902
    %v942 = vunpack.c.h.b16 %v902
    %v943 = vunpack.c.l.b16 %v903
    %v944 = vunpack.c.h.b16 %v903
    %v945 = vunpack.c.l.b16 %v904
    %v946 = vunpack.c.h.b16 %v904
    %v947 = vunpack.c.l.b16 %v905
    %v948 = vunpack.c.h.b16 %v905
    %v949 = vunpack.c.l.b16 %v906
    %v950 = vunpack.c.h.b16 %v906
    %v951 = vunpack.c.l.b16 %v907
    %v952 = vunpack.c.h.b16 %v907
    %v953 = vunpack.c.l.b16 %v908
    %v954 = vunpack.c.h.b16 %v908
    %v955 = vunpack.c.l.b16 %v909
    %v956 = vunpack.c.h.b16 %v909
    %v957 = vunpack.c.l.b16 %v910
    %v958 = vunpack.c.h.b16 %v910
    %v959 = vpack.c.b16 %v929, %v927
    %v960 = vpack.c.b16 %v930, %v928
    %v961 = vpack.c.b16 %v933, %v931
    %v962 = vpack.c.b16 %v934, %v932
    %v963 = vpack.c.b16 %v937, %v935
    %v964 = vpack.c.b16 %v938, %v936
    %v965 = vpack.c.b16 %v941, %v939
    %v966 = vpack.c.b16 %v942, %v940
    %v967 = vpack.c.b16 %v945, %v943
    %v968 = vpack.c.b16 %v946, %v944
    %v969 = vpack.c.b16 %v949, %v947
    %v970 = vpack.c.b16 %v950, %v948
    %v971 = vpack.c.b16 %v953, %v951
    %v972 = vpack.c.b16 %v954, %v952
    %v973 = vpack.c.b16 %v957, %v955
    %v974 = vpack.c.b16 %v958, %v956
    %991 = vmatprep.subr.bf16.mxu0 %v960
    %992 = vmatpush1.bf16.msra.mxu0 %v959
    %993 = vmatprep.subr.bf16.mxu0 %v962
    %994 = vmatpush1.bf16.msra.mxu0 %v961
    %995 = vmatprep.subr.bf16.mxu0 %v964
    %996 = vmatpush1.bf16.msra.mxu0 %v963
    %997 = vmatprep.subr.bf16.mxu0 %v966
    %998 = vmatpush1.bf16.msra.mxu0 %v965
    %999 = vmatprep.subr.bf16.mxu0 %v968
    %1000 = vmatpush1.bf16.msra.mxu0 %v967
    %1001 = vmatprep.subr.bf16.mxu0 %v970
    %1002 = vmatpush1.bf16.msra.mxu0 %v969
    %1003 = vmatprep.subr.bf16.mxu0 %v972
    %1004 = vmatpush1.bf16.msra.mxu0 %v971
    %1005 = vmatprep.subr.bf16.mxu0 %v974
    %1006 = vmatpush1.bf16.msra.mxu0 %v973
    %1007 = vmatprep.subr.bf16.mxu0 0
    %1008 = vmatpush1.bf16.msra.mxu0 0
    %1009 = vmatprep.subr.bf16.mxu0 0
    %1010 = vmatpush1.bf16.msra.mxu0 0
    %1011 = vmatprep.subr.bf16.mxu0 0
    %1012 = vmatpush1.bf16.msra.mxu0 0
    %1013 = vmatprep.subr.bf16.mxu0 0
    %1014 = vmatpush1.bf16.msra.mxu0 0
    %1015 = vmatprep.subr.bf16.mxu0 0
    %1016 = vmatpush1.bf16.msra.mxu0 0
    %1017 = vmatprep.subr.bf16.mxu0 0
    %1018 = vmatpush1.bf16.msra.mxu0 0
    %1019 = vmatprep.subr.bf16.mxu0 0
    %1020 = vmatpush1.bf16.msra.mxu0 0
    %1021 = vmatprep.subr.bf16.mxu0 0
    %1022 = vmatpush1.bf16.msra.mxu0 0
    %1023 = vmatprep.mubr.bf16.mxu0 0
    %1024 = vmatmul.mubr.bf16.gmra.mrb[0].mxu0 %v760
    %v1025 = vpop.f32.mrb[0].mxu0
    %v1026 = vadd.f32 0.0, %v1025
    %v1027 = vpop.f32.mrb[0].mxu0
    %v1028 = vadd.f32 0.0, %v1027
    %v1029 = vpop.f32.mrb[0].mxu0
    %v1030 = vpop.f32.mrb[0].mxu0
    %1031 = vdwg.mxu0
    %v1048 = vunpack.c.l.b16 %v879
    %v1049 = vunpack.c.h.b16 %v879
    %v1050 = vunpack.c.l.b16 %v880
    %v1051 = vunpack.c.h.b16 %v880
    %v1052 = vunpack.c.l.b16 %v881
    %v1053 = vunpack.c.h.b16 %v881
    %v1054 = vunpack.c.l.b16 %v882
    %v1055 = vunpack.c.h.b16 %v882
    %v1056 = vunpack.c.l.b16 %v883
    %v1057 = vunpack.c.h.b16 %v883
    %v1058 = vunpack.c.l.b16 %v884
    %v1059 = vunpack.c.h.b16 %v884
    %v1060 = vunpack.c.l.b16 %v885
    %v1061 = vunpack.c.h.b16 %v885
    %v1062 = vunpack.c.l.b16 %v886
    %v1063 = vunpack.c.h.b16 %v886
    %v1064 = vunpack.c.l.b16 %v887
    %v1065 = vunpack.c.h.b16 %v887
    %v1066 = vunpack.c.l.b16 %v888
    %v1067 = vunpack.c.h.b16 %v888
    %v1068 = vunpack.c.l.b16 %v889
    %v1069 = vunpack.c.h.b16 %v889
    %v1070 = vunpack.c.l.b16 %v890
    %v1071 = vunpack.c.h.b16 %v890
    %v1072 = vunpack.c.l.b16 %v891
    %v1073 = vunpack.c.h.b16 %v891
    %v1074 = vunpack.c.l.b16 %v892
    %v1075 = vunpack.c.h.b16 %v892
    %v1076 = vunpack.c.l.b16 %v893
    %v1077 = vunpack.c.h.b16 %v893
    %v1078 = vunpack.c.l.b16 %v894
    %v1079 = vunpack.c.h.b16 %v894
    %v1080 = vpack.c.b16 %v1050, %v1048
    %v1081 = vpack.c.b16 %v1051, %v1049
    %v1082 = vpack.c.b16 %v1054, %v1052
    %v1083 = vpack.c.b16 %v1055, %v1053
    %v1084 = vpack.c.b16 %v1058, %v1056
    %v1085 = vpack.c.b16 %v1059, %v1057
    %v1086 = vpack.c.b16 %v1062, %v1060
    %v1087 = vpack.c.b16 %v1063, %v1061
    %v1088 = vpack.c.b16 %v1066, %v1064
    %v1089 = vpack.c.b16 %v1067, %v1065
    %v1090 = vpack.c.b16 %v1070, %v1068
    %v1091 = vpack.c.b16 %v1071, %v1069
    %v1092 = vpack.c.b16 %v1074, %v1072
    %v1093 = vpack.c.b16 %v1075, %v1073
    %v1094 = vpack.c.b16 %v1078, %v1076
    %v1095 = vpack.c.b16 %v1079, %v1077
    %1112 = vmatprep.subr.bf16.mxu0 %v1081
    %1113 = vmatpush1.bf16.msra.mxu0 %v1080
    %1114 = vmatprep.subr.bf16.mxu0 %v1083
    %1115 = vmatpush1.bf16.msra.mxu0 %v1082
    %1116 = vmatprep.subr.bf16.mxu0 %v1085
    %1117 = vmatpush1.bf16.msra.mxu0 %v1084
    %1118 = vmatprep.subr.bf16.mxu0 %v1087
    %1119 = vmatpush1.bf16.msra.mxu0 %v1086
    %1120 = vmatprep.subr.bf16.mxu0 %v1089
    %1121 = vmatpush1.bf16.msra.mxu0 %v1088
    %1122 = vmatprep.subr.bf16.mxu0 %v1091
    %1123 = vmatpush1.bf16.msra.mxu0 %v1090
    %1124 = vmatprep.subr.bf16.mxu0 %v1093
    %1125 = vmatpush1.bf16.msra.mxu0 %v1092
    %1126 = vmatprep.subr.bf16.mxu0 %v1095
    %1127 = vmatpush1.bf16.msra.mxu0 %v1094
    %1128 = vmatprep.subr.bf16.mxu0 0
    %1129 = vmatpush1.bf16.msra.mxu0 0
    %1130 = vmatprep.subr.bf16.mxu0 0
    %1131 = vmatpush1.bf16.msra.mxu0 0
    %1132 = vmatprep.subr.bf16.mxu0 0
    %1133 = vmatpush1.bf16.msra.mxu0 0
    %1134 = vmatprep.subr.bf16.mxu0 0
    %1135 = vmatpush1.bf16.msra.mxu0 0
    %1136 = vmatprep.subr.bf16.mxu0 0
    %1137 = vmatpush1.bf16.msra.mxu0 0
    %1138 = vmatprep.subr.bf16.mxu0 0
    %1139 = vmatpush1.bf16.msra.mxu0 0
    %1140 = vmatprep.subr.bf16.mxu0 0
    %1141 = vmatpush1.bf16.msra.mxu0 0
    %1142 = vmatprep.subr.bf16.mxu0 0
    %1143 = vmatpush1.bf16.msra.mxu0 0
    %1144 = vmatprep.mubr.bf16.mxu0 0
    %1145 = vmatmul.mubr.bf16.gmra.mrb[0].mxu0 %v878
    %v1146 = vpop.f32.mrb[0].mxu0
    %v1147 = vadd.f32 %v1026, %v1146
    %v1148 = vpop.f32.mrb[0].mxu0
    %v1149 = vadd.f32 %v1028, %v1148
    %v1150 = vpop.f32.mrb[0].mxu0
    %v1151 = vpop.f32.mrb[0].mxu0
    %1152 = vdwg.mxu0
    %v1153 = vld [vmem:[%s15] sm:$0x3]
    %v1155 = vlaneseq
    %v1156 = vshrl.u32 %v1155, 7
    %v1157 = vsub.s32 0, %v1156
    %v1158 = vrot.slane %v1153, %v1157
    %v1159 = vlaneseq
    %v1160 = vshrl.u32 %v1159, 7
    %v1161 = vsub.s32 1, %v1160
    %v1162 = vrot.slane %v1153, %v1161
    %v1165 = vadd.f32 %v1147, %v1158
    %v1166 = vadd.f32 %v1149, %v1162
    %v1167 = vpack.c.bf16 %v1165, %v1165
    %v1168 = vpack.c.bf16 %v1166, %v1166
    %vm1169 = vcmp.gt.bf16.partialorder %v1167, 0
    %vm1170 = vcmp.gt.bf16.partialorder %v1168, 0
    %v1171 = vmul.bf16 %v1167, 1009007652
    %v1172 = vmul.bf16 %v1168, 1009007652
    %v1173 = vsel %vm1169, %v1167, %v1171
    %v1174 = vsel %vm1170, %v1168, %v1172
    %v1175 = vld [vmem:[%s16] sm:$0xff]
    %v1176 = vld [vmem:[%s16 + $0x8] sm:$0xff]
    %v1177 = vld [vmem:[%s16 + $0x10] sm:$0xff]
    %v1178 = vld [vmem:[%s16 + $0x18] sm:$0xff]
    %v1179 = vld [vmem:[%s16 + $0x20] sm:$0xff]
    %v1180 = vld [vmem:[%s16 + $0x28] sm:$0xff]
    %v1181 = vld [vmem:[%s16 + $0x30] sm:$0xff]
    %v1182 = vld [vmem:[%s16 + $0x38] sm:$0xff]
    %v1183 = vld [vmem:[%s16 + $0x40] sm:$0xff]
    %v1184 = vld [vmem:[%s16 + $0x48] sm:$0xff]
    %v1185 = vld [vmem:[%s16 + $0x50] sm:$0xff]
    %v1186 = vld [vmem:[%s16 + $0x58] sm:$0xff]
    %v1187 = vld [vmem:[%s16 + $0x60] sm:$0xff]
    %v1188 = vld [vmem:[%s16 + $0x68] sm:$0xff]
    %v1189 = vld [vmem:[%s16 + $0x70] sm:$0xff]
    %v1190 = vld [vmem:[%s16 + $0x78] sm:$0xff]
    %v1191 = vld [vmem:[%s16 + $0x80] sm:$0xff]
    %v1192 = vld [vmem:[%s16 + $0x88] sm:$0xff]
    %v1193 = vld [vmem:[%s16 + $0x90] sm:$0xff]
    %v1194 = vld [vmem:[%s16 + $0x98] sm:$0xff]
    %v1195 = vld [vmem:[%s16 + $0xa0] sm:$0xff]
    %v1196 = vld [vmem:[%s16 + $0xa8] sm:$0xff]
    %v1197 = vld [vmem:[%s16 + $0xb0] sm:$0xff]
    %v1198 = vld [vmem:[%s16 + $0xb8] sm:$0xff]
    %v1199 = vld [vmem:[%s16 + $0xc0] sm:$0xff]
    %v1200 = vld [vmem:[%s16 + $0xc8] sm:$0xff]
    %v1201 = vld [vmem:[%s16 + $0xd0] sm:$0xff]
    %v1202 = vld [vmem:[%s16 + $0xd8] sm:$0xff]
    %v1203 = vld [vmem:[%s16 + $0xe0] sm:$0xff]
    %v1204 = vld [vmem:[%s16 + $0xe8] sm:$0xff]
    %v1205 = vld [vmem:[%s16 + $0xf0] sm:$0xff]
    %v1206 = vld [vmem:[%s16 + $0xf8] sm:$0xff]
    %v1207 = vld [vmem:[%s17] sm:$0x3]
    %v1209 = vlaneseq
    %v1210 = vshrl.u32 %v1209, 7
    %v1211 = vsub.s32 0, %v1210
    %v1212 = vrot.slane %v1207, %v1211
    %v1213 = vlaneseq
    %v1214 = vshrl.u32 %v1213, 7
    %v1215 = vsub.s32 1, %v1214
    %v1216 = vrot.slane %v1207, %v1215
    %v1251 = vunpack.c.l.b16 %v1175
    %v1252 = vunpack.c.h.b16 %v1175
    %v1253 = vunpack.c.l.b16 %v1176
    %v1254 = vunpack.c.h.b16 %v1176
    %v1255 = vunpack.c.l.b16 %v1177
    %v1256 = vunpack.c.h.b16 %v1177
    %v1257 = vunpack.c.l.b16 %v1178
    %v1258 = vunpack.c.h.b16 %v1178
    %v1259 = vunpack.c.l.b16 %v1179
    %v1260 = vunpack.c.h.b16 %v1179
    %v1261 = vunpack.c.l.b16 %v1180
    %v1262 = vunpack.c.h.b16 %v1180
    %v1263 = vunpack.c.l.b16 %v1181
    %v1264 = vunpack.c.h.b16 %v1181
    %v1265 = vunpack.c.l.b16 %v1182
    %v1266 = vunpack.c.h.b16 %v1182
    %v1267 = vunpack.c.l.b16 %v1183
    %v1268 = vunpack.c.h.b16 %v1183
    %v1269 = vunpack.c.l.b16 %v1184
    %v1270 = vunpack.c.h.b16 %v1184
    %v1271 = vunpack.c.l.b16 %v1185
    %v1272 = vunpack.c.h.b16 %v1185
    %v1273 = vunpack.c.l.b16 %v1186
    %v1274 = vunpack.c.h.b16 %v1186
    %v1275 = vunpack.c.l.b16 %v1187
    %v1276 = vunpack.c.h.b16 %v1187
    %v1277 = vunpack.c.l.b16 %v1188
    %v1278 = vunpack.c.h.b16 %v1188
    %v1279 = vunpack.c.l.b16 %v1189
    %v1280 = vunpack.c.h.b16 %v1189
    %v1281 = vunpack.c.l.b16 %v1190
    %v1282 = vunpack.c.h.b16 %v1190
    %v1283 = vunpack.c.l.b16 %v1191
    %v1284 = vunpack.c.h.b16 %v1191
    %v1285 = vunpack.c.l.b16 %v1192
    %v1286 = vunpack.c.h.b16 %v1192
    %v1287 = vunpack.c.l.b16 %v1193
    %v1288 = vunpack.c.h.b16 %v1193
    %v1289 = vunpack.c.l.b16 %v1194
    %v1290 = vunpack.c.h.b16 %v1194
    %v1291 = vunpack.c.l.b16 %v1195
    %v1292 = vunpack.c.h.b16 %v1195
    %v1293 = vunpack.c.l.b16 %v1196
    %v1294 = vunpack.c.h.b16 %v1196
    %v1295 = vunpack.c.l.b16 %v1197
    %v1296 = vunpack.c.h.b16 %v1197
    %v1297 = vunpack.c.l.b16 %v1198
    %v1298 = vunpack.c.h.b16 %v1198
    %v1299 = vunpack.c.l.b16 %v1199
    %v1300 = vunpack.c.h.b16 %v1199
    %v1301 = vunpack.c.l.b16 %v1200
    %v1302 = vunpack.c.h.b16 %v1200
    %v1303 = vunpack.c.l.b16 %v1201
    %v1304 = vunpack.c.h.b16 %v1201
    %v1305 = vunpack.c.l.b16 %v1202
    %v1306 = vunpack.c.h.b16 %v1202
    %v1307 = vunpack.c.l.b16 %v1203
    %v1308 = vunpack.c.h.b16 %v1203
    %v1309 = vunpack.c.l.b16 %v1204
    %v1310 = vunpack.c.h.b16 %v1204
    %v1311 = vunpack.c.l.b16 %v1205
    %v1312 = vunpack.c.h.b16 %v1205
    %v1313 = vunpack.c.l.b16 %v1206
    %v1314 = vunpack.c.h.b16 %v1206
    %v1315 = vpack.c.b16 %v1253, %v1251
    %v1316 = vpack.c.b16 %v1254, %v1252
    %v1317 = vpack.c.b16 %v1257, %v1255
    %v1318 = vpack.c.b16 %v1258, %v1256
    %v1319 = vpack.c.b16 %v1261, %v1259
    %v1320 = vpack.c.b16 %v1262, %v1260
    %v1321 = vpack.c.b16 %v1265, %v1263
    %v1322 = vpack.c.b16 %v1266, %v1264
    %v1323 = vpack.c.b16 %v1269, %v1267
    %v1324 = vpack.c.b16 %v1270, %v1268
    %v1325 = vpack.c.b16 %v1273, %v1271
    %v1326 = vpack.c.b16 %v1274, %v1272
    %v1327 = vpack.c.b16 %v1277, %v1275
    %v1328 = vpack.c.b16 %v1278, %v1276
    %v1329 = vpack.c.b16 %v1281, %v1279
    %v1330 = vpack.c.b16 %v1282, %v1280
    %v1331 = vpack.c.b16 %v1285, %v1283
    %v1332 = vpack.c.b16 %v1286, %v1284
    %v1333 = vpack.c.b16 %v1289, %v1287
    %v1334 = vpack.c.b16 %v1290, %v1288
    %v1335 = vpack.c.b16 %v1293, %v1291
    %v1336 = vpack.c.b16 %v1294, %v1292
    %v1337 = vpack.c.b16 %v1297, %v1295
    %v1338 = vpack.c.b16 %v1298, %v1296
    %v1339 = vpack.c.b16 %v1301, %v1299
    %v1340 = vpack.c.b16 %v1302, %v1300
    %v1341 = vpack.c.b16 %v1305, %v1303
    %v1342 = vpack.c.b16 %v1306, %v1304
    %v1343 = vpack.c.b16 %v1309, %v1307
    %v1344 = vpack.c.b16 %v1310, %v1308
    %v1345 = vpack.c.b16 %v1313, %v1311
    %v1346 = vpack.c.b16 %v1314, %v1312
    %1379 = vmatprep.subr.bf16.mxu0 %v1316
    %1380 = vmatpush1.bf16.msra.mxu0 %v1315
    %1381 = vmatprep.subr.bf16.mxu0 %v1318
    %1382 = vmatpush1.bf16.msra.mxu0 %v1317
    %1383 = vmatprep.subr.bf16.mxu0 %v1320
    %1384 = vmatpush1.bf16.msra.mxu0 %v1319
    %1385 = vmatprep.subr.bf16.mxu0 %v1322
    %1386 = vmatpush1.bf16.msra.mxu0 %v1321
    %1387 = vmatprep.subr.bf16.mxu0 %v1324
    %1388 = vmatpush1.bf16.msra.mxu0 %v1323
    %1389 = vmatprep.subr.bf16.mxu0 %v1326
    %1390 = vmatpush1.bf16.msra.mxu0 %v1325
    %1391 = vmatprep.subr.bf16.mxu0 %v1328
    %1392 = vmatpush1.bf16.msra.mxu0 %v1327
    %1393 = vmatprep.subr.bf16.mxu0 %v1330
    %1394 = vmatpush1.bf16.msra.mxu0 %v1329
    %1395 = vmatprep.subr.bf16.mxu0 %v1332
    %1396 = vmatpush1.bf16.msra.mxu0 %v1331
    %1397 = vmatprep.subr.bf16.mxu0 %v1334
    %1398 = vmatpush1.bf16.msra.mxu0 %v1333
    %1399 = vmatprep.subr.bf16.mxu0 %v1336
    %1400 = vmatpush1.bf16.msra.mxu0 %v1335
    %1401 = vmatprep.subr.bf16.mxu0 %v1338
    %1402 = vmatpush1.bf16.msra.mxu0 %v1337
    %1403 = vmatprep.subr.bf16.mxu0 %v1340
    %1404 = vmatpush1.bf16.msra.mxu0 %v1339
    %1405 = vmatprep.subr.bf16.mxu0 %v1342
    %1406 = vmatpush1.bf16.msra.mxu0 %v1341
    %1407 = vmatprep.subr.bf16.mxu0 %v1344
    %1408 = vmatpush1.bf16.msra.mxu0 %v1343
    %1409 = vmatprep.subr.bf16.mxu0 %v1346
    %1410 = vmatpush1.bf16.msra.mxu0 %v1345
    %1411 = vmatprep.mubr.bf16.mxu0 %v1174
    %1412 = vmatmul.mubr.bf16.gmra.mrb[0].mxu0 %v1173
    %v1413 = vpop.f32.mrb[0].mxu0
    %v1414 = vadd.f32 %v1212, %v1413
    %v1415 = vpop.f32.mrb[0].mxu0
    %v1416 = vadd.f32 %v1216, %v1415
    %v1417 = vpop.f32.mrb[0].mxu0
    %v1418 = vpop.f32.mrb[0].mxu0
    %1419 = vdwg.mxu0
    %vm1420 = vcmp.gt.f32.partialorder %v1414, 0.0
    %vm1421 = vcmp.gt.f32.partialorder %v1416, 0.0
    %v1422 = vmul.f32 %v1414, 0.01
    %v1423 = vmul.f32 %v1416, 0.01
    %v1424 = vsel %vm1420, %v1414, %v1422
    %v1425 = vsel %vm1421, %v1416, %v1423
    %v1426 = vpack.c.bf16 %v1424, %v1424
    %v1427 = vpack.c.bf16 %v1425, %v1425
    %v1428 = vld [vmem:[%s18] sm:$0xff]
    %v1429 = vld [vmem:[%s18 + $0x8] sm:$0xff]
    %v1430 = vld [vmem:[%s18 + $0x10] sm:$0xff]
    %v1431 = vld [vmem:[%s18 + $0x18] sm:$0xff]
    %v1432 = vld [vmem:[%s18 + $0x20] sm:$0xff]
    %v1433 = vld [vmem:[%s18 + $0x28] sm:$0xff]
    %v1434 = vld [vmem:[%s18 + $0x30] sm:$0xff]
    %v1435 = vld [vmem:[%s18 + $0x38] sm:$0xff]
    %v1436 = vld [vmem:[%s18 + $0x40] sm:$0xff]
    %v1437 = vld [vmem:[%s18 + $0x48] sm:$0xff]
    %v1438 = vld [vmem:[%s18 + $0x50] sm:$0xff]
    %v1439 = vld [vmem:[%s18 + $0x58] sm:$0xff]
    %v1440 = vld [vmem:[%s18 + $0x60] sm:$0xff]
    %v1441 = vld [vmem:[%s18 + $0x68] sm:$0xff]
    %v1442 = vld [vmem:[%s18 + $0x70] sm:$0xff]
    %v1443 = vld [vmem:[%s18 + $0x78] sm:$0xff]
    %v1444 = vld [vmem:[%s18 + $0x80] sm:$0xff]
    %v1445 = vld [vmem:[%s18 + $0x88] sm:$0xff]
    %v1446 = vld [vmem:[%s18 + $0x90] sm:$0xff]
    %v1447 = vld [vmem:[%s18 + $0x98] sm:$0xff]
    %v1448 = vld [vmem:[%s18 + $0xa0] sm:$0xff]
    %v1449 = vld [vmem:[%s18 + $0xa8] sm:$0xff]
    %v1450 = vld [vmem:[%s18 + $0xb0] sm:$0xff]
    %v1451 = vld [vmem:[%s18 + $0xb8] sm:$0xff]
    %v1452 = vld [vmem:[%s18 + $0xc0] sm:$0xff]
    %v1453 = vld [vmem:[%s18 + $0xc8] sm:$0xff]
    %v1454 = vld [vmem:[%s18 + $0xd0] sm:$0xff]
    %v1455 = vld [vmem:[%s18 + $0xd8] sm:$0xff]
    %v1456 = vld [vmem:[%s18 + $0xe0] sm:$0xff]
    %v1457 = vld [vmem:[%s18 + $0xe8] sm:$0xff]
    %v1458 = vld [vmem:[%s18 + $0xf0] sm:$0xff]
    %v1459 = vld [vmem:[%s18 + $0xf8] sm:$0xff]
    %v1460 = vld [vmem:[%s19] sm:$0xff]
    %v1461 = vld [vmem:[%s19 + $0x8] sm:$0xff]
    %v1462 = vld [vmem:[%s19 + $0x10] sm:$0xff]
    %v1463 = vld [vmem:[%s19 + $0x18] sm:$0xff]
    %v1464 = vld [vmem:[%s19 + $0x20] sm:$0xff]
    %v1465 = vld [vmem:[%s19 + $0x28] sm:$0xff]
    %v1466 = vld [vmem:[%s19 + $0x30] sm:$0xff]
    %v1467 = vld [vmem:[%s19 + $0x38] sm:$0xff]
    %v1468 = vld [vmem:[%s19 + $0x40] sm:$0xff]
    %v1469 = vld [vmem:[%s19 + $0x48] sm:$0xff]
    %v1470 = vld [vmem:[%s19 + $0x50] sm:$0xff]
    %v1471 = vld [vmem:[%s19 + $0x58] sm:$0xff]
    %v1472 = vld [vmem:[%s19 + $0x60] sm:$0xff]
    %v1473 = vld [vmem:[%s19 + $0x68] sm:$0xff]
    %v1474 = vld [vmem:[%s19 + $0x70] sm:$0xff]
    %v1475 = vld [vmem:[%s19 + $0x78] sm:$0xff]
    %v1476 = vld [vmem:[%s19 + $0x80] sm:$0xff]
    %v1477 = vld [vmem:[%s19 + $0x88] sm:$0xff]
    %v1478 = vld [vmem:[%s19 + $0x90] sm:$0xff]
    %v1479 = vld [vmem:[%s19 + $0x98] sm:$0xff]
    %v1480 = vld [vmem:[%s19 + $0xa0] sm:$0xff]
    %v1481 = vld [vmem:[%s19 + $0xa8] sm:$0xff]
    %v1482 = vld [vmem:[%s19 + $0xb0] sm:$0xff]
    %v1483 = vld [vmem:[%s19 + $0xb8] sm:$0xff]
    %v1484 = vld [vmem:[%s19 + $0xc0] sm:$0xff]
    %v1485 = vld [vmem:[%s19 + $0xc8] sm:$0xff]
    %v1486 = vld [vmem:[%s19 + $0xd0] sm:$0xff]
    %v1487 = vld [vmem:[%s19 + $0xd8] sm:$0xff]
    %v1488 = vld [vmem:[%s19 + $0xe0] sm:$0xff]
    %v1489 = vld [vmem:[%s19 + $0xe8] sm:$0xff]
    %v1490 = vld [vmem:[%s19 + $0xf0] sm:$0xff]
    %v1491 = vld [vmem:[%s19 + $0xf8] sm:$0xff]
    %v1524 = vunpack.c.l.b16 %v1460
    %v1525 = vunpack.c.h.b16 %v1460
    %v1526 = vunpack.c.l.b16 %v1461
    %v1527 = vunpack.c.h.b16 %v1461
    %v1528 = vunpack.c.l.b16 %v1462
    %v1529 = vunpack.c.h.b16 %v1462
    %v1530 = vunpack.c.l.b16 %v1463
    %v1531 = vunpack.c.h.b16 %v1463
    %v1532 = vunpack.c.l.b16 %v1464
    %v1533 = vunpack.c.h.b16 %v1464
    %v1534 = vunpack.c.l.b16 %v1465
    %v1535 = vunpack.c.h.b16 %v1465
    %v1536 = vunpack.c.l.b16 %v1466
    %v1537 = vunpack.c.h.b16 %v1466
    %v1538 = vunpack.c.l.b16 %v1467
    %v1539 = vunpack.c.h.b16 %v1467
    %v1540 = vunpack.c.l.b16 %v1468
    %v1541 = vunpack.c.h.b16 %v1468
    %v1542 = vunpack.c.l.b16 %v1469
    %v1543 = vunpack.c.h.b16 %v1469
    %v1544 = vunpack.c.l.b16 %v1470
    %v1545 = vunpack.c.h.b16 %v1470
    %v1546 = vunpack.c.l.b16 %v1471
    %v1547 = vunpack.c.h.b16 %v1471
    %v1548 = vunpack.c.l.b16 %v1472
    %v1549 = vunpack.c.h.b16 %v1472
    %v1550 = vunpack.c.l.b16 %v1473
    %v1551 = vunpack.c.h.b16 %v1473
    %v1552 = vunpack.c.l.b16 %v1474
    %v1553 = vunpack.c.h.b16 %v1474
    %v1554 = vunpack.c.l.b16 %v1475
    %v1555 = vunpack.c.h.b16 %v1475
    %v1556 = vunpack.c.l.b16 %v1476
    %v1557 = vunpack.c.h.b16 %v1476
    %v1558 = vunpack.c.l.b16 %v1477
    %v1559 = vunpack.c.h.b16 %v1477
    %v1560 = vunpack.c.l.b16 %v1478
    %v1561 = vunpack.c.h.b16 %v1478
    %v1562 = vunpack.c.l.b16 %v1479
    %v1563 = vunpack.c.h.b16 %v1479
    %v1564 = vunpack.c.l.b16 %v1480
    %v1565 = vunpack.c.h.b16 %v1480
    %v1566 = vunpack.c.l.b16 %v1481
    %v1567 = vunpack.c.h.b16 %v1481
    %v1568 = vunpack.c.l.b16 %v1482
    %v1569 = vunpack.c.h.b16 %v1482
    %v1570 = vunpack.c.l.b16 %v1483
    %v1571 = vunpack.c.h.b16 %v1483
    %v1572 = vunpack.c.l.b16 %v1484
    %v1573 = vunpack.c.h.b16 %v1484
    %v1574 = vunpack.c.l.b16 %v1485
    %v1575 = vunpack.c.h.b16 %v1485
    %v1576 = vunpack.c.l.b16 %v1486
    %v1577 = vunpack.c.h.b16 %v1486
    %v1578 = vunpack.c.l.b16 %v1487
    %v1579 = vunpack.c.h.b16 %v1487
    %v1580 = vunpack.c.l.b16 %v1488
    %v1581 = vunpack.c.h.b16 %v1488
    %v1582 = vunpack.c.l.b16 %v1489
    %v1583 = vunpack.c.h.b16 %v1489
    %v1584 = vunpack.c.l.b16 %v1490
    %v1585 = vunpack.c.h.b16 %v1490
    %v1586 = vunpack.c.l.b16 %v1491
    %v1587 = vunpack.c.h.b16 %v1491
    %v1588 = vpack.c.b16 %v1526, %v1524
    %v1589 = vpack.c.b16 %v1527, %v1525
    %v1590 = vpack.c.b16 %v1530, %v1528
    %v1591 = vpack.c.b16 %v1531, %v1529
    %v1592 = vpack.c.b16 %v1534, %v1532
    %v1593 = vpack.c.b16 %v1535, %v1533
    %v1594 = vpack.c.b16 %v1538, %v1536
    %v1595 = vpack.c.b16 %v1539, %v1537
    %v1596 = vpack.c.b16 %v1542, %v1540
    %v1597 = vpack.c.b16 %v1543, %v1541
    %v1598 = vpack.c.b16 %v1546, %v1544
    %v1599 = vpack.c.b16 %v1547, %v1545
    %v1600 = vpack.c.b16 %v1550, %v1548
    %v1601 = vpack.c.b16 %v1551, %v1549
    %v1602 = vpack.c.b16 %v1554, %v1552
    %v1603 = vpack.c.b16 %v1555, %v1553
    %v1604 = vpack.c.b16 %v1558, %v1556
    %v1605 = vpack.c.b16 %v1559, %v1557
    %v1606 = vpack.c.b16 %v1562, %v1560
    %v1607 = vpack.c.b16 %v1563, %v1561
    %v1608 = vpack.c.b16 %v1566, %v1564
    %v1609 = vpack.c.b16 %v1567, %v1565
    %v1610 = vpack.c.b16 %v1570, %v1568
    %v1611 = vpack.c.b16 %v1571, %v1569
    %v1612 = vpack.c.b16 %v1574, %v1572
    %v1613 = vpack.c.b16 %v1575, %v1573
    %v1614 = vpack.c.b16 %v1578, %v1576
    %v1615 = vpack.c.b16 %v1579, %v1577
    %v1616 = vpack.c.b16 %v1582, %v1580
    %v1617 = vpack.c.b16 %v1583, %v1581
    %v1618 = vpack.c.b16 %v1586, %v1584
    %v1619 = vpack.c.b16 %v1587, %v1585
    %1652 = vmatprep.subr.bf16.mxu0 %v1589
    %1653 = vmatpush1.bf16.msra.mxu0 %v1588
    %1654 = vmatprep.subr.bf16.mxu0 %v1591
    %1655 = vmatpush1.bf16.msra.mxu0 %v1590
    %1656 = vmatprep.subr.bf16.mxu0 %v1593
    %1657 = vmatpush1.bf16.msra.mxu0 %v1592
    %1658 = vmatprep.subr.bf16.mxu0 %v1595
    %1659 = vmatpush1.bf16.msra.mxu0 %v1594
    %1660 = vmatprep.subr.bf16.mxu0 %v1597
    %1661 = vmatpush1.bf16.msra.mxu0 %v1596
    %1662 = vmatprep.subr.bf16.mxu0 %v1599
    %1663 = vmatpush1.bf16.msra.mxu0 %v1598
    %1664 = vmatprep.subr.bf16.mxu0 %v1601
    %1665 = vmatpush1.bf16.msra.mxu0 %v1600
    %1666 = vmatprep.subr.bf16.mxu0 %v1603
    %1667 = vmatpush1.bf16.msra.mxu0 %v1602
    %1668 = vmatprep.subr.bf16.mxu0 %v1605
    %1669 = vmatpush1.bf16.msra.mxu0 %v1604
    %1670 = vmatprep.subr.bf16.mxu0 %v1607
    %1671 = vmatpush1.bf16.msra.mxu0 %v1606
    %1672 = vmatprep.subr.bf16.mxu0 %v1609
    %1673 = vmatpush1.bf16.msra.mxu0 %v1608
    %1674 = vmatprep.subr.bf16.mxu0 %v1611
    %1675 = vmatpush1.bf16.msra.mxu0 %v1610
    %1676 = vmatprep.subr.bf16.mxu0 %v1613
    %1677 = vmatpush1.bf16.msra.mxu0 %v1612
    %1678 = vmatprep.subr.bf16.mxu0 %v1615
    %1679 = vmatpush1.bf16.msra.mxu0 %v1614
    %1680 = vmatprep.subr.bf16.mxu0 %v1617
    %1681 = vmatpush1.bf16.msra.mxu0 %v1616
    %1682 = vmatprep.subr.bf16.mxu0 %v1619
    %1683 = vmatpush1.bf16.msra.mxu0 %v1618
    %1684 = vmatprep.mubr.bf16.mxu0 %v1168
    %1685 = vmatmul.mubr.bf16.gmra.mrb[0].mxu0 %v1167
    %v1686 = vpop.f32.mrb[0].mxu0
    %v1687 = vadd.f32 0.0, %v1686
    %v1688 = vpop.f32.mrb[0].mxu0
    %v1689 = vadd.f32 0.0, %v1688
    %v1690 = vpop.f32.mrb[0].mxu0
    %v1691 = vpop.f32.mrb[0].mxu0
    %1692 = vdwg.mxu0
    %v1725 = vunpack.c.l.b16 %v1428
    %v1726 = vunpack.c.h.b16 %v1428
    %v1727 = vunpack.c.l.b16 %v1429
    %v1728 = vunpack.c.h.b16 %v1429
    %v1729 = vunpack.c.l.b16 %v1430
    %v1730 = vunpack.c.h.b16 %v1430
    %v1731 = vunpack.c.l.b16 %v1431
    %v1732 = vunpack.c.h.b16 %v1431
    %v1733 = vunpack.c.l.b16 %v1432
    %v1734 = vunpack.c.h.b16 %v1432
    %v1735 = vunpack.c.l.b16 %v1433
    %v1736 = vunpack.c.h.b16 %v1433
    %v1737 = vunpack.c.l.b16 %v1434
    %v1738 = vunpack.c.h.b16 %v1434
    %v1739 = vunpack.c.l.b16 %v1435
    %v1740 = vunpack.c.h.b16 %v1435
    %v1741 = vunpack.c.l.b16 %v1436
    %v1742 = vunpack.c.h.b16 %v1436
    %v1743 = vunpack.c.l.b16 %v1437
    %v1744 = vunpack.c.h.b16 %v1437
    %v1745 = vunpack.c.l.b16 %v1438
    %v1746 = vunpack.c.h.b16 %v1438
    %v1747 = vunpack.c.l.b16 %v1439
    %v1748 = vunpack.c.h.b16 %v1439
    %v1749 = vunpack.c.l.b16 %v1440
    %v1750 = vunpack.c.h.b16 %v1440
    %v1751 = vunpack.c.l.b16 %v1441
    %v1752 = vunpack.c.h.b16 %v1441
    %v1753 = vunpack.c.l.b16 %v1442
    %v1754 = vunpack.c.h.b16 %v1442
    %v1755 = vunpack.c.l.b16 %v1443
    %v1756 = vunpack.c.h.b16 %v1443
    %v1757 = vunpack.c.l.b16 %v1444
    %v1758 = vunpack.c.h.b16 %v1444
    %v1759 = vunpack.c.l.b16 %v1445
    %v1760 = vunpack.c.h.b16 %v1445
    %v1761 = vunpack.c.l.b16 %v1446
    %v1762 = vunpack.c.h.b16 %v1446
    %v1763 = vunpack.c.l.b16 %v1447
    %v1764 = vunpack.c.h.b16 %v1447
    %v1765 = vunpack.c.l.b16 %v1448
    %v1766 = vunpack.c.h.b16 %v1448
    %v1767 = vunpack.c.l.b16 %v1449
    %v1768 = vunpack.c.h.b16 %v1449
    %v1769 = vunpack.c.l.b16 %v1450
    %v1770 = vunpack.c.h.b16 %v1450
    %v1771 = vunpack.c.l.b16 %v1451
    %v1772 = vunpack.c.h.b16 %v1451
    %v1773 = vunpack.c.l.b16 %v1452
    %v1774 = vunpack.c.h.b16 %v1452
    %v1775 = vunpack.c.l.b16 %v1453
    %v1776 = vunpack.c.h.b16 %v1453
    %v1777 = vunpack.c.l.b16 %v1454
    %v1778 = vunpack.c.h.b16 %v1454
    %v1779 = vunpack.c.l.b16 %v1455
    %v1780 = vunpack.c.h.b16 %v1455
    %v1781 = vunpack.c.l.b16 %v1456
    %v1782 = vunpack.c.h.b16 %v1456
    %v1783 = vunpack.c.l.b16 %v1457
    %v1784 = vunpack.c.h.b16 %v1457
    %v1785 = vunpack.c.l.b16 %v1458
    %v1786 = vunpack.c.h.b16 %v1458
    %v1787 = vunpack.c.l.b16 %v1459
    %v1788 = vunpack.c.h.b16 %v1459
    %v1789 = vpack.c.b16 %v1727, %v1725
    %v1790 = vpack.c.b16 %v1728, %v1726
    %v1791 = vpack.c.b16 %v1731, %v1729
    %v1792 = vpack.c.b16 %v1732, %v1730
    %v1793 = vpack.c.b16 %v1735, %v1733
    %v1794 = vpack.c.b16 %v1736, %v1734
    %v1795 = vpack.c.b16 %v1739, %v1737
    %v1796 = vpack.c.b16 %v1740, %v1738
    %v1797 = vpack.c.b16 %v1743, %v1741
    %v1798 = vpack.c.b16 %v1744, %v1742
    %v1799 = vpack.c.b16 %v1747, %v1745
    %v1800 = vpack.c.b16 %v1748, %v1746
    %v1801 = vpack.c.b16 %v1751, %v1749
    %v1802 = vpack.c.b16 %v1752, %v1750
    %v1803 = vpack.c.b16 %v1755, %v1753
    %v1804 = vpack.c.b16 %v1756, %v1754
    %v1805 = vpack.c.b16 %v1759, %v1757
    %v1806 = vpack.c.b16 %v1760, %v1758
    %v1807 = vpack.c.b16 %v1763, %v1761
    %v1808 = vpack.c.b16 %v1764, %v1762
    %v1809 = vpack.c.b16 %v1767, %v1765
    %v1810 = vpack.c.b16 %v1768, %v1766
    %v1811 = vpack.c.b16 %v1771, %v1769
    %v1812 = vpack.c.b16 %v1772, %v1770
    %v1813 = vpack.c.b16 %v1775, %v1773
    %v1814 = vpack.c.b16 %v1776, %v1774
    %v1815 = vpack.c.b16 %v1779, %v1777
    %v1816 = vpack.c.b16 %v1780, %v1778
    %v1817 = vpack.c.b16 %v1783, %v1781
    %v1818 = vpack.c.b16 %v1784, %v1782
    %v1819 = vpack.c.b16 %v1787, %v1785
    %v1820 = vpack.c.b16 %v1788, %v1786
    %1853 = vmatprep.subr.bf16.mxu0 %v1790
    %1854 = vmatpush1.bf16.msra.mxu0 %v1789
    %1855 = vmatprep.subr.bf16.mxu0 %v1792
    %1856 = vmatpush1.bf16.msra.mxu0 %v1791
    %1857 = vmatprep.subr.bf16.mxu0 %v1794
    %1858 = vmatpush1.bf16.msra.mxu0 %v1793
    %1859 = vmatprep.subr.bf16.mxu0 %v1796
    %1860 = vmatpush1.bf16.msra.mxu0 %v1795
    %1861 = vmatprep.subr.bf16.mxu0 %v1798
    %1862 = vmatpush1.bf16.msra.mxu0 %v1797
    %1863 = vmatprep.subr.bf16.mxu0 %v1800
    %1864 = vmatpush1.bf16.msra.mxu0 %v1799
    %1865 = vmatprep.subr.bf16.mxu0 %v1802
    %1866 = vmatpush1.bf16.msra.mxu0 %v1801
    %1867 = vmatprep.subr.bf16.mxu0 %v1804
    %1868 = vmatpush1.bf16.msra.mxu0 %v1803
    %1869 = vmatprep.subr.bf16.mxu0 %v1806
    %1870 = vmatpush1.bf16.msra.mxu0 %v1805
    %1871 = vmatprep.subr.bf16.mxu0 %v1808
    %1872 = vmatpush1.bf16.msra.mxu0 %v1807
    %1873 = vmatprep.subr.bf16.mxu0 %v1810
    %1874 = vmatpush1.bf16.msra.mxu0 %v1809
    %1875 = vmatprep.subr.bf16.mxu0 %v1812
    %1876 = vmatpush1.bf16.msra.mxu0 %v1811
    %1877 = vmatprep.subr.bf16.mxu0 %v1814
    %1878 = vmatpush1.bf16.msra.mxu0 %v1813
    %1879 = vmatprep.subr.bf16.mxu0 %v1816
    %1880 = vmatpush1.bf16.msra.mxu0 %v1815
    %1881 = vmatprep.subr.bf16.mxu0 %v1818
    %1882 = vmatpush1.bf16.msra.mxu0 %v1817
    %1883 = vmatprep.subr.bf16.mxu0 %v1820
    %1884 = vmatpush1.bf16.msra.mxu0 %v1819
    %1885 = vmatprep.mubr.bf16.mxu0 %v1427
    %1886 = vmatmul.mubr.bf16.gmra.mrb[0].mxu0 %v1426
    %v1887 = vpop.f32.mrb[0].mxu0
    %v1888 = vadd.f32 %v1687, %v1887
    %v1889 = vpop.f32.mrb[0].mxu0
    %v1890 = vadd.f32 %v1689, %v1889
    %v1891 = vpop.f32.mrb[0].mxu0
    %v1892 = vpop.f32.mrb[0].mxu0
    %1893 = vdwg.mxu0
    %v1894 = vld [vmem:[%s20] sm:$0x3]
    %v1896 = vlaneseq
    %v1897 = vshrl.u32 %v1896, 7
    %v1898 = vsub.s32 0, %v1897
    %v1899 = vrot.slane %v1894, %v1898
    %v1900 = vlaneseq
    %v1901 = vshrl.u32 %v1900, 7
    %v1902 = vsub.s32 1, %v1901
    %v1903 = vrot.slane %v1894, %v1902
    %v1906 = vadd.f32 %v1888, %v1899
    %v1907 = vadd.f32 %v1890, %v1903
    %v1908 = vpack.c.bf16 %v1906, %v1906
    %v1909 = vpack.c.bf16 %v1907, %v1907
    %v1910 = vunpack.c.l.bf16 %v1908
    %v1911 = vunpack.c.l.bf16 %v1909
    %v1912 = vld [vmem:[%s21] sm:$0x3]
    %v1914 = vlaneseq
    %v1915 = vshrl.u32 %v1914, 7
    %v1916 = vsub.s32 0, %v1915
    %v1917 = vrot.slane %v1912, %v1916
    %v1918 = vlaneseq
    %v1919 = vshrl.u32 %v1918, 7
    %v1920 = vsub.s32 1, %v1919
    %v1921 = vrot.slane %v1912, %v1920
    %v1924 = vmul.f32 %v1910, %v1917
    %v1925 = vmul.f32 %v1911, %v1921
    %vm1926 = vcmask 1041408
    %v1927 = vsel %vm1926, %v1924, 0.0
    %v1928 = vsel %vm1926, %v1925, 0.0
    %v1929 = vadd.f32 %v1927, %v1928
    %1930 = vadd.xlane.f32.xlu0 %v1929
    %v1931 = vpop.xlane.xlu0 %1930
    %v1932 = vld [vmem:[#allocation2] sm:$0x1]
    %v1934 = vlaneseq
    %v1935 = vshrl.u32 %v1934, 7
    %v1936 = vsub.s32 0, %v1935
    %v1937 = vrot.slane %v1932, %v1936
    %v1939 = vadd.f32 %v1931, %v1937
    %vm1940 = vcmask 1024
    %v1941 = vsel %vm1940, %v1939, 0.0
    %1942 = vadd.xlane.f32.xlu0 %v1941
    %v1943 = vpop.xlane.xlu0 %1942
    %v1944 = vrot.slane %v1943, 4
    %v1945 = vadd.f32 %v1943, %v1944
    %v1946 = vrot.slane %v1945, 2
    %v1947 = vadd.f32 %v1945, %v1946
    %v1948 = vrot.slane %v1947, 1
    %v1949 = vadd.f32 %v1947, %v1948
    %s1950 = vtos %v1949
    %v1951 = vstv %s1950
    %v1952 = vadd.f32 %v1951, 0.0
    %1953 = vst [vmem:[%s23] sm:$0xff] %v1952
    // Predicated region
    $region98: #{msdiscriminator_forward.20} parent=1 // pred_check
      _
    $region99: #{msdiscriminator_forward.20} parent=1 // pred_check_branch
      %1955 = sbr.rel (0) target = $region101
    $region100: #{msdiscriminator_forward.20} parent=1 // pred_region
      _
    $region101: #{msdiscriminator_forward.20} parent=1 // pred_fallthru
      _
    // Predicated region
    $region102: #{msdiscriminator_forward.20} parent=1 // pred_check
      _
    $region103: #{msdiscriminator_forward.20} parent=1 // pred_check_branch
      %1957 = sbr.rel (0) target = $region105
    $region104: #{msdiscriminator_forward.20} parent=1 // pred_region
      _
    $region105: #{msdiscriminator_forward.20} parent=1 // pred_fallthru
      _
    %1958 = vsyncpa [#allocation4], 1

// kernel: msdiscriminator_forward.12
$region0: #{msdiscriminator_forward.12}
  #allocation0 [shape = 'u32[]', space=smem, size = 0x4, offset = 0x4, fixed_abs, tag = 'smem constant byte address 0x4 - core index']
  #allocation1 [shape = 'u32[144,128]{1,0:T(1,128)}', space=vmem, size = 0x12000, scoped, tag = 'internal scratch']
  %s0 = inlined_call_operand.vmem [shape: bf16[128,36], index: 0, kind: input, shape index: {}]
  %s1 = inlined_call_operand.vmem [shape: bf16[128,4], index: 1, kind: input, shape index: {}]
  %s2 = inlined_call_operand.vmem [shape: bf16[36,128], index: 2, kind: input, shape index: {}]
  %s3 = inlined_call_operand.vmem [shape: f32[1,128], index: 3, kind: input, shape index: {}]
  %s4 = inlined_call_operand.vmem [shape: bf16[128,128], index: 4, kind: input, shape index: {}]
  %s5 = inlined_call_operand.vmem [shape: bf16[4,128], index: 5, kind: input, shape index: {}]
  %s6 = inlined_call_operand.vmem [shape: f32[1,128], index: 6, kind: input, shape index: {}]
  %s7 = inlined_call_operand.vmem [shape: bf16[128,128], index: 7, kind: output, shape index: {}]
  %s8 = sld [smem:[#allocation0]]
  $region38: #{msdiscriminator_forward.12} parent=0
    _
  %s10 = ssub.s32 1, %s8
  %s11 = scalar_select 0, %s10, %s8
  // Predicated region
  $region2: #{msdiscriminator_forward.12} parent=0 // pred_check
    _
  $region3: #{msdiscriminator_forward.12} parent=0 // pred_check_branch
    %13 = sbr.rel (0) target = $region5
  $region4: #{msdiscriminator_forward.12} parent=0 // pred_region
    _
  $region5: #{msdiscriminator_forward.12} parent=0 // pred_fallthru
    _
  // Predicated region
  $region6: #{msdiscriminator_forward.12} parent=0 // pred_check
    _
  $region7: #{msdiscriminator_forward.12} parent=0 // pred_check_branch
    %15 = sbr.rel (0) target = $region9
  $region8: #{msdiscriminator_forward.12} parent=0 // pred_region
    _
  $region9: #{msdiscriminator_forward.12} parent=0 // pred_fallthru
    _
  // Predicated region
  $region10: #{msdiscriminator_forward.12} parent=0 // pred_check
    _
  $region11: #{msdiscriminator_forward.12} parent=0 // pred_check_branch
    %17 = sbr.rel (0) target = $region13
  $region12: #{msdiscriminator_forward.12} parent=0 // pred_region
    _
  $region13: #{msdiscriminator_forward.12} parent=0 // pred_fallthru
    _
  // Predicated region
  $region14: #{msdiscriminator_forward.12} parent=0 // pred_check
    _
  $region15: #{msdiscriminator_forward.12} parent=0 // pred_check_branch
    %19 = sbr.rel (0) target = $region17
  $region16: #{msdiscriminator_forward.12} parent=0 // pred_region
    _
  $region17: #{msdiscriminator_forward.12} parent=0 // pred_fallthru
    _
  // Predicated region
  $region18: #{msdiscriminator_forward.12} parent=0 // pred_check
    _
  $region19: #{msdiscriminator_forward.12} parent=0 // pred_check_branch
    %21 = sbr.rel (0) target = $region21
  $region20: #{msdiscriminator_forward.12} parent=0 // pred_region
    _
  $region21: #{msdiscriminator_forward.12} parent=0 // pred_fallthru
    _
  // Predicated region
  $region22: #{msdiscriminator_forward.12} parent=0 // pred_check
    _
  $region23: #{msdiscriminator_forward.12} parent=0 // pred_check_branch
    %23 = sbr.rel (0) target = $region25
  $region24: #{msdiscriminator_forward.12} parent=0 // pred_region
    _
  $region25: #{msdiscriminator_forward.12} parent=0 // pred_fallthru
    _
  // Predicated region
  $region26: #{msdiscriminator_forward.12} parent=0 // pred_check
    _
  $region27: #{msdiscriminator_forward.12} parent=0 // pred_check_branch
    %25 = sbr.rel (0) target = $region29
  $region28: #{msdiscriminator_forward.12} parent=0 // pred_region
    _
  $region29: #{msdiscriminator_forward.12} parent=0 // pred_fallthru
    _
  %v28 = vld [vmem:[%s0] sm:$0xf]
  %v29 = vld [vmem:[%s0 + $0x4] sm:$0xf]
  %v30 = vld [vmem:[%s0 + $0x8] sm:$0xf]
  %v31 = vld [vmem:[%s0 + $0xc] sm:$0xf]
  %v32 = vld [vmem:[%s0 + $0x10] sm:$0xf]
  %v33 = vld [vmem:[%s0 + $0x14] sm:$0xf]
  %v34 = vld [vmem:[%s0 + $0x18] sm:$0xf]
  %v35 = vld [vmem:[%s0 + $0x1c] sm:$0xf]
  %v36 = vld [vmem:[%s0 + $0x20] sm:$0xf]
  %v37 = vld [vmem:[%s0 + $0x24] sm:$0xf]
  %v38 = vld [vmem:[%s0 + $0x28] sm:$0xf]
  %v39 = vld [vmem:[%s0 + $0x2c] sm:$0xf]
  %v40 = vld [vmem:[%s0 + $0x30] sm:$0xf]
  %v41 = vld [vmem:[%s0 + $0x34] sm:$0xf]
  %v42 = vld [vmem:[%s0 + $0x38] sm:$0xf]
  %v43 = vld [vmem:[%s0 + $0x3c] sm:$0xf]
  %vm44 = vcmp.gt.bf16.partialorder %v28, 0
  %vm45 = vcmp.gt.bf16.partialorder %v29, 0
  %vm46 = vcmp.gt.bf16.partialorder %v30, 0
  %vm47 = vcmp.gt.bf16.partialorder %v31, 0
  %vm48 = vcmp.gt.bf16.partialorder %v32, 0
  %vm49 = vcmp.gt.bf16.partialorder %v33, 0
  %vm50 = vcmp.gt.bf16.partialorder %v34, 0
  %vm51 = vcmp.gt.bf16.partialorder %v35, 0
  %vm52 = vcmp.gt.bf16.partialorder %v36, 0
  %vm53 = vcmp.gt.bf16.partialorder %v37, 0
  %vm54 = vcmp.gt.bf16.partialorder %v38, 0
  %vm55 = vcmp.gt.bf16.partialorder %v39, 0
  %vm56 = vcmp.gt.bf16.partialorder %v40, 0
  %vm57 = vcmp.gt.bf16.partialorder %v41, 0
  %vm58 = vcmp.gt.bf16.partialorder %v42, 0
  %vm59 = vcmp.gt.bf16.partialorder %v43, 0
  %v60 = vmul.bf16 %v28, 1009007652
  %v61 = vmul.bf16 %v29, 1009007652
  %v62 = vmul.bf16 %v30, 1009007652
  %v63 = vmul.bf16 %v31, 1009007652
  %v64 = vmul.bf16 %v32, 1009007652
  %v65 = vmul.bf16 %v33, 1009007652
  %v66 = vmul.bf16 %v34, 1009007652
  %v67 = vmul.bf16 %v35, 1009007652
  %v68 = vmul.bf16 %v36, 1009007652
  %v69 = vmul.bf16 %v37, 1009007652
  %v70 = vmul.bf16 %v38, 1009007652
  %v71 = vmul.bf16 %v39, 1009007652
  %v72 = vmul.bf16 %v40, 1009007652
  %v73 = vmul.bf16 %v41, 1009007652
  %v74 = vmul.bf16 %v42, 1009007652
  %v75 = vmul.bf16 %v43, 1009007652
  %v76 = vsel %vm44, %v28, %v60
  %v77 = vsel %vm45, %v29, %v61
  %v78 = vsel %vm46, %v30, %v62
  %v79 = vsel %vm47, %v31, %v63
  %v80 = vsel %vm48, %v32, %v64
  %v81 = vsel %vm49, %v33, %v65
  %v82 = vsel %vm50, %v34, %v66
  %v83 = vsel %vm51, %v35, %v67
  %v84 = vsel %vm52, %v36, %v68
  %v85 = vsel %vm53, %v37, %v69
  %v86 = vsel %vm54, %v38, %v70
  %v87 = vsel %vm55, %v39, %v71
  %v88 = vsel %vm56, %v40, %v72
  %v89 = vsel %vm57, %v41, %v73
  %v90 = vsel %vm58, %v42, %v74
  %v91 = vsel %vm59, %v43, %v75
  %v92 = vld [vmem:[%s2] sm:$0xf]
  %v93 = vld [vmem:[%s2 + $0x4] sm:$0xf]
  %v94 = vld [vmem:[%s2 + $0x8] sm:$0xf]
  %v95 = vld [vmem:[%s2 + $0xc] sm:$0xf]
  %v96 = vld [vmem:[%s2 + $0x10] sm:$0x3]
  %v97 = vld [vmem:[%s3] sm:$0x1]
  %v99 = vlaneseq
  %v100 = vshrl.u32 %v99, 7
  %v101 = vsub.s32 0, %v100
  %v102 = vrot.slane %v97, %v101
  %v120 = vunpack.c.l.b16 %v76
  %v121 = vunpack.c.l.b16 %v77
  %v122 = vunpack.c.l.b16 %v78
  %v123 = vunpack.c.l.b16 %v79
  %v124 = vunpack.c.l.b16 %v80
  %v125 = vunpack.c.l.b16 %v81
  %v126 = vunpack.c.l.b16 %v82
  %v127 = vunpack.c.l.b16 %v83
  %v128 = vunpack.c.l.b16 %v84
  %v129 = vunpack.c.l.b16 %v85
  %v130 = vunpack.c.l.b16 %v86
  %v131 = vunpack.c.l.b16 %v87
  %v132 = vunpack.c.l.b16 %v88
  %v133 = vunpack.c.l.b16 %v89
  %v134 = vunpack.c.l.b16 %v90
  %v135 = vunpack.c.l.b16 %v91
  %v136 = vpack.c.b16 %v121, %v120
  %v137 = vpack.c.b16 %v123, %v122
  %v138 = vpack.c.b16 %v125, %v124
  %v139 = vpack.c.b16 %v127, %v126
  %v140 = vpack.c.b16 %v129, %v128
  %v141 = vpack.c.b16 %v131, %v130
  %v142 = vpack.c.b16 %v133, %v132
  %v143 = vpack.c.b16 %v135, %v134
  %v149 = vunpack.c.l.b16 %v92
  %v150 = vunpack.c.l.b16 %v93
  %v151 = vunpack.c.l.b16 %v94
  %v152 = vunpack.c.l.b16 %v95
  %v153 = vunpack.c.l.b16 %v96
  %v154 = vpack.c.b16 %v150, %v149
  %v155 = vpack.c.b16 %v152, %v151
  %v156 = vpack.c.b16 %v153, %v153
  %vm159 = vcmask 293888
  %v161 = vsel %vm159, %v136, 0
  %v164 = vsel %vm159, %v137, 0
  %v167 = vsel %vm159, %v138, 0
  %v170 = vsel %vm159, %v139, 0
  %v173 = vsel %vm159, %v140, 0
  %v176 = vsel %vm159, %v141, 0
  %v179 = vsel %vm159, %v142, 0
  %v182 = vsel %vm159, %v143, 0
  %vm184 = vcmask 1041408
  %v186 = vsel %vm184, %v156, 0
  %188 = vmatprep.subr.bf16.mxu0 0
  %189 = vmatpush1.bf16.msra.mxu0 %v154
  %190 = vmatprep.subr.bf16.mxu0 0
  %191 = vmatpush1.bf16.msra.mxu0 %v155
  %192 = vmatprep.subr.bf16.mxu0 0
  %193 = vmatpush1.bf16.msra.mxu0 %v186
  %194 = vmatprep.subr.bf16.mxu0 0
  %195 = vmatpush1.bf16.msra.mxu0 0
  %196 = vmatprep.subr.bf16.mxu0 0
  %197 = vmatpush1.bf16.msra.mxu0 0
  %198 = vmatprep.subr.bf16.mxu0 0
  %199 = vmatpush1.bf16.msra.mxu0 0
  %200 = vmatprep.subr.bf16.mxu0 0
  %201 = vmatpush1.bf16.msra.mxu0 0
  %202 = vmatprep.subr.bf16.mxu0 0
  %203 = vmatpush1.bf16.msra.mxu0 0
  %204 = vmatprep.subr.bf16.mxu0 0
  %205 = vmatpush1.bf16.msra.mxu0 0
  %206 = vmatprep.subr.bf16.mxu0 0
  %207 = vmatpush1.bf16.msra.mxu0 0
  %208 = vmatprep.subr.bf16.mxu0 0
  %209 = vmatpush1.bf16.msra.mxu0 0
  %210 = vmatprep.subr.bf16.mxu0 0
  %211 = vmatpush1.bf16.msra.mxu0 0
  %212 = vmatprep.subr.bf16.mxu0 0
  %213 = vmatpush1.bf16.msra.mxu0 0
  %214 = vmatprep.subr.bf16.mxu0 0
  %215 = vmatpush1.bf16.msra.mxu0 0
  %216 = vmatprep.subr.bf16.mxu0 0
  %217 = vmatpush1.bf16.msra.mxu0 0
  %218 = vmatprep.subr.bf16.mxu0 0
  %219 = vmatpush1.bf16.msra.mxu0 0
  %220 = vmatprep.mubr.bf16.mxu0 0
  %221 = vmatmul.mubr.bf16.gmra.mrb[0].mxu0 %v161
  %v222 = vpop.f32.mrb[0].mxu0
  %v223 = vadd.f32 %v102, %v222
  %v224 = vpop.f32.mrb[0].mxu0
  %v225 = vpop.f32.mrb[0].mxu0
  %v226 = vadd.f32 %v102, %v225
  %v227 = vpop.f32.mrb[0].mxu0
  %228 = vmatprep.mubr.bf16.mxu0 0
  %229 = vmatmul.mubr.bf16.gmra.mrb[0].mxu0 %v164
  %v230 = vpop.f32.mrb[0].mxu0
  %v231 = vadd.f32 %v102, %v230
  %v232 = vpop.f32.mrb[0].mxu0
  %v233 = vpop.f32.mrb[0].mxu0
  %v234 = vadd.f32 %v102, %v233
  %v235 = vpop.f32.mrb[0].mxu0
  %236 = vmatprep.mubr.bf16.mxu0 0
  %237 = vmatmul.mubr.bf16.gmra.mrb[0].mxu0 %v167
  %v238 = vpop.f32.mrb[0].mxu0
  %v239 = vadd.f32 %v102, %v238
  %v240 = vpop.f32.mrb[0].mxu0
  %v241 = vpop.f32.mrb[0].mxu0
  %v242 = vadd.f32 %v102, %v241
  %v243 = vpop.f32.mrb[0].mxu0
  %244 = vmatprep.mubr.bf16.mxu0 0
  %245 = vmatmul.mubr.bf16.gmra.mrb[0].mxu0 %v170
  %v246 = vpop.f32.mrb[0].mxu0
  %v247 = vadd.f32 %v102, %v246
  %v248 = vpop.f32.mrb[0].mxu0
  %v249 = vpop.f32.mrb[0].mxu0
  %v250 = vadd.f32 %v102, %v249
  %v251 = vpop.f32.mrb[0].mxu0
  %252 = vmatprep.mubr.bf16.mxu0 0
  %253 = vmatmul.mubr.bf16.gmra.mrb[0].mxu0 %v173
  %v254 = vpop.f32.mrb[0].mxu0
  %v255 = vadd.f32 %v102, %v254
  %v256 = vpop.f32.mrb[0].mxu0
  %v257 = vpop.f32.mrb[0].mxu0
  %v258 = vadd.f32 %v102, %v257
  %v259 = vpop.f32.mrb[0].mxu0
  %260 = vmatprep.mubr.bf16.mxu0 0
  %261 = vmatmul.mubr.bf16.gmra.mrb[0].mxu0 %v176
  %v262 = vpop.f32.mrb[0].mxu0
  %v263 = vadd.f32 %v102, %v262
  %v264 = vpop.f32.mrb[0].mxu0
  %v265 = vpop.f32.mrb[0].mxu0
  %v266 = vadd.f32 %v102, %v265
  %v267 = vpop.f32.mrb[0].mxu0
  %268 = vmatprep.mubr.bf16.mxu0 0
  %269 = vmatmul.mubr.bf16.gmra.mrb[0].mxu0 %v179
  %v270 = vpop.f32.mrb[0].mxu0
  %v271 = vadd.f32 %v102, %v270
  %v272 = vpop.f32.mrb[0].mxu0
  %v273 = vpop.f32.mrb[0].mxu0
  %v274 = vadd.f32 %v102, %v273
  %v275 = vpop.f32.mrb[0].mxu0
  %276 = vmatprep.mubr.bf16.mxu0 0
  %277 = vmatmul.mubr.bf16.gmra.mrb[0].mxu0 %v182
  %v278 = vpop.f32.mrb[0].mxu0
  %v279 = vadd.f32 %v102, %v278
  %v280 = vpop.f32.mrb[0].mxu0
  %v281 = vpop.f32.mrb[0].mxu0
  %v282 = vadd.f32 %v102, %v281
  %v283 = vpop.f32.mrb[0].mxu0
  %284 = vdwg.mxu0
  %vm285 = vcmp.gt.f32.partialorder %v223, 0.0
  %vm286 = vcmp.gt.f32.partialorder %v226, 0.0
  %vm287 = vcmp.gt.f32.partialorder %v231, 0.0
  %vm288 = vcmp.gt.f32.partialorder %v234, 0.0
  %vm289 = vcmp.gt.f32.partialorder %v239, 0.0
  %vm290 = vcmp.gt.f32.partialorder %v242, 0.0
  %vm291 = vcmp.gt.f32.partialorder %v247, 0.0
  %vm292 = vcmp.gt.f32.partialorder %v250, 0.0
  %vm293 = vcmp.gt.f32.partialorder %v255, 0.0
  %vm294 = vcmp.gt.f32.partialorder %v258, 0.0
  %vm295 = vcmp.gt.f32.partialorder %v263, 0.0
  %vm296 = vcmp.gt.f32.partialorder %v266, 0.0
  %vm297 = vcmp.gt.f32.partialorder %v271, 0.0
  %vm298 = vcmp.gt.f32.partialorder %v274, 0.0
  %vm299 = vcmp.gt.f32.partialorder %v279, 0.0
  %vm300 = vcmp.gt.f32.partialorder %v282, 0.0
  %v301 = vmul.f32 %v223, 0.01
  %v302 = vmul.f32 %v226, 0.01
  %v303 = vmul.f32 %v231, 0.01
  %v304 = vmul.f32 %v234, 0.01
  %v305 = vmul.f32 %v239, 0.01
  %v306 = vmul.f32 %v242, 0.01
  %v307 = vmul.f32 %v247, 0.01
  %v308 = vmul.f32 %v250, 0.01
  %v309 = vmul.f32 %v255, 0.01
  %v310 = vmul.f32 %v258, 0.01
  %v311 = vmul.f32 %v263, 0.01
  %v312 = vmul.f32 %v266, 0.01
  %v313 = vmul.f32 %v271, 0.01
  %v314 = vmul.f32 %v274, 0.01
  %v315 = vmul.f32 %v279, 0.01
  %v316 = vmul.f32 %v282, 0.01
  %v317 = vsel %vm285, %v223, %v301
  %v318 = vsel %vm286, %v226, %v302
  %v319 = vsel %vm287, %v231, %v303
  %v320 = vsel %vm288, %v234, %v304
  %v321 = vsel %vm289, %v239, %v305
  %v322 = vsel %vm290, %v242, %v306
  %v323 = vsel %vm291, %v247, %v307
  %v324 = vsel %vm292, %v250, %v308
  %v325 = vsel %vm293, %v255, %v309
  %v326 = vsel %vm294, %v258, %v310
  %v327 = vsel %vm295, %v263, %v311
  %v328 = vsel %vm296, %v266, %v312
  %v329 = vsel %vm297, %v271, %v313
  %v330 = vsel %vm298, %v274, %v314
  %v331 = vsel %vm299, %v279, %v315
  %v332 = vsel %vm300, %v282, %v316
  %v333 = vpack.c.bf16 %v318, %v317
  %v334 = vpack.c.bf16 %v320, %v319
  %v335 = vpack.c.bf16 %v322, %v321
  %v336 = vpack.c.bf16 %v324, %v323
  %v337 = vpack.c.bf16 %v326, %v325
  %v338 = vpack.c.bf16 %v328, %v327
  %v339 = vpack.c.bf16 %v330, %v329
  %v340 = vpack.c.bf16 %v332, %v331
  %v341 = vld [vmem:[%s4] sm:$0xf]
  %v342 = vld [vmem:[%s4 + $0x4] sm:$0xf]
  %v343 = vld [vmem:[%s4 + $0x8] sm:$0xf]
  %v344 = vld [vmem:[%s4 + $0xc] sm:$0xf]
  %v345 = vld [vmem:[%s4 + $0x10] sm:$0xf]
  %v346 = vld [vmem:[%s4 + $0x14] sm:$0xf]
  %v347 = vld [vmem:[%s4 + $0x18] sm:$0xf]
  %v348 = vld [vmem:[%s4 + $0x1c] sm:$0xf]
  %v349 = vld [vmem:[%s4 + $0x20] sm:$0xf]
  %v350 = vld [vmem:[%s4 + $0x24] sm:$0xf]
  %v351 = vld [vmem:[%s4 + $0x28] sm:$0xf]
  %v352 = vld [vmem:[%s4 + $0x2c] sm:$0xf]
  %v353 = vld [vmem:[%s4 + $0x30] sm:$0xf]
  %v354 = vld [vmem:[%s4 + $0x34] sm:$0xf]
  %v355 = vld [vmem:[%s4 + $0x38] sm:$0xf]
  %v356 = vld [vmem:[%s4 + $0x3c] sm:$0xf]
  %v357 = vld [vmem:[%s1] sm:$0xf]
  %v358 = vld [vmem:[%s1 + $0x4] sm:$0xf]
  %v359 = vld [vmem:[%s1 + $0x8] sm:$0xf]
  %v360 = vld [vmem:[%s1 + $0xc] sm:$0xf]
  %v361 = vld [vmem:[%s1 + $0x10] sm:$0xf]
  %v362 = vld [vmem:[%s1 + $0x14] sm:$0xf]
  %v363 = vld [vmem:[%s1 + $0x18] sm:$0xf]
  %v364 = vld [vmem:[%s1 + $0x1c] sm:$0xf]
  %v365 = vld [vmem:[%s1 + $0x20] sm:$0xf]
  %v366 = vld [vmem:[%s1 + $0x24] sm:$0xf]
  %v367 = vld [vmem:[%s1 + $0x28] sm:$0xf]
  %v368 = vld [vmem:[%s1 + $0x2c] sm:$0xf]
  %v369 = vld [vmem:[%s1 + $0x30] sm:$0xf]
  %v370 = vld [vmem:[%s1 + $0x34] sm:$0xf]
  %v371 = vld [vmem:[%s1 + $0x38] sm:$0xf]
  %v372 = vld [vmem:[%s1 + $0x3c] sm:$0xf]
  %v373 = vld [vmem:[%s5] sm:$0x3]
  %v390 = vunpack.c.l.b16 %v357
  %v391 = vunpack.c.l.b16 %v358
  %v392 = vunpack.c.l.b16 %v359
  %v393 = vunpack.c.l.b16 %v360
  %v394 = vunpack.c.l.b16 %v361
  %v395 = vunpack.c.l.b16 %v362
  %v396 = vunpack.c.l.b16 %v363
  %v397 = vunpack.c.l.b16 %v364
  %v398 = vunpack.c.l.b16 %v365
  %v399 = vunpack.c.l.b16 %v366
  %v400 = vunpack.c.l.b16 %v367
  %v401 = vunpack.c.l.b16 %v368
  %v402 = vunpack.c.l.b16 %v369
  %v403 = vunpack.c.l.b16 %v370
  %v404 = vunpack.c.l.b16 %v371
  %v405 = vunpack.c.l.b16 %v372
  %v406 = vpack.c.b16 %v391, %v390
  %v407 = vpack.c.b16 %v393, %v392
  %v408 = vpack.c.b16 %v395, %v394
  %v409 = vpack.c.b16 %v397, %v396
  %v410 = vpack.c.b16 %v399, %v398
  %v411 = vpack.c.b16 %v401, %v400
  %v412 = vpack.c.b16 %v403, %v402
  %v413 = vpack.c.b16 %v405, %v404
  %vm414 = vcmask 31744
  %v416 = vsel %vm414, %v406, 0
  %v419 = vsel %vm414, %v407, 0
  %v422 = vsel %vm414, %v408, 0
  %v425 = vsel %vm414, %v409, 0
  %v428 = vsel %vm414, %v410, 0
  %v431 = vsel %vm414, %v411, 0
  %v434 = vsel %vm414, %v412, 0
  %v437 = vsel %vm414, %v413, 0
  %v440 = vsel %vm184, %v373, 0
  %442 = vmatprep.subr.bf16.mxu0 0
  %443 = vmatpush1.bf16.msra.mxu0 %v440
  %444 = vmatprep.subr.bf16.mxu0 0
  %445 = vmatpush1.bf16.msra.mxu0 0
  %446 = vmatprep.subr.bf16.mxu0 0
  %447 = vmatpush1.bf16.msra.mxu0 0
  %448 = vmatprep.subr.bf16.mxu0 0
  %449 = vmatpush1.bf16.msra.mxu0 0
  %450 = vmatprep.subr.bf16.mxu0 0
  %451 = vmatpush1.bf16.msra.mxu0 0
  %452 = vmatprep.subr.bf16.mxu0 0
  %453 = vmatpush1.bf16.msra.mxu0 0
  %454 = vmatprep.subr.bf16.mxu0 0
  %455 = vmatpush1.bf16.msra.mxu0 0
  %456 = vmatprep.subr.bf16.mxu0 0
  %457 = vmatpush1.bf16.msra.mxu0 0
  %458 = vmatprep.subr.bf16.mxu0 0
  %459 = vmatpush1.bf16.msra.mxu0 0
  %460 = vmatprep.subr.bf16.mxu0 0
  %461 = vmatpush1.bf16.msra.mxu0 0
  %462 = vmatprep.subr.bf16.mxu0 0
  %463 = vmatpush1.bf16.msra.mxu0 0
  %464 = vmatprep.subr.bf16.mxu0 0
  %465 = vmatpush1.bf16.msra.mxu0 0
  %466 = vmatprep.subr.bf16.mxu0 0
  %467 = vmatpush1.bf16.msra.mxu0 0
  %468 = vmatprep.subr.bf16.mxu0 0
  %469 = vmatpush1.bf16.msra.mxu0 0
  %470 = vmatprep.subr.bf16.mxu0 0
  %471 = vmatpush1.bf16.msra.mxu0 0
  %472 = vmatprep.subr.bf16.mxu0 0
  %473 = vmatpush1.bf16.msra.mxu0 0
  %474 = vmatprep.mubr.bf16.mxu0 0
  %475 = vmatmul.mubr.bf16.gmra.mrb[0].mxu0 %v416
  %v476 = vpop.f32.mrb[0].mxu0
  %v477 = vadd.f32 0.0, %v476
  %v478 = vpop.f32.mrb[0].mxu0
  %v479 = vpop.f32.mrb[0].mxu0
  %v480 = vadd.f32 0.0, %v479
  %v481 = vpop.f32.mrb[0].mxu0
  %482 = vmatprep.mubr.bf16.mxu0 0
  %483 = vmatmul.mubr.bf16.gmra.mrb[0].mxu0 %v419
  %v484 = vpop.f32.mrb[0].mxu0
  %v485 = vadd.f32 0.0, %v484
  %v486 = vpop.f32.mrb[0].mxu0
  %v487 = vpop.f32.mrb[0].mxu0
  %v488 = vadd.f32 0.0, %v487
  %v489 = vpop.f32.mrb[0].mxu0
  %490 = vmatprep.mubr.bf16.mxu0 0
  %491 = vmatmul.mubr.bf16.gmra.mrb[0].mxu0 %v422
  %v492 = vpop.f32.mrb[0].mxu0
  %v493 = vadd.f32 0.0, %v492
  %v494 = vpop.f32.mrb[0].mxu0
  %v495 = vpop.f32.mrb[0].mxu0
  %v496 = vadd.f32 0.0, %v495
  %v497 = vpop.f32.mrb[0].mxu0
  %498 = vmatprep.mubr.bf16.mxu0 0
  %499 = vmatmul.mubr.bf16.gmra.mrb[0].mxu0 %v425
  %v500 = vpop.f32.mrb[0].mxu0
  %v501 = vadd.f32 0.0, %v500
  %v502 = vpop.f32.mrb[0].mxu0
  %v503 = vpop.f32.mrb[0].mxu0
  %v504 = vadd.f32 0.0, %v503
  %v505 = vpop.f32.mrb[0].mxu0
  %506 = vmatprep.mubr.bf16.mxu0 0
  %507 = vmatmul.mubr.bf16.gmra.mrb[0].mxu0 %v428
  %v508 = vpop.f32.mrb[0].mxu0
  %v509 = vadd.f32 0.0, %v508
  %v510 = vpop.f32.mrb[0].mxu0
  %v511 = vpop.f32.mrb[0].mxu0
  %v512 = vadd.f32 0.0, %v511
  %v513 = vpop.f32.mrb[0].mxu0
  %514 = vmatprep.mubr.bf16.mxu0 0
  %515 = vmatmul.mubr.bf16.gmra.mrb[0].mxu0 %v431
  %v516 = vpop.f32.mrb[0].mxu0
  %v517 = vadd.f32 0.0, %v516
  %v518 = vpop.f32.mrb[0].mxu0
  %v519 = vpop.f32.mrb[0].mxu0
  %v520 = vadd.f32 0.0, %v519
  %v521 = vpop.f32.mrb[0].mxu0
  %522 = vmatprep.mubr.bf16.mxu0 0
  %523 = vmatmul.mubr.bf16.gmra.mrb[0].mxu0 %v434
  %v524 = vpop.f32.mrb[0].mxu0
  %v525 = vadd.f32 0.0, %v524
  %v526 = vpop.f32.mrb[0].mxu0
  %v527 = vpop.f32.mrb[0].mxu0
  %v528 = vadd.f32 0.0, %v527
  %v529 = vpop.f32.mrb[0].mxu0
  %530 = vmatprep.mubr.bf16.mxu0 0
  %531 = vmatmul.mubr.bf16.gmra.mrb[0].mxu0 %v437
  %v532 = vpop.f32.mrb[0].mxu0
  %v533 = vadd.f32 0.0, %v532
  %v534 = vpop.f32.mrb[0].mxu0
  %v535 = vpop.f32.mrb[0].mxu0
  %v536 = vadd.f32 0.0, %v535
  %v537 = vpop.f32.mrb[0].mxu0
  %538 = vdwg.mxu0
  %v555 = vunpack.c.l.b16 %v341
  %v556 = vunpack.c.l.b16 %v342
  %v557 = vunpack.c.l.b16 %v343
  %v558 = vunpack.c.l.b16 %v344
  %v559 = vunpack.c.l.b16 %v345
  %v560 = vunpack.c.l.b16 %v346
  %v561 = vunpack.c.l.b16 %v347
  %v562 = vunpack.c.l.b16 %v348
  %v563 = vunpack.c.l.b16 %v349
  %v564 = vunpack.c.l.b16 %v350
  %v565 = vunpack.c.l.b16 %v351
  %v566 = vunpack.c.l.b16 %v352
  %v567 = vunpack.c.l.b16 %v353
  %v568 = vunpack.c.l.b16 %v354
  %v569 = vunpack.c.l.b16 %v355
  %v570 = vunpack.c.l.b16 %v356
  %v571 = vpack.c.b16 %v556, %v555
  %v572 = vpack.c.b16 %v558, %v557
  %v573 = vpack.c.b16 %v560, %v559
  %v574 = vpack.c.b16 %v562, %v561
  %v575 = vpack.c.b16 %v564, %v563
  %v576 = vpack.c.b16 %v566, %v565
  %v577 = vpack.c.b16 %v568, %v567
  %v578 = vpack.c.b16 %v570, %v569
  %587 = vmatprep.subr.bf16.mxu0 0
  %588 = vmatpush1.bf16.msra.mxu0 %v571
  %589 = vmatprep.subr.bf16.mxu0 0
  %590 = vmatpush1.bf16.msra.mxu0 %v572
  %591 = vmatprep.subr.bf16.mxu0 0
  %592 = vmatpush1.bf16.msra.mxu0 %v573
  %593 = vmatprep.subr.bf16.mxu0 0
  %594 = vmatpush1.bf16.msra.mxu0 %v574
  %595 = vmatprep.subr.bf16.mxu0 0
  %596 = vmatpush1.bf16.msra.mxu0 %v575
  %597 = vmatprep.subr.bf16.mxu0 0
  %598 = vmatpush1.bf16.msra.mxu0 %v576
  %599 = vmatprep.subr.bf16.mxu0 0
  %600 = vmatpush1.bf16.msra.mxu0 %v577
  %601 = vmatprep.subr.bf16.mxu0 0
  %602 = vmatpush1.bf16.msra.mxu0 %v578
  %603 = vmatprep.subr.bf16.mxu0 0
  %604 = vmatpush1.bf16.msra.mxu0 0
  %605 = vmatprep.subr.bf16.mxu0 0
  %606 = vmatpush1.bf16.msra.mxu0 0
  %607 = vmatprep.subr.bf16.mxu0 0
  %608 = vmatpush1.bf16.msra.mxu0 0
  %609 = vmatprep.subr.bf16.mxu0 0
  %610 = vmatpush1.bf16.msra.mxu0 0
  %611 = vmatprep.subr.bf16.mxu0 0
  %612 = vmatpush1.bf16.msra.mxu0 0
  %613 = vmatprep.subr.bf16.mxu0 0
  %614 = vmatpush1.bf16.msra.mxu0 0
  %615 = vmatprep.subr.bf16.mxu0 0
  %616 = vmatpush1.bf16.msra.mxu0 0
  %617 = vmatprep.subr.bf16.mxu0 0
  %618 = vmatpush1.bf16.msra.mxu0 0
  %619 = vmatprep.mubr.bf16.mxu0 0
  %620 = vmatmul.mubr.bf16.gmra.mrb[0].mxu0 %v333
  %v621 = vpop.f32.mrb[0].mxu0
  %v622 = vadd.f32 %v477, %v621
  %v623 = vpop.f32.mrb[0].mxu0
  %v624 = vpop.f32.mrb[0].mxu0
  %v625 = vadd.f32 %v480, %v624
  %v626 = vpop.f32.mrb[0].mxu0
  %627 = vmatprep.mubr.bf16.mxu0 0
  %628 = vmatmul.mubr.bf16.gmra.mrb[0].mxu0 %v334
  %v629 = vpop.f32.mrb[0].mxu0
  %v630 = vadd.f32 %v485, %v629
  %v631 = vpop.f32.mrb[0].mxu0
  %v632 = vpop.f32.mrb[0].mxu0
  %v633 = vadd.f32 %v488, %v632
  %v634 = vpop.f32.mrb[0].mxu0
  %635 = vmatprep.mubr.bf16.mxu0 0
  %636 = vmatmul.mubr.bf16.gmra.mrb[0].mxu0 %v335
  %v637 = vpop.f32.mrb[0].mxu0
  %v638 = vadd.f32 %v493, %v637
  %v639 = vpop.f32.mrb[0].mxu0
  %v640 = vpop.f32.mrb[0].mxu0
  %v641 = vadd.f32 %v496, %v640
  %v642 = vpop.f32.mrb[0].mxu0
  %643 = vmatprep.mubr.bf16.mxu0 0
  %644 = vmatmul.mubr.bf16.gmra.mrb[0].mxu0 %v336
  %v645 = vpop.f32.mrb[0].mxu0
  %v646 = vadd.f32 %v501, %v645
  %v647 = vpop.f32.mrb[0].mxu0
  %v648 = vpop.f32.mrb[0].mxu0
  %v649 = vadd.f32 %v504, %v648
  %v650 = vpop.f32.mrb[0].mxu0
  %651 = vmatprep.mubr.bf16.mxu0 0
  %652 = vmatmul.mubr.bf16.gmra.mrb[0].mxu0 %v337
  %v653 = vpop.f32.mrb[0].mxu0
  %v654 = vadd.f32 %v509, %v653
  %v655 = vpop.f32.mrb[0].mxu0
  %v656 = vpop.f32.mrb[0].mxu0
  %v657 = vadd.f32 %v512, %v656
  %v658 = vpop.f32.mrb[0].mxu0
  %659 = vmatprep.mubr.bf16.mxu0 0
  %660 = vmatmul.mubr.bf16.gmra.mrb[0].mxu0 %v338
  %v661 = vpop.f32.mrb[0].mxu0
  %v662 = vadd.f32 %v517, %v661
  %v663 = vpop.f32.mrb[0].mxu0
  %v664 = vpop.f32.mrb[0].mxu0
  %v665 = vadd.f32 %v520, %v664
  %v666 = vpop.f32.mrb[0].mxu0
  %667 = vmatprep.mubr.bf16.mxu0 0
  %668 = vmatmul.mubr.bf16.gmra.mrb[0].mxu0 %v339
  %v669 = vpop.f32.mrb[0].mxu0
  %v670 = vadd.f32 %v525, %v669
  %v671 = vpop.f32.mrb[0].mxu0
  %v672 = vpop.f32.mrb[0].mxu0
  %v673 = vadd.f32 %v528, %v672
  %v674 = vpop.f32.mrb[0].mxu0
  %675 = vmatprep.mubr.bf16.mxu0 0
  %676 = vmatmul.mubr.bf16.gmra.mrb[0].mxu0 %v340
  %v677 = vpop.f32.mrb[0].mxu0
  %v678 = vadd.f32 %v533, %v677
  %v679 = vpop.f32.mrb[0].mxu0
  %v680 = vpop.f32.mrb[0].mxu0
  %v681 = vadd.f32 %v536, %v680
  %v682 = vpop.f32.mrb[0].mxu0
  %683 = vdwg.mxu0
  %v684 = vld [vmem:[%s6] sm:$0x1]
  %v686 = vlaneseq
  %v687 = vshrl.u32 %v686, 7
  %v688 = vsub.s32 0, %v687
  %v689 = vrot.slane %v684, %v688
  %v691 = vadd.f32 %v622, %v689
  %v692 = vadd.f32 %v625, %v689
  %v693 = vadd.f32 %v630, %v689
  %v694 = vadd.f32 %v633, %v689
  %v695 = vadd.f32 %v638, %v689
  %v696 = vadd.f32 %v641, %v689
  %v697 = vadd.f32 %v646, %v689
  %v698 = vadd.f32 %v649, %v689
  %v699 = vadd.f32 %v654, %v689
  %v700 = vadd.f32 %v657, %v689
  %v701 = vadd.f32 %v662, %v689
  %v702 = vadd.f32 %v665, %v689
  %v703 = vadd.f32 %v670, %v689
  %v704 = vadd.f32 %v673, %v689
  %v705 = vadd.f32 %v678, %v689
  %v706 = vadd.f32 %v681, %v689
  %v707 = vpack.c.bf16 %v692, %v691
  %v708 = vpack.c.bf16 %v694, %v693
  %v709 = vpack.c.bf16 %v696, %v695
  %v710 = vpack.c.bf16 %v698, %v697
  %v711 = vpack.c.bf16 %v700, %v699
  %v712 = vpack.c.bf16 %v702, %v701
  %v713 = vpack.c.bf16 %v704, %v703
  %v714 = vpack.c.bf16 %v706, %v705
  %v723 = vunpack.c.l.b16 %v707
  %v724 = vunpack.c.h.b16 %v707
  %v725 = vunpack.c.l.b16 %v708
  %v726 = vunpack.c.h.b16 %v708
  %v727 = vunpack.c.l.b16 %v709
  %v728 = vunpack.c.h.b16 %v709
  %v729 = vunpack.c.l.b16 %v710
  %v730 = vunpack.c.h.b16 %v710
  %v731 = vunpack.c.l.b16 %v711
  %v732 = vunpack.c.h.b16 %v711
  %v733 = vunpack.c.l.b16 %v712
  %v734 = vunpack.c.h.b16 %v712
  %v735 = vunpack.c.l.b16 %v713
  %v736 = vunpack.c.h.b16 %v713
  %v737 = vunpack.c.l.b16 %v714
  %v738 = vunpack.c.h.b16 %v714
  %v739 = vpack.c.b16 %v723, %v723
  %v740 = vpack.c.b16 %v724, %v724
  %v741 = vpack.c.b16 %v725, %v725
  %v742 = vpack.c.b16 %v726, %v726
  %v743 = vpack.c.b16 %v727, %v727
  %v744 = vpack.c.b16 %v728, %v728
  %v745 = vpack.c.b16 %v729, %v729
  %v746 = vpack.c.b16 %v730, %v730
  %v747 = vpack.c.b16 %v731, %v731
  %v748 = vpack.c.b16 %v732, %v732
  %v749 = vpack.c.b16 %v733, %v733
  %v750 = vpack.c.b16 %v734, %v734
  %v751 = vpack.c.b16 %v735, %v735
  %v752 = vpack.c.b16 %v736, %v736
  %v753 = vpack.c.b16 %v737, %v737
  %v754 = vpack.c.b16 %v738, %v738
  %771 = vst [vmem:[%s7] sm:$0xf] %v739
  %772 = vst [vmem:[%s7 + $0x4] sm:$0xf] %v740
  %773 = vst [vmem:[%s7 + $0x8] sm:$0xf] %v741
  %774 = vst [vmem:[%s7 + $0xc] sm:$0xf] %v742
  %775 = vst [vmem:[%s7 + $0x10] sm:$0xf] %v743
  %776 = vst [vmem:[%s7 + $0x14] sm:$0xf] %v744
  %777 = vst [vmem:[%s7 + $0x18] sm:$0xf] %v745
  %778 = vst [vmem:[%s7 + $0x1c] sm:$0xf] %v746
  %779 = vst [vmem:[%s7 + $0x20] sm:$0xf] %v747
  %780 = vst [vmem:[%s7 + $0x24] sm:$0xf] %v748
  %781 = vst [vmem:[%s7 + $0x28] sm:$0xf] %v749
  %782 = vst [vmem:[%s7 + $0x2c] sm:$0xf] %v750
  %783 = vst [vmem:[%s7 + $0x30] sm:$0xf] %v751
  %784 = vst [vmem:[%s7 + $0x34] sm:$0xf] %v752
  %785 = vst [vmem:[%s7 + $0x38] sm:$0xf] %v753
  %786 = vst [vmem:[%s7 + $0x3c] sm:$0xf] %v754
  // Predicated region
  $region30: #{msdiscriminator_forward.12} parent=0 // pred_check
    _
  $region31: #{msdiscriminator_forward.12} parent=0 // pred_check_branch
    %788 = sbr.rel (0) target = $region33
  $region32: #{msdiscriminator_forward.12} parent=0 // pred_region
    _
  $region33: #{msdiscriminator_forward.12} parent=0 // pred_fallthru
    _
  // Predicated region
  $region34: #{msdiscriminator_forward.12} parent=0 // pred_check
    _
  $region35: #{msdiscriminator_forward.12} parent=0 // pred_check_branch
    %790 = sbr.rel (0) target = $region37
  $region36: #{msdiscriminator_forward.12} parent=0 // pred_region
    _
  $region37: #{msdiscriminator_forward.12} parent=0 // pred_fallthru
    _

// kernel: msdiscriminator_forward.13
$region0: #{msdiscriminator_forward.13}
  #allocation0 [shape = 'u32[]', space=smem, size = 0x4, offset = 0x4, fixed_abs, tag = 'smem constant byte address 0x4 - core index']
  #allocation1 [shape = 'u32[144,128]{1,0:T(1,128)}', space=vmem, size = 0x12000, scoped, tag = 'internal scratch']
  %s0 = inlined_call_operand.vmem [shape: bf16[32,1152], index: 0, kind: input, shape index: {}]
  %s1 = inlined_call_operand.vmem [shape: bf16[32,128], index: 1, kind: input, shape index: {}]
  %s2 = inlined_call_operand.vmem [shape: bf16[1152,128], index: 2, kind: input, shape index: {}]
  %s3 = inlined_call_operand.vmem [shape: f32[1,128], index: 3, kind: input, shape index: {}]
  %s4 = inlined_call_operand.vmem [shape: bf16[128,128], index: 4, kind: input, shape index: {}]
  %s5 = inlined_call_operand.vmem [shape: bf16[128,128], index: 5, kind: input, shape index: {}]
  %s6 = inlined_call_operand.vmem [shape: f32[1,128], index: 6, kind: input, shape index: {}]
  %s7 = inlined_call_operand.vmem [shape: bf16[32,128], index: 7, kind: output, shape index: {}]
  %s8 = sld [smem:[#allocation0]]
  $region38: #{msdiscriminator_forward.13} parent=0
    _
  %s10 = ssub.s32 1, %s8
  %s11 = scalar_select 0, %s10, %s8
  // Predicated region
  $region2: #{msdiscriminator_forward.13} parent=0 // pred_check
    _
  $region3: #{msdiscriminator_forward.13} parent=0 // pred_check_branch
    %13 = sbr.rel (0) target = $region5
  $region4: #{msdiscriminator_forward.13} parent=0 // pred_region
    _
  $region5: #{msdiscriminator_forward.13} parent=0 // pred_fallthru
    _
  // Predicated region
  $region6: #{msdiscriminator_forward.13} parent=0 // pred_check
    _
  $region7: #{msdiscriminator_forward.13} parent=0 // pred_check_branch
    %15 = sbr.rel (0) target = $region9
  $region8: #{msdiscriminator_forward.13} parent=0 // pred_region
    _
  $region9: #{msdiscriminator_forward.13} parent=0 // pred_fallthru
    _
  // Predicated region
  $region10: #{msdiscriminator_forward.13} parent=0 // pred_check
    _
  $region11: #{msdiscriminator_forward.13} parent=0 // pred_check_branch
    %17 = sbr.rel (0) target = $region13
  $region12: #{msdiscriminator_forward.13} parent=0 // pred_region
    _
  $region13: #{msdiscriminator_forward.13} parent=0 // pred_fallthru
    _
  // Predicated region
  $region14: #{msdiscriminator_forward.13} parent=0 // pred_check
    _
  $region15: #{msdiscriminator_forward.13} parent=0 // pred_check_branch
    %19 = sbr.rel (0) target = $region17
  $region16: #{msdiscriminator_forward.13} parent=0 // pred_region
    _
  $region17: #{msdiscriminator_forward.13} parent=0 // pred_fallthru
    _
  // Predicated region
  $region18: #{msdiscriminator_forward.13} parent=0 // pred_check
    _
  $region19: #{msdiscriminator_forward.13} parent=0 // pred_check_branch
    %21 = sbr.rel (0) target = $region21
  $region20: #{msdiscriminator_forward.13} parent=0 // pred_region
    _
  $region21: #{msdiscriminator_forward.13} parent=0 // pred_fallthru
    _
  // Predicated region
  $region22: #{msdiscriminator_forward.13} parent=0 // pred_check
    _
  $region23: #{msdiscriminator_forward.13} parent=0 // pred_check_branch
    %23 = sbr.rel (0) target = $region25
  $region24: #{msdiscriminator_forward.13} parent=0 // pred_region
    _
  $region25: #{msdiscriminator_forward.13} parent=0 // pred_fallthru
    _
  // Predicated region
  $region26: #{msdiscriminator_forward.13} parent=0 // pred_check
    _
  $region27: #{msdiscriminator_forward.13} parent=0 // pred_check_branch
    %25 = sbr.rel (0) target = $region29
  $region28: #{msdiscriminator_forward.13} parent=0 // pred_region
    _
  $region29: #{msdiscriminator_forward.13} parent=0 // pred_fallthru
    _
  %v28 = vld [vmem:[%s0] sm:$0xff]
  %v29 = vld [vmem:[%s0 + $0x8] sm:$0xff]
  %v30 = vld [vmem:[%s0 + $0x10] sm:$0xff]
  %v31 = vld [vmem:[%s0 + $0x18] sm:$0xff]
  %v32 = vld [vmem:[%s0 + $0x20] sm:$0xf]
  %v33 = vld [vmem:[%s0 + $0x24] sm:$0xff]
  %v34 = vld [vmem:[%s0 + $0x2c] sm:$0xff]
  %v35 = vld [vmem:[%s0 + $0x34] sm:$0xff]
  %v36 = vld [vmem:[%s0 + $0x3c] sm:$0xff]
  %v37 = vld [vmem:[%s0 + $0x44] sm:$0xf]
  %v38 = vld [vmem:[%s0 + $0x48] sm:$0xff]
  %v39 = vld [vmem:[%s0 + $0x50] sm:$0xff]
  %v40 = vld [vmem:[%s0 + $0x58] sm:$0xff]
  %v41 = vld [vmem:[%s0 + $0x60] sm:$0xff]
  %v42 = vld [vmem:[%s0 + $0x68] sm:$0xf]
  %v43 = vld [vmem:[%s0 + $0x6c] sm:$0xff]
  %v44 = vld [vmem:[%s0 + $0x74] sm:$0xff]
  %v45 = vld [vmem:[%s0 + $0x7c] sm:$0xff]
  %v46 = vld [vmem:[%s0 + $0x84] sm:$0xff]
  %v47 = vld [vmem:[%s0 + $0x8c] sm:$0xf]
  %vm48 = vcmp.gt.bf16.partialorder %v28, 0
  %vm49 = vcmp.gt.bf16.partialorder %v29, 0
  %vm50 = vcmp.gt.bf16.partialorder %v30, 0
  %vm51 = vcmp.gt.bf16.partialorder %v31, 0
  %vm52 = vcmp.gt.bf16.partialorder %v32, 0
  %vm53 = vcmp.gt.bf16.partialorder %v33, 0
  %vm54 = vcmp.gt.bf16.partialorder %v34, 0
  %vm55 = vcmp.gt.bf16.partialorder %v35, 0
  %vm56 = vcmp.gt.bf16.partialorder %v36, 0
  %vm57 = vcmp.gt.bf16.partialorder %v37, 0
  %vm58 = vcmp.gt.bf16.partialorder %v38, 0
  %vm59 = vcmp.gt.bf16.partialorder %v39, 0
  %vm60 = vcmp.gt.bf16.partialorder %v40, 0
  %vm61 = vcmp.gt.bf16.partialorder %v41, 0
  %vm62 = vcmp.gt.bf16.partialorder %v42, 0
  %vm63 = vcmp.gt.bf16.partialorder %v43, 0
  %vm64 = vcmp.gt.bf16.partialorder %v44, 0
  %vm65 = vcmp.gt.bf16.partialorder %v45, 0
  %vm66 = vcmp.gt.bf16.partialorder %v46, 0
  %vm67 = vcmp.gt.bf16.partialorder %v47, 0
  %v68 = vmul.bf16 %v28, 1009007652
  %v69 = vmul.bf16 %v29, 1009007652
  %v70 = vmul.bf16 %v30, 1009007652
  %v71 = vmul.bf16 %v31, 1009007652
  %v72 = vmul.bf16 %v32, 1009007652
  %v73 = vmul.bf16 %v33, 1009007652
  %v74 = vmul.bf16 %v34, 1009007652
  %v75 = vmul.bf16 %v35, 1009007652
  %v76 = vmul.bf16 %v36, 1009007652
  %v77 = vmul.bf16 %v37, 1009007652
  %v78 = vmul.bf16 %v38, 1009007652
  %v79 = vmul.bf16 %v39, 1009007652
  %v80 = vmul.bf16 %v40, 1009007652
  %v81 = vmul.bf16 %v41, 1009007652
  %v82 = vmul.bf16 %v42, 1009007652
  %v83 = vmul.bf16 %v43, 1009007652
  %v84 = vmul.bf16 %v44, 1009007652
  %v85 = vmul.bf16 %v45, 1009007652
  %v86 = vmul.bf16 %v46, 1009007652
  %v87 = vmul.bf16 %v47, 1009007652
  %v88 = vsel %vm48, %v28, %v68
  %v89 = vsel %vm49, %v29, %v69
  %v90 = vsel %vm50, %v30, %v70
  %v91 = vsel %vm51, %v31, %v71
  %v92 = vsel %vm52, %v32, %v72
  %v93 = vsel %vm53, %v33, %v73
  %v94 = vsel %vm54, %v34, %v74
  %v95 = vsel %vm55, %v35, %v75
  %v96 = vsel %vm56, %v36, %v76
  %v97 = vsel %vm57, %v37, %v77
  %v98 = vsel %vm58, %v38, %v78
  %v99 = vsel %vm59, %v39, %v79
  %v100 = vsel %vm60, %v40, %v80
  %v101 = vsel %vm61, %v41, %v81
  %v102 = vsel %vm62, %v42, %v82
  %v103 = vsel %vm63, %v43, %v83
  %v104 = vsel %vm64, %v44, %v84
  %v105 = vsel %vm65, %v45, %v85
  %v106 = vsel %vm66, %v46, %v86
  %v107 = vsel %vm67, %v47, %v87
  %v108 = vld [vmem:[%s2] sm:$0xf]
  %v109 = vld [vmem:[%s2 + $0x4] sm:$0xf]
  %v110 = vld [vmem:[%s2 + $0x8] sm:$0xf]
  %v111 = vld [vmem:[%s2 + $0xc] sm:$0xf]
  %v112 = vld [vmem:[%s2 + $0x10] sm:$0xf]
  %v113 = vld [vmem:[%s2 + $0x14] sm:$0xf]
  %v114 = vld [vmem:[%s2 + $0x18] sm:$0xf]
  %v115 = vld [vmem:[%s2 + $0x1c] sm:$0xf]
  %v116 = vld [vmem:[%s2 + $0x20] sm:$0xf]
  %v117 = vld [vmem:[%s2 + $0x24] sm:$0xf]
  %v118 = vld [vmem:[%s2 + $0x28] sm:$0xf]
  %v119 = vld [vmem:[%s2 + $0x2c] sm:$0xf]
  %v120 = vld [vmem:[%s2 + $0x30] sm:$0xf]
  %v121 = vld [vmem:[%s2 + $0x34] sm:$0xf]
  %v122 = vld [vmem:[%s2 + $0x38] sm:$0xf]
  %v123 = vld [vmem:[%s2 + $0x3c] sm:$0xf]
  %v124 = vld [vmem:[%s2 + $0x40] sm:$0xf]
  %v125 = vld [vmem:[%s2 + $0x44] sm:$0xf]
  %v126 = vld [vmem:[%s2 + $0x48] sm:$0xf]
  %v127 = vld [vmem:[%s2 + $0x4c] sm:$0xf]
  %v128 = vld [vmem:[%s2 + $0x50] sm:$0xf]
  %v129 = vld [vmem:[%s2 + $0x54] sm:$0xf]
  %v130 = vld [vmem:[%s2 + $0x58] sm:$0xf]
  %v131 = vld [vmem:[%s2 + $0x5c] sm:$0xf]
  %v132 = vld [vmem:[%s2 + $0x60] sm:$0xf]
  %v133 = vld [vmem:[%s2 + $0x64] sm:$0xf]
  %v134 = vld [vmem:[%s2 + $0x68] sm:$0xf]
  %v135 = vld [vmem:[%s2 + $0x6c] sm:$0xf]
  %v136 = vld [vmem:[%s2 + $0x70] sm:$0xf]
  %v137 = vld [vmem:[%s2 + $0x74] sm:$0xf]
  %v138 = vld [vmem:[%s2 + $0x78] sm:$0xf]
  %v139 = vld [vmem:[%s2 + $0x7c] sm:$0xf]
  %v140 = vld [vmem:[%s2 + $0x80] sm:$0xf]
  %v141 = vld [vmem:[%s2 + $0x84] sm:$0xf]
  %v142 = vld [vmem:[%s2 + $0x88] sm:$0xf]
  %v143 = vld [vmem:[%s2 + $0x8c] sm:$0xf]
  %v144 = vld [vmem:[%s2 + $0x90] sm:$0xf]
  %v145 = vld [vmem:[%s2 + $0x94] sm:$0xf]
  %v146 = vld [vmem:[%s2 + $0x98] sm:$0xf]
  %v147 = vld [vmem:[%s2 + $0x9c] sm:$0xf]
  %v148 = vld [vmem:[%s2 + $0xa0] sm:$0xf]
  %v149 = vld [vmem:[%s2 + $0xa4] sm:$0xf]
  %v150 = vld [vmem:[%s2 + $0xa8] sm:$0xf]
  %v151 = vld [vmem:[%s2 + $0xac] sm:$0xf]
  %v152 = vld [vmem:[%s2 + $0xb0] sm:$0xf]
  %v153 = vld [vmem:[%s2 + $0xb4] sm:$0xf]
  %v154 = vld [vmem:[%s2 + $0xb8] sm:$0xf]
  %v155 = vld [vmem:[%s2 + $0xbc] sm:$0xf]
  %v156 = vld [vmem:[%s2 + $0xc0] sm:$0xf]
  %v157 = vld [vmem:[%s2 + $0xc4] sm:$0xf]
  %v158 = vld [vmem:[%s2 + $0xc8] sm:$0xf]
  %v159 = vld [vmem:[%s2 + $0xcc] sm:$0xf]
  %v160 = vld [vmem:[%s2 + $0xd0] sm:$0xf]
  %v161 = vld [vmem:[%s2 + $0xd4] sm:$0xf]
  %v162 = vld [vmem:[%s2 + $0xd8] sm:$0xf]
  %v163 = vld [vmem:[%s2 + $0xdc] sm:$0xf]
  %v164 = vld [vmem:[%s2 + $0xe0] sm:$0xf]
  %v165 = vld [vmem:[%s2 + $0xe4] sm:$0xf]
  %v166 = vld [vmem:[%s2 + $0xe8] sm:$0xf]
  %v167 = vld [vmem:[%s2 + $0xec] sm:$0xf]
  %v168 = vld [vmem:[%s2 + $0xf0] sm:$0xf]
  %v169 = vld [vmem:[%s2 + $0xf4] sm:$0xf]
  %v170 = vld [vmem:[%s2 + $0xf8] sm:$0xf]
  %v171 = vld [vmem:[%s2 + $0xfc] sm:$0xf]
  %v172 = vld [vmem:[%s2 + $0x100] sm:$0xf]
  %v173 = vld [vmem:[%s2 + $0x104] sm:$0xf]
  %v174 = vld [vmem:[%s2 + $0x108] sm:$0xf]
  %v175 = vld [vmem:[%s2 + $0x10c] sm:$0xf]
  %v176 = vld [vmem:[%s2 + $0x110] sm:$0xf]
  %v177 = vld [vmem:[%s2 + $0x114] sm:$0xf]
  %v178 = vld [vmem:[%s2 + $0x118] sm:$0xf]
  %v179 = vld [vmem:[%s2 + $0x11c] sm:$0xf]
  %v180 = vld [vmem:[%s2 + $0x120] sm:$0xf]
  %v181 = vld [vmem:[%s2 + $0x124] sm:$0xf]
  %v182 = vld [vmem:[%s2 + $0x128] sm:$0xf]
  %v183 = vld [vmem:[%s2 + $0x12c] sm:$0xf]
  %v184 = vld [vmem:[%s2 + $0x130] sm:$0xf]
  %v185 = vld [vmem:[%s2 + $0x134] sm:$0xf]
  %v186 = vld [vmem:[%s2 + $0x138] sm:$0xf]
  %v187 = vld [vmem:[%s2 + $0x13c] sm:$0xf]
  %v188 = vld [vmem:[%s2 + $0x140] sm:$0xf]
  %v189 = vld [vmem:[%s2 + $0x144] sm:$0xf]
  %v190 = vld [vmem:[%s2 + $0x148] sm:$0xf]
  %v191 = vld [vmem:[%s2 + $0x14c] sm:$0xf]
  %v192 = vld [vmem:[%s2 + $0x150] sm:$0xf]
  %v193 = vld [vmem:[%s2 + $0x154] sm:$0xf]
  %v194 = vld [vmem:[%s2 + $0x158] sm:$0xf]
  %v195 = vld [vmem:[%s2 + $0x15c] sm:$0xf]
  %v196 = vld [vmem:[%s2 + $0x160] sm:$0xf]
  %v197 = vld [vmem:[%s2 + $0x164] sm:$0xf]
  %v198 = vld [vmem:[%s2 + $0x168] sm:$0xf]
  %v199 = vld [vmem:[%s2 + $0x16c] sm:$0xf]
  %v200 = vld [vmem:[%s2 + $0x170] sm:$0xf]
  %v201 = vld [vmem:[%s2 + $0x174] sm:$0xf]
  %v202 = vld [vmem:[%s2 + $0x178] sm:$0xf]
  %v203 = vld [vmem:[%s2 + $0x17c] sm:$0xf]
  %v204 = vld [vmem:[%s2 + $0x180] sm:$0xf]
  %v205 = vld [vmem:[%s2 + $0x184] sm:$0xf]
  %v206 = vld [vmem:[%s2 + $0x188] sm:$0xf]
  %v207 = vld [vmem:[%s2 + $0x18c] sm:$0xf]
  %v208 = vld [vmem:[%s2 + $0x190] sm:$0xf]
  %v209 = vld [vmem:[%s2 + $0x194] sm:$0xf]
  %v210 = vld [vmem:[%s2 + $0x198] sm:$0xf]
  %v211 = vld [vmem:[%s2 + $0x19c] sm:$0xf]
  %v212 = vld [vmem:[%s2 + $0x1a0] sm:$0xf]
  %v213 = vld [vmem:[%s2 + $0x1a4] sm:$0xf]
  %v214 = vld [vmem:[%s2 + $0x1a8] sm:$0xf]
  %v215 = vld [vmem:[%s2 + $0x1ac] sm:$0xf]
  %v216 = vld [vmem:[%s2 + $0x1b0] sm:$0xf]
  %v217 = vld [vmem:[%s2 + $0x1b4] sm:$0xf]
  %v218 = vld [vmem:[%s2 + $0x1b8] sm:$0xf]
  %v219 = vld [vmem:[%s2 + $0x1bc] sm:$0xf]
  %v220 = vld [vmem:[%s2 + $0x1c0] sm:$0xf]
  %v221 = vld [vmem:[%s2 + $0x1c4] sm:$0xf]
  %v222 = vld [vmem:[%s2 + $0x1c8] sm:$0xf]
  %v223 = vld [vmem:[%s2 + $0x1cc] sm:$0xf]
  %v224 = vld [vmem:[%s2 + $0x1d0] sm:$0xf]
  %v225 = vld [vmem:[%s2 + $0x1d4] sm:$0xf]
  %v226 = vld [vmem:[%s2 + $0x1d8] sm:$0xf]
  %v227 = vld [vmem:[%s2 + $0x1dc] sm:$0xf]
  %v228 = vld [vmem:[%s2 + $0x1e0] sm:$0xf]
  %v229 = vld [vmem:[%s2 + $0x1e4] sm:$0xf]
  %v230 = vld [vmem:[%s2 + $0x1e8] sm:$0xf]
  %v231 = vld [vmem:[%s2 + $0x1ec] sm:$0xf]
  %v232 = vld [vmem:[%s2 + $0x1f0] sm:$0xf]
  %v233 = vld [vmem:[%s2 + $0x1f4] sm:$0xf]
  %v234 = vld [vmem:[%s2 + $0x1f8] sm:$0xf]
  %v235 = vld [vmem:[%s2 + $0x1fc] sm:$0xf]
  %v236 = vld [vmem:[%s2 + $0x200] sm:$0xf]
  %v237 = vld [vmem:[%s2 + $0x204] sm:$0xf]
  %v238 = vld [vmem:[%s2 + $0x208] sm:$0xf]
  %v239 = vld [vmem:[%s2 + $0x20c] sm:$0xf]
  %v240 = vld [vmem:[%s2 + $0x210] sm:$0xf]
  %v241 = vld [vmem:[%s2 + $0x214] sm:$0xf]
  %v242 = vld [vmem:[%s2 + $0x218] sm:$0xf]
  %v243 = vld [vmem:[%s2 + $0x21c] sm:$0xf]
  %v244 = vld [vmem:[%s2 + $0x220] sm:$0xf]
  %v245 = vld [vmem:[%s2 + $0x224] sm:$0xf]
  %v246 = vld [vmem:[%s2 + $0x228] sm:$0xf]
  %v247 = vld [vmem:[%s2 + $0x22c] sm:$0xf]
  %v248 = vld [vmem:[%s2 + $0x230] sm:$0xf]
  %v249 = vld [vmem:[%s2 + $0x234] sm:$0xf]
  %v250 = vld [vmem:[%s2 + $0x238] sm:$0xf]
  %v251 = vld [vmem:[%s2 + $0x23c] sm:$0xf]
  %v252 = vld [vmem:[%s3] sm:$0x1]
  %v254 = vlaneseq
  %v255 = vshrl.u32 %v254, 7
  %v256 = vsub.s32 0, %v255
  %v257 = vrot.slane %v252, %v256
  %v279 = vunpack.c.l.b16 %v88
  %v280 = vunpack.c.h.b16 %v88
  %v281 = vunpack.c.l.b16 %v89
  %v282 = vunpack.c.h.b16 %v89
  %v283 = vunpack.c.l.b16 %v90
  %v284 = vunpack.c.h.b16 %v90
  %v285 = vunpack.c.l.b16 %v91
  %v286 = vunpack.c.h.b16 %v91
  %v287 = vunpack.c.l.b16 %v92
  %v288 = vunpack.c.l.b16 %v93
  %v289 = vunpack.c.h.b16 %v93
  %v290 = vunpack.c.l.b16 %v94
  %v291 = vunpack.c.h.b16 %v94
  %v292 = vunpack.c.l.b16 %v95
  %v293 = vunpack.c.h.b16 %v95
  %v294 = vunpack.c.l.b16 %v96
  %v295 = vunpack.c.h.b16 %v96
  %v296 = vunpack.c.l.b16 %v97
  %v297 = vunpack.c.l.b16 %v98
  %v298 = vunpack.c.h.b16 %v98
  %v299 = vunpack.c.l.b16 %v99
  %v300 = vunpack.c.h.b16 %v99
  %v301 = vunpack.c.l.b16 %v100
  %v302 = vunpack.c.h.b16 %v100
  %v303 = vunpack.c.l.b16 %v101
  %v304 = vunpack.c.h.b16 %v101
  %v305 = vunpack.c.l.b16 %v102
  %v306 = vunpack.c.l.b16 %v103
  %v307 = vunpack.c.h.b16 %v103
  %v308 = vunpack.c.l.b16 %v104
  %v309 = vunpack.c.h.b16 %v104
  %v310 = vunpack.c.l.b16 %v105
  %v311 = vunpack.c.h.b16 %v105
  %v312 = vunpack.c.l.b16 %v106
  %v313 = vunpack.c.h.b16 %v106
  %v314 = vunpack.c.l.b16 %v107
  %v315 = vpack.c.b16 %v288, %v279
  %v316 = vpack.c.b16 %v289, %v280
  %v317 = vpack.c.b16 %v290, %v281
  %v318 = vpack.c.b16 %v291, %v282
  %v319 = vpack.c.b16 %v292, %v283
  %v320 = vpack.c.b16 %v293, %v284
  %v321 = vpack.c.b16 %v294, %v285
  %v322 = vpack.c.b16 %v295, %v286
  %v323 = vpack.c.b16 %v296, %v287
  %v324 = vpack.c.b16 %v306, %v297
  %v325 = vpack.c.b16 %v307, %v298
  %v326 = vpack.c.b16 %v308, %v299
  %v327 = vpack.c.b16 %v309, %v300
  %v328 = vpack.c.b16 %v310, %v301
  %v329 = vpack.c.b16 %v311, %v302
  %v330 = vpack.c.b16 %v312, %v303
  %v331 = vpack.c.b16 %v313, %v304
  %v332 = vpack.c.b16 %v314, %v305
  %v495 = vunpack.c.l.b16 %v108
  %v496 = vunpack.c.l.b16 %v109
  %v497 = vunpack.c.l.b16 %v110
  %v498 = vunpack.c.l.b16 %v111
  %v499 = vunpack.c.l.b16 %v112
  %v500 = vunpack.c.l.b16 %v113
  %v501 = vunpack.c.l.b16 %v114
  %v502 = vunpack.c.l.b16 %v115
  %v503 = vunpack.c.l.b16 %v116
  %v504 = vunpack.c.l.b16 %v117
  %v505 = vunpack.c.l.b16 %v118
  %v506 = vunpack.c.l.b16 %v119
  %v507 = vunpack.c.l.b16 %v120
  %v508 = vunpack.c.l.b16 %v121
  %v509 = vunpack.c.l.b16 %v122
  %v510 = vunpack.c.l.b16 %v123
  %v511 = vunpack.c.l.b16 %v124
  %v512 = vunpack.c.l.b16 %v125
  %v513 = vunpack.c.l.b16 %v126
  %v514 = vunpack.c.l.b16 %v127
  %v515 = vunpack.c.l.b16 %v128
  %v516 = vunpack.c.l.b16 %v129
  %v517 = vunpack.c.l.b16 %v130
  %v518 = vunpack.c.l.b16 %v131
  %v519 = vunpack.c.l.b16 %v132
  %v520 = vunpack.c.l.b16 %v133
  %v521 = vunpack.c.l.b16 %v134
  %v522 = vunpack.c.l.b16 %v135
  %v523 = vunpack.c.l.b16 %v136
  %v524 = vunpack.c.l.b16 %v137
  %v525 = vunpack.c.l.b16 %v138
  %v526 = vunpack.c.l.b16 %v139
  %v527 = vunpack.c.l.b16 %v140
  %v528 = vunpack.c.l.b16 %v141
  %v529 = vunpack.c.l.b16 %v142
  %v530 = vunpack.c.l.b16 %v143
  %v531 = vunpack.c.l.b16 %v144
  %v532 = vunpack.c.l.b16 %v145
  %v533 = vunpack.c.l.b16 %v146
  %v534 = vunpack.c.l.b16 %v147
  %v535 = vunpack.c.l.b16 %v148
  %v536 = vunpack.c.l.b16 %v149
  %v537 = vunpack.c.l.b16 %v150
  %v538 = vunpack.c.l.b16 %v151
  %v539 = vunpack.c.l.b16 %v152
  %v540 = vunpack.c.l.b16 %v153
  %v541 = vunpack.c.l.b16 %v154
  %v542 = vunpack.c.l.b16 %v155
  %v543 = vunpack.c.l.b16 %v156
  %v544 = vunpack.c.l.b16 %v157
  %v545 = vunpack.c.l.b16 %v158
  %v546 = vunpack.c.l.b16 %v159
  %v547 = vunpack.c.l.b16 %v160
  %v548 = vunpack.c.l.b16 %v161
  %v549 = vunpack.c.l.b16 %v162
  %v550 = vunpack.c.l.b16 %v163
  %v551 = vunpack.c.l.b16 %v164
  %v552 = vunpack.c.l.b16 %v165
  %v553 = vunpack.c.l.b16 %v166
  %v554 = vunpack.c.l.b16 %v167
  %v555 = vunpack.c.l.b16 %v168
  %v556 = vunpack.c.l.b16 %v169
  %v557 = vunpack.c.l.b16 %v170
  %v558 = vunpack.c.l.b16 %v171
  %v559 = vunpack.c.l.b16 %v172
  %v560 = vunpack.c.l.b16 %v173
  %v561 = vunpack.c.l.b16 %v174
  %v562 = vunpack.c.l.b16 %v175
  %v563 = vunpack.c.l.b16 %v176
  %v564 = vunpack.c.l.b16 %v177
  %v565 = vunpack.c.l.b16 %v178
  %v566 = vunpack.c.l.b16 %v179
  %v567 = vunpack.c.l.b16 %v180
  %v568 = vunpack.c.l.b16 %v181
  %v569 = vunpack.c.l.b16 %v182
  %v570 = vunpack.c.l.b16 %v183
  %v571 = vunpack.c.l.b16 %v184
  %v572 = vunpack.c.l.b16 %v185
  %v573 = vunpack.c.l.b16 %v186
  %v574 = vunpack.c.l.b16 %v187
  %v575 = vunpack.c.l.b16 %v188
  %v576 = vunpack.c.l.b16 %v189
  %v577 = vunpack.c.l.b16 %v190
  %v578 = vunpack.c.l.b16 %v191
  %v579 = vunpack.c.l.b16 %v192
  %v580 = vunpack.c.l.b16 %v193
  %v581 = vunpack.c.l.b16 %v194
  %v582 = vunpack.c.l.b16 %v195
  %v583 = vunpack.c.l.b16 %v196
  %v584 = vunpack.c.l.b16 %v197
  %v585 = vunpack.c.l.b16 %v198
  %v586 = vunpack.c.l.b16 %v199
  %v587 = vunpack.c.l.b16 %v200
  %v588 = vunpack.c.l.b16 %v201
  %v589 = vunpack.c.l.b16 %v202
  %v590 = vunpack.c.l.b16 %v203
  %v591 = vunpack.c.l.b16 %v204
  %v592 = vunpack.c.l.b16 %v205
  %v593 = vunpack.c.l.b16 %v206
  %v594 = vunpack.c.l.b16 %v207
  %v595 = vunpack.c.l.b16 %v208
  %v596 = vunpack.c.l.b16 %v209
  %v597 = vunpack.c.l.b16 %v210
  %v598 = vunpack.c.l.b16 %v211
  %v599 = vunpack.c.l.b16 %v212
  %v600 = vunpack.c.l.b16 %v213
  %v601 = vunpack.c.l.b16 %v214
  %v602 = vunpack.c.l.b16 %v215
  %v603 = vunpack.c.l.b16 %v216
  %v604 = vunpack.c.l.b16 %v217
  %v605 = vunpack.c.l.b16 %v218
  %v606 = vunpack.c.l.b16 %v219
  %v607 = vunpack.c.l.b16 %v220
  %v608 = vunpack.c.l.b16 %v221
  %v609 = vunpack.c.l.b16 %v222
  %v610 = vunpack.c.l.b16 %v223
  %v611 = vunpack.c.l.b16 %v224
  %v612 = vunpack.c.l.b16 %v225
  %v613 = vunpack.c.l.b16 %v226
  %v614 = vunpack.c.l.b16 %v227
  %v615 = vunpack.c.l.b16 %v228
  %v616 = vunpack.c.l.b16 %v229
  %v617 = vunpack.c.l.b16 %v230
  %v618 = vunpack.c.l.b16 %v231
  %v619 = vunpack.c.l.b16 %v232
  %v620 = vunpack.c.l.b16 %v233
  %v621 = vunpack.c.l.b16 %v234
  %v622 = vunpack.c.l.b16 %v235
  %v623 = vunpack.c.l.b16 %v236
  %v624 = vunpack.c.l.b16 %v237
  %v625 = vunpack.c.l.b16 %v238
  %v626 = vunpack.c.l.b16 %v239
  %v627 = vunpack.c.l.b16 %v240
  %v628 = vunpack.c.l.b16 %v241
  %v629 = vunpack.c.l.b16 %v242
  %v630 = vunpack.c.l.b16 %v243
  %v631 = vunpack.c.l.b16 %v244
  %v632 = vunpack.c.l.b16 %v245
  %v633 = vunpack.c.l.b16 %v246
  %v634 = vunpack.c.l.b16 %v247
  %v635 = vunpack.c.l.b16 %v248
  %v636 = vunpack.c.l.b16 %v249
  %v637 = vunpack.c.l.b16 %v250
  %v638 = vunpack.c.l.b16 %v251
  %v639 = vpack.c.b16 %v496, %v495
  %v640 = vpack.c.b16 %v498, %v497
  %v641 = vpack.c.b16 %v500, %v499
  %v642 = vpack.c.b16 %v502, %v501
  %v643 = vpack.c.b16 %v504, %v503
  %v644 = vpack.c.b16 %v506, %v505
  %v645 = vpack.c.b16 %v508, %v507
  %v646 = vpack.c.b16 %v510, %v509
  %v647 = vpack.c.b16 %v512, %v511
  %v648 = vpack.c.b16 %v514, %v513
  %v649 = vpack.c.b16 %v516, %v515
  %v650 = vpack.c.b16 %v518, %v517
  %v651 = vpack.c.b16 %v520, %v519
  %v652 = vpack.c.b16 %v522, %v521
  %v653 = vpack.c.b16 %v524, %v523
  %v654 = vpack.c.b16 %v526, %v525
  %v655 = vpack.c.b16 %v528, %v527
  %v656 = vpack.c.b16 %v530, %v529
  %v657 = vpack.c.b16 %v532, %v531
  %v658 = vpack.c.b16 %v534, %v533
  %v659 = vpack.c.b16 %v536, %v535
  %v660 = vpack.c.b16 %v538, %v537
  %v661 = vpack.c.b16 %v540, %v539
  %v662 = vpack.c.b16 %v542, %v541
  %v663 = vpack.c.b16 %v544, %v543
  %v664 = vpack.c.b16 %v546, %v545
  %v665 = vpack.c.b16 %v548, %v547
  %v666 = vpack.c.b16 %v550, %v549
  %v667 = vpack.c.b16 %v552, %v551
  %v668 = vpack.c.b16 %v554, %v553
  %v669 = vpack.c.b16 %v556, %v555
  %v670 = vpack.c.b16 %v558, %v557
  %v671 = vpack.c.b16 %v560, %v559
  %v672 = vpack.c.b16 %v562, %v561
  %v673 = vpack.c.b16 %v564, %v563
  %v674 = vpack.c.b16 %v566, %v565
  %v675 = vpack.c.b16 %v568, %v567
  %v676 = vpack.c.b16 %v570, %v569
  %v677 = vpack.c.b16 %v572, %v571
  %v678 = vpack.c.b16 %v574, %v573
  %v679 = vpack.c.b16 %v576, %v575
  %v680 = vpack.c.b16 %v578, %v577
  %v681 = vpack.c.b16 %v580, %v579
  %v682 = vpack.c.b16 %v582, %v581
  %v683 = vpack.c.b16 %v584, %v583
  %v684 = vpack.c.b16 %v586, %v585
  %v685 = vpack.c.b16 %v588, %v587
  %v686 = vpack.c.b16 %v590, %v589
  %v687 = vpack.c.b16 %v592, %v591
  %v688 = vpack.c.b16 %v594, %v593
  %v689 = vpack.c.b16 %v596, %v595
  %v690 = vpack.c.b16 %v598, %v597
  %v691 = vpack.c.b16 %v600, %v599
  %v692 = vpack.c.b16 %v602, %v601
  %v693 = vpack.c.b16 %v604, %v603
  %v694 = vpack.c.b16 %v606, %v605
  %v695 = vpack.c.b16 %v608, %v607
  %v696 = vpack.c.b16 %v610, %v609
  %v697 = vpack.c.b16 %v612, %v611
  %v698 = vpack.c.b16 %v614, %v613
  %v699 = vpack.c.b16 %v616, %v615
  %v700 = vpack.c.b16 %v618, %v617
  %v701 = vpack.c.b16 %v620, %v619
  %v702 = vpack.c.b16 %v622, %v621
  %v703 = vpack.c.b16 %v624, %v623
  %v704 = vpack.c.b16 %v626, %v625
  %v705 = vpack.c.b16 %v628, %v627
  %v706 = vpack.c.b16 %v630, %v629
  %v707 = vpack.c.b16 %v632, %v631
  %v708 = vpack.c.b16 %v634, %v633
  %v709 = vpack.c.b16 %v636, %v635
  %v710 = vpack.c.b16 %v638, %v637
  %783 = vmatprep.subr.bf16.mxu0 0
  %784 = vmatpush1.bf16.msra.mxu0 %v639
  %785 = vmatprep.subr.bf16.mxu0 0
  %786 = vmatpush1.bf16.msra.mxu0 %v640
  %787 = vmatprep.subr.bf16.mxu0 0
  %788 = vmatpush1.bf16.msra.mxu0 %v641
  %789 = vmatprep.subr.bf16.mxu0 0
  %790 = vmatpush1.bf16.msra.mxu0 %v642
  %791 = vmatprep.subr.bf16.mxu0 0
  %792 = vmatpush1.bf16.msra.mxu0 %v643
  %793 = vmatprep.subr.bf16.mxu0 0
  %794 = vmatpush1.bf16.msra.mxu0 %v644
  %795 = vmatprep.subr.bf16.mxu0 0
  %796 = vmatpush1.bf16.msra.mxu0 %v645
  %797 = vmatprep.subr.bf16.mxu0 0
  %798 = vmatpush1.bf16.msra.mxu0 %v646
  %799 = vmatprep.subr.bf16.mxu0 0
  %800 = vmatpush1.bf16.msra.mxu0 %v647
  %801 = vmatprep.subr.bf16.mxu0 0
  %802 = vmatpush1.bf16.msra.mxu0 %v648
  %803 = vmatprep.subr.bf16.mxu0 0
  %804 = vmatpush1.bf16.msra.mxu0 %v649
  %805 = vmatprep.subr.bf16.mxu0 0
  %806 = vmatpush1.bf16.msra.mxu0 %v650
  %807 = vmatprep.subr.bf16.mxu0 0
  %808 = vmatpush1.bf16.msra.mxu0 %v651
  %809 = vmatprep.subr.bf16.mxu0 0
  %810 = vmatpush1.bf16.msra.mxu0 %v652
  %811 = vmatprep.subr.bf16.mxu0 0
  %812 = vmatpush1.bf16.msra.mxu0 %v653
  %813 = vmatprep.subr.bf16.mxu0 0
  %814 = vmatpush1.bf16.msra.mxu0 %v654
  %815 = vmatprep.mubr.bf16.mxu0 %v316
  %816 = vmatmul.mubr.bf16.gmra.mrb[0].mxu0 %v315
  %v817 = vpop.f32.mrb[0].mxu0
  %v818 = vadd.f32 %v257, %v817
  %v819 = vpop.f32.mrb[0].mxu0
  %v820 = vpop.f32.mrb[0].mxu0
  %v821 = vadd.f32 %v257, %v820
  %v822 = vpop.f32.mrb[0].mxu0
  %823 = vmatprep.mubr.bf16.mxu0 %v325
  %824 = vmatmul.mubr.bf16.gmra.mrb[0].mxu0 %v324
  %v825 = vpop.f32.mrb[0].mxu0
  %v826 = vadd.f32 %v257, %v825
  %v827 = vpop.f32.mrb[0].mxu0
  %v828 = vpop.f32.mrb[0].mxu0
  %v829 = vadd.f32 %v257, %v828
  %v830 = vpop.f32.mrb[0].mxu0
  %831 = vdwg.mxu0
  %832 = vmatprep.subr.bf16.mxu0 0
  %833 = vmatpush1.bf16.msra.mxu0 %v655
  %834 = vmatprep.subr.bf16.mxu0 0
  %835 = vmatpush1.bf16.msra.mxu0 %v656
  %836 = vmatprep.subr.bf16.mxu0 0
  %837 = vmatpush1.bf16.msra.mxu0 %v657
  %838 = vmatprep.subr.bf16.mxu0 0
  %839 = vmatpush1.bf16.msra.mxu0 %v658
  %840 = vmatprep.subr.bf16.mxu0 0
  %841 = vmatpush1.bf16.msra.mxu0 %v659
  %842 = vmatprep.subr.bf16.mxu0 0
  %843 = vmatpush1.bf16.msra.mxu0 %v660
  %844 = vmatprep.subr.bf16.mxu0 0
  %845 = vmatpush1.bf16.msra.mxu0 %v661
  %846 = vmatprep.subr.bf16.mxu0 0
  %847 = vmatpush1.bf16.msra.mxu0 %v662
  %848 = vmatprep.subr.bf16.mxu0 0
  %849 = vmatpush1.bf16.msra.mxu0 %v663
  %850 = vmatprep.subr.bf16.mxu0 0
  %851 = vmatpush1.bf16.msra.mxu0 %v664
  %852 = vmatprep.subr.bf16.mxu0 0
  %853 = vmatpush1.bf16.msra.mxu0 %v665
  %854 = vmatprep.subr.bf16.mxu0 0
  %855 = vmatpush1.bf16.msra.mxu0 %v666
  %856 = vmatprep.subr.bf16.mxu0 0
  %857 = vmatpush1.bf16.msra.mxu0 %v667
  %858 = vmatprep.subr.bf16.mxu0 0
  %859 = vmatpush1.bf16.msra.mxu0 %v668
  %860 = vmatprep.subr.bf16.mxu0 0
  %861 = vmatpush1.bf16.msra.mxu0 %v669
  %862 = vmatprep.subr.bf16.mxu0 0
  %863 = vmatpush1.bf16.msra.mxu0 %v670
  %864 = vmatprep.mubr.bf16.mxu0 %v318
  %865 = vmatmul.mubr.bf16.gmra.mrb[0].mxu0 %v317
  %v866 = vpop.f32.mrb[0].mxu0
  %v867 = vadd.f32 %v818, %v866
  %v868 = vpop.f32.mrb[0].mxu0
  %v869 = vpop.f32.mrb[0].mxu0
  %v870 = vadd.f32 %v821, %v869
  %v871 = vpop.f32.mrb[0].mxu0
  %872 = vmatprep.mubr.bf16.mxu0 %v327
  %873 = vmatmul.mubr.bf16.gmra.mrb[0].mxu0 %v326
  %v874 = vpop.f32.mrb[0].mxu0
  %v875 = vadd.f32 %v826, %v874
  %v876 = vpop.f32.mrb[0].mxu0
  %v877 = vpop.f32.mrb[0].mxu0
  %v878 = vadd.f32 %v829, %v877
  %v879 = vpop.f32.mrb[0].mxu0
  %880 = vdwg.mxu0
  %881 = vmatprep.subr.bf16.mxu0 0
  %882 = vmatpush1.bf16.msra.mxu0 %v671
  %883 = vmatprep.subr.bf16.mxu0 0
  %884 = vmatpush1.bf16.msra.mxu0 %v672
  %885 = vmatprep.subr.bf16.mxu0 0
  %886 = vmatpush1.bf16.msra.mxu0 %v673
  %887 = vmatprep.subr.bf16.mxu0 0
  %888 = vmatpush1.bf16.msra.mxu0 %v674
  %889 = vmatprep.subr.bf16.mxu0 0
  %890 = vmatpush1.bf16.msra.mxu0 %v675
  %891 = vmatprep.subr.bf16.mxu0 0
  %892 = vmatpush1.bf16.msra.mxu0 %v676
  %893 = vmatprep.subr.bf16.mxu0 0
  %894 = vmatpush1.bf16.msra.mxu0 %v677
  %895 = vmatprep.subr.bf16.mxu0 0
  %896 = vmatpush1.bf16.msra.mxu0 %v678
  %897 = vmatprep.subr.bf16.mxu0 0
  %898 = vmatpush1.bf16.msra.mxu0 %v679
  %899 = vmatprep.subr.bf16.mxu0 0
  %900 = vmatpush1.bf16.msra.mxu0 %v680
  %901 = vmatprep.subr.bf16.mxu0 0
  %902 = vmatpush1.bf16.msra.mxu0 %v681
  %903 = vmatprep.subr.bf16.mxu0 0
  %904 = vmatpush1.bf16.msra.mxu0 %v682
  %905 = vmatprep.subr.bf16.mxu0 0
  %906 = vmatpush1.bf16.msra.mxu0 %v683
  %907 = vmatprep.subr.bf16.mxu0 0
  %908 = vmatpush1.bf16.msra.mxu0 %v684
  %909 = vmatprep.subr.bf16.mxu0 0
  %910 = vmatpush1.bf16.msra.mxu0 %v685
  %911 = vmatprep.subr.bf16.mxu0 0
  %912 = vmatpush1.bf16.msra.mxu0 %v686
  %913 = vmatprep.mubr.bf16.mxu0 %v320
  %914 = vmatmul.mubr.bf16.gmra.mrb[0].mxu0 %v319
  %v915 = vpop.f32.mrb[0].mxu0
  %v916 = vadd.f32 %v867, %v915
  %v917 = vpop.f32.mrb[0].mxu0
  %v918 = vpop.f32.mrb[0].mxu0
  %v919 = vadd.f32 %v870, %v918
  %v920 = vpop.f32.mrb[0].mxu0
  %921 = vmatprep.mubr.bf16.mxu0 %v329
  %922 = vmatmul.mubr.bf16.gmra.mrb[0].mxu0 %v328
  %v923 = vpop.f32.mrb[0].mxu0
  %v924 = vadd.f32 %v875, %v923
  %v925 = vpop.f32.mrb[0].mxu0
  %v926 = vpop.f32.mrb[0].mxu0
  %v927 = vadd.f32 %v878, %v926
  %v928 = vpop.f32.mrb[0].mxu0
  %929 = vdwg.mxu0
  %930 = vmatprep.subr.bf16.mxu0 0
  %931 = vmatpush1.bf16.msra.mxu0 %v687
  %932 = vmatprep.subr.bf16.mxu0 0
  %933 = vmatpush1.bf16.msra.mxu0 %v688
  %934 = vmatprep.subr.bf16.mxu0 0
  %935 = vmatpush1.bf16.msra.mxu0 %v689
  %936 = vmatprep.subr.bf16.mxu0 0
  %937 = vmatpush1.bf16.msra.mxu0 %v690
  %938 = vmatprep.subr.bf16.mxu0 0
  %939 = vmatpush1.bf16.msra.mxu0 %v691
  %940 = vmatprep.subr.bf16.mxu0 0
  %941 = vmatpush1.bf16.msra.mxu0 %v692
  %942 = vmatprep.subr.bf16.mxu0 0
  %943 = vmatpush1.bf16.msra.mxu0 %v693
  %944 = vmatprep.subr.bf16.mxu0 0
  %945 = vmatpush1.bf16.msra.mxu0 %v694
  %946 = vmatprep.subr.bf16.mxu0 0
  %947 = vmatpush1.bf16.msra.mxu0 %v695
  %948 = vmatprep.subr.bf16.mxu0 0
  %949 = vmatpush1.bf16.msra.mxu0 %v696
  %950 = vmatprep.subr.bf16.mxu0 0
  %951 = vmatpush1.bf16.msra.mxu0 %v697
  %952 = vmatprep.subr.bf16.mxu0 0
  %953 = vmatpush1.bf16.msra.mxu0 %v698
  %954 = vmatprep.subr.bf16.mxu0 0
  %955 = vmatpush1.bf16.msra.mxu0 %v699
  %956 = vmatprep.subr.bf16.mxu0 0
  %957 = vmatpush1.bf16.msra.mxu0 %v700
  %958 = vmatprep.subr.bf16.mxu0 0
  %959 = vmatpush1.bf16.msra.mxu0 %v701
  %960 = vmatprep.subr.bf16.mxu0 0
  %961 = vmatpush1.bf16.msra.mxu0 %v702
  %962 = vmatprep.mubr.bf16.mxu0 %v322
  %963 = vmatmul.mubr.bf16.gmra.mrb[0].mxu0 %v321
  %v964 = vpop.f32.mrb[0].mxu0
  %v965 = vadd.f32 %v916, %v964
  %v966 = vpop.f32.mrb[0].mxu0
  %v967 = vpop.f32.mrb[0].mxu0
  %v968 = vadd.f32 %v919, %v967
  %v969 = vpop.f32.mrb[0].mxu0
  %970 = vmatprep.mubr.bf16.mxu0 %v331
  %971 = vmatmul.mubr.bf16.gmra.mrb[0].mxu0 %v330
  %v972 = vpop.f32.mrb[0].mxu0
  %v973 = vadd.f32 %v924, %v972
  %v974 = vpop.f32.mrb[0].mxu0
  %v975 = vpop.f32.mrb[0].mxu0
  %v976 = vadd.f32 %v927, %v975
  %v977 = vpop.f32.mrb[0].mxu0
  %978 = vdwg.mxu0
  %979 = vmatprep.subr.bf16.mxu0 0
  %980 = vmatpush1.bf16.msra.mxu0 %v703
  %981 = vmatprep.subr.bf16.mxu0 0
  %982 = vmatpush1.bf16.msra.mxu0 %v704
  %983 = vmatprep.subr.bf16.mxu0 0
  %984 = vmatpush1.bf16.msra.mxu0 %v705
  %985 = vmatprep.subr.bf16.mxu0 0
  %986 = vmatpush1.bf16.msra.mxu0 %v706
  %987 = vmatprep.subr.bf16.mxu0 0
  %988 = vmatpush1.bf16.msra.mxu0 %v707
  %989 = vmatprep.subr.bf16.mxu0 0
  %990 = vmatpush1.bf16.msra.mxu0 %v708
  %991 = vmatprep.subr.bf16.mxu0 0
  %992 = vmatpush1.bf16.msra.mxu0 %v709
  %993 = vmatprep.subr.bf16.mxu0 0
  %994 = vmatpush1.bf16.msra.mxu0 %v710
  %995 = vmatprep.subr.bf16.mxu0 0
  %996 = vmatpush1.bf16.msra.mxu0 0
  %997 = vmatprep.subr.bf16.mxu0 0
  %998 = vmatpush1.bf16.msra.mxu0 0
  %999 = vmatprep.subr.bf16.mxu0 0
  %1000 = vmatpush1.bf16.msra.mxu0 0
  %1001 = vmatprep.subr.bf16.mxu0 0
  %1002 = vmatpush1.bf16.msra.mxu0 0
  %1003 = vmatprep.subr.bf16.mxu0 0
  %1004 = vmatpush1.bf16.msra.mxu0 0
  %1005 = vmatprep.subr.bf16.mxu0 0
  %1006 = vmatpush1.bf16.msra.mxu0 0
  %1007 = vmatprep.subr.bf16.mxu0 0
  %1008 = vmatpush1.bf16.msra.mxu0 0
  %1009 = vmatprep.subr.bf16.mxu0 0
  %1010 = vmatpush1.bf16.msra.mxu0 0
  %1011 = vmatprep.mubr.bf16.mxu0 0
  %1012 = vmatmul.mubr.bf16.gmra.mrb[0].mxu0 %v323
  %v1013 = vpop.f32.mrb[0].mxu0
  %v1014 = vadd.f32 %v965, %v1013
  %v1015 = vpop.f32.mrb[0].mxu0
  %v1016 = vpop.f32.mrb[0].mxu0
  %v1017 = vadd.f32 %v968, %v1016
  %v1018 = vpop.f32.mrb[0].mxu0
  %1019 = vmatprep.mubr.bf16.mxu0 0
  %1020 = vmatmul.mubr.bf16.gmra.mrb[0].mxu0 %v332
  %v1021 = vpop.f32.mrb[0].mxu0
  %v1022 = vadd.f32 %v973, %v1021
  %v1023 = vpop.f32.mrb[0].mxu0
  %v1024 = vpop.f32.mrb[0].mxu0
  %v1025 = vadd.f32 %v976, %v1024
  %v1026 = vpop.f32.mrb[0].mxu0
  %1027 = vdwg.mxu0
  %vm1028 = vcmp.gt.f32.partialorder %v1014, 0.0
  %vm1029 = vcmp.gt.f32.partialorder %v1017, 0.0
  %vm1030 = vcmp.gt.f32.partialorder %v1022, 0.0
  %vm1031 = vcmp.gt.f32.partialorder %v1025, 0.0
  %v1032 = vmul.f32 %v1014, 0.01
  %v1033 = vmul.f32 %v1017, 0.01
  %v1034 = vmul.f32 %v1022, 0.01
  %v1035 = vmul.f32 %v1025, 0.01
  %v1036 = vsel %vm1028, %v1014, %v1032
  %v1037 = vsel %vm1029, %v1017, %v1033
  %v1038 = vsel %vm1030, %v1022, %v1034
  %v1039 = vsel %vm1031, %v1025, %v1035
  %v1040 = vpack.c.bf16 %v1037, %v1036
  %v1041 = vpack.c.bf16 %v1039, %v1038
  %v1042 = vld [vmem:[%s4] sm:$0xf]
  %v1043 = vld [vmem:[%s4 + $0x4] sm:$0xf]
  %v1044 = vld [vmem:[%s4 + $0x8] sm:$0xf]
  %v1045 = vld [vmem:[%s4 + $0xc] sm:$0xf]
  %v1046 = vld [vmem:[%s4 + $0x10] sm:$0xf]
  %v1047 = vld [vmem:[%s4 + $0x14] sm:$0xf]
  %v1048 = vld [vmem:[%s4 + $0x18] sm:$0xf]
  %v1049 = vld [vmem:[%s4 + $0x1c] sm:$0xf]
  %v1050 = vld [vmem:[%s4 + $0x20] sm:$0xf]
  %v1051 = vld [vmem:[%s4 + $0x24] sm:$0xf]
  %v1052 = vld [vmem:[%s4 + $0x28] sm:$0xf]
  %v1053 = vld [vmem:[%s4 + $0x2c] sm:$0xf]
  %v1054 = vld [vmem:[%s4 + $0x30] sm:$0xf]
  %v1055 = vld [vmem:[%s4 + $0x34] sm:$0xf]
  %v1056 = vld [vmem:[%s4 + $0x38] sm:$0xf]
  %v1057 = vld [vmem:[%s4 + $0x3c] sm:$0xf]
  %v1058 = vld [vmem:[%s1] sm:$0xf]
  %v1059 = vld [vmem:[%s1 + $0x4] sm:$0xf]
  %v1060 = vld [vmem:[%s1 + $0x8] sm:$0xf]
  %v1061 = vld [vmem:[%s1 + $0xc] sm:$0xf]
  %v1062 = vld [vmem:[%s5] sm:$0xf]
  %v1063 = vld [vmem:[%s5 + $0x4] sm:$0xf]
  %v1064 = vld [vmem:[%s5 + $0x8] sm:$0xf]
  %v1065 = vld [vmem:[%s5 + $0xc] sm:$0xf]
  %v1066 = vld [vmem:[%s5 + $0x10] sm:$0xf]
  %v1067 = vld [vmem:[%s5 + $0x14] sm:$0xf]
  %v1068 = vld [vmem:[%s5 + $0x18] sm:$0xf]
  %v1069 = vld [vmem:[%s5 + $0x1c] sm:$0xf]
  %v1070 = vld [vmem:[%s5 + $0x20] sm:$0xf]
  %v1071 = vld [vmem:[%s5 + $0x24] sm:$0xf]
  %v1072 = vld [vmem:[%s5 + $0x28] sm:$0xf]
  %v1073 = vld [vmem:[%s5 + $0x2c] sm:$0xf]
  %v1074 = vld [vmem:[%s5 + $0x30] sm:$0xf]
  %v1075 = vld [vmem:[%s5 + $0x34] sm:$0xf]
  %v1076 = vld [vmem:[%s5 + $0x38] sm:$0xf]
  %v1077 = vld [vmem:[%s5 + $0x3c] sm:$0xf]
  %v1082 = vunpack.c.l.b16 %v1058
  %v1083 = vunpack.c.l.b16 %v1059
  %v1084 = vunpack.c.l.b16 %v1060
  %v1085 = vunpack.c.l.b16 %v1061
  %v1086 = vpack.c.b16 %v1083, %v1082
  %v1087 = vpack.c.b16 %v1085, %v1084
  %v1106 = vunpack.c.l.b16 %v1062
  %v1107 = vunpack.c.l.b16 %v1063
  %v1108 = vunpack.c.l.b16 %v1064
  %v1109 = vunpack.c.l.b16 %v1065
  %v1110 = vunpack.c.l.b16 %v1066
  %v1111 = vunpack.c.l.b16 %v1067
  %v1112 = vunpack.c.l.b16 %v1068
  %v1113 = vunpack.c.l.b16 %v1069
  %v1114 = vunpack.c.l.b16 %v1070
  %v1115 = vunpack.c.l.b16 %v1071
  %v1116 = vunpack.c.l.b16 %v1072
  %v1117 = vunpack.c.l.b16 %v1073
  %v1118 = vunpack.c.l.b16 %v1074
  %v1119 = vunpack.c.l.b16 %v1075
  %v1120 = vunpack.c.l.b16 %v1076
  %v1121 = vunpack.c.l.b16 %v1077
  %v1122 = vpack.c.b16 %v1107, %v1106
  %v1123 = vpack.c.b16 %v1109, %v1108
  %v1124 = vpack.c.b16 %v1111, %v1110
  %v1125 = vpack.c.b16 %v1113, %v1112
  %v1126 = vpack.c.b16 %v1115, %v1114
  %v1127 = vpack.c.b16 %v1117, %v1116
  %v1128 = vpack.c.b16 %v1119, %v1118
  %v1129 = vpack.c.b16 %v1121, %v1120
  %1138 = vmatprep.subr.bf16.mxu0 0
  %1139 = vmatpush1.bf16.msra.mxu0 %v1122
  %1140 = vmatprep.subr.bf16.mxu0 0
  %1141 = vmatpush1.bf16.msra.mxu0 %v1123
  %1142 = vmatprep.subr.bf16.mxu0 0
  %1143 = vmatpush1.bf16.msra.mxu0 %v1124
  %1144 = vmatprep.subr.bf16.mxu0 0
  %1145 = vmatpush1.bf16.msra.mxu0 %v1125
  %1146 = vmatprep.subr.bf16.mxu0 0
  %1147 = vmatpush1.bf16.msra.mxu0 %v1126
  %1148 = vmatprep.subr.bf16.mxu0 0
  %1149 = vmatpush1.bf16.msra.mxu0 %v1127
  %1150 = vmatprep.subr.bf16.mxu0 0
  %1151 = vmatpush1.bf16.msra.mxu0 %v1128
  %1152 = vmatprep.subr.bf16.mxu0 0
  %1153 = vmatpush1.bf16.msra.mxu0 %v1129
  %1154 = vmatprep.subr.bf16.mxu0 0
  %1155 = vmatpush1.bf16.msra.mxu0 0
  %1156 = vmatprep.subr.bf16.mxu0 0
  %1157 = vmatpush1.bf16.msra.mxu0 0
  %1158 = vmatprep.subr.bf16.mxu0 0
  %1159 = vmatpush1.bf16.msra.mxu0 0
  %1160 = vmatprep.subr.bf16.mxu0 0
  %1161 = vmatpush1.bf16.msra.mxu0 0
  %1162 = vmatprep.subr.bf16.mxu0 0
  %1163 = vmatpush1.bf16.msra.mxu0 0
  %1164 = vmatprep.subr.bf16.mxu0 0
  %1165 = vmatpush1.bf16.msra.mxu0 0
  %1166 = vmatprep.subr.bf16.mxu0 0
  %1167 = vmatpush1.bf16.msra.mxu0 0
  %1168 = vmatprep.subr.bf16.mxu0 0
  %1169 = vmatpush1.bf16.msra.mxu0 0
  %1170 = vmatprep.mubr.bf16.mxu0 0
  %1171 = vmatmul.mubr.bf16.gmra.mrb[0].mxu0 %v1086
  %v1172 = vpop.f32.mrb[0].mxu0
  %v1173 = vadd.f32 0.0, %v1172
  %v1174 = vpop.f32.mrb[0].mxu0
  %v1175 = vpop.f32.mrb[0].mxu0
  %v1176 = vadd.f32 0.0, %v1175
  %v1177 = vpop.f32.mrb[0].mxu0
  %1178 = vmatprep.mubr.bf16.mxu0 0
  %1179 = vmatmul.mubr.bf16.gmra.mrb[0].mxu0 %v1087
  %v1180 = vpop.f32.mrb[0].mxu0
  %v1181 = vadd.f32 0.0, %v1180
  %v1182 = vpop.f32.mrb[0].mxu0
  %v1183 = vpop.f32.mrb[0].mxu0
  %v1184 = vadd.f32 0.0, %v1183
  %v1185 = vpop.f32.mrb[0].mxu0
  %1186 = vdwg.mxu0
  %v1203 = vunpack.c.l.b16 %v1042
  %v1204 = vunpack.c.l.b16 %v1043
  %v1205 = vunpack.c.l.b16 %v1044
  %v1206 = vunpack.c.l.b16 %v1045
  %v1207 = vunpack.c.l.b16 %v1046
  %v1208 = vunpack.c.l.b16 %v1047
  %v1209 = vunpack.c.l.b16 %v1048
  %v1210 = vunpack.c.l.b16 %v1049
  %v1211 = vunpack.c.l.b16 %v1050
  %v1212 = vunpack.c.l.b16 %v1051
  %v1213 = vunpack.c.l.b16 %v1052
  %v1214 = vunpack.c.l.b16 %v1053
  %v1215 = vunpack.c.l.b16 %v1054
  %v1216 = vunpack.c.l.b16 %v1055
  %v1217 = vunpack.c.l.b16 %v1056
  %v1218 = vunpack.c.l.b16 %v1057
  %v1219 = vpack.c.b16 %v1204, %v1203
  %v1220 = vpack.c.b16 %v1206, %v1205
  %v1221 = vpack.c.b16 %v1208, %v1207
  %v1222 = vpack.c.b16 %v1210, %v1209
  %v1223 = vpack.c.b16 %v1212, %v1211
  %v1224 = vpack.c.b16 %v1214, %v1213
  %v1225 = vpack.c.b16 %v1216, %v1215
  %v1226 = vpack.c.b16 %v1218, %v1217
  %1235 = vmatprep.subr.bf16.mxu0 0
  %1236 = vmatpush1.bf16.msra.mxu0 %v1219
  %1237 = vmatprep.subr.bf16.mxu0 0
  %1238 = vmatpush1.bf16.msra.mxu0 %v1220
  %1239 = vmatprep.subr.bf16.mxu0 0
  %1240 = vmatpush1.bf16.msra.mxu0 %v1221
  %1241 = vmatprep.subr.bf16.mxu0 0
  %1242 = vmatpush1.bf16.msra.mxu0 %v1222
  %1243 = vmatprep.subr.bf16.mxu0 0
  %1244 = vmatpush1.bf16.msra.mxu0 %v1223
  %1245 = vmatprep.subr.bf16.mxu0 0
  %1246 = vmatpush1.bf16.msra.mxu0 %v1224
  %1247 = vmatprep.subr.bf16.mxu0 0
  %1248 = vmatpush1.bf16.msra.mxu0 %v1225
  %1249 = vmatprep.subr.bf16.mxu0 0
  %1250 = vmatpush1.bf16.msra.mxu0 %v1226
  %1251 = vmatprep.subr.bf16.mxu0 0
  %1252 = vmatpush1.bf16.msra.mxu0 0
  %1253 = vmatprep.subr.bf16.mxu0 0
  %1254 = vmatpush1.bf16.msra.mxu0 0
  %1255 = vmatprep.subr.bf16.mxu0 0
  %1256 = vmatpush1.bf16.msra.mxu0 0
  %1257 = vmatprep.subr.bf16.mxu0 0
  %1258 = vmatpush1.bf16.msra.mxu0 0
  %1259 = vmatprep.subr.bf16.mxu0 0
  %1260 = vmatpush1.bf16.msra.mxu0 0
  %1261 = vmatprep.subr.bf16.mxu0 0
  %1262 = vmatpush1.bf16.msra.mxu0 0
  %1263 = vmatprep.subr.bf16.mxu0 0
  %1264 = vmatpush1.bf16.msra.mxu0 0
  %1265 = vmatprep.subr.bf16.mxu0 0
  %1266 = vmatpush1.bf16.msra.mxu0 0
  %1267 = vmatprep.mubr.bf16.mxu0 0
  %1268 = vmatmul.mubr.bf16.gmra.mrb[0].mxu0 %v1040
  %v1269 = vpop.f32.mrb[0].mxu0
  %v1270 = vadd.f32 %v1173, %v1269
  %v1271 = vpop.f32.mrb[0].mxu0
  %v1272 = vpop.f32.mrb[0].mxu0
  %v1273 = vadd.f32 %v1176, %v1272
  %v1274 = vpop.f32.mrb[0].mxu0
  %1275 = vmatprep.mubr.bf16.mxu0 0
  %1276 = vmatmul.mubr.bf16.gmra.mrb[0].mxu0 %v1041
  %v1277 = vpop.f32.mrb[0].mxu0
  %v1278 = vadd.f32 %v1181, %v1277
  %v1279 = vpop.f32.mrb[0].mxu0
  %v1280 = vpop.f32.mrb[0].mxu0
  %v1281 = vadd.f32 %v1184, %v1280
  %v1282 = vpop.f32.mrb[0].mxu0
  %1283 = vdwg.mxu0
  %v1284 = vld [vmem:[%s6] sm:$0x1]
  %v1286 = vlaneseq
  %v1287 = vshrl.u32 %v1286, 7
  %v1288 = vsub.s32 0, %v1287
  %v1289 = vrot.slane %v1284, %v1288
  %v1291 = vadd.f32 %v1270, %v1289
  %v1292 = vadd.f32 %v1273, %v1289
  %v1293 = vadd.f32 %v1278, %v1289
  %v1294 = vadd.f32 %v1281, %v1289
  %v1295 = vpack.c.bf16 %v1292, %v1291
  %v1296 = vpack.c.bf16 %v1294, %v1293
  %v1299 = vunpack.c.l.b16 %v1295
  %v1300 = vunpack.c.h.b16 %v1295
  %v1301 = vunpack.c.l.b16 %v1296
  %v1302 = vunpack.c.h.b16 %v1296
  %v1303 = vpack.c.b16 %v1299, %v1299
  %v1304 = vpack.c.b16 %v1300, %v1300
  %v1305 = vpack.c.b16 %v1301, %v1301
  %v1306 = vpack.c.b16 %v1302, %v1302
  %1311 = vst [vmem:[%s7] sm:$0xf] %v1303
  %1312 = vst [vmem:[%s7 + $0x4] sm:$0xf] %v1304
  %1313 = vst [vmem:[%s7 + $0x8] sm:$0xf] %v1305
  %1314 = vst [vmem:[%s7 + $0xc] sm:$0xf] %v1306
  // Predicated region
  $region30: #{msdiscriminator_forward.13} parent=0 // pred_check
    _
  $region31: #{msdiscriminator_forward.13} parent=0 // pred_check_branch
    %1316 = sbr.rel (0) target = $region33
  $region32: #{msdiscriminator_forward.13} parent=0 // pred_region
    _
  $region33: #{msdiscriminator_forward.13} parent=0 // pred_fallthru
    _
  // Predicated region
  $region34: #{msdiscriminator_forward.13} parent=0 // pred_check
    _
  $region35: #{msdiscriminator_forward.13} parent=0 // pred_check_branch
    %1318 = sbr.rel (0) target = $region37
  $region36: #{msdiscriminator_forward.13} parent=0 // pred_region
    _
  $region37: #{msdiscriminator_forward.13} parent=0 // pred_fallthru
    _

// kernel: msdiscriminator_forward.16
$region0: #{msdiscriminator_forward.16}
  #allocation0 [shape = 'u32[]', space=smem, size = 0x4, offset = 0x4, fixed_abs, tag = 'smem constant byte address 0x4 - core index']
  #allocation1 [shape = 'u32[144,128]{1,0:T(1,128)}', space=vmem, size = 0x12000, scoped, tag = 'internal scratch']
  #allocation2 [shape = 'f32[1,1]{1,0:T(1,128)S(1)}', space=vmem, size = 0x200, scoped, tag = 'scoped memory for msdiscriminator_forward.16']
  %s0 = inlined_call_operand.vmem [shape: bf16[2,128], index: 0, kind: input, shape index: {}]
  %s1 = inlined_call_operand.vmem [shape: bf16[128,128], index: 1, kind: input, shape index: {}]
  %s2 = inlined_call_operand.vmem [shape: f32[1,128], index: 2, kind: input, shape index: {}]
  %s3 = inlined_call_operand.vmem [shape: bf16[128,128], index: 3, kind: input, shape index: {}]
  %s4 = inlined_call_operand.vmem [shape: bf16[128,128], index: 4, kind: input, shape index: {}]
  %s5 = inlined_call_operand.vmem [shape: f32[1,128], index: 5, kind: input, shape index: {}]
  %s6 = inlined_call_operand.vmem [shape: bf16[128,128], index: 6, kind: input, shape index: {}]
  %s7 = inlined_call_operand.vmem [shape: f32[1,128], index: 7, kind: input, shape index: {}]
  %s8 = inlined_call_operand.vmem [shape: bf16[128,128], index: 8, kind: input, shape index: {}]
  %s9 = inlined_call_operand.vmem [shape: bf16[128,128], index: 9, kind: input, shape index: {}]
  %s10 = inlined_call_operand.vmem [shape: f32[1,128], index: 10, kind: input, shape index: {}]
  %s11 = inlined_call_operand.vmem [shape: bf16[128,128], index: 11, kind: input, shape index: {}]
  %s12 = inlined_call_operand.vmem [shape: f32[1,128], index: 12, kind: input, shape index: {}]
  %s13 = inlined_call_operand.vmem [shape: bf16[128,256], index: 13, kind: input, shape index: {}]
  %s14 = inlined_call_operand.vmem [shape: bf16[128,256], index: 14, kind: input, shape index: {}]
  %s15 = inlined_call_operand.vmem [shape: f32[1,256], index: 15, kind: input, shape index: {}]
  %s16 = inlined_call_operand.vmem [shape: bf16[256,256], index: 16, kind: input, shape index: {}]
  %s17 = inlined_call_operand.vmem [shape: f32[1,256], index: 17, kind: input, shape index: {}]
  %s18 = inlined_call_operand.vmem [shape: bf16[256,256], index: 18, kind: input, shape index: {}]
  %s19 = inlined_call_operand.vmem [shape: bf16[256,256], index: 19, kind: input, shape index: {}]
  %s20 = inlined_call_operand.vmem [shape: f32[1,256], index: 20, kind: input, shape index: {}]
  %s21 = inlined_call_operand.vmem [shape: f32[1,256], index: 21, kind: input, shape index: {}]
  %s22 = inlined_call_operand.<no memory space> [shape: f32[1,1], index: 22, kind: input, shape index: {}]
  %s23 = inlined_call_operand.vmem [shape: f32[8,128], index: 23, kind: output, shape index: {}]
  %s24 = sld [smem:[#allocation0]]
  $region102: #{msdiscriminator_forward.16} parent=0
    _
  %s26 = ssub.s32 1, %s24
  %s27 = scalar_select 0, %s26, %s24
  %v28 = vstv %s22
  %29 = vst [vmem:[#allocation2] sm:$0x1] %v28
  // Predicated region
  $region2: #{msdiscriminator_forward.16} parent=0 // pred_check
    _
  $region3: #{msdiscriminator_forward.16} parent=0 // pred_check_branch
    %31 = sbr.rel (0) target = $region5
  $region4: #{msdiscriminator_forward.16} parent=0 // pred_region
    _
  $region5: #{msdiscriminator_forward.16} parent=0 // pred_fallthru
    _
  // Predicated region
  $region6: #{msdiscriminator_forward.16} parent=0 // pred_check
    _
  $region7: #{msdiscriminator_forward.16} parent=0 // pred_check_branch
    %33 = sbr.rel (0) target = $region9
  $region8: #{msdiscriminator_forward.16} parent=0 // pred_region
    _
  $region9: #{msdiscriminator_forward.16} parent=0 // pred_fallthru
    _
  // Predicated region
  $region10: #{msdiscriminator_forward.16} parent=0 // pred_check
    _
  $region11: #{msdiscriminator_forward.16} parent=0 // pred_check_branch
    %35 = sbr.rel (0) target = $region13
  $region12: #{msdiscriminator_forward.16} parent=0 // pred_region
    _
  $region13: #{msdiscriminator_forward.16} parent=0 // pred_fallthru
    _
  // Predicated region
  $region14: #{msdiscriminator_forward.16} parent=0 // pred_check
    _
  $region15: #{msdiscriminator_forward.16} parent=0 // pred_check_branch
    %37 = sbr.rel (0) target = $region17
  $region16: #{msdiscriminator_forward.16} parent=0 // pred_region
    _
  $region17: #{msdiscriminator_forward.16} parent=0 // pred_fallthru
    _
  // Predicated region
  $region18: #{msdiscriminator_forward.16} parent=0 // pred_check
    _
  $region19: #{msdiscriminator_forward.16} parent=0 // pred_check_branch
    %39 = sbr.rel (0) target = $region21
  $region20: #{msdiscriminator_forward.16} parent=0 // pred_region
    _
  $region21: #{msdiscriminator_forward.16} parent=0 // pred_fallthru
    _
  // Predicated region
  $region22: #{msdiscriminator_forward.16} parent=0 // pred_check
    _
  $region23: #{msdiscriminator_forward.16} parent=0 // pred_check_branch
    %41 = sbr.rel (0) target = $region25
  $region24: #{msdiscriminator_forward.16} parent=0 // pred_region
    _
  $region25: #{msdiscriminator_forward.16} parent=0 // pred_fallthru
    _
  // Predicated region
  $region26: #{msdiscriminator_forward.16} parent=0 // pred_check
    _
  $region27: #{msdiscriminator_forward.16} parent=0 // pred_check_branch
    %43 = sbr.rel (0) target = $region29
  $region28: #{msdiscriminator_forward.16} parent=0 // pred_region
    _
  $region29: #{msdiscriminator_forward.16} parent=0 // pred_fallthru
    _
  // Predicated region
  $region30: #{msdiscriminator_forward.16} parent=0 // pred_check
    _
  $region31: #{msdiscriminator_forward.16} parent=0 // pred_check_branch
    %45 = sbr.rel (0) target = $region33
  $region32: #{msdiscriminator_forward.16} parent=0 // pred_region
    _
  $region33: #{msdiscriminator_forward.16} parent=0 // pred_fallthru
    _
  // Predicated region
  $region34: #{msdiscriminator_forward.16} parent=0 // pred_check
    _
  $region35: #{msdiscriminator_forward.16} parent=0 // pred_check_branch
    %47 = sbr.rel (0) target = $region37
  $region36: #{msdiscriminator_forward.16} parent=0 // pred_region
    _
  $region37: #{msdiscriminator_forward.16} parent=0 // pred_fallthru
    _
  // Predicated region
  $region38: #{msdiscriminator_forward.16} parent=0 // pred_check
    _
  $region39: #{msdiscriminator_forward.16} parent=0 // pred_check_branch
    %49 = sbr.rel (0) target = $region41
  $region40: #{msdiscriminator_forward.16} parent=0 // pred_region
    _
  $region41: #{msdiscriminator_forward.16} parent=0 // pred_fallthru
    _
  // Predicated region
  $region42: #{msdiscriminator_forward.16} parent=0 // pred_check
    _
  $region43: #{msdiscriminator_forward.16} parent=0 // pred_check_branch
    %51 = sbr.rel (0) target = $region45
  $region44: #{msdiscriminator_forward.16} parent=0 // pred_region
    _
  $region45: #{msdiscriminator_forward.16} parent=0 // pred_fallthru
    _
  // Predicated region
  $region46: #{msdiscriminator_forward.16} parent=0 // pred_check
    _
  $region47: #{msdiscriminator_forward.16} parent=0 // pred_check_branch
    %53 = sbr.rel (0) target = $region49
  $region48: #{msdiscriminator_forward.16} parent=0 // pred_region
    _
  $region49: #{msdiscriminator_forward.16} parent=0 // pred_fallthru
    _
  // Predicated region
  $region50: #{msdiscriminator_forward.16} parent=0 // pred_check
    _
  $region51: #{msdiscriminator_forward.16} parent=0 // pred_check_branch
    %55 = sbr.rel (0) target = $region53
  $region52: #{msdiscriminator_forward.16} parent=0 // pred_region
    _
  $region53: #{msdiscriminator_forward.16} parent=0 // pred_fallthru
    _
  // Predicated region
  $region54: #{msdiscriminator_forward.16} parent=0 // pred_check
    _
  $region55: #{msdiscriminator_forward.16} parent=0 // pred_check_branch
    %57 = sbr.rel (0) target = $region57
  $region56: #{msdiscriminator_forward.16} parent=0 // pred_region
    _
  $region57: #{msdiscriminator_forward.16} parent=0 // pred_fallthru
    _
  // Predicated region
  $region58: #{msdiscriminator_forward.16} parent=0 // pred_check
    _
  $region59: #{msdiscriminator_forward.16} parent=0 // pred_check_branch
    %59 = sbr.rel (0) target = $region61
  $region60: #{msdiscriminator_forward.16} parent=0 // pred_region
    _
  $region61: #{msdiscriminator_forward.16} parent=0 // pred_fallthru
    _
  // Predicated region
  $region62: #{msdiscriminator_forward.16} parent=0 // pred_check
    _
  $region63: #{msdiscriminator_forward.16} parent=0 // pred_check_branch
    %61 = sbr.rel (0) target = $region65
  $region64: #{msdiscriminator_forward.16} parent=0 // pred_region
    _
  $region65: #{msdiscriminator_forward.16} parent=0 // pred_fallthru
    _
  // Predicated region
  $region66: #{msdiscriminator_forward.16} parent=0 // pred_check
    _
  $region67: #{msdiscriminator_forward.16} parent=0 // pred_check_branch
    %63 = sbr.rel (0) target = $region69
  $region68: #{msdiscriminator_forward.16} parent=0 // pred_region
    _
  $region69: #{msdiscriminator_forward.16} parent=0 // pred_fallthru
    _
  // Predicated region
  $region70: #{msdiscriminator_forward.16} parent=0 // pred_check
    _
  $region71: #{msdiscriminator_forward.16} parent=0 // pred_check_branch
    %65 = sbr.rel (0) target = $region73
  $region72: #{msdiscriminator_forward.16} parent=0 // pred_region
    _
  $region73: #{msdiscriminator_forward.16} parent=0 // pred_fallthru
    _
  // Predicated region
  $region74: #{msdiscriminator_forward.16} parent=0 // pred_check
    _
  $region75: #{msdiscriminator_forward.16} parent=0 // pred_check_branch
    %67 = sbr.rel (0) target = $region77
  $region76: #{msdiscriminator_forward.16} parent=0 // pred_region
    _
  $region77: #{msdiscriminator_forward.16} parent=0 // pred_fallthru
    _
  // Predicated region
  $region78: #{msdiscriminator_forward.16} parent=0 // pred_check
    _
  $region79: #{msdiscriminator_forward.16} parent=0 // pred_check_branch
    %69 = sbr.rel (0) target = $region81
  $region80: #{msdiscriminator_forward.16} parent=0 // pred_region
    _
  $region81: #{msdiscriminator_forward.16} parent=0 // pred_fallthru
    _
  // Predicated region
  $region82: #{msdiscriminator_forward.16} parent=0 // pred_check
    _
  $region83: #{msdiscriminator_forward.16} parent=0 // pred_check_branch
    %71 = sbr.rel (0) target = $region85
  $region84: #{msdiscriminator_forward.16} parent=0 // pred_region
    _
  $region85: #{msdiscriminator_forward.16} parent=0 // pred_fallthru
    _
  // Predicated region
  $region86: #{msdiscriminator_forward.16} parent=0 // pred_check
    _
  $region87: #{msdiscriminator_forward.16} parent=0 // pred_check_branch
    %73 = sbr.rel (0) target = $region89
  $region88: #{msdiscriminator_forward.16} parent=0 // pred_region
    _
  $region89: #{msdiscriminator_forward.16} parent=0 // pred_fallthru
    _
  // Predicated region
  $region90: #{msdiscriminator_forward.16} parent=0 // pred_check
    _
  $region91: #{msdiscriminator_forward.16} parent=0 // pred_check_branch
    %75 = sbr.rel (0) target = $region93
  $region92: #{msdiscriminator_forward.16} parent=0 // pred_region
    _
  $region93: #{msdiscriminator_forward.16} parent=0 // pred_fallthru
    _
  %v78 = vld [vmem:[%s0] sm:$0x1]
  %vm79 = vcmp.gt.bf16.partialorder %v78, 0
  %v80 = vmul.bf16 %v78, 1009007652
  %v81 = vsel %vm79, %v78, %v80
  %v82 = vld [vmem:[%s1] sm:$0xf]
  %v83 = vld [vmem:[%s1 + $0x4] sm:$0xf]
  %v84 = vld [vmem:[%s1 + $0x8] sm:$0xf]
  %v85 = vld [vmem:[%s1 + $0xc] sm:$0xf]
  %v86 = vld [vmem:[%s1 + $0x10] sm:$0xf]
  %v87 = vld [vmem:[%s1 + $0x14] sm:$0xf]
  %v88 = vld [vmem:[%s1 + $0x18] sm:$0xf]
  %v89 = vld [vmem:[%s1 + $0x1c] sm:$0xf]
  %v90 = vld [vmem:[%s1 + $0x20] sm:$0xf]
  %v91 = vld [vmem:[%s1 + $0x24] sm:$0xf]
  %v92 = vld [vmem:[%s1 + $0x28] sm:$0xf]
  %v93 = vld [vmem:[%s1 + $0x2c] sm:$0xf]
  %v94 = vld [vmem:[%s1 + $0x30] sm:$0xf]
  %v95 = vld [vmem:[%s1 + $0x34] sm:$0xf]
  %v96 = vld [vmem:[%s1 + $0x38] sm:$0xf]
  %v97 = vld [vmem:[%s1 + $0x3c] sm:$0xf]
  %v98 = vld [vmem:[%s2] sm:$0x1]
  %v100 = vlaneseq
  %v101 = vshrl.u32 %v100, 7
  %v102 = vsub.s32 0, %v101
  %v103 = vrot.slane %v98, %v102
  %v121 = vunpack.c.l.b16 %v82
  %v122 = vunpack.c.l.b16 %v83
  %v123 = vunpack.c.l.b16 %v84
  %v124 = vunpack.c.l.b16 %v85
  %v125 = vunpack.c.l.b16 %v86
  %v126 = vunpack.c.l.b16 %v87
  %v127 = vunpack.c.l.b16 %v88
  %v128 = vunpack.c.l.b16 %v89
  %v129 = vunpack.c.l.b16 %v90
  %v130 = vunpack.c.l.b16 %v91
  %v131 = vunpack.c.l.b16 %v92
  %v132 = vunpack.c.l.b16 %v93
  %v133 = vunpack.c.l.b16 %v94
  %v134 = vunpack.c.l.b16 %v95
  %v135 = vunpack.c.l.b16 %v96
  %v136 = vunpack.c.l.b16 %v97
  %v137 = vpack.c.b16 %v122, %v121
  %v138 = vpack.c.b16 %v124, %v123
  %v139 = vpack.c.b16 %v126, %v125
  %v140 = vpack.c.b16 %v128, %v127
  %v141 = vpack.c.b16 %v130, %v129
  %v142 = vpack.c.b16 %v132, %v131
  %v143 = vpack.c.b16 %v134, %v133
  %v144 = vpack.c.b16 %v136, %v135
  %153 = vmatprep.subr.bf16.mxu0 0
  %154 = vmatpush1.bf16.msra.mxu0 %v137
  %155 = vmatprep.subr.bf16.mxu0 0
  %156 = vmatpush1.bf16.msra.mxu0 %v138
  %157 = vmatprep.subr.bf16.mxu0 0
  %158 = vmatpush1.bf16.msra.mxu0 %v139
  %159 = vmatprep.subr.bf16.mxu0 0
  %160 = vmatpush1.bf16.msra.mxu0 %v140
  %161 = vmatprep.subr.bf16.mxu0 0
  %162 = vmatpush1.bf16.msra.mxu0 %v141
  %163 = vmatprep.subr.bf16.mxu0 0
  %164 = vmatpush1.bf16.msra.mxu0 %v142
  %165 = vmatprep.subr.bf16.mxu0 0
  %166 = vmatpush1.bf16.msra.mxu0 %v143
  %167 = vmatprep.subr.bf16.mxu0 0
  %168 = vmatpush1.bf16.msra.mxu0 %v144
  %169 = vmatprep.subr.bf16.mxu0 0
  %170 = vmatpush1.bf16.msra.mxu0 0
  %171 = vmatprep.subr.bf16.mxu0 0
  %172 = vmatpush1.bf16.msra.mxu0 0
  %173 = vmatprep.subr.bf16.mxu0 0
  %174 = vmatpush1.bf16.msra.mxu0 0
  %175 = vmatprep.subr.bf16.mxu0 0
  %176 = vmatpush1.bf16.msra.mxu0 0
  %177 = vmatprep.subr.bf16.mxu0 0
  %178 = vmatpush1.bf16.msra.mxu0 0
  %179 = vmatprep.subr.bf16.mxu0 0
  %180 = vmatpush1.bf16.msra.mxu0 0
  %181 = vmatprep.subr.bf16.mxu0 0
  %182 = vmatpush1.bf16.msra.mxu0 0
  %183 = vmatprep.subr.bf16.mxu0 0
  %184 = vmatpush1.bf16.msra.mxu0 0
  %185 = vmatprep.mubr.bf16.mxu0 0
  %186 = vmatmul.mubr.bf16.gmra.mrb[0].mxu0 %v81
  %v187 = vpop.f32.mrb[0].mxu0
  %v188 = vadd.f32 %v103, %v187
  %v189 = vpop.f32.mrb[0].mxu0
  %v190 = vpop.f32.mrb[0].mxu0
  %v191 = vpop.f32.mrb[0].mxu0
  %192 = vdwg.mxu0
  %vm193 = vcmp.gt.f32.partialorder %v188, 0.0
  %v194 = vmul.f32 %v188, 0.01
  %v195 = vsel %vm193, %v188, %v194
  %v196 = vpack.c.bf16 %v195, %v195
  %v197 = vld [vmem:[%s3] sm:$0xf]
  %v198 = vld [vmem:[%s3 + $0x4] sm:$0xf]
  %v199 = vld [vmem:[%s3 + $0x8] sm:$0xf]
  %v200 = vld [vmem:[%s3 + $0xc] sm:$0xf]
  %v201 = vld [vmem:[%s3 + $0x10] sm:$0xf]
  %v202 = vld [vmem:[%s3 + $0x14] sm:$0xf]
  %v203 = vld [vmem:[%s3 + $0x18] sm:$0xf]
  %v204 = vld [vmem:[%s3 + $0x1c] sm:$0xf]
  %v205 = vld [vmem:[%s3 + $0x20] sm:$0xf]
  %v206 = vld [vmem:[%s3 + $0x24] sm:$0xf]
  %v207 = vld [vmem:[%s3 + $0x28] sm:$0xf]
  %v208 = vld [vmem:[%s3 + $0x2c] sm:$0xf]
  %v209 = vld [vmem:[%s3 + $0x30] sm:$0xf]
  %v210 = vld [vmem:[%s3 + $0x34] sm:$0xf]
  %v211 = vld [vmem:[%s3 + $0x38] sm:$0xf]
  %v212 = vld [vmem:[%s3 + $0x3c] sm:$0xf]
  %v213 = vld [vmem:[%s4] sm:$0xf]
  %v214 = vld [vmem:[%s4 + $0x4] sm:$0xf]
  %v215 = vld [vmem:[%s4 + $0x8] sm:$0xf]
  %v216 = vld [vmem:[%s4 + $0xc] sm:$0xf]
  %v217 = vld [vmem:[%s4 + $0x10] sm:$0xf]
  %v218 = vld [vmem:[%s4 + $0x14] sm:$0xf]
  %v219 = vld [vmem:[%s4 + $0x18] sm:$0xf]
  %v220 = vld [vmem:[%s4 + $0x1c] sm:$0xf]
  %v221 = vld [vmem:[%s4 + $0x20] sm:$0xf]
  %v222 = vld [vmem:[%s4 + $0x24] sm:$0xf]
  %v223 = vld [vmem:[%s4 + $0x28] sm:$0xf]
  %v224 = vld [vmem:[%s4 + $0x2c] sm:$0xf]
  %v225 = vld [vmem:[%s4 + $0x30] sm:$0xf]
  %v226 = vld [vmem:[%s4 + $0x34] sm:$0xf]
  %v227 = vld [vmem:[%s4 + $0x38] sm:$0xf]
  %v228 = vld [vmem:[%s4 + $0x3c] sm:$0xf]
  %v245 = vunpack.c.l.b16 %v213
  %v246 = vunpack.c.l.b16 %v214
  %v247 = vunpack.c.l.b16 %v215
  %v248 = vunpack.c.l.b16 %v216
  %v249 = vunpack.c.l.b16 %v217
  %v250 = vunpack.c.l.b16 %v218
  %v251 = vunpack.c.l.b16 %v219
  %v252 = vunpack.c.l.b16 %v220
  %v253 = vunpack.c.l.b16 %v221
  %v254 = vunpack.c.l.b16 %v222
  %v255 = vunpack.c.l.b16 %v223
  %v256 = vunpack.c.l.b16 %v224
  %v257 = vunpack.c.l.b16 %v225
  %v258 = vunpack.c.l.b16 %v226
  %v259 = vunpack.c.l.b16 %v227
  %v260 = vunpack.c.l.b16 %v228
  %v261 = vpack.c.b16 %v246, %v245
  %v262 = vpack.c.b16 %v248, %v247
  %v263 = vpack.c.b16 %v250, %v249
  %v264 = vpack.c.b16 %v252, %v251
  %v265 = vpack.c.b16 %v254, %v253
  %v266 = vpack.c.b16 %v256, %v255
  %v267 = vpack.c.b16 %v258, %v257
  %v268 = vpack.c.b16 %v260, %v259
  %277 = vmatprep.subr.bf16.mxu0 0
  %278 = vmatpush1.bf16.msra.mxu0 %v261
  %279 = vmatprep.subr.bf16.mxu0 0
  %280 = vmatpush1.bf16.msra.mxu0 %v262
  %281 = vmatprep.subr.bf16.mxu0 0
  %282 = vmatpush1.bf16.msra.mxu0 %v263
  %283 = vmatprep.subr.bf16.mxu0 0
  %284 = vmatpush1.bf16.msra.mxu0 %v264
  %285 = vmatprep.subr.bf16.mxu0 0
  %286 = vmatpush1.bf16.msra.mxu0 %v265
  %287 = vmatprep.subr.bf16.mxu0 0
  %288 = vmatpush1.bf16.msra.mxu0 %v266
  %289 = vmatprep.subr.bf16.mxu0 0
  %290 = vmatpush1.bf16.msra.mxu0 %v267
  %291 = vmatprep.subr.bf16.mxu0 0
  %292 = vmatpush1.bf16.msra.mxu0 %v268
  %293 = vmatprep.subr.bf16.mxu0 0
  %294 = vmatpush1.bf16.msra.mxu0 0
  %295 = vmatprep.subr.bf16.mxu0 0
  %296 = vmatpush1.bf16.msra.mxu0 0
  %297 = vmatprep.subr.bf16.mxu0 0
  %298 = vmatpush1.bf16.msra.mxu0 0
  %299 = vmatprep.subr.bf16.mxu0 0
  %300 = vmatpush1.bf16.msra.mxu0 0
  %301 = vmatprep.subr.bf16.mxu0 0
  %302 = vmatpush1.bf16.msra.mxu0 0
  %303 = vmatprep.subr.bf16.mxu0 0
  %304 = vmatpush1.bf16.msra.mxu0 0
  %305 = vmatprep.subr.bf16.mxu0 0
  %306 = vmatpush1.bf16.msra.mxu0 0
  %307 = vmatprep.subr.bf16.mxu0 0
  %308 = vmatpush1.bf16.msra.mxu0 0
  %309 = vmatprep.mubr.bf16.mxu0 0
  %310 = vmatmul.mubr.bf16.gmra.mrb[0].mxu0 %v78
  %v311 = vpop.f32.mrb[0].mxu0
  %v312 = vadd.f32 0.0, %v311
  %v313 = vpop.f32.mrb[0].mxu0
  %v314 = vpop.f32.mrb[0].mxu0
  %v315 = vpop.f32.mrb[0].mxu0
  %316 = vdwg.mxu0
  %v333 = vunpack.c.l.b16 %v197
  %v334 = vunpack.c.l.b16 %v198
  %v335 = vunpack.c.l.b16 %v199
  %v336 = vunpack.c.l.b16 %v200
  %v337 = vunpack.c.l.b16 %v201
  %v338 = vunpack.c.l.b16 %v202
  %v339 = vunpack.c.l.b16 %v203
  %v340 = vunpack.c.l.b16 %v204
  %v341 = vunpack.c.l.b16 %v205
  %v342 = vunpack.c.l.b16 %v206
  %v343 = vunpack.c.l.b16 %v207
  %v344 = vunpack.c.l.b16 %v208
  %v345 = vunpack.c.l.b16 %v209
  %v346 = vunpack.c.l.b16 %v210
  %v347 = vunpack.c.l.b16 %v211
  %v348 = vunpack.c.l.b16 %v212
  %v349 = vpack.c.b16 %v334, %v333
  %v350 = vpack.c.b16 %v336, %v335
  %v351 = vpack.c.b16 %v338, %v337
  %v352 = vpack.c.b16 %v340, %v339
  %v353 = vpack.c.b16 %v342, %v341
  %v354 = vpack.c.b16 %v344, %v343
  %v355 = vpack.c.b16 %v346, %v345
  %v356 = vpack.c.b16 %v348, %v347
  %365 = vmatprep.subr.bf16.mxu0 0
  %366 = vmatpush1.bf16.msra.mxu0 %v349
  %367 = vmatprep.subr.bf16.mxu0 0
  %368 = vmatpush1.bf16.msra.mxu0 %v350
  %369 = vmatprep.subr.bf16.mxu0 0
  %370 = vmatpush1.bf16.msra.mxu0 %v351
  %371 = vmatprep.subr.bf16.mxu0 0
  %372 = vmatpush1.bf16.msra.mxu0 %v352
  %373 = vmatprep.subr.bf16.mxu0 0
  %374 = vmatpush1.bf16.msra.mxu0 %v353
  %375 = vmatprep.subr.bf16.mxu0 0
  %376 = vmatpush1.bf16.msra.mxu0 %v354
  %377 = vmatprep.subr.bf16.mxu0 0
  %378 = vmatpush1.bf16.msra.mxu0 %v355
  %379 = vmatprep.subr.bf16.mxu0 0
  %380 = vmatpush1.bf16.msra.mxu0 %v356
  %381 = vmatprep.subr.bf16.mxu0 0
  %382 = vmatpush1.bf16.msra.mxu0 0
  %383 = vmatprep.subr.bf16.mxu0 0
  %384 = vmatpush1.bf16.msra.mxu0 0
  %385 = vmatprep.subr.bf16.mxu0 0
  %386 = vmatpush1.bf16.msra.mxu0 0
  %387 = vmatprep.subr.bf16.mxu0 0
  %388 = vmatpush1.bf16.msra.mxu0 0
  %389 = vmatprep.subr.bf16.mxu0 0
  %390 = vmatpush1.bf16.msra.mxu0 0
  %391 = vmatprep.subr.bf16.mxu0 0
  %392 = vmatpush1.bf16.msra.mxu0 0
  %393 = vmatprep.subr.bf16.mxu0 0
  %394 = vmatpush1.bf16.msra.mxu0 0
  %395 = vmatprep.subr.bf16.mxu0 0
  %396 = vmatpush1.bf16.msra.mxu0 0
  %397 = vmatprep.mubr.bf16.mxu0 0
  %398 = vmatmul.mubr.bf16.gmra.mrb[0].mxu0 %v196
  %v399 = vpop.f32.mrb[0].mxu0
  %v400 = vadd.f32 %v312, %v399
  %v401 = vpop.f32.mrb[0].mxu0
  %v402 = vpop.f32.mrb[0].mxu0
  %v403 = vpop.f32.mrb[0].mxu0
  %404 = vdwg.mxu0
  %v405 = vld [vmem:[%s5] sm:$0x1]
  %v407 = vlaneseq
  %v408 = vshrl.u32 %v407, 7
  %v409 = vsub.s32 0, %v408
  %v410 = vrot.slane %v405, %v409
  %v412 = vadd.f32 %v400, %v410
  %v413 = vpack.c.bf16 %v412, %v412
  %vm414 = vcmp.gt.bf16.partialorder %v413, 0
  %v415 = vmul.bf16 %v413, 1009007652
  %v416 = vsel %vm414, %v413, %v415
  %v417 = vld [vmem:[%s6] sm:$0xf]
  %v418 = vld [vmem:[%s6 + $0x4] sm:$0xf]
  %v419 = vld [vmem:[%s6 + $0x8] sm:$0xf]
  %v420 = vld [vmem:[%s6 + $0xc] sm:$0xf]
  %v421 = vld [vmem:[%s6 + $0x10] sm:$0xf]
  %v422 = vld [vmem:[%s6 + $0x14] sm:$0xf]
  %v423 = vld [vmem:[%s6 + $0x18] sm:$0xf]
  %v424 = vld [vmem:[%s6 + $0x1c] sm:$0xf]
  %v425 = vld [vmem:[%s6 + $0x20] sm:$0xf]
  %v426 = vld [vmem:[%s6 + $0x24] sm:$0xf]
  %v427 = vld [vmem:[%s6 + $0x28] sm:$0xf]
  %v428 = vld [vmem:[%s6 + $0x2c] sm:$0xf]
  %v429 = vld [vmem:[%s6 + $0x30] sm:$0xf]
  %v430 = vld [vmem:[%s6 + $0x34] sm:$0xf]
  %v431 = vld [vmem:[%s6 + $0x38] sm:$0xf]
  %v432 = vld [vmem:[%s6 + $0x3c] sm:$0xf]
  %v433 = vld [vmem:[%s7] sm:$0x1]
  %v435 = vlaneseq
  %v436 = vshrl.u32 %v435, 7
  %v437 = vsub.s32 0, %v436
  %v438 = vrot.slane %v433, %v437
  %v456 = vunpack.c.l.b16 %v417
  %v457 = vunpack.c.l.b16 %v418
  %v458 = vunpack.c.l.b16 %v419
  %v459 = vunpack.c.l.b16 %v420
  %v460 = vunpack.c.l.b16 %v421
  %v461 = vunpack.c.l.b16 %v422
  %v462 = vunpack.c.l.b16 %v423
  %v463 = vunpack.c.l.b16 %v424
  %v464 = vunpack.c.l.b16 %v425
  %v465 = vunpack.c.l.b16 %v426
  %v466 = vunpack.c.l.b16 %v427
  %v467 = vunpack.c.l.b16 %v428
  %v468 = vunpack.c.l.b16 %v429
  %v469 = vunpack.c.l.b16 %v430
  %v470 = vunpack.c.l.b16 %v431
  %v471 = vunpack.c.l.b16 %v432
  %v472 = vpack.c.b16 %v457, %v456
  %v473 = vpack.c.b16 %v459, %v458
  %v474 = vpack.c.b16 %v461, %v460
  %v475 = vpack.c.b16 %v463, %v462
  %v476 = vpack.c.b16 %v465, %v464
  %v477 = vpack.c.b16 %v467, %v466
  %v478 = vpack.c.b16 %v469, %v468
  %v479 = vpack.c.b16 %v471, %v470
  %488 = vmatprep.subr.bf16.mxu0 0
  %489 = vmatpush1.bf16.msra.mxu0 %v472
  %490 = vmatprep.subr.bf16.mxu0 0
  %491 = vmatpush1.bf16.msra.mxu0 %v473
  %492 = vmatprep.subr.bf16.mxu0 0
  %493 = vmatpush1.bf16.msra.mxu0 %v474
  %494 = vmatprep.subr.bf16.mxu0 0
  %495 = vmatpush1.bf16.msra.mxu0 %v475
  %496 = vmatprep.subr.bf16.mxu0 0
  %497 = vmatpush1.bf16.msra.mxu0 %v476
  %498 = vmatprep.subr.bf16.mxu0 0
  %499 = vmatpush1.bf16.msra.mxu0 %v477
  %500 = vmatprep.subr.bf16.mxu0 0
  %501 = vmatpush1.bf16.msra.mxu0 %v478
  %502 = vmatprep.subr.bf16.mxu0 0
  %503 = vmatpush1.bf16.msra.mxu0 %v479
  %504 = vmatprep.subr.bf16.mxu0 0
  %505 = vmatpush1.bf16.msra.mxu0 0
  %506 = vmatprep.subr.bf16.mxu0 0
  %507 = vmatpush1.bf16.msra.mxu0 0
  %508 = vmatprep.subr.bf16.mxu0 0
  %509 = vmatpush1.bf16.msra.mxu0 0
  %510 = vmatprep.subr.bf16.mxu0 0
  %511 = vmatpush1.bf16.msra.mxu0 0
  %512 = vmatprep.subr.bf16.mxu0 0
  %513 = vmatpush1.bf16.msra.mxu0 0
  %514 = vmatprep.subr.bf16.mxu0 0
  %515 = vmatpush1.bf16.msra.mxu0 0
  %516 = vmatprep.subr.bf16.mxu0 0
  %517 = vmatpush1.bf16.msra.mxu0 0
  %518 = vmatprep.subr.bf16.mxu0 0
  %519 = vmatpush1.bf16.msra.mxu0 0
  %520 = vmatprep.mubr.bf16.mxu0 0
  %521 = vmatmul.mubr.bf16.gmra.mrb[0].mxu0 %v416
  %v522 = vpop.f32.mrb[0].mxu0
  %v523 = vadd.f32 %v438, %v522
  %v524 = vpop.f32.mrb[0].mxu0
  %v525 = vpop.f32.mrb[0].mxu0
  %v526 = vpop.f32.mrb[0].mxu0
  %527 = vdwg.mxu0
  %vm528 = vcmp.gt.f32.partialorder %v523, 0.0
  %v529 = vmul.f32 %v523, 0.01
  %v530 = vsel %vm528, %v523, %v529
  %v531 = vpack.c.bf16 %v530, %v530
  %v532 = vld [vmem:[%s8] sm:$0xf]
  %v533 = vld [vmem:[%s8 + $0x4] sm:$0xf]
  %v534 = vld [vmem:[%s8 + $0x8] sm:$0xf]
  %v535 = vld [vmem:[%s8 + $0xc] sm:$0xf]
  %v536 = vld [vmem:[%s8 + $0x10] sm:$0xf]
  %v537 = vld [vmem:[%s8 + $0x14] sm:$0xf]
  %v538 = vld [vmem:[%s8 + $0x18] sm:$0xf]
  %v539 = vld [vmem:[%s8 + $0x1c] sm:$0xf]
  %v540 = vld [vmem:[%s8 + $0x20] sm:$0xf]
  %v541 = vld [vmem:[%s8 + $0x24] sm:$0xf]
  %v542 = vld [vmem:[%s8 + $0x28] sm:$0xf]
  %v543 = vld [vmem:[%s8 + $0x2c] sm:$0xf]
  %v544 = vld [vmem:[%s8 + $0x30] sm:$0xf]
  %v545 = vld [vmem:[%s8 + $0x34] sm:$0xf]
  %v546 = vld [vmem:[%s8 + $0x38] sm:$0xf]
  %v547 = vld [vmem:[%s8 + $0x3c] sm:$0xf]
  %v548 = vld [vmem:[%s9] sm:$0xf]
  %v549 = vld [vmem:[%s9 + $0x4] sm:$0xf]
  %v550 = vld [vmem:[%s9 + $0x8] sm:$0xf]
  %v551 = vld [vmem:[%s9 + $0xc] sm:$0xf]
  %v552 = vld [vmem:[%s9 + $0x10] sm:$0xf]
  %v553 = vld [vmem:[%s9 + $0x14] sm:$0xf]
  %v554 = vld [vmem:[%s9 + $0x18] sm:$0xf]
  %v555 = vld [vmem:[%s9 + $0x1c] sm:$0xf]
  %v556 = vld [vmem:[%s9 + $0x20] sm:$0xf]
  %v557 = vld [vmem:[%s9 + $0x24] sm:$0xf]
  %v558 = vld [vmem:[%s9 + $0x28] sm:$0xf]
  %v559 = vld [vmem:[%s9 + $0x2c] sm:$0xf]
  %v560 = vld [vmem:[%s9 + $0x30] sm:$0xf]
  %v561 = vld [vmem:[%s9 + $0x34] sm:$0xf]
  %v562 = vld [vmem:[%s9 + $0x38] sm:$0xf]
  %v563 = vld [vmem:[%s9 + $0x3c] sm:$0xf]
  %v580 = vunpack.c.l.b16 %v548
  %v581 = vunpack.c.l.b16 %v549
  %v582 = vunpack.c.l.b16 %v550
  %v583 = vunpack.c.l.b16 %v551
  %v584 = vunpack.c.l.b16 %v552
  %v585 = vunpack.c.l.b16 %v553
  %v586 = vunpack.c.l.b16 %v554
  %v587 = vunpack.c.l.b16 %v555
  %v588 = vunpack.c.l.b16 %v556
  %v589 = vunpack.c.l.b16 %v557
  %v590 = vunpack.c.l.b16 %v558
  %v591 = vunpack.c.l.b16 %v559
  %v592 = vunpack.c.l.b16 %v560
  %v593 = vunpack.c.l.b16 %v561
  %v594 = vunpack.c.l.b16 %v562
  %v595 = vunpack.c.l.b16 %v563
  %v596 = vpack.c.b16 %v581, %v580
  %v597 = vpack.c.b16 %v583, %v582
  %v598 = vpack.c.b16 %v585, %v584
  %v599 = vpack.c.b16 %v587, %v586
  %v600 = vpack.c.b16 %v589, %v588
  %v601 = vpack.c.b16 %v591, %v590
  %v602 = vpack.c.b16 %v593, %v592
  %v603 = vpack.c.b16 %v595, %v594
  %612 = vmatprep.subr.bf16.mxu0 0
  %613 = vmatpush1.bf16.msra.mxu0 %v596
  %614 = vmatprep.subr.bf16.mxu0 0
  %615 = vmatpush1.bf16.msra.mxu0 %v597
  %616 = vmatprep.subr.bf16.mxu0 0
  %617 = vmatpush1.bf16.msra.mxu0 %v598
  %618 = vmatprep.subr.bf16.mxu0 0
  %619 = vmatpush1.bf16.msra.mxu0 %v599
  %620 = vmatprep.subr.bf16.mxu0 0
  %621 = vmatpush1.bf16.msra.mxu0 %v600
  %622 = vmatprep.subr.bf16.mxu0 0
  %623 = vmatpush1.bf16.msra.mxu0 %v601
  %624 = vmatprep.subr.bf16.mxu0 0
  %625 = vmatpush1.bf16.msra.mxu0 %v602
  %626 = vmatprep.subr.bf16.mxu0 0
  %627 = vmatpush1.bf16.msra.mxu0 %v603
  %628 = vmatprep.subr.bf16.mxu0 0
  %629 = vmatpush1.bf16.msra.mxu0 0
  %630 = vmatprep.subr.bf16.mxu0 0
  %631 = vmatpush1.bf16.msra.mxu0 0
  %632 = vmatprep.subr.bf16.mxu0 0
  %633 = vmatpush1.bf16.msra.mxu0 0
  %634 = vmatprep.subr.bf16.mxu0 0
  %635 = vmatpush1.bf16.msra.mxu0 0
  %636 = vmatprep.subr.bf16.mxu0 0
  %637 = vmatpush1.bf16.msra.mxu0 0
  %638 = vmatprep.subr.bf16.mxu0 0
  %639 = vmatpush1.bf16.msra.mxu0 0
  %640 = vmatprep.subr.bf16.mxu0 0
  %641 = vmatpush1.bf16.msra.mxu0 0
  %642 = vmatprep.subr.bf16.mxu0 0
  %643 = vmatpush1.bf16.msra.mxu0 0
  %644 = vmatprep.mubr.bf16.mxu0 0
  %645 = vmatmul.mubr.bf16.gmra.mrb[0].mxu0 %v413
  %v646 = vpop.f32.mrb[0].mxu0
  %v647 = vadd.f32 0.0, %v646
  %v648 = vpop.f32.mrb[0].mxu0
  %v649 = vpop.f32.mrb[0].mxu0
  %v650 = vpop.f32.mrb[0].mxu0
  %651 = vdwg.mxu0
  %v668 = vunpack.c.l.b16 %v532
  %v669 = vunpack.c.l.b16 %v533
  %v670 = vunpack.c.l.b16 %v534
  %v671 = vunpack.c.l.b16 %v535
  %v672 = vunpack.c.l.b16 %v536
  %v673 = vunpack.c.l.b16 %v537
  %v674 = vunpack.c.l.b16 %v538
  %v675 = vunpack.c.l.b16 %v539
  %v676 = vunpack.c.l.b16 %v540
  %v677 = vunpack.c.l.b16 %v541
  %v678 = vunpack.c.l.b16 %v542
  %v679 = vunpack.c.l.b16 %v543
  %v680 = vunpack.c.l.b16 %v544
  %v681 = vunpack.c.l.b16 %v545
  %v682 = vunpack.c.l.b16 %v546
  %v683 = vunpack.c.l.b16 %v547
  %v684 = vpack.c.b16 %v669, %v668
  %v685 = vpack.c.b16 %v671, %v670
  %v686 = vpack.c.b16 %v673, %v672
  %v687 = vpack.c.b16 %v675, %v674
  %v688 = vpack.c.b16 %v677, %v676
  %v689 = vpack.c.b16 %v679, %v678
  %v690 = vpack.c.b16 %v681, %v680
  %v691 = vpack.c.b16 %v683, %v682
  %700 = vmatprep.subr.bf16.mxu0 0
  %701 = vmatpush1.bf16.msra.mxu0 %v684
  %702 = vmatprep.subr.bf16.mxu0 0
  %703 = vmatpush1.bf16.msra.mxu0 %v685
  %704 = vmatprep.subr.bf16.mxu0 0
  %705 = vmatpush1.bf16.msra.mxu0 %v686
  %706 = vmatprep.subr.bf16.mxu0 0
  %707 = vmatpush1.bf16.msra.mxu0 %v687
  %708 = vmatprep.subr.bf16.mxu0 0
  %709 = vmatpush1.bf16.msra.mxu0 %v688
  %710 = vmatprep.subr.bf16.mxu0 0
  %711 = vmatpush1.bf16.msra.mxu0 %v689
  %712 = vmatprep.subr.bf16.mxu0 0
  %713 = vmatpush1.bf16.msra.mxu0 %v690
  %714 = vmatprep.subr.bf16.mxu0 0
  %715 = vmatpush1.bf16.msra.mxu0 %v691
  %716 = vmatprep.subr.bf16.mxu0 0
  %717 = vmatpush1.bf16.msra.mxu0 0
  %718 = vmatprep.subr.bf16.mxu0 0
  %719 = vmatpush1.bf16.msra.mxu0 0
  %720 = vmatprep.subr.bf16.mxu0 0
  %721 = vmatpush1.bf16.msra.mxu0 0
  %722 = vmatprep.subr.bf16.mxu0 0
  %723 = vmatpush1.bf16.msra.mxu0 0
  %724 = vmatprep.subr.bf16.mxu0 0
  %725 = vmatpush1.bf16.msra.mxu0 0
  %726 = vmatprep.subr.bf16.mxu0 0
  %727 = vmatpush1.bf16.msra.mxu0 0
  %728 = vmatprep.subr.bf16.mxu0 0
  %729 = vmatpush1.bf16.msra.mxu0 0
  %730 = vmatprep.subr.bf16.mxu0 0
  %731 = vmatpush1.bf16.msra.mxu0 0
  %732 = vmatprep.mubr.bf16.mxu0 0
  %733 = vmatmul.mubr.bf16.gmra.mrb[0].mxu0 %v531
  %v734 = vpop.f32.mrb[0].mxu0
  %v735 = vadd.f32 %v647, %v734
  %v736 = vpop.f32.mrb[0].mxu0
  %v737 = vpop.f32.mrb[0].mxu0
  %v738 = vpop.f32.mrb[0].mxu0
  %739 = vdwg.mxu0
  %v740 = vld [vmem:[%s10] sm:$0x1]
  %v742 = vlaneseq
  %v743 = vshrl.u32 %v742, 7
  %v744 = vsub.s32 0, %v743
  %v745 = vrot.slane %v740, %v744
  %v747 = vadd.f32 %v735, %v745
  %v748 = vpack.c.bf16 %v747, %v747
  %vm749 = vcmp.gt.bf16.partialorder %v748, 0
  %v750 = vmul.bf16 %v748, 1009007652
  %v751 = vsel %vm749, %v748, %v750
  %v752 = vld [vmem:[%s11] sm:$0xf]
  %v753 = vld [vmem:[%s11 + $0x4] sm:$0xf]
  %v754 = vld [vmem:[%s11 + $0x8] sm:$0xf]
  %v755 = vld [vmem:[%s11 + $0xc] sm:$0xf]
  %v756 = vld [vmem:[%s11 + $0x10] sm:$0xf]
  %v757 = vld [vmem:[%s11 + $0x14] sm:$0xf]
  %v758 = vld [vmem:[%s11 + $0x18] sm:$0xf]
  %v759 = vld [vmem:[%s11 + $0x1c] sm:$0xf]
  %v760 = vld [vmem:[%s11 + $0x20] sm:$0xf]
  %v761 = vld [vmem:[%s11 + $0x24] sm:$0xf]
  %v762 = vld [vmem:[%s11 + $0x28] sm:$0xf]
  %v763 = vld [vmem:[%s11 + $0x2c] sm:$0xf]
  %v764 = vld [vmem:[%s11 + $0x30] sm:$0xf]
  %v765 = vld [vmem:[%s11 + $0x34] sm:$0xf]
  %v766 = vld [vmem:[%s11 + $0x38] sm:$0xf]
  %v767 = vld [vmem:[%s11 + $0x3c] sm:$0xf]
  %v768 = vld [vmem:[%s12] sm:$0x1]
  %v770 = vlaneseq
  %v771 = vshrl.u32 %v770, 7
  %v772 = vsub.s32 0, %v771
  %v773 = vrot.slane %v768, %v772
  %v791 = vunpack.c.l.b16 %v752
  %v792 = vunpack.c.l.b16 %v753
  %v793 = vunpack.c.l.b16 %v754
  %v794 = vunpack.c.l.b16 %v755
  %v795 = vunpack.c.l.b16 %v756
  %v796 = vunpack.c.l.b16 %v757
  %v797 = vunpack.c.l.b16 %v758
  %v798 = vunpack.c.l.b16 %v759
  %v799 = vunpack.c.l.b16 %v760
  %v800 = vunpack.c.l.b16 %v761
  %v801 = vunpack.c.l.b16 %v762
  %v802 = vunpack.c.l.b16 %v763
  %v803 = vunpack.c.l.b16 %v764
  %v804 = vunpack.c.l.b16 %v765
  %v805 = vunpack.c.l.b16 %v766
  %v806 = vunpack.c.l.b16 %v767
  %v807 = vpack.c.b16 %v792, %v791
  %v808 = vpack.c.b16 %v794, %v793
  %v809 = vpack.c.b16 %v796, %v795
  %v810 = vpack.c.b16 %v798, %v797
  %v811 = vpack.c.b16 %v800, %v799
  %v812 = vpack.c.b16 %v802, %v801
  %v813 = vpack.c.b16 %v804, %v803
  %v814 = vpack.c.b16 %v806, %v805
  %823 = vmatprep.subr.bf16.mxu0 0
  %824 = vmatpush1.bf16.msra.mxu0 %v807
  %825 = vmatprep.subr.bf16.mxu0 0
  %826 = vmatpush1.bf16.msra.mxu0 %v808
  %827 = vmatprep.subr.bf16.mxu0 0
  %828 = vmatpush1.bf16.msra.mxu0 %v809
  %829 = vmatprep.subr.bf16.mxu0 0
  %830 = vmatpush1.bf16.msra.mxu0 %v810
  %831 = vmatprep.subr.bf16.mxu0 0
  %832 = vmatpush1.bf16.msra.mxu0 %v811
  %833 = vmatprep.subr.bf16.mxu0 0
  %834 = vmatpush1.bf16.msra.mxu0 %v812
  %835 = vmatprep.subr.bf16.mxu0 0
  %836 = vmatpush1.bf16.msra.mxu0 %v813
  %837 = vmatprep.subr.bf16.mxu0 0
  %838 = vmatpush1.bf16.msra.mxu0 %v814
  %839 = vmatprep.subr.bf16.mxu0 0
  %840 = vmatpush1.bf16.msra.mxu0 0
  %841 = vmatprep.subr.bf16.mxu0 0
  %842 = vmatpush1.bf16.msra.mxu0 0
  %843 = vmatprep.subr.bf16.mxu0 0
  %844 = vmatpush1.bf16.msra.mxu0 0
  %845 = vmatprep.subr.bf16.mxu0 0
  %846 = vmatpush1.bf16.msra.mxu0 0
  %847 = vmatprep.subr.bf16.mxu0 0
  %848 = vmatpush1.bf16.msra.mxu0 0
  %849 = vmatprep.subr.bf16.mxu0 0
  %850 = vmatpush1.bf16.msra.mxu0 0
  %851 = vmatprep.subr.bf16.mxu0 0
  %852 = vmatpush1.bf16.msra.mxu0 0
  %853 = vmatprep.subr.bf16.mxu0 0
  %854 = vmatpush1.bf16.msra.mxu0 0
  %855 = vmatprep.mubr.bf16.mxu0 0
  %856 = vmatmul.mubr.bf16.gmra.mrb[0].mxu0 %v751
  %v857 = vpop.f32.mrb[0].mxu0
  %v858 = vadd.f32 %v773, %v857
  %v859 = vpop.f32.mrb[0].mxu0
  %v860 = vpop.f32.mrb[0].mxu0
  %v861 = vpop.f32.mrb[0].mxu0
  %862 = vdwg.mxu0
  %vm863 = vcmp.gt.f32.partialorder %v858, 0.0
  %v864 = vmul.f32 %v858, 0.01
  %v865 = vsel %vm863, %v858, %v864
  %v866 = vpack.c.bf16 %v865, %v865
  %v867 = vld [vmem:[%s13] sm:$0xff]
  %v868 = vld [vmem:[%s13 + $0x8] sm:$0xff]
  %v869 = vld [vmem:[%s13 + $0x10] sm:$0xff]
  %v870 = vld [vmem:[%s13 + $0x18] sm:$0xff]
  %v871 = vld [vmem:[%s13 + $0x20] sm:$0xff]
  %v872 = vld [vmem:[%s13 + $0x28] sm:$0xff]
  %v873 = vld [vmem:[%s13 + $0x30] sm:$0xff]
  %v874 = vld [vmem:[%s13 + $0x38] sm:$0xff]
  %v875 = vld [vmem:[%s13 + $0x40] sm:$0xff]
  %v876 = vld [vmem:[%s13 + $0x48] sm:$0xff]
  %v877 = vld [vmem:[%s13 + $0x50] sm:$0xff]
  %v878 = vld [vmem:[%s13 + $0x58] sm:$0xff]
  %v879 = vld [vmem:[%s13 + $0x60] sm:$0xff]
  %v880 = vld [vmem:[%s13 + $0x68] sm:$0xff]
  %v881 = vld [vmem:[%s13 + $0x70] sm:$0xff]
  %v882 = vld [vmem:[%s13 + $0x78] sm:$0xff]
  %v883 = vld [vmem:[%s14] sm:$0xff]
  %v884 = vld [vmem:[%s14 + $0x8] sm:$0xff]
  %v885 = vld [vmem:[%s14 + $0x10] sm:$0xff]
  %v886 = vld [vmem:[%s14 + $0x18] sm:$0xff]
  %v887 = vld [vmem:[%s14 + $0x20] sm:$0xff]
  %v888 = vld [vmem:[%s14 + $0x28] sm:$0xff]
  %v889 = vld [vmem:[%s14 + $0x30] sm:$0xff]
  %v890 = vld [vmem:[%s14 + $0x38] sm:$0xff]
  %v891 = vld [vmem:[%s14 + $0x40] sm:$0xff]
  %v892 = vld [vmem:[%s14 + $0x48] sm:$0xff]
  %v893 = vld [vmem:[%s14 + $0x50] sm:$0xff]
  %v894 = vld [vmem:[%s14 + $0x58] sm:$0xff]
  %v895 = vld [vmem:[%s14 + $0x60] sm:$0xff]
  %v896 = vld [vmem:[%s14 + $0x68] sm:$0xff]
  %v897 = vld [vmem:[%s14 + $0x70] sm:$0xff]
  %v898 = vld [vmem:[%s14 + $0x78] sm:$0xff]
  %v915 = vunpack.c.l.b16 %v883
  %v916 = vunpack.c.h.b16 %v883
  %v917 = vunpack.c.l.b16 %v884
  %v918 = vunpack.c.h.b16 %v884
  %v919 = vunpack.c.l.b16 %v885
  %v920 = vunpack.c.h.b16 %v885
  %v921 = vunpack.c.l.b16 %v886
  %v922 = vunpack.c.h.b16 %v886
  %v923 = vunpack.c.l.b16 %v887
  %v924 = vunpack.c.h.b16 %v887
  %v925 = vunpack.c.l.b16 %v888
  %v926 = vunpack.c.h.b16 %v888
  %v927 = vunpack.c.l.b16 %v889
  %v928 = vunpack.c.h.b16 %v889
  %v929 = vunpack.c.l.b16 %v890
  %v930 = vunpack.c.h.b16 %v890
  %v931 = vunpack.c.l.b16 %v891
  %v932 = vunpack.c.h.b16 %v891
  %v933 = vunpack.c.l.b16 %v892
  %v934 = vunpack.c.h.b16 %v892
  %v935 = vunpack.c.l.b16 %v893
  %v936 = vunpack.c.h.b16 %v893
  %v937 = vunpack.c.l.b16 %v894
  %v938 = vunpack.c.h.b16 %v894
  %v939 = vunpack.c.l.b16 %v895
  %v940 = vunpack.c.h.b16 %v895
  %v941 = vunpack.c.l.b16 %v896
  %v942 = vunpack.c.h.b16 %v896
  %v943 = vunpack.c.l.b16 %v897
  %v944 = vunpack.c.h.b16 %v897
  %v945 = vunpack.c.l.b16 %v898
  %v946 = vunpack.c.h.b16 %v898
  %v947 = vpack.c.b16 %v917, %v915
  %v948 = vpack.c.b16 %v918, %v916
  %v949 = vpack.c.b16 %v921, %v919
  %v950 = vpack.c.b16 %v922, %v920
  %v951 = vpack.c.b16 %v925, %v923
  %v952 = vpack.c.b16 %v926, %v924
  %v953 = vpack.c.b16 %v929, %v927
  %v954 = vpack.c.b16 %v930, %v928
  %v955 = vpack.c.b16 %v933, %v931
  %v956 = vpack.c.b16 %v934, %v932
  %v957 = vpack.c.b16 %v937, %v935
  %v958 = vpack.c.b16 %v938, %v936
  %v959 = vpack.c.b16 %v941, %v939
  %v960 = vpack.c.b16 %v942, %v940
  %v961 = vpack.c.b16 %v945, %v943
  %v962 = vpack.c.b16 %v946, %v944
  %979 = vmatprep.subr.bf16.mxu0 %v948
  %980 = vmatpush1.bf16.msra.mxu0 %v947
  %981 = vmatprep.subr.bf16.mxu0 %v950
  %982 = vmatpush1.bf16.msra.mxu0 %v949
  %983 = vmatprep.subr.bf16.mxu0 %v952
  %984 = vmatpush1.bf16.msra.mxu0 %v951
  %985 = vmatprep.subr.bf16.mxu0 %v954
  %986 = vmatpush1.bf16.msra.mxu0 %v953
  %987 = vmatprep.subr.bf16.mxu0 %v956
  %988 = vmatpush1.bf16.msra.mxu0 %v955
  %989 = vmatprep.subr.bf16.mxu0 %v958
  %990 = vmatpush1.bf16.msra.mxu0 %v957
  %991 = vmatprep.subr.bf16.mxu0 %v960
  %992 = vmatpush1.bf16.msra.mxu0 %v959
  %993 = vmatprep.subr.bf16.mxu0 %v962
  %994 = vmatpush1.bf16.msra.mxu0 %v961
  %995 = vmatprep.subr.bf16.mxu0 0
  %996 = vmatpush1.bf16.msra.mxu0 0
  %997 = vmatprep.subr.bf16.mxu0 0
  %998 = vmatpush1.bf16.msra.mxu0 0
  %999 = vmatprep.subr.bf16.mxu0 0
  %1000 = vmatpush1.bf16.msra.mxu0 0
  %1001 = vmatprep.subr.bf16.mxu0 0
  %1002 = vmatpush1.bf16.msra.mxu0 0
  %1003 = vmatprep.subr.bf16.mxu0 0
  %1004 = vmatpush1.bf16.msra.mxu0 0
  %1005 = vmatprep.subr.bf16.mxu0 0
  %1006 = vmatpush1.bf16.msra.mxu0 0
  %1007 = vmatprep.subr.bf16.mxu0 0
  %1008 = vmatpush1.bf16.msra.mxu0 0
  %1009 = vmatprep.subr.bf16.mxu0 0
  %1010 = vmatpush1.bf16.msra.mxu0 0
  %1011 = vmatprep.mubr.bf16.mxu0 0
  %1012 = vmatmul.mubr.bf16.gmra.mrb[0].mxu0 %v748
  %v1013 = vpop.f32.mrb[0].mxu0
  %v1014 = vadd.f32 0.0, %v1013
  %v1015 = vpop.f32.mrb[0].mxu0
  %v1016 = vadd.f32 0.0, %v1015
  %v1017 = vpop.f32.mrb[0].mxu0
  %v1018 = vpop.f32.mrb[0].mxu0
  %1019 = vdwg.mxu0
  %v1036 = vunpack.c.l.b16 %v867
  %v1037 = vunpack.c.h.b16 %v867
  %v1038 = vunpack.c.l.b16 %v868
  %v1039 = vunpack.c.h.b16 %v868
  %v1040 = vunpack.c.l.b16 %v869
  %v1041 = vunpack.c.h.b16 %v869
  %v1042 = vunpack.c.l.b16 %v870
  %v1043 = vunpack.c.h.b16 %v870
  %v1044 = vunpack.c.l.b16 %v871
  %v1045 = vunpack.c.h.b16 %v871
  %v1046 = vunpack.c.l.b16 %v872
  %v1047 = vunpack.c.h.b16 %v872
  %v1048 = vunpack.c.l.b16 %v873
  %v1049 = vunpack.c.h.b16 %v873
  %v1050 = vunpack.c.l.b16 %v874
  %v1051 = vunpack.c.h.b16 %v874
  %v1052 = vunpack.c.l.b16 %v875
  %v1053 = vunpack.c.h.b16 %v875
  %v1054 = vunpack.c.l.b16 %v876
  %v1055 = vunpack.c.h.b16 %v876
  %v1056 = vunpack.c.l.b16 %v877
  %v1057 = vunpack.c.h.b16 %v877
  %v1058 = vunpack.c.l.b16 %v878
  %v1059 = vunpack.c.h.b16 %v878
  %v1060 = vunpack.c.l.b16 %v879
  %v1061 = vunpack.c.h.b16 %v879
  %v1062 = vunpack.c.l.b16 %v880
  %v1063 = vunpack.c.h.b16 %v880
  %v1064 = vunpack.c.l.b16 %v881
  %v1065 = vunpack.c.h.b16 %v881
  %v1066 = vunpack.c.l.b16 %v882
  %v1067 = vunpack.c.h.b16 %v882
  %v1068 = vpack.c.b16 %v1038, %v1036
  %v1069 = vpack.c.b16 %v1039, %v1037
  %v1070 = vpack.c.b16 %v1042, %v1040
  %v1071 = vpack.c.b16 %v1043, %v1041
  %v1072 = vpack.c.b16 %v1046, %v1044
  %v1073 = vpack.c.b16 %v1047, %v1045
  %v1074 = vpack.c.b16 %v1050, %v1048
  %v1075 = vpack.c.b16 %v1051, %v1049
  %v1076 = vpack.c.b16 %v1054, %v1052
  %v1077 = vpack.c.b16 %v1055, %v1053
  %v1078 = vpack.c.b16 %v1058, %v1056
  %v1079 = vpack.c.b16 %v1059, %v1057
  %v1080 = vpack.c.b16 %v1062, %v1060
  %v1081 = vpack.c.b16 %v1063, %v1061
  %v1082 = vpack.c.b16 %v1066, %v1064
  %v1083 = vpack.c.b16 %v1067, %v1065
  %1100 = vmatprep.subr.bf16.mxu0 %v1069
  %1101 = vmatpush1.bf16.msra.mxu0 %v1068
  %1102 = vmatprep.subr.bf16.mxu0 %v1071
  %1103 = vmatpush1.bf16.msra.mxu0 %v1070
  %1104 = vmatprep.subr.bf16.mxu0 %v1073
  %1105 = vmatpush1.bf16.msra.mxu0 %v1072
  %1106 = vmatprep.subr.bf16.mxu0 %v1075
  %1107 = vmatpush1.bf16.msra.mxu0 %v1074
  %1108 = vmatprep.subr.bf16.mxu0 %v1077
  %1109 = vmatpush1.bf16.msra.mxu0 %v1076
  %1110 = vmatprep.subr.bf16.mxu0 %v1079
  %1111 = vmatpush1.bf16.msra.mxu0 %v1078
  %1112 = vmatprep.subr.bf16.mxu0 %v1081
  %1113 = vmatpush1.bf16.msra.mxu0 %v1080
  %1114 = vmatprep.subr.bf16.mxu0 %v1083
  %1115 = vmatpush1.bf16.msra.mxu0 %v1082
  %1116 = vmatprep.subr.bf16.mxu0 0
  %1117 = vmatpush1.bf16.msra.mxu0 0
  %1118 = vmatprep.subr.bf16.mxu0 0
  %1119 = vmatpush1.bf16.msra.mxu0 0
  %1120 = vmatprep.subr.bf16.mxu0 0
  %1121 = vmatpush1.bf16.msra.mxu0 0
  %1122 = vmatprep.subr.bf16.mxu0 0
  %1123 = vmatpush1.bf16.msra.mxu0 0
  %1124 = vmatprep.subr.bf16.mxu0 0
  %1125 = vmatpush1.bf16.msra.mxu0 0
  %1126 = vmatprep.subr.bf16.mxu0 0
  %1127 = vmatpush1.bf16.msra.mxu0 0
  %1128 = vmatprep.subr.bf16.mxu0 0
  %1129 = vmatpush1.bf16.msra.mxu0 0
  %1130 = vmatprep.subr.bf16.mxu0 0
  %1131 = vmatpush1.bf16.msra.mxu0 0
  %1132 = vmatprep.mubr.bf16.mxu0 0
  %1133 = vmatmul.mubr.bf16.gmra.mrb[0].mxu0 %v866
  %v1134 = vpop.f32.mrb[0].mxu0
  %v1135 = vadd.f32 %v1014, %v1134
  %v1136 = vpop.f32.mrb[0].mxu0
  %v1137 = vadd.f32 %v1016, %v1136
  %v1138 = vpop.f32.mrb[0].mxu0
  %v1139 = vpop.f32.mrb[0].mxu0
  %1140 = vdwg.mxu0
  %v1141 = vld [vmem:[%s15] sm:$0x3]
  %v1143 = vlaneseq
  %v1144 = vshrl.u32 %v1143, 7
  %v1145 = vsub.s32 0, %v1144
  %v1146 = vrot.slane %v1141, %v1145
  %v1147 = vlaneseq
  %v1148 = vshrl.u32 %v1147, 7
  %v1149 = vsub.s32 1, %v1148
  %v1150 = vrot.slane %v1141, %v1149
  %v1153 = vadd.f32 %v1135, %v1146
  %v1154 = vadd.f32 %v1137, %v1150
  %v1155 = vpack.c.bf16 %v1153, %v1153
  %v1156 = vpack.c.bf16 %v1154, %v1154
  %vm1157 = vcmp.gt.bf16.partialorder %v1155, 0
  %vm1158 = vcmp.gt.bf16.partialorder %v1156, 0
  %v1159 = vmul.bf16 %v1155, 1009007652
  %v1160 = vmul.bf16 %v1156, 1009007652
  %v1161 = vsel %vm1157, %v1155, %v1159
  %v1162 = vsel %vm1158, %v1156, %v1160
  %v1163 = vld [vmem:[%s16] sm:$0xff]
  %v1164 = vld [vmem:[%s16 + $0x8] sm:$0xff]
  %v1165 = vld [vmem:[%s16 + $0x10] sm:$0xff]
  %v1166 = vld [vmem:[%s16 + $0x18] sm:$0xff]
  %v1167 = vld [vmem:[%s16 + $0x20] sm:$0xff]
  %v1168 = vld [vmem:[%s16 + $0x28] sm:$0xff]
  %v1169 = vld [vmem:[%s16 + $0x30] sm:$0xff]
  %v1170 = vld [vmem:[%s16 + $0x38] sm:$0xff]
  %v1171 = vld [vmem:[%s16 + $0x40] sm:$0xff]
  %v1172 = vld [vmem:[%s16 + $0x48] sm:$0xff]
  %v1173 = vld [vmem:[%s16 + $0x50] sm:$0xff]
  %v1174 = vld [vmem:[%s16 + $0x58] sm:$0xff]
  %v1175 = vld [vmem:[%s16 + $0x60] sm:$0xff]
  %v1176 = vld [vmem:[%s16 + $0x68] sm:$0xff]
  %v1177 = vld [vmem:[%s16 + $0x70] sm:$0xff]
  %v1178 = vld [vmem:[%s16 + $0x78] sm:$0xff]
  %v1179 = vld [vmem:[%s16 + $0x80] sm:$0xff]
  %v1180 = vld [vmem:[%s16 + $0x88] sm:$0xff]
  %v1181 = vld [vmem:[%s16 + $0x90] sm:$0xff]
  %v1182 = vld [vmem:[%s16 + $0x98] sm:$0xff]
  %v1183 = vld [vmem:[%s16 + $0xa0] sm:$0xff]
  %v1184 = vld [vmem:[%s16 + $0xa8] sm:$0xff]
  %v1185 = vld [vmem:[%s16 + $0xb0] sm:$0xff]
  %v1186 = vld [vmem:[%s16 + $0xb8] sm:$0xff]
  %v1187 = vld [vmem:[%s16 + $0xc0] sm:$0xff]
  %v1188 = vld [vmem:[%s16 + $0xc8] sm:$0xff]
  %v1189 = vld [vmem:[%s16 + $0xd0] sm:$0xff]
  %v1190 = vld [vmem:[%s16 + $0xd8] sm:$0xff]
  %v1191 = vld [vmem:[%s16 + $0xe0] sm:$0xff]
  %v1192 = vld [vmem:[%s16 + $0xe8] sm:$0xff]
  %v1193 = vld [vmem:[%s16 + $0xf0] sm:$0xff]
  %v1194 = vld [vmem:[%s16 + $0xf8] sm:$0xff]
  %v1195 = vld [vmem:[%s17] sm:$0x3]
  %v1197 = vlaneseq
  %v1198 = vshrl.u32 %v1197, 7
  %v1199 = vsub.s32 0, %v1198
  %v1200 = vrot.slane %v1195, %v1199
  %v1201 = vlaneseq
  %v1202 = vshrl.u32 %v1201, 7
  %v1203 = vsub.s32 1, %v1202
  %v1204 = vrot.slane %v1195, %v1203
  %v1239 = vunpack.c.l.b16 %v1163
  %v1240 = vunpack.c.h.b16 %v1163
  %v1241 = vunpack.c.l.b16 %v1164
  %v1242 = vunpack.c.h.b16 %v1164
  %v1243 = vunpack.c.l.b16 %v1165
  %v1244 = vunpack.c.h.b16 %v1165
  %v1245 = vunpack.c.l.b16 %v1166
  %v1246 = vunpack.c.h.b16 %v1166
  %v1247 = vunpack.c.l.b16 %v1167
  %v1248 = vunpack.c.h.b16 %v1167
  %v1249 = vunpack.c.l.b16 %v1168
  %v1250 = vunpack.c.h.b16 %v1168
  %v1251 = vunpack.c.l.b16 %v1169
  %v1252 = vunpack.c.h.b16 %v1169
  %v1253 = vunpack.c.l.b16 %v1170
  %v1254 = vunpack.c.h.b16 %v1170
  %v1255 = vunpack.c.l.b16 %v1171
  %v1256 = vunpack.c.h.b16 %v1171
  %v1257 = vunpack.c.l.b16 %v1172
  %v1258 = vunpack.c.h.b16 %v1172
  %v1259 = vunpack.c.l.b16 %v1173
  %v1260 = vunpack.c.h.b16 %v1173
  %v1261 = vunpack.c.l.b16 %v1174
  %v1262 = vunpack.c.h.b16 %v1174
  %v1263 = vunpack.c.l.b16 %v1175
  %v1264 = vunpack.c.h.b16 %v1175
  %v1265 = vunpack.c.l.b16 %v1176
  %v1266 = vunpack.c.h.b16 %v1176
  %v1267 = vunpack.c.l.b16 %v1177
  %v1268 = vunpack.c.h.b16 %v1177
  %v1269 = vunpack.c.l.b16 %v1178
  %v1270 = vunpack.c.h.b16 %v1178
  %v1271 = vunpack.c.l.b16 %v1179
  %v1272 = vunpack.c.h.b16 %v1179
  %v1273 = vunpack.c.l.b16 %v1180
  %v1274 = vunpack.c.h.b16 %v1180
  %v1275 = vunpack.c.l.b16 %v1181
  %v1276 = vunpack.c.h.b16 %v1181
  %v1277 = vunpack.c.l.b16 %v1182
  %v1278 = vunpack.c.h.b16 %v1182
  %v1279 = vunpack.c.l.b16 %v1183
  %v1280 = vunpack.c.h.b16 %v1183
  %v1281 = vunpack.c.l.b16 %v1184
  %v1282 = vunpack.c.h.b16 %v1184
  %v1283 = vunpack.c.l.b16 %v1185
  %v1284 = vunpack.c.h.b16 %v1185
  %v1285 = vunpack.c.l.b16 %v1186
  %v1286 = vunpack.c.h.b16 %v1186
  %v1287 = vunpack.c.l.b16 %v1187
  %v1288 = vunpack.c.h.b16 %v1187
  %v1289 = vunpack.c.l.b16 %v1188
  %v1290 = vunpack.c.h.b16 %v1188
  %v1291 = vunpack.c.l.b16 %v1189
  %v1292 = vunpack.c.h.b16 %v1189
  %v1293 = vunpack.c.l.b16 %v1190
  %v1294 = vunpack.c.h.b16 %v1190
  %v1295 = vunpack.c.l.b16 %v1191
  %v1296 = vunpack.c.h.b16 %v1191
  %v1297 = vunpack.c.l.b16 %v1192
  %v1298 = vunpack.c.h.b16 %v1192
  %v1299 = vunpack.c.l.b16 %v1193
  %v1300 = vunpack.c.h.b16 %v1193
  %v1301 = vunpack.c.l.b16 %v1194
  %v1302 = vunpack.c.h.b16 %v1194
  %v1303 = vpack.c.b16 %v1241, %v1239
  %v1304 = vpack.c.b16 %v1242, %v1240
  %v1305 = vpack.c.b16 %v1245, %v1243
  %v1306 = vpack.c.b16 %v1246, %v1244
  %v1307 = vpack.c.b16 %v1249, %v1247
  %v1308 = vpack.c.b16 %v1250, %v1248
  %v1309 = vpack.c.b16 %v1253, %v1251
  %v1310 = vpack.c.b16 %v1254, %v1252
  %v1311 = vpack.c.b16 %v1257, %v1255
  %v1312 = vpack.c.b16 %v1258, %v1256
  %v1313 = vpack.c.b16 %v1261, %v1259
  %v1314 = vpack.c.b16 %v1262, %v1260
  %v1315 = vpack.c.b16 %v1265, %v1263
  %v1316 = vpack.c.b16 %v1266, %v1264
  %v1317 = vpack.c.b16 %v1269, %v1267
  %v1318 = vpack.c.b16 %v1270, %v1268
  %v1319 = vpack.c.b16 %v1273, %v1271
  %v1320 = vpack.c.b16 %v1274, %v1272
  %v1321 = vpack.c.b16 %v1277, %v1275
  %v1322 = vpack.c.b16 %v1278, %v1276
  %v1323 = vpack.c.b16 %v1281, %v1279
  %v1324 = vpack.c.b16 %v1282, %v1280
  %v1325 = vpack.c.b16 %v1285, %v1283
  %v1326 = vpack.c.b16 %v1286, %v1284
  %v1327 = vpack.c.b16 %v1289, %v1287
  %v1328 = vpack.c.b16 %v1290, %v1288
  %v1329 = vpack.c.b16 %v1293, %v1291
  %v1330 = vpack.c.b16 %v1294, %v1292
  %v1331 = vpack.c.b16 %v1297, %v1295
  %v1332 = vpack.c.b16 %v1298, %v1296
  %v1333 = vpack.c.b16 %v1301, %v1299
  %v1334 = vpack.c.b16 %v1302, %v1300
  %1367 = vmatprep.subr.bf16.mxu0 %v1304
  %1368 = vmatpush1.bf16.msra.mxu0 %v1303
  %1369 = vmatprep.subr.bf16.mxu0 %v1306
  %1370 = vmatpush1.bf16.msra.mxu0 %v1305
  %1371 = vmatprep.subr.bf16.mxu0 %v1308
  %1372 = vmatpush1.bf16.msra.mxu0 %v1307
  %1373 = vmatprep.subr.bf16.mxu0 %v1310
  %1374 = vmatpush1.bf16.msra.mxu0 %v1309
  %1375 = vmatprep.subr.bf16.mxu0 %v1312
  %1376 = vmatpush1.bf16.msra.mxu0 %v1311
  %1377 = vmatprep.subr.bf16.mxu0 %v1314
  %1378 = vmatpush1.bf16.msra.mxu0 %v1313
  %1379 = vmatprep.subr.bf16.mxu0 %v1316
  %1380 = vmatpush1.bf16.msra.mxu0 %v1315
  %1381 = vmatprep.subr.bf16.mxu0 %v1318
  %1382 = vmatpush1.bf16.msra.mxu0 %v1317
  %1383 = vmatprep.subr.bf16.mxu0 %v1320
  %1384 = vmatpush1.bf16.msra.mxu0 %v1319
  %1385 = vmatprep.subr.bf16.mxu0 %v1322
  %1386 = vmatpush1.bf16.msra.mxu0 %v1321
  %1387 = vmatprep.subr.bf16.mxu0 %v1324
  %1388 = vmatpush1.bf16.msra.mxu0 %v1323
  %1389 = vmatprep.subr.bf16.mxu0 %v1326
  %1390 = vmatpush1.bf16.msra.mxu0 %v1325
  %1391 = vmatprep.subr.bf16.mxu0 %v1328
  %1392 = vmatpush1.bf16.msra.mxu0 %v1327
  %1393 = vmatprep.subr.bf16.mxu0 %v1330
  %1394 = vmatpush1.bf16.msra.mxu0 %v1329
  %1395 = vmatprep.subr.bf16.mxu0 %v1332
  %1396 = vmatpush1.bf16.msra.mxu0 %v1331
  %1397 = vmatprep.subr.bf16.mxu0 %v1334
  %1398 = vmatpush1.bf16.msra.mxu0 %v1333
  %1399 = vmatprep.mubr.bf16.mxu0 %v1162
  %1400 = vmatmul.mubr.bf16.gmra.mrb[0].mxu0 %v1161
  %v1401 = vpop.f32.mrb[0].mxu0
  %v1402 = vadd.f32 %v1200, %v1401
  %v1403 = vpop.f32.mrb[0].mxu0
  %v1404 = vadd.f32 %v1204, %v1403
  %v1405 = vpop.f32.mrb[0].mxu0
  %v1406 = vpop.f32.mrb[0].mxu0
  %1407 = vdwg.mxu0
  %vm1408 = vcmp.gt.f32.partialorder %v1402, 0.0
  %vm1409 = vcmp.gt.f32.partialorder %v1404, 0.0
  %v1410 = vmul.f32 %v1402, 0.01
  %v1411 = vmul.f32 %v1404, 0.01
  %v1412 = vsel %vm1408, %v1402, %v1410
  %v1413 = vsel %vm1409, %v1404, %v1411
  %v1414 = vpack.c.bf16 %v1412, %v1412
  %v1415 = vpack.c.bf16 %v1413, %v1413
  %v1416 = vld [vmem:[%s18] sm:$0xff]
  %v1417 = vld [vmem:[%s18 + $0x8] sm:$0xff]
  %v1418 = vld [vmem:[%s18 + $0x10] sm:$0xff]
  %v1419 = vld [vmem:[%s18 + $0x18] sm:$0xff]
  %v1420 = vld [vmem:[%s18 + $0x20] sm:$0xff]
  %v1421 = vld [vmem:[%s18 + $0x28] sm:$0xff]
  %v1422 = vld [vmem:[%s18 + $0x30] sm:$0xff]
  %v1423 = vld [vmem:[%s18 + $0x38] sm:$0xff]
  %v1424 = vld [vmem:[%s18 + $0x40] sm:$0xff]
  %v1425 = vld [vmem:[%s18 + $0x48] sm:$0xff]
  %v1426 = vld [vmem:[%s18 + $0x50] sm:$0xff]
  %v1427 = vld [vmem:[%s18 + $0x58] sm:$0xff]
  %v1428 = vld [vmem:[%s18 + $0x60] sm:$0xff]
  %v1429 = vld [vmem:[%s18 + $0x68] sm:$0xff]
  %v1430 = vld [vmem:[%s18 + $0x70] sm:$0xff]
  %v1431 = vld [vmem:[%s18 + $0x78] sm:$0xff]
  %v1432 = vld [vmem:[%s18 + $0x80] sm:$0xff]
  %v1433 = vld [vmem:[%s18 + $0x88] sm:$0xff]
  %v1434 = vld [vmem:[%s18 + $0x90] sm:$0xff]
  %v1435 = vld [vmem:[%s18 + $0x98] sm:$0xff]
  %v1436 = vld [vmem:[%s18 + $0xa0] sm:$0xff]
  %v1437 = vld [vmem:[%s18 + $0xa8] sm:$0xff]
  %v1438 = vld [vmem:[%s18 + $0xb0] sm:$0xff]
  %v1439 = vld [vmem:[%s18 + $0xb8] sm:$0xff]
  %v1440 = vld [vmem:[%s18 + $0xc0] sm:$0xff]
  %v1441 = vld [vmem:[%s18 + $0xc8] sm:$0xff]
  %v1442 = vld [vmem:[%s18 + $0xd0] sm:$0xff]
  %v1443 = vld [vmem:[%s18 + $0xd8] sm:$0xff]
  %v1444 = vld [vmem:[%s18 + $0xe0] sm:$0xff]
  %v1445 = vld [vmem:[%s18 + $0xe8] sm:$0xff]
  %v1446 = vld [vmem:[%s18 + $0xf0] sm:$0xff]
  %v1447 = vld [vmem:[%s18 + $0xf8] sm:$0xff]
  %v1448 = vld [vmem:[%s19] sm:$0xff]
  %v1449 = vld [vmem:[%s19 + $0x8] sm:$0xff]
  %v1450 = vld [vmem:[%s19 + $0x10] sm:$0xff]
  %v1451 = vld [vmem:[%s19 + $0x18] sm:$0xff]
  %v1452 = vld [vmem:[%s19 + $0x20] sm:$0xff]
  %v1453 = vld [vmem:[%s19 + $0x28] sm:$0xff]
  %v1454 = vld [vmem:[%s19 + $0x30] sm:$0xff]
  %v1455 = vld [vmem:[%s19 + $0x38] sm:$0xff]
  %v1456 = vld [vmem:[%s19 + $0x40] sm:$0xff]
  %v1457 = vld [vmem:[%s19 + $0x48] sm:$0xff]
  %v1458 = vld [vmem:[%s19 + $0x50] sm:$0xff]
  %v1459 = vld [vmem:[%s19 + $0x58] sm:$0xff]
  %v1460 = vld [vmem:[%s19 + $0x60] sm:$0xff]
  %v1461 = vld [vmem:[%s19 + $0x68] sm:$0xff]
  %v1462 = vld [vmem:[%s19 + $0x70] sm:$0xff]
  %v1463 = vld [vmem:[%s19 + $0x78] sm:$0xff]
  %v1464 = vld [vmem:[%s19 + $0x80] sm:$0xff]
  %v1465 = vld [vmem:[%s19 + $0x88] sm:$0xff]
  %v1466 = vld [vmem:[%s19 + $0x90] sm:$0xff]
  %v1467 = vld [vmem:[%s19 + $0x98] sm:$0xff]
  %v1468 = vld [vmem:[%s19 + $0xa0] sm:$0xff]
  %v1469 = vld [vmem:[%s19 + $0xa8] sm:$0xff]
  %v1470 = vld [vmem:[%s19 + $0xb0] sm:$0xff]
  %v1471 = vld [vmem:[%s19 + $0xb8] sm:$0xff]
  %v1472 = vld [vmem:[%s19 + $0xc0] sm:$0xff]
  %v1473 = vld [vmem:[%s19 + $0xc8] sm:$0xff]
  %v1474 = vld [vmem:[%s19 + $0xd0] sm:$0xff]
  %v1475 = vld [vmem:[%s19 + $0xd8] sm:$0xff]
  %v1476 = vld [vmem:[%s19 + $0xe0] sm:$0xff]
  %v1477 = vld [vmem:[%s19 + $0xe8] sm:$0xff]
  %v1478 = vld [vmem:[%s19 + $0xf0] sm:$0xff]
  %v1479 = vld [vmem:[%s19 + $0xf8] sm:$0xff]
  %v1512 = vunpack.c.l.b16 %v1448
  %v1513 = vunpack.c.h.b16 %v1448
  %v1514 = vunpack.c.l.b16 %v1449
  %v1515 = vunpack.c.h.b16 %v1449
  %v1516 = vunpack.c.l.b16 %v1450
  %v1517 = vunpack.c.h.b16 %v1450
  %v1518 = vunpack.c.l.b16 %v1451
  %v1519 = vunpack.c.h.b16 %v1451
  %v1520 = vunpack.c.l.b16 %v1452
  %v1521 = vunpack.c.h.b16 %v1452
  %v1522 = vunpack.c.l.b16 %v1453
  %v1523 = vunpack.c.h.b16 %v1453
  %v1524 = vunpack.c.l.b16 %v1454
  %v1525 = vunpack.c.h.b16 %v1454
  %v1526 = vunpack.c.l.b16 %v1455
  %v1527 = vunpack.c.h.b16 %v1455
  %v1528 = vunpack.c.l.b16 %v1456
  %v1529 = vunpack.c.h.b16 %v1456
  %v1530 = vunpack.c.l.b16 %v1457
  %v1531 = vunpack.c.h.b16 %v1457
  %v1532 = vunpack.c.l.b16 %v1458
  %v1533 = vunpack.c.h.b16 %v1458
  %v1534 = vunpack.c.l.b16 %v1459
  %v1535 = vunpack.c.h.b16 %v1459
  %v1536 = vunpack.c.l.b16 %v1460
  %v1537 = vunpack.c.h.b16 %v1460
  %v1538 = vunpack.c.l.b16 %v1461
  %v1539 = vunpack.c.h.b16 %v1461
  %v1540 = vunpack.c.l.b16 %v1462
  %v1541 = vunpack.c.h.b16 %v1462
  %v1542 = vunpack.c.l.b16 %v1463
  %v1543 = vunpack.c.h.b16 %v1463
  %v1544 = vunpack.c.l.b16 %v1464
  %v1545 = vunpack.c.h.b16 %v1464
  %v1546 = vunpack.c.l.b16 %v1465
  %v1547 = vunpack.c.h.b16 %v1465
  %v1548 = vunpack.c.l.b16 %v1466
  %v1549 = vunpack.c.h.b16 %v1466
  %v1550 = vunpack.c.l.b16 %v1467
  %v1551 = vunpack.c.h.b16 %v1467
  %v1552 = vunpack.c.l.b16 %v1468
  %v1553 = vunpack.c.h.b16 %v1468
  %v1554 = vunpack.c.l.b16 %v1469
  %v1555 = vunpack.c.h.b16 %v1469
  %v1556 = vunpack.c.l.b16 %v1470
  %v1557 = vunpack.c.h.b16 %v1470
  %v1558 = vunpack.c.l.b16 %v1471
  %v1559 = vunpack.c.h.b16 %v1471
  %v1560 = vunpack.c.l.b16 %v1472
  %v1561 = vunpack.c.h.b16 %v1472
  %v1562 = vunpack.c.l.b16 %v1473
  %v1563 = vunpack.c.h.b16 %v1473
  %v1564 = vunpack.c.l.b16 %v1474
  %v1565 = vunpack.c.h.b16 %v1474
  %v1566 = vunpack.c.l.b16 %v1475
  %v1567 = vunpack.c.h.b16 %v1475
  %v1568 = vunpack.c.l.b16 %v1476
  %v1569 = vunpack.c.h.b16 %v1476
  %v1570 = vunpack.c.l.b16 %v1477
  %v1571 = vunpack.c.h.b16 %v1477
  %v1572 = vunpack.c.l.b16 %v1478
  %v1573 = vunpack.c.h.b16 %v1478
  %v1574 = vunpack.c.l.b16 %v1479
  %v1575 = vunpack.c.h.b16 %v1479
  %v1576 = vpack.c.b16 %v1514, %v1512
  %v1577 = vpack.c.b16 %v1515, %v1513
  %v1578 = vpack.c.b16 %v1518, %v1516
  %v1579 = vpack.c.b16 %v1519, %v1517
  %v1580 = vpack.c.b16 %v1522, %v1520
  %v1581 = vpack.c.b16 %v1523, %v1521
  %v1582 = vpack.c.b16 %v1526, %v1524
  %v1583 = vpack.c.b16 %v1527, %v1525
  %v1584 = vpack.c.b16 %v1530, %v1528
  %v1585 = vpack.c.b16 %v1531, %v1529
  %v1586 = vpack.c.b16 %v1534, %v1532
  %v1587 = vpack.c.b16 %v1535, %v1533
  %v1588 = vpack.c.b16 %v1538, %v1536
  %v1589 = vpack.c.b16 %v1539, %v1537
  %v1590 = vpack.c.b16 %v1542, %v1540
  %v1591 = vpack.c.b16 %v1543, %v1541
  %v1592 = vpack.c.b16 %v1546, %v1544
  %v1593 = vpack.c.b16 %v1547, %v1545
  %v1594 = vpack.c.b16 %v1550, %v1548
  %v1595 = vpack.c.b16 %v1551, %v1549
  %v1596 = vpack.c.b16 %v1554, %v1552
  %v1597 = vpack.c.b16 %v1555, %v1553
  %v1598 = vpack.c.b16 %v1558, %v1556
  %v1599 = vpack.c.b16 %v1559, %v1557
  %v1600 = vpack.c.b16 %v1562, %v1560
  %v1601 = vpack.c.b16 %v1563, %v1561
  %v1602 = vpack.c.b16 %v1566, %v1564
  %v1603 = vpack.c.b16 %v1567, %v1565
  %v1604 = vpack.c.b16 %v1570, %v1568
  %v1605 = vpack.c.b16 %v1571, %v1569
  %v1606 = vpack.c.b16 %v1574, %v1572
  %v1607 = vpack.c.b16 %v1575, %v1573
  %1640 = vmatprep.subr.bf16.mxu0 %v1577
  %1641 = vmatpush1.bf16.msra.mxu0 %v1576
  %1642 = vmatprep.subr.bf16.mxu0 %v1579
  %1643 = vmatpush1.bf16.msra.mxu0 %v1578
  %1644 = vmatprep.subr.bf16.mxu0 %v1581
  %1645 = vmatpush1.bf16.msra.mxu0 %v1580
  %1646 = vmatprep.subr.bf16.mxu0 %v1583
  %1647 = vmatpush1.bf16.msra.mxu0 %v1582
  %1648 = vmatprep.subr.bf16.mxu0 %v1585
  %1649 = vmatpush1.bf16.msra.mxu0 %v1584
  %1650 = vmatprep.subr.bf16.mxu0 %v1587
  %1651 = vmatpush1.bf16.msra.mxu0 %v1586
  %1652 = vmatprep.subr.bf16.mxu0 %v1589
  %1653 = vmatpush1.bf16.msra.mxu0 %v1588
  %1654 = vmatprep.subr.bf16.mxu0 %v1591
  %1655 = vmatpush1.bf16.msra.mxu0 %v1590
  %1656 = vmatprep.subr.bf16.mxu0 %v1593
  %1657 = vmatpush1.bf16.msra.mxu0 %v1592
  %1658 = vmatprep.subr.bf16.mxu0 %v1595
  %1659 = vmatpush1.bf16.msra.mxu0 %v1594
  %1660 = vmatprep.subr.bf16.mxu0 %v1597
  %1661 = vmatpush1.bf16.msra.mxu0 %v1596
  %1662 = vmatprep.subr.bf16.mxu0 %v1599
  %1663 = vmatpush1.bf16.msra.mxu0 %v1598
  %1664 = vmatprep.subr.bf16.mxu0 %v1601
  %1665 = vmatpush1.bf16.msra.mxu0 %v1600
  %1666 = vmatprep.subr.bf16.mxu0 %v1603
  %1667 = vmatpush1.bf16.msra.mxu0 %v1602
  %1668 = vmatprep.subr.bf16.mxu0 %v1605
  %1669 = vmatpush1.bf16.msra.mxu0 %v1604
  %1670 = vmatprep.subr.bf16.mxu0 %v1607
  %1671 = vmatpush1.bf16.msra.mxu0 %v1606
  %1672 = vmatprep.mubr.bf16.mxu0 %v1156
  %1673 = vmatmul.mubr.bf16.gmra.mrb[0].mxu0 %v1155
  %v1674 = vpop.f32.mrb[0].mxu0
  %v1675 = vadd.f32 0.0, %v1674
  %v1676 = vpop.f32.mrb[0].mxu0
  %v1677 = vadd.f32 0.0, %v1676
  %v1678 = vpop.f32.mrb[0].mxu0
  %v1679 = vpop.f32.mrb[0].mxu0
  %1680 = vdwg.mxu0
  %v1713 = vunpack.c.l.b16 %v1416
  %v1714 = vunpack.c.h.b16 %v1416
  %v1715 = vunpack.c.l.b16 %v1417
  %v1716 = vunpack.c.h.b16 %v1417
  %v1717 = vunpack.c.l.b16 %v1418
  %v1718 = vunpack.c.h.b16 %v1418
  %v1719 = vunpack.c.l.b16 %v1419
  %v1720 = vunpack.c.h.b16 %v1419
  %v1721 = vunpack.c.l.b16 %v1420
  %v1722 = vunpack.c.h.b16 %v1420
  %v1723 = vunpack.c.l.b16 %v1421
  %v1724 = vunpack.c.h.b16 %v1421
  %v1725 = vunpack.c.l.b16 %v1422
  %v1726 = vunpack.c.h.b16 %v1422
  %v1727 = vunpack.c.l.b16 %v1423
  %v1728 = vunpack.c.h.b16 %v1423
  %v1729 = vunpack.c.l.b16 %v1424
  %v1730 = vunpack.c.h.b16 %v1424
  %v1731 = vunpack.c.l.b16 %v1425
  %v1732 = vunpack.c.h.b16 %v1425
  %v1733 = vunpack.c.l.b16 %v1426
  %v1734 = vunpack.c.h.b16 %v1426
  %v1735 = vunpack.c.l.b16 %v1427
  %v1736 = vunpack.c.h.b16 %v1427
  %v1737 = vunpack.c.l.b16 %v1428
  %v1738 = vunpack.c.h.b16 %v1428
  %v1739 = vunpack.c.l.b16 %v1429
  %v1740 = vunpack.c.h.b16 %v1429
  %v1741 = vunpack.c.l.b16 %v1430
  %v1742 = vunpack.c.h.b16 %v1430
  %v1743 = vunpack.c.l.b16 %v1431
  %v1744 = vunpack.c.h.b16 %v1431
  %v1745 = vunpack.c.l.b16 %v1432
  %v1746 = vunpack.c.h.b16 %v1432
  %v1747 = vunpack.c.l.b16 %v1433
  %v1748 = vunpack.c.h.b16 %v1433
  %v1749 = vunpack.c.l.b16 %v1434
  %v1750 = vunpack.c.h.b16 %v1434
  %v1751 = vunpack.c.l.b16 %v1435
  %v1752 = vunpack.c.h.b16 %v1435
  %v1753 = vunpack.c.l.b16 %v1436
  %v1754 = vunpack.c.h.b16 %v1436
  %v1755 = vunpack.c.l.b16 %v1437
  %v1756 = vunpack.c.h.b16 %v1437
  %v1757 = vunpack.c.l.b16 %v1438
  %v1758 = vunpack.c.h.b16 %v1438
  %v1759 = vunpack.c.l.b16 %v1439
  %v1760 = vunpack.c.h.b16 %v1439
  %v1761 = vunpack.c.l.b16 %v1440
  %v1762 = vunpack.c.h.b16 %v1440
  %v1763 = vunpack.c.l.b16 %v1441
  %v1764 = vunpack.c.h.b16 %v1441
  %v1765 = vunpack.c.l.b16 %v1442
  %v1766 = vunpack.c.h.b16 %v1442
  %v1767 = vunpack.c.l.b16 %v1443
  %v1768 = vunpack.c.h.b16 %v1443
  %v1769 = vunpack.c.l.b16 %v1444
  %v1770 = vunpack.c.h.b16 %v1444
  %v1771 = vunpack.c.l.b16 %v1445
  %v1772 = vunpack.c.h.b16 %v1445
  %v1773 = vunpack.c.l.b16 %v1446
  %v1774 = vunpack.c.h.b16 %v1446
  %v1775 = vunpack.c.l.b16 %v1447
  %v1776 = vunpack.c.h.b16 %v1447
  %v1777 = vpack.c.b16 %v1715, %v1713
  %v1778 = vpack.c.b16 %v1716, %v1714
  %v1779 = vpack.c.b16 %v1719, %v1717
  %v1780 = vpack.c.b16 %v1720, %v1718
  %v1781 = vpack.c.b16 %v1723, %v1721
  %v1782 = vpack.c.b16 %v1724, %v1722
  %v1783 = vpack.c.b16 %v1727, %v1725
  %v1784 = vpack.c.b16 %v1728, %v1726
  %v1785 = vpack.c.b16 %v1731, %v1729
  %v1786 = vpack.c.b16 %v1732, %v1730
  %v1787 = vpack.c.b16 %v1735, %v1733
  %v1788 = vpack.c.b16 %v1736, %v1734
  %v1789 = vpack.c.b16 %v1739, %v1737
  %v1790 = vpack.c.b16 %v1740, %v1738
  %v1791 = vpack.c.b16 %v1743, %v1741
  %v1792 = vpack.c.b16 %v1744, %v1742
  %v1793 = vpack.c.b16 %v1747, %v1745
  %v1794 = vpack.c.b16 %v1748, %v1746
  %v1795 = vpack.c.b16 %v1751, %v1749
  %v1796 = vpack.c.b16 %v1752, %v1750
  %v1797 = vpack.c.b16 %v1755, %v1753
  %v1798 = vpack.c.b16 %v1756, %v1754
  %v1799 = vpack.c.b16 %v1759, %v1757
  %v1800 = vpack.c.b16 %v1760, %v1758
  %v1801 = vpack.c.b16 %v1763, %v1761
  %v1802 = vpack.c.b16 %v1764, %v1762
  %v1803 = vpack.c.b16 %v1767, %v1765
  %v1804 = vpack.c.b16 %v1768, %v1766
  %v1805 = vpack.c.b16 %v1771, %v1769
  %v1806 = vpack.c.b16 %v1772, %v1770
  %v1807 = vpack.c.b16 %v1775, %v1773
  %v1808 = vpack.c.b16 %v1776, %v1774
  %1841 = vmatprep.subr.bf16.mxu0 %v1778
  %1842 = vmatpush1.bf16.msra.mxu0 %v1777
  %1843 = vmatprep.subr.bf16.mxu0 %v1780
  %1844 = vmatpush1.bf16.msra.mxu0 %v1779
  %1845 = vmatprep.subr.bf16.mxu0 %v1782
  %1846 = vmatpush1.bf16.msra.mxu0 %v1781
  %1847 = vmatprep.subr.bf16.mxu0 %v1784
  %1848 = vmatpush1.bf16.msra.mxu0 %v1783
  %1849 = vmatprep.subr.bf16.mxu0 %v1786
  %1850 = vmatpush1.bf16.msra.mxu0 %v1785
  %1851 = vmatprep.subr.bf16.mxu0 %v1788
  %1852 = vmatpush1.bf16.msra.mxu0 %v1787
  %1853 = vmatprep.subr.bf16.mxu0 %v1790
  %1854 = vmatpush1.bf16.msra.mxu0 %v1789
  %1855 = vmatprep.subr.bf16.mxu0 %v1792
  %1856 = vmatpush1.bf16.msra.mxu0 %v1791
  %1857 = vmatprep.subr.bf16.mxu0 %v1794
  %1858 = vmatpush1.bf16.msra.mxu0 %v1793
  %1859 = vmatprep.subr.bf16.mxu0 %v1796
  %1860 = vmatpush1.bf16.msra.mxu0 %v1795
  %1861 = vmatprep.subr.bf16.mxu0 %v1798
  %1862 = vmatpush1.bf16.msra.mxu0 %v1797
  %1863 = vmatprep.subr.bf16.mxu0 %v1800
  %1864 = vmatpush1.bf16.msra.mxu0 %v1799
  %1865 = vmatprep.subr.bf16.mxu0 %v1802
  %1866 = vmatpush1.bf16.msra.mxu0 %v1801
  %1867 = vmatprep.subr.bf16.mxu0 %v1804
  %1868 = vmatpush1.bf16.msra.mxu0 %v1803
  %1869 = vmatprep.subr.bf16.mxu0 %v1806
  %1870 = vmatpush1.bf16.msra.mxu0 %v1805
  %1871 = vmatprep.subr.bf16.mxu0 %v1808
  %1872 = vmatpush1.bf16.msra.mxu0 %v1807
  %1873 = vmatprep.mubr.bf16.mxu0 %v1415
  %1874 = vmatmul.mubr.bf16.gmra.mrb[0].mxu0 %v1414
  %v1875 = vpop.f32.mrb[0].mxu0
  %v1876 = vadd.f32 %v1675, %v1875
  %v1877 = vpop.f32.mrb[0].mxu0
  %v1878 = vadd.f32 %v1677, %v1877
  %v1879 = vpop.f32.mrb[0].mxu0
  %v1880 = vpop.f32.mrb[0].mxu0
  %1881 = vdwg.mxu0
  %v1882 = vld [vmem:[%s20] sm:$0x3]
  %v1884 = vlaneseq
  %v1885 = vshrl.u32 %v1884, 7
  %v1886 = vsub.s32 0, %v1885
  %v1887 = vrot.slane %v1882, %v1886
  %v1888 = vlaneseq
  %v1889 = vshrl.u32 %v1888, 7
  %v1890 = vsub.s32 1, %v1889
  %v1891 = vrot.slane %v1882, %v1890
  %v1894 = vadd.f32 %v1876, %v1887
  %v1895 = vadd.f32 %v1878, %v1891
  %v1896 = vpack.c.bf16 %v1894, %v1894
  %v1897 = vpack.c.bf16 %v1895, %v1895
  %v1898 = vunpack.c.l.bf16 %v1896
  %v1899 = vunpack.c.l.bf16 %v1897
  %v1900 = vld [vmem:[%s21] sm:$0x3]
  %v1902 = vlaneseq
  %v1903 = vshrl.u32 %v1902, 7
  %v1904 = vsub.s32 0, %v1903
  %v1905 = vrot.slane %v1900, %v1904
  %v1906 = vlaneseq
  %v1907 = vshrl.u32 %v1906, 7
  %v1908 = vsub.s32 1, %v1907
  %v1909 = vrot.slane %v1900, %v1908
  %v1912 = vmul.f32 %v1898, %v1905
  %v1913 = vmul.f32 %v1899, %v1909
  %vm1914 = vcmask 1041408
  %v1915 = vsel %vm1914, %v1912, 0.0
  %v1916 = vsel %vm1914, %v1913, 0.0
  %v1917 = vadd.f32 %v1915, %v1916
  %1918 = vadd.xlane.f32.xlu0 %v1917
  %v1919 = vpop.xlane.xlu0 %1918
  %v1920 = vld [vmem:[#allocation2] sm:$0x1]
  %v1922 = vlaneseq
  %v1923 = vshrl.u32 %v1922, 7
  %v1924 = vsub.s32 0, %v1923
  %v1925 = vrot.slane %v1920, %v1924
  %v1927 = vadd.f32 %v1919, %v1925
  %vm1928 = vcmask 1024
  %v1929 = vsel %vm1928, %v1927, 0.0
  %1930 = vadd.xlane.f32.xlu0 %v1929
  %v1931 = vpop.xlane.xlu0 %1930
  %v1932 = vrot.slane %v1931, 4
  %v1933 = vadd.f32 %v1931, %v1932
  %v1934 = vrot.slane %v1933, 2
  %v1935 = vadd.f32 %v1933, %v1934
  %v1936 = vrot.slane %v1935, 1
  %v1937 = vadd.f32 %v1935, %v1936
  %s1938 = vtos %v1937
  %v1939 = vstv %s1938
  %v1940 = vadd.f32 %v1939, 0.0
  %1941 = vst [vmem:[%s23] sm:$0xff] %v1940
  // Predicated region
  $region94: #{msdiscriminator_forward.16} parent=0 // pred_check
    _
  $region95: #{msdiscriminator_forward.16} parent=0 // pred_check_branch
    %1943 = sbr.rel (0) target = $region97
  $region96: #{msdiscriminator_forward.16} parent=0 // pred_region
    _
  $region97: #{msdiscriminator_forward.16} parent=0 // pred_fallthru
    _
  // Predicated region
  $region98: #{msdiscriminator_forward.16} parent=0 // pred_check
    _
  $region99: #{msdiscriminator_forward.16} parent=0 // pred_check_branch
    %1945 = sbr.rel (0) target = $region101
  $region100: #{msdiscriminator_forward.16} parent=0 // pred_region
    _
  $region101: #{msdiscriminator_forward.16} parent=0 // pred_fallthru
    _

</llo_original>
